<compile_context>
chip_gen: v7x
topology: tpu7x:2x2x1
jax: 0.10.0
libtpu: 0.0.40
codegen_flags: <defaults>
</compile_context>

<pallas_src>
import jax
import jax.numpy as jnp
import numpy as np
from jax.experimental import pallas as pl
from jax.experimental.pallas import tpu as pltpu

EPS = 1e-5
TAPS = tuple((kh, kw) for kh in range(3) for kw in range(3))  # t = kh*3 + kw


def _fused_cnn_kernel(x1_ref, w1_ref, s1_ref, w234_ref, s234_ref, o_ref, pad_ref):
    # x1_ref:   (B, 4*Ho*Wo, 9)     layer-1 im2col, rows ordered (pool-phase, oh, ow)
    # w1_ref:   (9, C)              layer-1 taps (BN scale folded in)
    # s1_ref:   (1, C)              layer-1 folded bias/BN shift
    # w234_ref: (L, 9, C, C)        hidden layers, per-tap weights (BN scale folded in)
    # s234_ref: (L, 1, C)           hidden layers, folded shifts
    # o_ref:    (B, Ho*Wo, C)       output block
    # pad_ref:  (B, Ho+2, Wo+2, C)  zero-bordered activation scratch (VMEM)
    B = o_ref.shape[0]
    C = w1_ref.shape[1]
    Ho = pad_ref.shape[1] - 2
    Wo = pad_ref.shape[2] - 2
    M = B * Ho * Wo
    n_hidden = w234_ref.shape[0]

    # Establish the zero halo border (interior is overwritten below).  Unconditional:
    # ~B*25 KB of stores, and safe under megacore grid splitting.
    pad_ref[...] = jnp.zeros(pad_ref.shape, jnp.float32)

    # ---- Layer 1: Conv2d(1->C, 3x3, p=1) + BN + ReLU as ONE MXU matmul + fused pool ----
    x1 = x1_ref[...].reshape(B * 4 * Ho * Wo, 9)
    y1 = jnp.dot(x1, w1_ref[...], preferred_element_type=jnp.float32)    # (B*4*Ho*Wo, C)
    y1 = jnp.maximum(y1 + s1_ref[...], 0.0)
    # Rows are (b, pool-phase, oh, ow): MaxPool2d(2) = elementwise max over the 4
    # phase planes (a leading dim) -> pure VPU, no cross-lane/sublane relayout.
    a = jnp.max(y1.reshape(B, 4, Ho * Wo, C), axis=1)                    # (B, Ho*Wo, C)
    pad_ref[:, 1:Ho + 1, 1:Wo + 1, :] = a.reshape(B, Ho, Wo, C)

    # ---- Layers 2..4: Conv2d(C->C, 3x3, p=1)+BN+ReLU as 9 accumulating per-tap matmuls ----
    for l in range(n_hidden):
        acc = jnp.zeros((M, C), jnp.float32)
        for t, (kh, kw) in enumerate(TAPS):
            lhs = pad_ref[:, kh:kh + Ho, kw:kw + Wo, :].reshape(M, C)    # static ref slice
            acc = acc + jnp.dot(lhs, w234_ref[l, t],
                                preferred_element_type=jnp.float32)
        a = jnp.maximum(acc + s234_ref[l], 0.0)
        if l + 1 < n_hidden:
            pad_ref[:, 1:Ho + 1, 1:Wo + 1, :] = a.reshape(B, Ho, Wo, C)
        else:
            o_ref[...] = a.reshape(B, Ho * Wo, C)


def _tensorcores_per_device():
    """Best-effort count of TensorCores exposed per JAX device (megacore / v7x)."""
    try:
        kind = jax.devices()[0].device_kind.lower()
    except Exception:
        return 1
    return 2 if any(tag in kind for tag in ("v4", "v5p", "v7")) else 1


@jax.jit
def cnn_encoder_forward(x_nchw, params):
    N, cin0, H, W = x_nchw.shape
    assert cin0 == 1 and H % 2 == 0 and W % 2 == 0
    C = params[0]["w"].shape[0]
    Ho, Wo = H // 2, W // 2

    def fold(p):
        scale = p["gamma"] / jnp.sqrt(p["var"] + EPS)            # (Cout,)
        shift = (p["b"] - p["mean"]) * scale + p["beta"]         # (Cout,)
        w = jnp.transpose(p["w"], (2, 3, 1, 0)) * scale          # (3,3,Cin,Cout), scale folded
        return w.astype(jnp.float32), shift.astype(jnp.float32)

    w1, s1 = fold(params[0])
    w1 = w1.reshape(9, C)                                        # (9, C)   Cin=1
    s1 = s1.reshape(1, C)

    w234, s234 = [], []
    for p in params[1:]:
        w, s = fold(p)
        w234.append(w.reshape(9, C, C))                          # [tap, cin, cout]
        s234.append(s.reshape(1, C))
    w234 = jnp.stack(w234)                                       # (3, 9, C, C)
    s234 = jnp.stack(s234)                                       # (3, 1, C)

    # Layer-1 im2col in XLA (tiny: N*H*W*9 f32).  Spatial rows reordered so each 2x2
    # maxpool window's 4 members land in 4 leading "phase" planes.
    xp = jnp.pad(x_nchw[:, 0].astype(jnp.float32), ((0, 0), (1, 1), (1, 1)))
    taps = jnp.stack([xp[:, kh:kh + H, kw:kw + W] for kh, kw in TAPS], axis=-1)  # (N,H,W,9)
    taps = taps.reshape(N, Ho, 2, Wo, 2, 9)
    x1 = jnp.transpose(taps, (0, 2, 4, 1, 3, 5)).reshape(N, 4 * Ho * Wo, 9)

    # Pack 2 images per grid step only if every TensorCore still gets >= 1 step.
    n_tc = _tensorcores_per_device()
    B = 2 if (N % 2 == 0 and (N // 2) >= n_tc) else 1

    out = pl.pallas_call(
        _fused_cnn_kernel,
        out_shape=jax.ShapeDtypeStruct((N, Ho * Wo, C), jnp.float32),
        grid=(N // B,),
        in_specs=[
            pl.BlockSpec((B, 4 * Ho * Wo, 9), lambda n: (n, 0, 0)),
            pl.BlockSpec((9, C), lambda n: (0, 0)),
            pl.BlockSpec((1, C), lambda n: (0, 0)),
            pl.BlockSpec((w234.shape[0], 9, C, C), lambda n: (0, 0, 0, 0)),
            pl.BlockSpec((s234.shape[0], 1, C), lambda n: (0, 0, 0)),
        ],
        out_specs=pl.BlockSpec((B, Ho * Wo, C), lambda n: (n, 0, 0)),
        scratch_shapes=[pltpu.VMEM((B, Ho + 2, Wo + 2, C), jnp.float32)],
        compiler_params=pltpu.CompilerParams(dimension_semantics=("parallel",)),
    )(x1, w1, s1, w234, s234)

    out = out.reshape(N, Ho, Wo, C)                              # NHWC
    return jnp.transpose(out, (0, 3, 1, 2))                      # -> NCHW


def make_layer_params(key, cin, cout):
    k = jax.random.split(key, 6)
    return dict(
        w=0.1 * jax.random.normal(k[0], (cout, cin, 3, 3), jnp.float32),   # OIHW (PyTorch)
        b=0.01 * jax.random.normal(k[1], (cout,), jnp.float32),
        gamma=1.0 + 0.1 * jax.random.normal(k[2], (cout,), jnp.float32),
        beta=0.1 * jax.random.normal(k[3], (cout,), jnp.float32),
        mean=0.05 * jax.random.normal(k[4], (cout,), jnp.float32),
        var=1.0 + 0.1 * jax.random.uniform(k[5], (cout,), jnp.float32),
    )


def init_params(key):
    ks = jax.random.split(key, 4)
    chans = [(1, 64), (64, 64), (64, 64), (64, 64)]
    return [make_layer_params(ks[i], ci, co) for i, (ci, co) in enumerate(chans)]


def reference_forward(x_nchw, params):
    out = x_nchw.astype(jnp.float32)
    for i, p in enumerate(params):
        y = jax.lax.conv_general_dilated(
            out, p["w"], (1, 1), ((1, 1), (1, 1)),
            dimension_numbers=("NCHW", "OIHW", "NCHW"),
            precision=jax.lax.Precision.HIGHEST)
        y = y + p["b"][None, :, None, None]
        y = (y - p["mean"][None, :, None, None]) / jnp.sqrt(p["var"][None, :, None, None] + EPS)
        y = y * p["gamma"][None, :, None, None] + p["beta"][None, :, None, None]
        y = jnp.maximum(y, 0.0)
        if i == 0:
            y = jax.lax.reduce_window(y, -jnp.inf, jax.lax.max,
                                      (1, 1, 2, 2), (1, 1, 2, 2), "VALID")
        out = y
    return out


if __name__ == "__main__":
    key = jax.random.PRNGKey(0)
    kx, kp = jax.random.split(key)
    x = jax.random.normal(kx, (2, 1, 16, 16), jnp.float32)  # NCHW, like the PyTorch module
    params = init_params(kp)

    out = cnn_encoder_forward(x, params)
    out = jax.block_until_ready(out)

    ref = reference_forward(x, params)
    assert out.shape == (2, 64, 8, 8), out.shape
    np.testing.assert_allclose(np.asarray(out), np.asarray(ref), rtol=1e-3, atol=1e-3)
    print("KERNEL_OK")
</pallas_src>

<mosaic_0001>
module attributes {stable_mosaic.version = 11 : i64} {
  func.func @_fused_cnn_kernel(%arg0: i32, %arg1: memref<2x256x9xf32, #tpu.memory_space<vmem>>, %arg2: memref<9x64xf32, #tpu.memory_space<vmem>>, %arg3: memref<1x64xf32, #tpu.memory_space<vmem>>, %arg4: memref<3x9x64x64xf32, #tpu.memory_space<vmem>>, %arg5: memref<3x1x64xf32, #tpu.memory_space<vmem>>, %arg6: memref<2x64x64xf32, #tpu.memory_space<vmem>>, %arg7: memref<2x10x10x64xf32, #tpu.memory_space<vmem>>) attributes {dimension_semantics = [#tpu.dimension_semantics<parallel>], iteration_bounds = array<i64: 1>, scalar_prefetch = 0 : i64, scratch_operands = 1 : i64, tpu.core_type = #tpu.core_type<tc>, window_params = [{transform_indices = @transform_0, window_bounds = array<i64: 2, 256, 9>}, {pipeline_mode = #tpu.pipeline_mode<synchronous>, transform_indices = @transform_1, window_bounds = array<i64: 9, 64>}, {pipeline_mode = #tpu.pipeline_mode<synchronous>, transform_indices = @transform_2, window_bounds = array<i64: 1, 64>}, {pipeline_mode = #tpu.pipeline_mode<synchronous>, transform_indices = @transform_3, window_bounds = array<i64: 3, 9, 64, 64>}, {pipeline_mode = #tpu.pipeline_mode<synchronous>, transform_indices = @transform_4, window_bounds = array<i64: 3, 1, 64>}, {transform_indices = @transform_5, window_bounds = array<i64: 2, 64, 64>}]} {
    %cst = arith.constant 0.000000e+00 : f32
    %0 = vector.broadcast %cst : f32 to vector<2x10x10x64xf32>
    %c0 = arith.constant 0 : index
    %c0_0 = arith.constant 0 : index
    %c0_1 = arith.constant 0 : index
    %c0_2 = arith.constant 0 : index
    %1 = vector.load %arg7[%c0, %c0_0, %c0_1, %c0_2] : memref<2x10x10x64xf32, #tpu.memory_space<vmem>>, vector<2x10x10x64xf32>
    tpu.vector_store %arg7[%c0, %c0_0, %c0_1, %c0_2], %0 {strides = array<i32>} : memref<2x10x10x64xf32, #tpu.memory_space<vmem>>, vector<2x10x10x64xf32>,
    %c0_3 = arith.constant 0 : index
    %c0_4 = arith.constant 0 : index
    %c0_5 = arith.constant 0 : index
    %2 = vector.load %arg1[%c0_3, %c0_4, %c0_5] : memref<2x256x9xf32, #tpu.memory_space<vmem>>, vector<2x256x9xf32>
    %3 = vector.shape_cast %2 : vector<2x256x9xf32> to vector<512x9xf32>
    %c0_6 = arith.constant 0 : index
    %c0_7 = arith.constant 0 : index
    %4 = vector.load %arg2[%c0_6, %c0_7] : memref<9x64xf32, #tpu.memory_space<vmem>>, vector<9x64xf32>
    %cst_8 = arith.constant dense<0.000000e+00> : vector<512x64xf32>
    %5 = tpu.matmul %3, %4, %cst_8 {dimension_numbers = #tpu.dot_dimension_numbers<[1], [0], [0], [1], [0, 0, 1, 1], [], []>} : vector<512x9xf32>, vector<9x64xf32>, vector<512x64xf32> -> vector<512x64xf32>
    %c0_9 = arith.constant 0 : index
    %c0_10 = arith.constant 0 : index
    %6 = vector.load %arg3[%c0_9, %c0_10] : memref<1x64xf32, #tpu.memory_space<vmem>>, vector<1x64xf32>
    %7 = vector.broadcast %6 : vector<1x64xf32> to vector<512x64xf32>
    %8 = arith.addf %5, %7 : vector<512x64xf32>
    %cst_11 = arith.constant 0.000000e+00 : f32
    %9 = vector.broadcast %cst_11 : f32 to vector<512x64xf32>
    %10 = arith.maximumf %8, %9 : vector<512x64xf32>
    %11 = vector.shape_cast %10 : vector<512x64xf32> to vector<2x4x64x64xf32>
    %cst_12 = arith.constant dense<0xFF800000> : vector<2x64x64xf32>
    %12 = vector.multi_reduction <maximumf>, %11, %cst_12 [1] : vector<2x4x64x64xf32> to vector<2x64x64xf32>
    %13 = vector.shape_cast %12 : vector<2x64x64xf32> to vector<2x8x8x64xf32>
    %c0_13 = arith.constant 0 : index
    %c1 = arith.constant 1 : index
    %c1_14 = arith.constant 1 : index
    %c0_15 = arith.constant 0 : index
    %14 = vector.load %arg7[%c0_13, %c1, %c1_14, %c0_15] : memref<2x10x10x64xf32, #tpu.memory_space<vmem>>, vector<2x8x8x64xf32>
    tpu.vector_store %arg7[%c0_13, %c1, %c1_14, %c0_15], %13 {strides = array<i32>} : memref<2x10x10x64xf32, #tpu.memory_space<vmem>>, vector<2x8x8x64xf32>,
    %cst_16 = arith.constant 0.000000e+00 : f32
    %15 = vector.broadcast %cst_16 : f32 to vector<128x64xf32>
    %c0_17 = arith.constant 0 : index
    %c0_18 = arith.constant 0 : index
    %c0_19 = arith.constant 0 : index
    %c0_20 = arith.constant 0 : index
    %16 = vector.load %arg7[%c0_17, %c0_18, %c0_19, %c0_20] : memref<2x10x10x64xf32, #tpu.memory_space<vmem>>, vector<2x8x8x64xf32>
    %17 = vector.shape_cast %16 : vector<2x8x8x64xf32> to vector<128x64xf32>
    %c0_21 = arith.constant 0 : index
    %c0_22 = arith.constant 0 : index
    %c0_23 = arith.constant 0 : index
    %c0_24 = arith.constant 0 : index
    %18 = vector.load %arg4[%c0_21, %c0_22, %c0_23, %c0_24] : memref<3x9x64x64xf32, #tpu.memory_space<vmem>>, vector<1x1x64x64xf32>
    %19 = vector.shape_cast %18 : vector<1x1x64x64xf32> to vector<64x64xf32>
    %cst_25 = arith.constant dense<0.000000e+00> : vector<128x64xf32>
    %20 = tpu.matmul %17, %19, %cst_25 {dimension_numbers = #tpu.dot_dimension_numbers<[1], [0], [0], [1], [0, 0, 1, 1], [], []>} : vector<128x64xf32>, vector<64x64xf32>, vector<128x64xf32> -> vector<128x64xf32>
    %21 = arith.addf %15, %20 : vector<128x64xf32>
    %c0_26 = arith.constant 0 : index
    %c0_27 = arith.constant 0 : index
    %c1_28 = arith.constant 1 : index
    %c0_29 = arith.constant 0 : index
    %22 = vector.load %arg7[%c0_26, %c0_27, %c1_28, %c0_29] : memref<2x10x10x64xf32, #tpu.memory_space<vmem>>, vector<2x8x8x64xf32>
    %23 = vector.shape_cast %22 : vector<2x8x8x64xf32> to vector<128x64xf32>
    %c0_30 = arith.constant 0 : index
    %c1_31 = arith.constant 1 : index
    %c0_32 = arith.constant 0 : index
    %c0_33 = arith.constant 0 : index
    %24 = vector.load %arg4[%c0_30, %c1_31, %c0_32, %c0_33] : memref<3x9x64x64xf32, #tpu.memory_space<vmem>>, vector<1x1x64x64xf32>
    %25 = vector.shape_cast %24 : vector<1x1x64x64xf32> to vector<64x64xf32>
    %cst_34 = arith.constant dense<0.000000e+00> : vector<128x64xf32>
    %26 = tpu.matmul %23, %25, %cst_34 {dimension_numbers = #tpu.dot_dimension_numbers<[1], [0], [0], [1], [0, 0, 1, 1], [], []>} : vector<128x64xf32>, vector<64x64xf32>, vector<128x64xf32> -> vector<128x64xf32>
    %27 = arith.addf %21, %26 : vector<128x64xf32>
    %c0_35 = arith.constant 0 : index
    %c0_36 = arith.constant 0 : index
    %c2 = arith.constant 2 : index
    %c0_37 = arith.constant 0 : index
    %28 = vector.load %arg7[%c0_35, %c0_36, %c2, %c0_37] : memref<2x10x10x64xf32, #tpu.memory_space<vmem>>, vector<2x8x8x64xf32>
    %29 = vector.shape_cast %28 : vector<2x8x8x64xf32> to vector<128x64xf32>
    %c0_38 = arith.constant 0 : index
    %c2_39 = arith.constant 2 : index
    %c0_40 = arith.constant 0 : index
    %c0_41 = arith.constant 0 : index
    %30 = vector.load %arg4[%c0_38, %c2_39, %c0_40, %c0_41] : memref<3x9x64x64xf32, #tpu.memory_space<vmem>>, vector<1x1x64x64xf32>
    %31 = vector.shape_cast %30 : vector<1x1x64x64xf32> to vector<64x64xf32>
    %cst_42 = arith.constant dense<0.000000e+00> : vector<128x64xf32>
    %32 = tpu.matmul %29, %31, %cst_42 {dimension_numbers = #tpu.dot_dimension_numbers<[1], [0], [0], [1], [0, 0, 1, 1], [], []>} : vector<128x64xf32>, vector<64x64xf32>, vector<128x64xf32> -> vector<128x64xf32>
    %33 = arith.addf %27, %32 : vector<128x64xf32>
    %c0_43 = arith.constant 0 : index
    %c1_44 = arith.constant 1 : index
    %c0_45 = arith.constant 0 : index
    %c0_46 = arith.constant 0 : index
    %34 = vector.load %arg7[%c0_43, %c1_44, %c0_45, %c0_46] : memref<2x10x10x64xf32, #tpu.memory_space<vmem>>, vector<2x8x8x64xf32>
    %35 = vector.shape_cast %34 : vector<2x8x8x64xf32> to vector<128x64xf32>
    %c0_47 = arith.constant 0 : index
    %c3 = arith.constant 3 : index
    %c0_48 = arith.constant 0 : index
    %c0_49 = arith.constant 0 : index
    %36 = vector.load %arg4[%c0_47, %c3, %c0_48, %c0_49] : memref<3x9x64x64xf32, #tpu.memory_space<vmem>>, vector<1x1x64x64xf32>
    %37 = vector.shape_cast %36 : vector<1x1x64x64xf32> to vector<64x64xf32>
    %cst_50 = arith.constant dense<0.000000e+00> : vector<128x64xf32>
    %38 = tpu.matmul %35, %37, %cst_50 {dimension_numbers = #tpu.dot_dimension_numbers<[1], [0], [0], [1], [0, 0, 1, 1], [], []>} : vector<128x64xf32>, vector<64x64xf32>, vector<128x64xf32> -> vector<128x64xf32>
    %39 = arith.addf %33, %38 : vector<128x64xf32>
    %c0_51 = arith.constant 0 : index
    %c1_52 = arith.constant 1 : index
    %c1_53 = arith.constant 1 : index
    %c0_54 = arith.constant 0 : index
    %40 = vector.load %arg7[%c0_51, %c1_52, %c1_53, %c0_54] : memref<2x10x10x64xf32, #tpu.memory_space<vmem>>, vector<2x8x8x64xf32>
    %41 = vector.shape_cast %40 : vector<2x8x8x64xf32> to vector<128x64xf32>
    %c0_55 = arith.constant 0 : index
    %c4 = arith.constant 4 : index
    %c0_56 = arith.constant 0 : index
    %c0_57 = arith.constant 0 : index
    %42 = vector.load %arg4[%c0_55, %c4, %c0_56, %c0_57] : memref<3x9x64x64xf32, #tpu.memory_space<vmem>>, vector<1x1x64x64xf32>
    %43 = vector.shape_cast %42 : vector<1x1x64x64xf32> to vector<64x64xf32>
    %cst_58 = arith.constant dense<0.000000e+00> : vector<128x64xf32>
    %44 = tpu.matmul %41, %43, %cst_58 {dimension_numbers = #tpu.dot_dimension_numbers<[1], [0], [0], [1], [0, 0, 1, 1], [], []>} : vector<128x64xf32>, vector<64x64xf32>, vector<128x64xf32> -> vector<128x64xf32>
    %45 = arith.addf %39, %44 : vector<128x64xf32>
    %c0_59 = arith.constant 0 : index
    %c1_60 = arith.constant 1 : index
    %c2_61 = arith.constant 2 : index
    %c0_62 = arith.constant 0 : index
    %46 = vector.load %arg7[%c0_59, %c1_60, %c2_61, %c0_62] : memref<2x10x10x64xf32, #tpu.memory_space<vmem>>, vector<2x8x8x64xf32>
    %47 = vector.shape_cast %46 : vector<2x8x8x64xf32> to vector<128x64xf32>
    %c0_63 = arith.constant 0 : index
    %c5 = arith.constant 5 : index
    %c0_64 = arith.constant 0 : index
    %c0_65 = arith.constant 0 : index
    %48 = vector.load %arg4[%c0_63, %c5, %c0_64, %c0_65] : memref<3x9x64x64xf32, #tpu.memory_space<vmem>>, vector<1x1x64x64xf32>
    %49 = vector.shape_cast %48 : vector<1x1x64x64xf32> to vector<64x64xf32>
    %cst_66 = arith.constant dense<0.000000e+00> : vector<128x64xf32>
    %50 = tpu.matmul %47, %49, %cst_66 {dimension_numbers = #tpu.dot_dimension_numbers<[1], [0], [0], [1], [0, 0, 1, 1], [], []>} : vector<128x64xf32>, vector<64x64xf32>, vector<128x64xf32> -> vector<128x64xf32>
    %51 = arith.addf %45, %50 : vector<128x64xf32>
    %c0_67 = arith.constant 0 : index
    %c2_68 = arith.constant 2 : index
    %c0_69 = arith.constant 0 : index
    %c0_70 = arith.constant 0 : index
    %52 = vector.load %arg7[%c0_67, %c2_68, %c0_69, %c0_70] : memref<2x10x10x64xf32, #tpu.memory_space<vmem>>, vector<2x8x8x64xf32>
    %53 = vector.shape_cast %52 : vector<2x8x8x64xf32> to vector<128x64xf32>
    %c0_71 = arith.constant 0 : index
    %c6 = arith.constant 6 : index
    %c0_72 = arith.constant 0 : index
    %c0_73 = arith.constant 0 : index
    %54 = vector.load %arg4[%c0_71, %c6, %c0_72, %c0_73] : memref<3x9x64x64xf32, #tpu.memory_space<vmem>>, vector<1x1x64x64xf32>
    %55 = vector.shape_cast %54 : vector<1x1x64x64xf32> to vector<64x64xf32>
    %cst_74 = arith.constant dense<0.000000e+00> : vector<128x64xf32>
    %56 = tpu.matmul %53, %55, %cst_74 {dimension_numbers = #tpu.dot_dimension_numbers<[1], [0], [0], [1], [0, 0, 1, 1], [], []>} : vector<128x64xf32>, vector<64x64xf32>, vector<128x64xf32> -> vector<128x64xf32>
    %57 = arith.addf %51, %56 : vector<128x64xf32>
    %c0_75 = arith.constant 0 : index
    %c2_76 = arith.constant 2 : index
    %c1_77 = arith.constant 1 : index
    %c0_78 = arith.constant 0 : index
    %58 = vector.load %arg7[%c0_75, %c2_76, %c1_77, %c0_78] : memref<2x10x10x64xf32, #tpu.memory_space<vmem>>, vector<2x8x8x64xf32>
    %59 = vector.shape_cast %58 : vector<2x8x8x64xf32> to vector<128x64xf32>
    %c0_79 = arith.constant 0 : index
    %c7 = arith.constant 7 : index
    %c0_80 = arith.constant 0 : index
    %c0_81 = arith.constant 0 : index
    %60 = vector.load %arg4[%c0_79, %c7, %c0_80, %c0_81] : memref<3x9x64x64xf32, #tpu.memory_space<vmem>>, vector<1x1x64x64xf32>
    %61 = vector.shape_cast %60 : vector<1x1x64x64xf32> to vector<64x64xf32>
    %cst_82 = arith.constant dense<0.000000e+00> : vector<128x64xf32>
    %62 = tpu.matmul %59, %61, %cst_82 {dimension_numbers = #tpu.dot_dimension_numbers<[1], [0], [0], [1], [0, 0, 1, 1], [], []>} : vector<128x64xf32>, vector<64x64xf32>, vector<128x64xf32> -> vector<128x64xf32>
    %63 = arith.addf %57, %62 : vector<128x64xf32>
    %c0_83 = arith.constant 0 : index
    %c2_84 = arith.constant 2 : index
    %c2_85 = arith.constant 2 : index
    %c0_86 = arith.constant 0 : index
    %64 = vector.load %arg7[%c0_83, %c2_84, %c2_85, %c0_86] : memref<2x10x10x64xf32, #tpu.memory_space<vmem>>, vector<2x8x8x64xf32>
    %65 = vector.shape_cast %64 : vector<2x8x8x64xf32> to vector<128x64xf32>
    %c0_87 = arith.constant 0 : index
    %c8 = arith.constant 8 : index
    %c0_88 = arith.constant 0 : index
    %c0_89 = arith.constant 0 : index
    %66 = vector.load %arg4[%c0_87, %c8, %c0_88, %c0_89] : memref<3x9x64x64xf32, #tpu.memory_space<vmem>>, vector<1x1x64x64xf32>
    %67 = vector.shape_cast %66 : vector<1x1x64x64xf32> to vector<64x64xf32>
    %cst_90 = arith.constant dense<0.000000e+00> : vector<128x64xf32>
    %68 = tpu.matmul %65, %67, %cst_90 {dimension_numbers = #tpu.dot_dimension_numbers<[1], [0], [0], [1], [0, 0, 1, 1], [], []>} : vector<128x64xf32>, vector<64x64xf32>, vector<128x64xf32> -> vector<128x64xf32>
    %69 = arith.addf %63, %68 : vector<128x64xf32>
    %c0_91 = arith.constant 0 : index
    %c0_92 = arith.constant 0 : index
    %c0_93 = arith.constant 0 : index
    %70 = vector.load %arg5[%c0_91, %c0_92, %c0_93] : memref<3x1x64xf32, #tpu.memory_space<vmem>>, vector<1x1x64xf32>
    %71 = vector.shape_cast %70 : vector<1x1x64xf32> to vector<1x64xf32>
    %72 = vector.broadcast %71 : vector<1x64xf32> to vector<128x64xf32>
    %73 = arith.addf %69, %72 : vector<128x64xf32>
    %cst_94 = arith.constant 0.000000e+00 : f32
    %74 = vector.broadcast %cst_94 : f32 to vector<128x64xf32>
    %75 = arith.maximumf %73, %74 : vector<128x64xf32>
    %76 = vector.shape_cast %75 : vector<128x64xf32> to vector<2x8x8x64xf32>
    %c0_95 = arith.constant 0 : index
    %c1_96 = arith.constant 1 : index
    %c1_97 = arith.constant 1 : index
    %c0_98 = arith.constant 0 : index
    %77 = vector.load %arg7[%c0_95, %c1_96, %c1_97, %c0_98] : memref<2x10x10x64xf32, #tpu.memory_space<vmem>>, vector<2x8x8x64xf32>
    tpu.vector_store %arg7[%c0_95, %c1_96, %c1_97, %c0_98], %76 {strides = array<i32>} : memref<2x10x10x64xf32, #tpu.memory_space<vmem>>, vector<2x8x8x64xf32>,
    %cst_99 = arith.constant 0.000000e+00 : f32
    %78 = vector.broadcast %cst_99 : f32 to vector<128x64xf32>
    %c0_100 = arith.constant 0 : index
    %c0_101 = arith.constant 0 : index
    %c0_102 = arith.constant 0 : index
    %c0_103 = arith.constant 0 : index
    %79 = vector.load %arg7[%c0_100, %c0_101, %c0_102, %c0_103] : memref<2x10x10x64xf32, #tpu.memory_space<vmem>>, vector<2x8x8x64xf32>
    %80 = vector.shape_cast %79 : vector<2x8x8x64xf32> to vector<128x64xf32>
    %c1_104 = arith.constant 1 : index
    %c0_105 = arith.constant 0 : index
    %c0_106 = arith.constant 0 : index
    %c0_107 = arith.constant 0 : index
    %81 = vector.load %arg4[%c1_104, %c0_105, %c0_106, %c0_107] : memref<3x9x64x64xf32, #tpu.memory_space<vmem>>, vector<1x1x64x64xf32>
    %82 = vector.shape_cast %81 : vector<1x1x64x64xf32> to vector<64x64xf32>
    %cst_108 = arith.constant dense<0.000000e+00> : vector<128x64xf32>
    %83 = tpu.matmul %80, %82, %cst_108 {dimension_numbers = #tpu.dot_dimension_numbers<[1], [0], [0], [1], [0, 0, 1, 1], [], []>} : vector<128x64xf32>, vector<64x64xf32>, vector<128x64xf32> -> vector<128x64xf32>
    %84 = arith.addf %78, %83 : vector<128x64xf32>
    %c0_109 = arith.constant 0 : index
    %c0_110 = arith.constant 0 : index
    %c1_111 = arith.constant 1 : index
    %c0_112 = arith.constant 0 : index
    %85 = vector.load %arg7[%c0_109, %c0_110, %c1_111, %c0_112] : memref<2x10x10x64xf32, #tpu.memory_space<vmem>>, vector<2x8x8x64xf32>
    %86 = vector.shape_cast %85 : vector<2x8x8x64xf32> to vector<128x64xf32>
    %c1_113 = arith.constant 1 : index
    %c1_114 = arith.constant 1 : index
    %c0_115 = arith.constant 0 : index
    %c0_116 = arith.constant 0 : index
    %87 = vector.load %arg4[%c1_113, %c1_114, %c0_115, %c0_116] : memref<3x9x64x64xf32, #tpu.memory_space<vmem>>, vector<1x1x64x64xf32>
    %88 = vector.shape_cast %87 : vector<1x1x64x64xf32> to vector<64x64xf32>
    %cst_117 = arith.constant dense<0.000000e+00> : vector<128x64xf32>
    %89 = tpu.matmul %86, %88, %cst_117 {dimension_numbers = #tpu.dot_dimension_numbers<[1], [0], [0], [1], [0, 0, 1, 1], [], []>} : vector<128x64xf32>, vector<64x64xf32>, vector<128x64xf32> -> vector<128x64xf32>
    %90 = arith.addf %84, %89 : vector<128x64xf32>
    %c0_118 = arith.constant 0 : index
    %c0_119 = arith.constant 0 : index
    %c2_120 = arith.constant 2 : index
    %c0_121 = arith.constant 0 : index
    %91 = vector.load %arg7[%c0_118, %c0_119, %c2_120, %c0_121] : memref<2x10x10x64xf32, #tpu.memory_space<vmem>>, vector<2x8x8x64xf32>
    %92 = vector.shape_cast %91 : vector<2x8x8x64xf32> to vector<128x64xf32>
    %c1_122 = arith.constant 1 : index
    %c2_123 = arith.constant 2 : index
    %c0_124 = arith.constant 0 : index
    %c0_125 = arith.constant 0 : index
    %93 = vector.load %arg4[%c1_122, %c2_123, %c0_124, %c0_125] : memref<3x9x64x64xf32, #tpu.memory_space<vmem>>, vector<1x1x64x64xf32>
    %94 = vector.shape_cast %93 : vector<1x1x64x64xf32> to vector<64x64xf32>
    %cst_126 = arith.constant dense<0.000000e+00> : vector<128x64xf32>
    %95 = tpu.matmul %92, %94, %cst_126 {dimension_numbers = #tpu.dot_dimension_numbers<[1], [0], [0], [1], [0, 0, 1, 1], [], []>} : vector<128x64xf32>, vector<64x64xf32>, vector<128x64xf32> -> vector<128x64xf32>
    %96 = arith.addf %90, %95 : vector<128x64xf32>
    %c0_127 = arith.constant 0 : index
    %c1_128 = arith.constant 1 : index
    %c0_129 = arith.constant 0 : index
    %c0_130 = arith.constant 0 : index
    %97 = vector.load %arg7[%c0_127, %c1_128, %c0_129, %c0_130] : memref<2x10x10x64xf32, #tpu.memory_space<vmem>>, vector<2x8x8x64xf32>
    %98 = vector.shape_cast %97 : vector<2x8x8x64xf32> to vector<128x64xf32>
    %c1_131 = arith.constant 1 : index
    %c3_132 = arith.constant 3 : index
    %c0_133 = arith.constant 0 : index
    %c0_134 = arith.constant 0 : index
    %99 = vector.load %arg4[%c1_131, %c3_132, %c0_133, %c0_134] : memref<3x9x64x64xf32, #tpu.memory_space<vmem>>, vector<1x1x64x64xf32>
    %100 = vector.shape_cast %99 : vector<1x1x64x64xf32> to vector<64x64xf32>
    %cst_135 = arith.constant dense<0.000000e+00> : vector<128x64xf32>
    %101 = tpu.matmul %98, %100, %cst_135 {dimension_numbers = #tpu.dot_dimension_numbers<[1], [0], [0], [1], [0, 0, 1, 1], [], []>} : vector<128x64xf32>, vector<64x64xf32>, vector<128x64xf32> -> vector<128x64xf32>
    %102 = arith.addf %96, %101 : vector<128x64xf32>
    %c0_136 = arith.constant 0 : index
    %c1_137 = arith.constant 1 : index
    %c1_138 = arith.constant 1 : index
    %c0_139 = arith.constant 0 : index
    %103 = vector.load %arg7[%c0_136, %c1_137, %c1_138, %c0_139] : memref<2x10x10x64xf32, #tpu.memory_space<vmem>>, vector<2x8x8x64xf32>
    %104 = vector.shape_cast %103 : vector<2x8x8x64xf32> to vector<128x64xf32>
    %c1_140 = arith.constant 1 : index
    %c4_141 = arith.constant 4 : index
    %c0_142 = arith.constant 0 : index
    %c0_143 = arith.constant 0 : index
    %105 = vector.load %arg4[%c1_140, %c4_141, %c0_142, %c0_143] : memref<3x9x64x64xf32, #tpu.memory_space<vmem>>, vector<1x1x64x64xf32>
    %106 = vector.shape_cast %105 : vector<1x1x64x64xf32> to vector<64x64xf32>
    %cst_144 = arith.constant dense<0.000000e+00> : vector<128x64xf32>
    %107 = tpu.matmul %104, %106, %cst_144 {dimension_numbers = #tpu.dot_dimension_numbers<[1], [0], [0], [1], [0, 0, 1, 1], [], []>} : vector<128x64xf32>, vector<64x64xf32>, vector<128x64xf32> -> vector<128x64xf32>
    %108 = arith.addf %102, %107 : vector<128x64xf32>
    %c0_145 = arith.constant 0 : index
    %c1_146 = arith.constant 1 : index
    %c2_147 = arith.constant 2 : index
    %c0_148 = arith.constant 0 : index
    %109 = vector.load %arg7[%c0_145, %c1_146, %c2_147, %c0_148] : memref<2x10x10x64xf32, #tpu.memory_space<vmem>>, vector<2x8x8x64xf32>
    %110 = vector.shape_cast %109 : vector<2x8x8x64xf32> to vector<128x64xf32>
    %c1_149 = arith.constant 1 : index
    %c5_150 = arith.constant 5 : index
    %c0_151 = arith.constant 0 : index
    %c0_152 = arith.constant 0 : index
    %111 = vector.load %arg4[%c1_149, %c5_150, %c0_151, %c0_152] : memref<3x9x64x64xf32, #tpu.memory_space<vmem>>, vector<1x1x64x64xf32>
    %112 = vector.shape_cast %111 : vector<1x1x64x64xf32> to vector<64x64xf32>
    %cst_153 = arith.constant dense<0.000000e+00> : vector<128x64xf32>
    %113 = tpu.matmul %110, %112, %cst_153 {dimension_numbers = #tpu.dot_dimension_numbers<[1], [0], [0], [1], [0, 0, 1, 1], [], []>} : vector<128x64xf32>, vector<64x64xf32>, vector<128x64xf32> -> vector<128x64xf32>
    %114 = arith.addf %108, %113 : vector<128x64xf32>
    %c0_154 = arith.constant 0 : index
    %c2_155 = arith.constant 2 : index
    %c0_156 = arith.constant 0 : index
    %c0_157 = arith.constant 0 : index
    %115 = vector.load %arg7[%c0_154, %c2_155, %c0_156, %c0_157] : memref<2x10x10x64xf32, #tpu.memory_space<vmem>>, vector<2x8x8x64xf32>
    %116 = vector.shape_cast %115 : vector<2x8x8x64xf32> to vector<128x64xf32>
    %c1_158 = arith.constant 1 : index
    %c6_159 = arith.constant 6 : index
    %c0_160 = arith.constant 0 : index
    %c0_161 = arith.constant 0 : index
    %117 = vector.load %arg4[%c1_158, %c6_159, %c0_160, %c0_161] : memref<3x9x64x64xf32, #tpu.memory_space<vmem>>, vector<1x1x64x64xf32>
    %118 = vector.shape_cast %117 : vector<1x1x64x64xf32> to vector<64x64xf32>
    %cst_162 = arith.constant dense<0.000000e+00> : vector<128x64xf32>
    %119 = tpu.matmul %116, %118, %cst_162 {dimension_numbers = #tpu.dot_dimension_numbers<[1], [0], [0], [1], [0, 0, 1, 1], [], []>} : vector<128x64xf32>, vector<64x64xf32>, vector<128x64xf32> -> vector<128x64xf32>
    %120 = arith.addf %114, %119 : vector<128x64xf32>
    %c0_163 = arith.constant 0 : index
    %c2_164 = arith.constant 2 : index
    %c1_165 = arith.constant 1 : index
    %c0_166 = arith.constant 0 : index
    %121 = vector.load %arg7[%c0_163, %c2_164, %c1_165, %c0_166] : memref<2x10x10x64xf32, #tpu.memory_space<vmem>>, vector<2x8x8x64xf32>
    %122 = vector.shape_cast %121 : vector<2x8x8x64xf32> to vector<128x64xf32>
    %c1_167 = arith.constant 1 : index
    %c7_168 = arith.constant 7 : index
    %c0_169 = arith.constant 0 : index
    %c0_170 = arith.constant 0 : index
    %123 = vector.load %arg4[%c1_167, %c7_168, %c0_169, %c0_170] : memref<3x9x64x64xf32, #tpu.memory_space<vmem>>, vector<1x1x64x64xf32>
    %124 = vector.shape_cast %123 : vector<1x1x64x64xf32> to vector<64x64xf32>
    %cst_171 = arith.constant dense<0.000000e+00> : vector<128x64xf32>
    %125 = tpu.matmul %122, %124, %cst_171 {dimension_numbers = #tpu.dot_dimension_numbers<[1], [0], [0], [1], [0, 0, 1, 1], [], []>} : vector<128x64xf32>, vector<64x64xf32>, vector<128x64xf32> -> vector<128x64xf32>
    %126 = arith.addf %120, %125 : vector<128x64xf32>
    %c0_172 = arith.constant 0 : index
    %c2_173 = arith.constant 2 : index
    %c2_174 = arith.constant 2 : index
    %c0_175 = arith.constant 0 : index
    %127 = vector.load %arg7[%c0_172, %c2_173, %c2_174, %c0_175] : memref<2x10x10x64xf32, #tpu.memory_space<vmem>>, vector<2x8x8x64xf32>
    %128 = vector.shape_cast %127 : vector<2x8x8x64xf32> to vector<128x64xf32>
    %c1_176 = arith.constant 1 : index
    %c8_177 = arith.constant 8 : index
    %c0_178 = arith.constant 0 : index
    %c0_179 = arith.constant 0 : index
    %129 = vector.load %arg4[%c1_176, %c8_177, %c0_178, %c0_179] : memref<3x9x64x64xf32, #tpu.memory_space<vmem>>, vector<1x1x64x64xf32>
    %130 = vector.shape_cast %129 : vector<1x1x64x64xf32> to vector<64x64xf32>
    %cst_180 = arith.constant dense<0.000000e+00> : vector<128x64xf32>
    %131 = tpu.matmul %128, %130, %cst_180 {dimension_numbers = #tpu.dot_dimension_numbers<[1], [0], [0], [1], [0, 0, 1, 1], [], []>} : vector<128x64xf32>, vector<64x64xf32>, vector<128x64xf32> -> vector<128x64xf32>
    %132 = arith.addf %126, %131 : vector<128x64xf32>
    %c1_181 = arith.constant 1 : index
    %c0_182 = arith.constant 0 : index
    %c0_183 = arith.constant 0 : index
    %133 = vector.load %arg5[%c1_181, %c0_182, %c0_183] : memref<3x1x64xf32, #tpu.memory_space<vmem>>, vector<1x1x64xf32>
    %134 = vector.shape_cast %133 : vector<1x1x64xf32> to vector<1x64xf32>
    %135 = vector.broadcast %134 : vector<1x64xf32> to vector<128x64xf32>
    %136 = arith.addf %132, %135 : vector<128x64xf32>
    %cst_184 = arith.constant 0.000000e+00 : f32
    %137 = vector.broadcast %cst_184 : f32 to vector<128x64xf32>
    %138 = arith.maximumf %136, %137 : vector<128x64xf32>
    %139 = vector.shape_cast %138 : vector<128x64xf32> to vector<2x8x8x64xf32>
    %c0_185 = arith.constant 0 : index
    %c1_186 = arith.constant 1 : index
    %c1_187 = arith.constant 1 : index
    %c0_188 = arith.constant 0 : index
    %140 = vector.load %arg7[%c0_185, %c1_186, %c1_187, %c0_188] : memref<2x10x10x64xf32, #tpu.memory_space<vmem>>, vector<2x8x8x64xf32>
    tpu.vector_store %arg7[%c0_185, %c1_186, %c1_187, %c0_188], %139 {strides = array<i32>} : memref<2x10x10x64xf32, #tpu.memory_space<vmem>>, vector<2x8x8x64xf32>,
    %cst_189 = arith.constant 0.000000e+00 : f32
    %141 = vector.broadcast %cst_189 : f32 to vector<128x64xf32>
    %c0_190 = arith.constant 0 : index
    %c0_191 = arith.constant 0 : index
    %c0_192 = arith.constant 0 : index
    %c0_193 = arith.constant 0 : index
    %142 = vector.load %arg7[%c0_190, %c0_191, %c0_192, %c0_193] : memref<2x10x10x64xf32, #tpu.memory_space<vmem>>, vector<2x8x8x64xf32>
    %143 = vector.shape_cast %142 : vector<2x8x8x64xf32> to vector<128x64xf32>
    %c2_194 = arith.constant 2 : index
    %c0_195 = arith.constant 0 : index
    %c0_196 = arith.constant 0 : index
    %c0_197 = arith.constant 0 : index
    %144 = vector.load %arg4[%c2_194, %c0_195, %c0_196, %c0_197] : memref<3x9x64x64xf32, #tpu.memory_space<vmem>>, vector<1x1x64x64xf32>
    %145 = vector.shape_cast %144 : vector<1x1x64x64xf32> to vector<64x64xf32>
    %cst_198 = arith.constant dense<0.000000e+00> : vector<128x64xf32>
    %146 = tpu.matmul %143, %145, %cst_198 {dimension_numbers = #tpu.dot_dimension_numbers<[1], [0], [0], [1], [0, 0, 1, 1], [], []>} : vector<128x64xf32>, vector<64x64xf32>, vector<128x64xf32> -> vector<128x64xf32>
    %147 = arith.addf %141, %146 : vector<128x64xf32>
    %c0_199 = arith.constant 0 : index
    %c0_200 = arith.constant 0 : index
    %c1_201 = arith.constant 1 : index
    %c0_202 = arith.constant 0 : index
    %148 = vector.load %arg7[%c0_199, %c0_200, %c1_201, %c0_202] : memref<2x10x10x64xf32, #tpu.memory_space<vmem>>, vector<2x8x8x64xf32>
    %149 = vector.shape_cast %148 : vector<2x8x8x64xf32> to vector<128x64xf32>
    %c2_203 = arith.constant 2 : index
    %c1_204 = arith.constant 1 : index
    %c0_205 = arith.constant 0 : index
    %c0_206 = arith.constant 0 : index
    %150 = vector.load %arg4[%c2_203, %c1_204, %c0_205, %c0_206] : memref<3x9x64x64xf32, #tpu.memory_space<vmem>>, vector<1x1x64x64xf32>
    %151 = vector.shape_cast %150 : vector<1x1x64x64xf32> to vector<64x64xf32>
    %cst_207 = arith.constant dense<0.000000e+00> : vector<128x64xf32>
    %152 = tpu.matmul %149, %151, %cst_207 {dimension_numbers = #tpu.dot_dimension_numbers<[1], [0], [0], [1], [0, 0, 1, 1], [], []>} : vector<128x64xf32>, vector<64x64xf32>, vector<128x64xf32> -> vector<128x64xf32>
    %153 = arith.addf %147, %152 : vector<128x64xf32>
    %c0_208 = arith.constant 0 : index
    %c0_209 = arith.constant 0 : index
    %c2_210 = arith.constant 2 : index
    %c0_211 = arith.constant 0 : index
    %154 = vector.load %arg7[%c0_208, %c0_209, %c2_210, %c0_211] : memref<2x10x10x64xf32, #tpu.memory_space<vmem>>, vector<2x8x8x64xf32>
    %155 = vector.shape_cast %154 : vector<2x8x8x64xf32> to vector<128x64xf32>
    %c2_212 = arith.constant 2 : index
    %c2_213 = arith.constant 2 : index
    %c0_214 = arith.constant 0 : index
    %c0_215 = arith.constant 0 : index
    %156 = vector.load %arg4[%c2_212, %c2_213, %c0_214, %c0_215] : memref<3x9x64x64xf32, #tpu.memory_space<vmem>>, vector<1x1x64x64xf32>
    %157 = vector.shape_cast %156 : vector<1x1x64x64xf32> to vector<64x64xf32>
    %cst_216 = arith.constant dense<0.000000e+00> : vector<128x64xf32>
    %158 = tpu.matmul %155, %157, %cst_216 {dimension_numbers = #tpu.dot_dimension_numbers<[1], [0], [0], [1], [0, 0, 1, 1], [], []>} : vector<128x64xf32>, vector<64x64xf32>, vector<128x64xf32> -> vector<128x64xf32>
    %159 = arith.addf %153, %158 : vector<128x64xf32>
    %c0_217 = arith.constant 0 : index
    %c1_218 = arith.constant 1 : index
    %c0_219 = arith.constant 0 : index
    %c0_220 = arith.constant 0 : index
    %160 = vector.load %arg7[%c0_217, %c1_218, %c0_219, %c0_220] : memref<2x10x10x64xf32, #tpu.memory_space<vmem>>, vector<2x8x8x64xf32>
    %161 = vector.shape_cast %160 : vector<2x8x8x64xf32> to vector<128x64xf32>
    %c2_221 = arith.constant 2 : index
    %c3_222 = arith.constant 3 : index
    %c0_223 = arith.constant 0 : index
    %c0_224 = arith.constant 0 : index
    %162 = vector.load %arg4[%c2_221, %c3_222, %c0_223, %c0_224] : memref<3x9x64x64xf32, #tpu.memory_space<vmem>>, vector<1x1x64x64xf32>
    %163 = vector.shape_cast %162 : vector<1x1x64x64xf32> to vector<64x64xf32>
    %cst_225 = arith.constant dense<0.000000e+00> : vector<128x64xf32>
    %164 = tpu.matmul %161, %163, %cst_225 {dimension_numbers = #tpu.dot_dimension_numbers<[1], [0], [0], [1], [0, 0, 1, 1], [], []>} : vector<128x64xf32>, vector<64x64xf32>, vector<128x64xf32> -> vector<128x64xf32>
    %165 = arith.addf %159, %164 : vector<128x64xf32>
    %c0_226 = arith.constant 0 : index
    %c1_227 = arith.constant 1 : index
    %c1_228 = arith.constant 1 : index
    %c0_229 = arith.constant 0 : index
    %166 = vector.load %arg7[%c0_226, %c1_227, %c1_228, %c0_229] : memref<2x10x10x64xf32, #tpu.memory_space<vmem>>, vector<2x8x8x64xf32>
    %167 = vector.shape_cast %166 : vector<2x8x8x64xf32> to vector<128x64xf32>
    %c2_230 = arith.constant 2 : index
    %c4_231 = arith.constant 4 : index
    %c0_232 = arith.constant 0 : index
    %c0_233 = arith.constant 0 : index
    %168 = vector.load %arg4[%c2_230, %c4_231, %c0_232, %c0_233] : memref<3x9x64x64xf32, #tpu.memory_space<vmem>>, vector<1x1x64x64xf32>
    %169 = vector.shape_cast %168 : vector<1x1x64x64xf32> to vector<64x64xf32>
    %cst_234 = arith.constant dense<0.000000e+00> : vector<128x64xf32>
    %170 = tpu.matmul %167, %169, %cst_234 {dimension_numbers = #tpu.dot_dimension_numbers<[1], [0], [0], [1], [0, 0, 1, 1], [], []>} : vector<128x64xf32>, vector<64x64xf32>, vector<128x64xf32> -> vector<128x64xf32>
    %171 = arith.addf %165, %170 : vector<128x64xf32>
    %c0_235 = arith.constant 0 : index
    %c1_236 = arith.constant 1 : index
    %c2_237 = arith.constant 2 : index
    %c0_238 = arith.constant 0 : index
    %172 = vector.load %arg7[%c0_235, %c1_236, %c2_237, %c0_238] : memref<2x10x10x64xf32, #tpu.memory_space<vmem>>, vector<2x8x8x64xf32>
    %173 = vector.shape_cast %172 : vector<2x8x8x64xf32> to vector<128x64xf32>
    %c2_239 = arith.constant 2 : index
    %c5_240 = arith.constant 5 : index
    %c0_241 = arith.constant 0 : index
    %c0_242 = arith.constant 0 : index
    %174 = vector.load %arg4[%c2_239, %c5_240, %c0_241, %c0_242] : memref<3x9x64x64xf32, #tpu.memory_space<vmem>>, vector<1x1x64x64xf32>
    %175 = vector.shape_cast %174 : vector<1x1x64x64xf32> to vector<64x64xf32>
    %cst_243 = arith.constant dense<0.000000e+00> : vector<128x64xf32>
    %176 = tpu.matmul %173, %175, %cst_243 {dimension_numbers = #tpu.dot_dimension_numbers<[1], [0], [0], [1], [0, 0, 1, 1], [], []>} : vector<128x64xf32>, vector<64x64xf32>, vector<128x64xf32> -> vector<128x64xf32>
    %177 = arith.addf %171, %176 : vector<128x64xf32>
    %c0_244 = arith.constant 0 : index
    %c2_245 = arith.constant 2 : index
    %c0_246 = arith.constant 0 : index
    %c0_247 = arith.constant 0 : index
    %178 = vector.load %arg7[%c0_244, %c2_245, %c0_246, %c0_247] : memref<2x10x10x64xf32, #tpu.memory_space<vmem>>, vector<2x8x8x64xf32>
    %179 = vector.shape_cast %178 : vector<2x8x8x64xf32> to vector<128x64xf32>
    %c2_248 = arith.constant 2 : index
    %c6_249 = arith.constant 6 : index
    %c0_250 = arith.constant 0 : index
    %c0_251 = arith.constant 0 : index
    %180 = vector.load %arg4[%c2_248, %c6_249, %c0_250, %c0_251] : memref<3x9x64x64xf32, #tpu.memory_space<vmem>>, vector<1x1x64x64xf32>
    %181 = vector.shape_cast %180 : vector<1x1x64x64xf32> to vector<64x64xf32>
    %cst_252 = arith.constant dense<0.000000e+00> : vector<128x64xf32>
    %182 = tpu.matmul %179, %181, %cst_252 {dimension_numbers = #tpu.dot_dimension_numbers<[1], [0], [0], [1], [0, 0, 1, 1], [], []>} : vector<128x64xf32>, vector<64x64xf32>, vector<128x64xf32> -> vector<128x64xf32>
    %183 = arith.addf %177, %182 : vector<128x64xf32>
    %c0_253 = arith.constant 0 : index
    %c2_254 = arith.constant 2 : index
    %c1_255 = arith.constant 1 : index
    %c0_256 = arith.constant 0 : index
    %184 = vector.load %arg7[%c0_253, %c2_254, %c1_255, %c0_256] : memref<2x10x10x64xf32, #tpu.memory_space<vmem>>, vector<2x8x8x64xf32>
    %185 = vector.shape_cast %184 : vector<2x8x8x64xf32> to vector<128x64xf32>
    %c2_257 = arith.constant 2 : index
    %c7_258 = arith.constant 7 : index
    %c0_259 = arith.constant 0 : index
    %c0_260 = arith.constant 0 : index
    %186 = vector.load %arg4[%c2_257, %c7_258, %c0_259, %c0_260] : memref<3x9x64x64xf32, #tpu.memory_space<vmem>>, vector<1x1x64x64xf32>
    %187 = vector.shape_cast %186 : vector<1x1x64x64xf32> to vector<64x64xf32>
    %cst_261 = arith.constant dense<0.000000e+00> : vector<128x64xf32>
    %188 = tpu.matmul %185, %187, %cst_261 {dimension_numbers = #tpu.dot_dimension_numbers<[1], [0], [0], [1], [0, 0, 1, 1], [], []>} : vector<128x64xf32>, vector<64x64xf32>, vector<128x64xf32> -> vector<128x64xf32>
    %189 = arith.addf %183, %188 : vector<128x64xf32>
    %c0_262 = arith.constant 0 : index
    %c2_263 = arith.constant 2 : index
    %c2_264 = arith.constant 2 : index
    %c0_265 = arith.constant 0 : index
    %190 = vector.load %arg7[%c0_262, %c2_263, %c2_264, %c0_265] : memref<2x10x10x64xf32, #tpu.memory_space<vmem>>, vector<2x8x8x64xf32>
    %191 = vector.shape_cast %190 : vector<2x8x8x64xf32> to vector<128x64xf32>
    %c2_266 = arith.constant 2 : index
    %c8_267 = arith.constant 8 : index
    %c0_268 = arith.constant 0 : index
    %c0_269 = arith.constant 0 : index
    %192 = vector.load %arg4[%c2_266, %c8_267, %c0_268, %c0_269] : memref<3x9x64x64xf32, #tpu.memory_space<vmem>>, vector<1x1x64x64xf32>
    %193 = vector.shape_cast %192 : vector<1x1x64x64xf32> to vector<64x64xf32>
    %cst_270 = arith.constant dense<0.000000e+00> : vector<128x64xf32>
    %194 = tpu.matmul %191, %193, %cst_270 {dimension_numbers = #tpu.dot_dimension_numbers<[1], [0], [0], [1], [0, 0, 1, 1], [], []>} : vector<128x64xf32>, vector<64x64xf32>, vector<128x64xf32> -> vector<128x64xf32>
    %195 = arith.addf %189, %194 : vector<128x64xf32>
    %c2_271 = arith.constant 2 : index
    %c0_272 = arith.constant 0 : index
    %c0_273 = arith.constant 0 : index
    %196 = vector.load %arg5[%c2_271, %c0_272, %c0_273] : memref<3x1x64xf32, #tpu.memory_space<vmem>>, vector<1x1x64xf32>
    %197 = vector.shape_cast %196 : vector<1x1x64xf32> to vector<1x64xf32>
    %198 = vector.broadcast %197 : vector<1x64xf32> to vector<128x64xf32>
    %199 = arith.addf %195, %198 : vector<128x64xf32>
    %cst_274 = arith.constant 0.000000e+00 : f32
    %200 = vector.broadcast %cst_274 : f32 to vector<128x64xf32>
    %201 = arith.maximumf %199, %200 : vector<128x64xf32>
    %202 = vector.shape_cast %201 : vector<128x64xf32> to vector<2x64x64xf32>
    %c0_275 = arith.constant 0 : index
    %c0_276 = arith.constant 0 : index
    %c0_277 = arith.constant 0 : index
    %203 = vector.load %arg6[%c0_275, %c0_276, %c0_277] : memref<2x64x64xf32, #tpu.memory_space<vmem>>, vector<2x64x64xf32>
    tpu.vector_store %arg6[%c0_275, %c0_276, %c0_277], %202 {strides = array<i32>} : memref<2x64x64xf32, #tpu.memory_space<vmem>>, vector<2x64x64xf32>,
    return
  }
  func.func @transform_0(%arg0: i32) -> (i32, i32, i32) {
    %c0_i32 = arith.constant 0 : i32
    %c0_i32_0 = arith.constant 0 : i32
    %c0_i32_1 = arith.constant 0 : i32
    return %arg0, %c0_i32, %c0_i32_0 : i32, i32, i32
  }
  func.func @transform_1(%arg0: i32) -> (i32, i32) {
    %c0_i32 = arith.constant 0 : i32
    %c0_i32_0 = arith.constant 0 : i32
    %c0_i32_1 = arith.constant 0 : i32
    return %c0_i32, %c0_i32_0 : i32, i32
  }
  func.func @transform_2(%arg0: i32) -> (i32, i32) {
    %c0_i32 = arith.constant 0 : i32
    %c0_i32_0 = arith.constant 0 : i32
    %c0_i32_1 = arith.constant 0 : i32
    return %c0_i32, %c0_i32_0 : i32, i32
  }
  func.func @transform_3(%arg0: i32) -> (i32, i32, i32, i32) {
    %c0_i32 = arith.constant 0 : i32
    %c0_i32_0 = arith.constant 0 : i32
    %c0_i32_1 = arith.constant 0 : i32
    %c0_i32_2 = arith.constant 0 : i32
    %c0_i32_3 = arith.constant 0 : i32
    return %c0_i32, %c0_i32_0, %c0_i32_1, %c0_i32_2 : i32, i32, i32, i32
  }
  func.func @transform_4(%arg0: i32) -> (i32, i32, i32) {
    %c0_i32 = arith.constant 0 : i32
    %c0_i32_0 = arith.constant 0 : i32
    %c0_i32_1 = arith.constant 0 : i32
    %c0_i32_2 = arith.constant 0 : i32
    return %c0_i32, %c0_i32_0, %c0_i32_1 : i32, i32, i32
  }
  func.func @transform_5(%arg0: i32) -> (i32, i32, i32) {
    %c0_i32 = arith.constant 0 : i32
    %c0_i32_0 = arith.constant 0 : i32
    %c0_i32_1 = arith.constant 0 : i32
    return %arg0, %c0_i32, %c0_i32_0 : i32, i32, i32
  }
}

</mosaic_0001>

<llo_original>
// kernel: cnn_encoder_forward.1
$region0: #{cnn_encoder_forward.1}
  #allocation0 [shape = 'u32[]', space=smem, size = 0x4, offset = 0x4, fixed_abs, tag = 'smem constant byte address 0x4 - core index']
  #allocation1 [shape = 'u32[144,128]{1,0:T(1,128)}', space=vmem, size = 0x12000, scoped, tag = 'internal scratch']
  #allocation2 [shape = 'f32[2,10,10,64]{3,2,1,0:T(8,128)}', space=vmem, size = 0x28000, scoped, tag = 'scratch operand']
  %s0 = inlined_call_operand.vmem [shape: f32[2,256,9], index: 0, kind: input, shape index: {}]
  %s1 = inlined_call_operand.vmem [shape: f32[9,64], index: 1, kind: input, shape index: {}]
  %s2 = inlined_call_operand.vmem [shape: f32[1,64], index: 2, kind: input, shape index: {}]
  %s3 = inlined_call_operand.vmem [shape: f32[3,9,64,64], index: 3, kind: input, shape index: {}]
  %s4 = inlined_call_operand.vmem [shape: f32[3,1,64], index: 4, kind: input, shape index: {}]
  %s5 = inlined_call_operand.hbm [shape: f32[2,64,64], index: 5, kind: output, shape index: {}]
  %s6 = sld [smem:[#allocation0]]
  $region30: #{cnn_encoder_forward.1} parent=0
    _
  %s8 = ssub.s32 1, %s6
  %s9 = scalar_select 0, %s8, %s6
  $region1: #{cnn_encoder_forward.1} parent=0
    #allocation3 [shape = 'u8[65536]{0}', space=vmem, size = 0x10000, scoped, tag = 'output window, operand 0, single buffered']
    #allocation4 [shape = 's32[1]{0}', space=sflag, size = 0x4, scoped, tag = 'scoped memory for cnn_encoder_forward.1']
    %10 = vsyncpa [#allocation4], 0
    // Predicated region
    $region2: #{cnn_encoder_forward.1} parent=1 // pred_check
      _
    $region3: #{cnn_encoder_forward.1} parent=1 // pred_check_branch
      %12 = sbr.rel (0) target = $region5
    $region4: #{cnn_encoder_forward.1} parent=1 // pred_region
      _
    $region5: #{cnn_encoder_forward.1} parent=1 // pred_fallthru
      _
    // Predicated region
    $region6: #{cnn_encoder_forward.1} parent=1 // pred_check
      _
    $region7: #{cnn_encoder_forward.1} parent=1 // pred_check_branch
      %14 = sbr.rel (0) target = $region9
    $region8: #{cnn_encoder_forward.1} parent=1 // pred_region
      _
    $region9: #{cnn_encoder_forward.1} parent=1 // pred_fallthru
      _
    // Predicated region
    $region10: #{cnn_encoder_forward.1} parent=1 // pred_check
      _
    $region11: #{cnn_encoder_forward.1} parent=1 // pred_check_branch
      %16 = sbr.rel (0) target = $region13
    $region12: #{cnn_encoder_forward.1} parent=1 // pred_region
      _
    $region13: #{cnn_encoder_forward.1} parent=1 // pred_fallthru
      _
    // Predicated region
    $region14: #{cnn_encoder_forward.1} parent=1 // pred_check
      _
    $region15: #{cnn_encoder_forward.1} parent=1 // pred_check_branch
      %18 = sbr.rel (0) target = $region17
    $region16: #{cnn_encoder_forward.1} parent=1 // pred_region
      _
    $region17: #{cnn_encoder_forward.1} parent=1 // pred_fallthru
      _
    // Predicated region
    $region18: #{cnn_encoder_forward.1} parent=1 // pred_check
      _
    $region19: #{cnn_encoder_forward.1} parent=1 // pred_check_branch
      %20 = sbr.rel (0) target = $region21
    $region20: #{cnn_encoder_forward.1} parent=1 // pred_region
      _
    $region21: #{cnn_encoder_forward.1} parent=1 // pred_fallthru
      _
    %vm21 = vcmask 523264
    %22 = vst.msk [vmem:[#allocation2] sm:$0xff] %vm21, 0.0
    %vm23 = vcmask 517120
    %24 = vst.msk [vmem:[#allocation2 + $0x8] sm:$0x3] %vm23, 0.0
    %25 = vst.msk [vmem:[#allocation2 + $0x10] sm:$0xff] %vm21, 0.0
    %26 = vst.msk [vmem:[#allocation2 + $0x18] sm:$0x3] %vm23, 0.0
    %27 = vst.msk [vmem:[#allocation2 + $0x20] sm:$0xff] %vm21, 0.0
    %28 = vst.msk [vmem:[#allocation2 + $0x28] sm:$0x3] %vm23, 0.0
    %29 = vst.msk [vmem:[#allocation2 + $0x30] sm:$0xff] %vm21, 0.0
    %30 = vst.msk [vmem:[#allocation2 + $0x38] sm:$0x3] %vm23, 0.0
    %31 = vst.msk [vmem:[#allocation2 + $0x40] sm:$0xff] %vm21, 0.0
    %32 = vst.msk [vmem:[#allocation2 + $0x48] sm:$0x3] %vm23, 0.0
    %33 = vst.msk [vmem:[#allocation2 + $0x50] sm:$0xff] %vm21, 0.0
    %34 = vst.msk [vmem:[#allocation2 + $0x58] sm:$0x3] %vm23, 0.0
    %35 = vst.msk [vmem:[#allocation2 + $0x60] sm:$0xff] %vm21, 0.0
    %36 = vst.msk [vmem:[#allocation2 + $0x68] sm:$0x3] %vm23, 0.0
    %37 = vst.msk [vmem:[#allocation2 + $0x70] sm:$0xff] %vm21, 0.0
    %38 = vst.msk [vmem:[#allocation2 + $0x78] sm:$0x3] %vm23, 0.0
    %39 = vst.msk [vmem:[#allocation2 + $0x80] sm:$0xff] %vm21, 0.0
    %40 = vst.msk [vmem:[#allocation2 + $0x88] sm:$0x3] %vm23, 0.0
    %41 = vst.msk [vmem:[#allocation2 + $0x90] sm:$0xff] %vm21, 0.0
    %42 = vst.msk [vmem:[#allocation2 + $0x98] sm:$0x3] %vm23, 0.0
    %43 = vst.msk [vmem:[#allocation2 + $0xa0] sm:$0xff] %vm21, 0.0
    %44 = vst.msk [vmem:[#allocation2 + $0xa8] sm:$0x3] %vm23, 0.0
    %45 = vst.msk [vmem:[#allocation2 + $0xb0] sm:$0xff] %vm21, 0.0
    %46 = vst.msk [vmem:[#allocation2 + $0xb8] sm:$0x3] %vm23, 0.0
    %47 = vst.msk [vmem:[#allocation2 + $0xc0] sm:$0xff] %vm21, 0.0
    %48 = vst.msk [vmem:[#allocation2 + $0xc8] sm:$0x3] %vm23, 0.0
    %49 = vst.msk [vmem:[#allocation2 + $0xd0] sm:$0xff] %vm21, 0.0
    %50 = vst.msk [vmem:[#allocation2 + $0xd8] sm:$0x3] %vm23, 0.0
    %51 = vst.msk [vmem:[#allocation2 + $0xe0] sm:$0xff] %vm21, 0.0
    %52 = vst.msk [vmem:[#allocation2 + $0xe8] sm:$0x3] %vm23, 0.0
    %53 = vst.msk [vmem:[#allocation2 + $0xf0] sm:$0xff] %vm21, 0.0
    %54 = vst.msk [vmem:[#allocation2 + $0xf8] sm:$0x3] %vm23, 0.0
    %55 = vst.msk [vmem:[#allocation2 + $0x100] sm:$0xff] %vm21, 0.0
    %56 = vst.msk [vmem:[#allocation2 + $0x108] sm:$0x3] %vm23, 0.0
    %57 = vst.msk [vmem:[#allocation2 + $0x110] sm:$0xff] %vm21, 0.0
    %58 = vst.msk [vmem:[#allocation2 + $0x118] sm:$0x3] %vm23, 0.0
    %59 = vst.msk [vmem:[#allocation2 + $0x120] sm:$0xff] %vm21, 0.0
    %60 = vst.msk [vmem:[#allocation2 + $0x128] sm:$0x3] %vm23, 0.0
    %61 = vst.msk [vmem:[#allocation2 + $0x130] sm:$0xff] %vm21, 0.0
    %62 = vst.msk [vmem:[#allocation2 + $0x138] sm:$0x3] %vm23, 0.0
    %v63 = vld [vmem:[%s0] sm:$0xff]
    %v64 = vld [vmem:[%s0 + $0x8] sm:$0xff]
    %v65 = vld [vmem:[%s0 + $0x10] sm:$0xff]
    %v66 = vld [vmem:[%s0 + $0x18] sm:$0xff]
    %v67 = vld [vmem:[%s0 + $0x20] sm:$0xff]
    %v68 = vld [vmem:[%s0 + $0x28] sm:$0xff]
    %v69 = vld [vmem:[%s0 + $0x30] sm:$0xff]
    %v70 = vld [vmem:[%s0 + $0x38] sm:$0xff]
    %v71 = vld [vmem:[%s0 + $0x40] sm:$0xff]
    %v72 = vld [vmem:[%s0 + $0x48] sm:$0xff]
    %v73 = vld [vmem:[%s0 + $0x50] sm:$0xff]
    %v74 = vld [vmem:[%s0 + $0x58] sm:$0xff]
    %v75 = vld [vmem:[%s0 + $0x60] sm:$0xff]
    %v76 = vld [vmem:[%s0 + $0x68] sm:$0xff]
    %v77 = vld [vmem:[%s0 + $0x70] sm:$0xff]
    %v78 = vld [vmem:[%s0 + $0x78] sm:$0xff]
    %v79 = vld [vmem:[%s0 + $0x80] sm:$0xff]
    %v80 = vld [vmem:[%s0 + $0x88] sm:$0xff]
    %v81 = vld [vmem:[%s0 + $0x90] sm:$0xff]
    %v82 = vld [vmem:[%s0 + $0x98] sm:$0xff]
    %v83 = vld [vmem:[%s0 + $0xa0] sm:$0xff]
    %v84 = vld [vmem:[%s0 + $0xa8] sm:$0xff]
    %v85 = vld [vmem:[%s0 + $0xb0] sm:$0xff]
    %v86 = vld [vmem:[%s0 + $0xb8] sm:$0xff]
    %v87 = vld [vmem:[%s0 + $0xc0] sm:$0xff]
    %v88 = vld [vmem:[%s0 + $0xc8] sm:$0xff]
    %v89 = vld [vmem:[%s0 + $0xd0] sm:$0xff]
    %v90 = vld [vmem:[%s0 + $0xd8] sm:$0xff]
    %v91 = vld [vmem:[%s0 + $0xe0] sm:$0xff]
    %v92 = vld [vmem:[%s0 + $0xe8] sm:$0xff]
    %v93 = vld [vmem:[%s0 + $0xf0] sm:$0xff]
    %v94 = vld [vmem:[%s0 + $0xf8] sm:$0xff]
    %v95 = vld [vmem:[%s0 + $0x100] sm:$0xff]
    %v96 = vld [vmem:[%s0 + $0x108] sm:$0xff]
    %v97 = vld [vmem:[%s0 + $0x110] sm:$0xff]
    %v98 = vld [vmem:[%s0 + $0x118] sm:$0xff]
    %v99 = vld [vmem:[%s0 + $0x120] sm:$0xff]
    %v100 = vld [vmem:[%s0 + $0x128] sm:$0xff]
    %v101 = vld [vmem:[%s0 + $0x130] sm:$0xff]
    %v102 = vld [vmem:[%s0 + $0x138] sm:$0xff]
    %v103 = vld [vmem:[%s0 + $0x140] sm:$0xff]
    %v104 = vld [vmem:[%s0 + $0x148] sm:$0xff]
    %v105 = vld [vmem:[%s0 + $0x150] sm:$0xff]
    %v106 = vld [vmem:[%s0 + $0x158] sm:$0xff]
    %v107 = vld [vmem:[%s0 + $0x160] sm:$0xff]
    %v108 = vld [vmem:[%s0 + $0x168] sm:$0xff]
    %v109 = vld [vmem:[%s0 + $0x170] sm:$0xff]
    %v110 = vld [vmem:[%s0 + $0x178] sm:$0xff]
    %v111 = vld [vmem:[%s0 + $0x180] sm:$0xff]
    %v112 = vld [vmem:[%s0 + $0x188] sm:$0xff]
    %v113 = vld [vmem:[%s0 + $0x190] sm:$0xff]
    %v114 = vld [vmem:[%s0 + $0x198] sm:$0xff]
    %v115 = vld [vmem:[%s0 + $0x1a0] sm:$0xff]
    %v116 = vld [vmem:[%s0 + $0x1a8] sm:$0xff]
    %v117 = vld [vmem:[%s0 + $0x1b0] sm:$0xff]
    %v118 = vld [vmem:[%s0 + $0x1b8] sm:$0xff]
    %v119 = vld [vmem:[%s0 + $0x1c0] sm:$0xff]
    %v120 = vld [vmem:[%s0 + $0x1c8] sm:$0xff]
    %v121 = vld [vmem:[%s0 + $0x1d0] sm:$0xff]
    %v122 = vld [vmem:[%s0 + $0x1d8] sm:$0xff]
    %v123 = vld [vmem:[%s0 + $0x1e0] sm:$0xff]
    %v124 = vld [vmem:[%s0 + $0x1e8] sm:$0xff]
    %v125 = vld [vmem:[%s0 + $0x1f0] sm:$0xff]
    %v126 = vld [vmem:[%s0 + $0x1f8] sm:$0xff]
    %v127 = vld [vmem:[%s1] sm:$0xff]
    %v128 = vld [vmem:[%s1 + $0x8] sm:$0x1]
    %v129 = vld [vmem:[%s2] sm:$0x1]
    %v131 = vlaneseq
    %v132 = vshrl.u32 %v131, 7
    %v133 = vsub.s32 0, %v132
    %v134 = vrot.slane %v129, %v133
    %vm136 = vcmask 72704
    %v138 = vsel %vm136, %v63, 0
    %v141 = vsel %vm136, %v64, 0
    %v144 = vsel %vm136, %v65, 0
    %v147 = vsel %vm136, %v66, 0
    %v150 = vsel %vm136, %v67, 0
    %v153 = vsel %vm136, %v68, 0
    %v156 = vsel %vm136, %v69, 0
    %v159 = vsel %vm136, %v70, 0
    %v162 = vsel %vm136, %v71, 0
    %v165 = vsel %vm136, %v72, 0
    %v168 = vsel %vm136, %v73, 0
    %v171 = vsel %vm136, %v74, 0
    %v174 = vsel %vm136, %v75, 0
    %v177 = vsel %vm136, %v76, 0
    %v180 = vsel %vm136, %v77, 0
    %v183 = vsel %vm136, %v78, 0
    %v186 = vsel %vm136, %v79, 0
    %v189 = vsel %vm136, %v80, 0
    %v192 = vsel %vm136, %v81, 0
    %v195 = vsel %vm136, %v82, 0
    %v198 = vsel %vm136, %v83, 0
    %v201 = vsel %vm136, %v84, 0
    %v204 = vsel %vm136, %v85, 0
    %v207 = vsel %vm136, %v86, 0
    %v210 = vsel %vm136, %v87, 0
    %v213 = vsel %vm136, %v88, 0
    %v216 = vsel %vm136, %v89, 0
    %v219 = vsel %vm136, %v90, 0
    %v222 = vsel %vm136, %v91, 0
    %v225 = vsel %vm136, %v92, 0
    %v228 = vsel %vm136, %v93, 0
    %v231 = vsel %vm136, %v94, 0
    %v234 = vsel %vm136, %v95, 0
    %v237 = vsel %vm136, %v96, 0
    %v240 = vsel %vm136, %v97, 0
    %v243 = vsel %vm136, %v98, 0
    %v246 = vsel %vm136, %v99, 0
    %v249 = vsel %vm136, %v100, 0
    %v252 = vsel %vm136, %v101, 0
    %v255 = vsel %vm136, %v102, 0
    %v258 = vsel %vm136, %v103, 0
    %v261 = vsel %vm136, %v104, 0
    %v264 = vsel %vm136, %v105, 0
    %v267 = vsel %vm136, %v106, 0
    %v270 = vsel %vm136, %v107, 0
    %v273 = vsel %vm136, %v108, 0
    %v276 = vsel %vm136, %v109, 0
    %v279 = vsel %vm136, %v110, 0
    %v282 = vsel %vm136, %v111, 0
    %v285 = vsel %vm136, %v112, 0
    %v288 = vsel %vm136, %v113, 0
    %v291 = vsel %vm136, %v114, 0
    %v294 = vsel %vm136, %v115, 0
    %v297 = vsel %vm136, %v116, 0
    %v300 = vsel %vm136, %v117, 0
    %v303 = vsel %vm136, %v118, 0
    %v306 = vsel %vm136, %v119, 0
    %v309 = vsel %vm136, %v120, 0
    %v312 = vsel %vm136, %v121, 0
    %v315 = vsel %vm136, %v122, 0
    %v318 = vsel %vm136, %v123, 0
    %v321 = vsel %vm136, %v124, 0
    %v324 = vsel %vm136, %v125, 0
    %v327 = vsel %vm136, %v126, 0
    %vm329 = vcmask 1040384
    %v331 = vsel %vm329, %v128, 0
    %333 = vmatprep.subr.mxu0 0.0
    %334 = vmatpush1.msra.mxu0 %v127
    %335 = vmatprep.subr.mxu0 0.0
    %336 = vmatpush1.msra.mxu0 %v331
    %337 = vmatprep.subr.mxu0 0.0
    %338 = vmatpush1.msra.mxu0 0.0
    %339 = vmatprep.subr.mxu0 0.0
    %340 = vmatpush1.msra.mxu0 0.0
    %341 = vmatprep.subr.mxu0 0.0
    %342 = vmatpush1.msra.mxu0 0.0
    %343 = vmatprep.subr.mxu0 0.0
    %344 = vmatpush1.msra.mxu0 0.0
    %345 = vmatprep.subr.mxu0 0.0
    %346 = vmatpush1.msra.mxu0 0.0
    %347 = vmatprep.subr.mxu0 0.0
    %348 = vmatpush1.msra.mxu0 0.0
    %349 = vmatprep.subr.mxu0 0.0
    %350 = vmatpush1.msra.mxu0 0.0
    %351 = vmatprep.subr.mxu0 0.0
    %352 = vmatpush1.msra.mxu0 0.0
    %353 = vmatprep.subr.mxu0 0.0
    %354 = vmatpush1.msra.mxu0 0.0
    %355 = vmatprep.subr.mxu0 0.0
    %356 = vmatpush1.msra.mxu0 0.0
    %357 = vmatprep.subr.mxu0 0.0
    %358 = vmatpush1.msra.mxu0 0.0
    %359 = vmatprep.subr.mxu0 0.0
    %360 = vmatpush1.msra.mxu0 0.0
    %361 = vmatprep.subr.mxu0 0.0
    %362 = vmatpush1.msra.mxu0 0.0
    %363 = vmatprep.subr.mxu0 0.0
    %364 = vmatpush1.msra.mxu0 0.0
    %365 = vmatprep.subr.mxu0 0.0
    %366 = vmatpush1.msra.mxu0 0.0
    %367 = vmatprep.subr.mxu0 0.0
    %368 = vmatpush1.msra.mxu0 0.0
    %369 = vmatprep.subr.mxu0 0.0
    %370 = vmatpush1.msra.mxu0 0.0
    %371 = vmatprep.subr.mxu0 0.0
    %372 = vmatpush1.msra.mxu0 0.0
    %373 = vmatprep.subr.mxu0 0.0
    %374 = vmatpush1.msra.mxu0 0.0
    %375 = vmatprep.subr.mxu0 0.0
    %376 = vmatpush1.msra.mxu0 0.0
    %377 = vmatprep.subr.mxu0 0.0
    %378 = vmatpush1.msra.mxu0 0.0
    %379 = vmatprep.subr.mxu0 0.0
    %380 = vmatpush1.msra.mxu0 0.0
    %381 = vmatprep.subr.mxu0 0.0
    %382 = vmatpush1.msra.mxu0 0.0
    %383 = vmatprep.subr.mxu0 0.0
    %384 = vmatpush1.msra.mxu0 0.0
    %385 = vmatprep.subr.mxu0 0.0
    %386 = vmatpush1.msra.mxu0 0.0
    %387 = vmatprep.subr.mxu0 0.0
    %388 = vmatpush1.msra.mxu0 0.0
    %389 = vmatprep.subr.mxu0 0.0
    %390 = vmatpush1.msra.mxu0 0.0
    %391 = vmatprep.subr.mxu0 0.0
    %392 = vmatpush1.msra.mxu0 0.0
    %393 = vmatprep.subr.mxu0 0.0
    %394 = vmatpush1.msra.mxu0 0.0
    %395 = vmatprep.subr.mxu0 0.0
    %396 = vmatpush1.msra.mxu0 0.0
    %397 = vmatprep.mubr.f32.mxu0 0.0
    %398 = vmatmul.mubr.f32.gmra.mrb[0].mxu0 %v138
    %v399 = vpop.f32.mrb[0].mxu0
    %v400 = vadd.f32 %v134, %v399
    %v401 = vpop.f32.mrb[0].mxu0
    %402 = vmatprep.mubr.f32.mxu0 0.0
    %403 = vmatmul.mubr.f32.gmra.mrb[0].mxu0 %v141
    %v404 = vpop.f32.mrb[0].mxu0
    %v405 = vadd.f32 %v134, %v404
    %v406 = vpop.f32.mrb[0].mxu0
    %407 = vmatprep.mubr.f32.mxu0 0.0
    %408 = vmatmul.mubr.f32.gmra.mrb[0].mxu0 %v144
    %v409 = vpop.f32.mrb[0].mxu0
    %v410 = vadd.f32 %v134, %v409
    %v411 = vpop.f32.mrb[0].mxu0
    %412 = vmatprep.mubr.f32.mxu0 0.0
    %413 = vmatmul.mubr.f32.gmra.mrb[0].mxu0 %v147
    %v414 = vpop.f32.mrb[0].mxu0
    %v415 = vadd.f32 %v134, %v414
    %v416 = vpop.f32.mrb[0].mxu0
    %417 = vmatprep.mubr.f32.mxu0 0.0
    %418 = vmatmul.mubr.f32.gmra.mrb[0].mxu0 %v150
    %v419 = vpop.f32.mrb[0].mxu0
    %v420 = vadd.f32 %v134, %v419
    %v421 = vpop.f32.mrb[0].mxu0
    %422 = vmatprep.mubr.f32.mxu0 0.0
    %423 = vmatmul.mubr.f32.gmra.mrb[0].mxu0 %v153
    %v424 = vpop.f32.mrb[0].mxu0
    %v425 = vadd.f32 %v134, %v424
    %v426 = vpop.f32.mrb[0].mxu0
    %427 = vmatprep.mubr.f32.mxu0 0.0
    %428 = vmatmul.mubr.f32.gmra.mrb[0].mxu0 %v156
    %v429 = vpop.f32.mrb[0].mxu0
    %v430 = vadd.f32 %v134, %v429
    %v431 = vpop.f32.mrb[0].mxu0
    %432 = vmatprep.mubr.f32.mxu0 0.0
    %433 = vmatmul.mubr.f32.gmra.mrb[0].mxu0 %v159
    %v434 = vpop.f32.mrb[0].mxu0
    %v435 = vadd.f32 %v134, %v434
    %v436 = vpop.f32.mrb[0].mxu0
    %437 = vmatprep.mubr.f32.mxu0 0.0
    %438 = vmatmul.mubr.f32.gmra.mrb[0].mxu0 %v162
    %v439 = vpop.f32.mrb[0].mxu0
    %v440 = vadd.f32 %v134, %v439
    %v441 = vpop.f32.mrb[0].mxu0
    %442 = vmatprep.mubr.f32.mxu0 0.0
    %443 = vmatmul.mubr.f32.gmra.mrb[0].mxu0 %v165
    %v444 = vpop.f32.mrb[0].mxu0
    %v445 = vadd.f32 %v134, %v444
    %v446 = vpop.f32.mrb[0].mxu0
    %447 = vmatprep.mubr.f32.mxu0 0.0
    %448 = vmatmul.mubr.f32.gmra.mrb[0].mxu0 %v168
    %v449 = vpop.f32.mrb[0].mxu0
    %v450 = vadd.f32 %v134, %v449
    %v451 = vpop.f32.mrb[0].mxu0
    %452 = vmatprep.mubr.f32.mxu0 0.0
    %453 = vmatmul.mubr.f32.gmra.mrb[0].mxu0 %v171
    %v454 = vpop.f32.mrb[0].mxu0
    %v455 = vadd.f32 %v134, %v454
    %v456 = vpop.f32.mrb[0].mxu0
    %457 = vmatprep.mubr.f32.mxu0 0.0
    %458 = vmatmul.mubr.f32.gmra.mrb[0].mxu0 %v174
    %v459 = vpop.f32.mrb[0].mxu0
    %v460 = vadd.f32 %v134, %v459
    %v461 = vpop.f32.mrb[0].mxu0
    %462 = vmatprep.mubr.f32.mxu0 0.0
    %463 = vmatmul.mubr.f32.gmra.mrb[0].mxu0 %v177
    %v464 = vpop.f32.mrb[0].mxu0
    %v465 = vadd.f32 %v134, %v464
    %v466 = vpop.f32.mrb[0].mxu0
    %467 = vmatprep.mubr.f32.mxu0 0.0
    %468 = vmatmul.mubr.f32.gmra.mrb[0].mxu0 %v180
    %v469 = vpop.f32.mrb[0].mxu0
    %v470 = vadd.f32 %v134, %v469
    %v471 = vpop.f32.mrb[0].mxu0
    %472 = vmatprep.mubr.f32.mxu0 0.0
    %473 = vmatmul.mubr.f32.gmra.mrb[0].mxu0 %v183
    %v474 = vpop.f32.mrb[0].mxu0
    %v475 = vadd.f32 %v134, %v474
    %v476 = vpop.f32.mrb[0].mxu0
    %477 = vmatprep.mubr.f32.mxu0 0.0
    %478 = vmatmul.mubr.f32.gmra.mrb[0].mxu0 %v186
    %v479 = vpop.f32.mrb[0].mxu0
    %v480 = vadd.f32 %v134, %v479
    %v481 = vpop.f32.mrb[0].mxu0
    %482 = vmatprep.mubr.f32.mxu0 0.0
    %483 = vmatmul.mubr.f32.gmra.mrb[0].mxu0 %v189
    %v484 = vpop.f32.mrb[0].mxu0
    %v485 = vadd.f32 %v134, %v484
    %v486 = vpop.f32.mrb[0].mxu0
    %487 = vmatprep.mubr.f32.mxu0 0.0
    %488 = vmatmul.mubr.f32.gmra.mrb[0].mxu0 %v192
    %v489 = vpop.f32.mrb[0].mxu0
    %v490 = vadd.f32 %v134, %v489
    %v491 = vpop.f32.mrb[0].mxu0
    %492 = vmatprep.mubr.f32.mxu0 0.0
    %493 = vmatmul.mubr.f32.gmra.mrb[0].mxu0 %v195
    %v494 = vpop.f32.mrb[0].mxu0
    %v495 = vadd.f32 %v134, %v494
    %v496 = vpop.f32.mrb[0].mxu0
    %497 = vmatprep.mubr.f32.mxu0 0.0
    %498 = vmatmul.mubr.f32.gmra.mrb[0].mxu0 %v198
    %v499 = vpop.f32.mrb[0].mxu0
    %v500 = vadd.f32 %v134, %v499
    %v501 = vpop.f32.mrb[0].mxu0
    %502 = vmatprep.mubr.f32.mxu0 0.0
    %503 = vmatmul.mubr.f32.gmra.mrb[0].mxu0 %v201
    %v504 = vpop.f32.mrb[0].mxu0
    %v505 = vadd.f32 %v134, %v504
    %v506 = vpop.f32.mrb[0].mxu0
    %507 = vmatprep.mubr.f32.mxu0 0.0
    %508 = vmatmul.mubr.f32.gmra.mrb[0].mxu0 %v204
    %v509 = vpop.f32.mrb[0].mxu0
    %v510 = vadd.f32 %v134, %v509
    %v511 = vpop.f32.mrb[0].mxu0
    %512 = vmatprep.mubr.f32.mxu0 0.0
    %513 = vmatmul.mubr.f32.gmra.mrb[0].mxu0 %v207
    %v514 = vpop.f32.mrb[0].mxu0
    %v515 = vadd.f32 %v134, %v514
    %v516 = vpop.f32.mrb[0].mxu0
    %517 = vmatprep.mubr.f32.mxu0 0.0
    %518 = vmatmul.mubr.f32.gmra.mrb[0].mxu0 %v210
    %v519 = vpop.f32.mrb[0].mxu0
    %v520 = vadd.f32 %v134, %v519
    %v521 = vpop.f32.mrb[0].mxu0
    %522 = vmatprep.mubr.f32.mxu0 0.0
    %523 = vmatmul.mubr.f32.gmra.mrb[0].mxu0 %v213
    %v524 = vpop.f32.mrb[0].mxu0
    %v525 = vadd.f32 %v134, %v524
    %v526 = vpop.f32.mrb[0].mxu0
    %527 = vmatprep.mubr.f32.mxu0 0.0
    %528 = vmatmul.mubr.f32.gmra.mrb[0].mxu0 %v216
    %v529 = vpop.f32.mrb[0].mxu0
    %v530 = vadd.f32 %v134, %v529
    %v531 = vpop.f32.mrb[0].mxu0
    %532 = vmatprep.mubr.f32.mxu0 0.0
    %533 = vmatmul.mubr.f32.gmra.mrb[0].mxu0 %v219
    %v534 = vpop.f32.mrb[0].mxu0
    %v535 = vadd.f32 %v134, %v534
    %v536 = vpop.f32.mrb[0].mxu0
    %537 = vmatprep.mubr.f32.mxu0 0.0
    %538 = vmatmul.mubr.f32.gmra.mrb[0].mxu0 %v222
    %v539 = vpop.f32.mrb[0].mxu0
    %v540 = vadd.f32 %v134, %v539
    %v541 = vpop.f32.mrb[0].mxu0
    %542 = vmatprep.mubr.f32.mxu0 0.0
    %543 = vmatmul.mubr.f32.gmra.mrb[0].mxu0 %v225
    %v544 = vpop.f32.mrb[0].mxu0
    %v545 = vadd.f32 %v134, %v544
    %v546 = vpop.f32.mrb[0].mxu0
    %547 = vmatprep.mubr.f32.mxu0 0.0
    %548 = vmatmul.mubr.f32.gmra.mrb[0].mxu0 %v228
    %v549 = vpop.f32.mrb[0].mxu0
    %v550 = vadd.f32 %v134, %v549
    %v551 = vpop.f32.mrb[0].mxu0
    %552 = vmatprep.mubr.f32.mxu0 0.0
    %553 = vmatmul.mubr.f32.gmra.mrb[0].mxu0 %v231
    %v554 = vpop.f32.mrb[0].mxu0
    %v555 = vadd.f32 %v134, %v554
    %v556 = vpop.f32.mrb[0].mxu0
    %557 = vmatprep.mubr.f32.mxu0 0.0
    %558 = vmatmul.mubr.f32.gmra.mrb[0].mxu0 %v234
    %v559 = vpop.f32.mrb[0].mxu0
    %v560 = vadd.f32 %v134, %v559
    %v561 = vpop.f32.mrb[0].mxu0
    %562 = vmatprep.mubr.f32.mxu0 0.0
    %563 = vmatmul.mubr.f32.gmra.mrb[0].mxu0 %v237
    %v564 = vpop.f32.mrb[0].mxu0
    %v565 = vadd.f32 %v134, %v564
    %v566 = vpop.f32.mrb[0].mxu0
    %567 = vmatprep.mubr.f32.mxu0 0.0
    %568 = vmatmul.mubr.f32.gmra.mrb[0].mxu0 %v240
    %v569 = vpop.f32.mrb[0].mxu0
    %v570 = vadd.f32 %v134, %v569
    %v571 = vpop.f32.mrb[0].mxu0
    %572 = vmatprep.mubr.f32.mxu0 0.0
    %573 = vmatmul.mubr.f32.gmra.mrb[0].mxu0 %v243
    %v574 = vpop.f32.mrb[0].mxu0
    %v575 = vadd.f32 %v134, %v574
    %v576 = vpop.f32.mrb[0].mxu0
    %577 = vmatprep.mubr.f32.mxu0 0.0
    %578 = vmatmul.mubr.f32.gmra.mrb[0].mxu0 %v246
    %v579 = vpop.f32.mrb[0].mxu0
    %v580 = vadd.f32 %v134, %v579
    %v581 = vpop.f32.mrb[0].mxu0
    %582 = vmatprep.mubr.f32.mxu0 0.0
    %583 = vmatmul.mubr.f32.gmra.mrb[0].mxu0 %v249
    %v584 = vpop.f32.mrb[0].mxu0
    %v585 = vadd.f32 %v134, %v584
    %v586 = vpop.f32.mrb[0].mxu0
    %587 = vmatprep.mubr.f32.mxu0 0.0
    %588 = vmatmul.mubr.f32.gmra.mrb[0].mxu0 %v252
    %v589 = vpop.f32.mrb[0].mxu0
    %v590 = vadd.f32 %v134, %v589
    %v591 = vpop.f32.mrb[0].mxu0
    %592 = vmatprep.mubr.f32.mxu0 0.0
    %593 = vmatmul.mubr.f32.gmra.mrb[0].mxu0 %v255
    %v594 = vpop.f32.mrb[0].mxu0
    %v595 = vadd.f32 %v134, %v594
    %v596 = vpop.f32.mrb[0].mxu0
    %597 = vmatprep.mubr.f32.mxu0 0.0
    %598 = vmatmul.mubr.f32.gmra.mrb[0].mxu0 %v258
    %v599 = vpop.f32.mrb[0].mxu0
    %v600 = vadd.f32 %v134, %v599
    %v601 = vpop.f32.mrb[0].mxu0
    %602 = vmatprep.mubr.f32.mxu0 0.0
    %603 = vmatmul.mubr.f32.gmra.mrb[0].mxu0 %v261
    %v604 = vpop.f32.mrb[0].mxu0
    %v605 = vadd.f32 %v134, %v604
    %v606 = vpop.f32.mrb[0].mxu0
    %607 = vmatprep.mubr.f32.mxu0 0.0
    %608 = vmatmul.mubr.f32.gmra.mrb[0].mxu0 %v264
    %v609 = vpop.f32.mrb[0].mxu0
    %v610 = vadd.f32 %v134, %v609
    %v611 = vpop.f32.mrb[0].mxu0
    %612 = vmatprep.mubr.f32.mxu0 0.0
    %613 = vmatmul.mubr.f32.gmra.mrb[0].mxu0 %v267
    %v614 = vpop.f32.mrb[0].mxu0
    %v615 = vadd.f32 %v134, %v614
    %v616 = vpop.f32.mrb[0].mxu0
    %617 = vmatprep.mubr.f32.mxu0 0.0
    %618 = vmatmul.mubr.f32.gmra.mrb[0].mxu0 %v270
    %v619 = vpop.f32.mrb[0].mxu0
    %v620 = vadd.f32 %v134, %v619
    %v621 = vpop.f32.mrb[0].mxu0
    %622 = vmatprep.mubr.f32.mxu0 0.0
    %623 = vmatmul.mubr.f32.gmra.mrb[0].mxu0 %v273
    %v624 = vpop.f32.mrb[0].mxu0
    %v625 = vadd.f32 %v134, %v624
    %v626 = vpop.f32.mrb[0].mxu0
    %627 = vmatprep.mubr.f32.mxu0 0.0
    %628 = vmatmul.mubr.f32.gmra.mrb[0].mxu0 %v276
    %v629 = vpop.f32.mrb[0].mxu0
    %v630 = vadd.f32 %v134, %v629
    %v631 = vpop.f32.mrb[0].mxu0
    %632 = vmatprep.mubr.f32.mxu0 0.0
    %633 = vmatmul.mubr.f32.gmra.mrb[0].mxu0 %v279
    %v634 = vpop.f32.mrb[0].mxu0
    %v635 = vadd.f32 %v134, %v634
    %v636 = vpop.f32.mrb[0].mxu0
    %637 = vmatprep.mubr.f32.mxu0 0.0
    %638 = vmatmul.mubr.f32.gmra.mrb[0].mxu0 %v282
    %v639 = vpop.f32.mrb[0].mxu0
    %v640 = vadd.f32 %v134, %v639
    %v641 = vpop.f32.mrb[0].mxu0
    %642 = vmatprep.mubr.f32.mxu0 0.0
    %643 = vmatmul.mubr.f32.gmra.mrb[0].mxu0 %v285
    %v644 = vpop.f32.mrb[0].mxu0
    %v645 = vadd.f32 %v134, %v644
    %v646 = vpop.f32.mrb[0].mxu0
    %647 = vmatprep.mubr.f32.mxu0 0.0
    %648 = vmatmul.mubr.f32.gmra.mrb[0].mxu0 %v288
    %v649 = vpop.f32.mrb[0].mxu0
    %v650 = vadd.f32 %v134, %v649
    %v651 = vpop.f32.mrb[0].mxu0
    %652 = vmatprep.mubr.f32.mxu0 0.0
    %653 = vmatmul.mubr.f32.gmra.mrb[0].mxu0 %v291
    %v654 = vpop.f32.mrb[0].mxu0
    %v655 = vadd.f32 %v134, %v654
    %v656 = vpop.f32.mrb[0].mxu0
    %657 = vmatprep.mubr.f32.mxu0 0.0
    %658 = vmatmul.mubr.f32.gmra.mrb[0].mxu0 %v294
    %v659 = vpop.f32.mrb[0].mxu0
    %v660 = vadd.f32 %v134, %v659
    %v661 = vpop.f32.mrb[0].mxu0
    %662 = vmatprep.mubr.f32.mxu0 0.0
    %663 = vmatmul.mubr.f32.gmra.mrb[0].mxu0 %v297
    %v664 = vpop.f32.mrb[0].mxu0
    %v665 = vadd.f32 %v134, %v664
    %v666 = vpop.f32.mrb[0].mxu0
    %667 = vmatprep.mubr.f32.mxu0 0.0
    %668 = vmatmul.mubr.f32.gmra.mrb[0].mxu0 %v300
    %v669 = vpop.f32.mrb[0].mxu0
    %v670 = vadd.f32 %v134, %v669
    %v671 = vpop.f32.mrb[0].mxu0
    %672 = vmatprep.mubr.f32.mxu0 0.0
    %673 = vmatmul.mubr.f32.gmra.mrb[0].mxu0 %v303
    %v674 = vpop.f32.mrb[0].mxu0
    %v675 = vadd.f32 %v134, %v674
    %v676 = vpop.f32.mrb[0].mxu0
    %677 = vmatprep.mubr.f32.mxu0 0.0
    %678 = vmatmul.mubr.f32.gmra.mrb[0].mxu0 %v306
    %v679 = vpop.f32.mrb[0].mxu0
    %v680 = vadd.f32 %v134, %v679
    %v681 = vpop.f32.mrb[0].mxu0
    %682 = vmatprep.mubr.f32.mxu0 0.0
    %683 = vmatmul.mubr.f32.gmra.mrb[0].mxu0 %v309
    %v684 = vpop.f32.mrb[0].mxu0
    %v685 = vadd.f32 %v134, %v684
    %v686 = vpop.f32.mrb[0].mxu0
    %687 = vmatprep.mubr.f32.mxu0 0.0
    %688 = vmatmul.mubr.f32.gmra.mrb[0].mxu0 %v312
    %v689 = vpop.f32.mrb[0].mxu0
    %v690 = vadd.f32 %v134, %v689
    %v691 = vpop.f32.mrb[0].mxu0
    %692 = vmatprep.mubr.f32.mxu0 0.0
    %693 = vmatmul.mubr.f32.gmra.mrb[0].mxu0 %v315
    %v694 = vpop.f32.mrb[0].mxu0
    %v695 = vadd.f32 %v134, %v694
    %v696 = vpop.f32.mrb[0].mxu0
    %697 = vmatprep.mubr.f32.mxu0 0.0
    %698 = vmatmul.mubr.f32.gmra.mrb[0].mxu0 %v318
    %v699 = vpop.f32.mrb[0].mxu0
    %v700 = vadd.f32 %v134, %v699
    %v701 = vpop.f32.mrb[0].mxu0
    %702 = vmatprep.mubr.f32.mxu0 0.0
    %703 = vmatmul.mubr.f32.gmra.mrb[0].mxu0 %v321
    %v704 = vpop.f32.mrb[0].mxu0
    %v705 = vadd.f32 %v134, %v704
    %v706 = vpop.f32.mrb[0].mxu0
    %707 = vmatprep.mubr.f32.mxu0 0.0
    %708 = vmatmul.mubr.f32.gmra.mrb[0].mxu0 %v324
    %v709 = vpop.f32.mrb[0].mxu0
    %v710 = vadd.f32 %v134, %v709
    %v711 = vpop.f32.mrb[0].mxu0
    %712 = vmatprep.mubr.f32.mxu0 0.0
    %713 = vmatmul.mubr.f32.gmra.mrb[0].mxu0 %v327
    %v714 = vpop.f32.mrb[0].mxu0
    %v715 = vadd.f32 %v134, %v714
    %v716 = vpop.f32.mrb[0].mxu0
    %717 = vdwg.mxu0
    %v718 = vmax.f32 %v400, 0.0
    %v719 = vmax.f32 %v405, 0.0
    %v720 = vmax.f32 %v410, 0.0
    %v721 = vmax.f32 %v415, 0.0
    %v722 = vmax.f32 %v420, 0.0
    %v723 = vmax.f32 %v425, 0.0
    %v724 = vmax.f32 %v430, 0.0
    %v725 = vmax.f32 %v435, 0.0
    %v726 = vmax.f32 %v440, 0.0
    %v727 = vmax.f32 %v445, 0.0
    %v728 = vmax.f32 %v450, 0.0
    %v729 = vmax.f32 %v455, 0.0
    %v730 = vmax.f32 %v460, 0.0
    %v731 = vmax.f32 %v465, 0.0
    %v732 = vmax.f32 %v470, 0.0
    %v733 = vmax.f32 %v475, 0.0
    %v734 = vmax.f32 %v480, 0.0
    %v735 = vmax.f32 %v485, 0.0
    %v736 = vmax.f32 %v490, 0.0
    %v737 = vmax.f32 %v495, 0.0
    %v738 = vmax.f32 %v500, 0.0
    %v739 = vmax.f32 %v505, 0.0
    %v740 = vmax.f32 %v510, 0.0
    %v741 = vmax.f32 %v515, 0.0
    %v742 = vmax.f32 %v520, 0.0
    %v743 = vmax.f32 %v525, 0.0
    %v744 = vmax.f32 %v530, 0.0
    %v745 = vmax.f32 %v535, 0.0
    %v746 = vmax.f32 %v540, 0.0
    %v747 = vmax.f32 %v545, 0.0
    %v748 = vmax.f32 %v550, 0.0
    %v749 = vmax.f32 %v555, 0.0
    %v750 = vmax.f32 %v560, 0.0
    %v751 = vmax.f32 %v565, 0.0
    %v752 = vmax.f32 %v570, 0.0
    %v753 = vmax.f32 %v575, 0.0
    %v754 = vmax.f32 %v580, 0.0
    %v755 = vmax.f32 %v585, 0.0
    %v756 = vmax.f32 %v590, 0.0
    %v757 = vmax.f32 %v595, 0.0
    %v758 = vmax.f32 %v600, 0.0
    %v759 = vmax.f32 %v605, 0.0
    %v760 = vmax.f32 %v610, 0.0
    %v761 = vmax.f32 %v615, 0.0
    %v762 = vmax.f32 %v620, 0.0
    %v763 = vmax.f32 %v625, 0.0
    %v764 = vmax.f32 %v630, 0.0
    %v765 = vmax.f32 %v635, 0.0
    %v766 = vmax.f32 %v640, 0.0
    %v767 = vmax.f32 %v645, 0.0
    %v768 = vmax.f32 %v650, 0.0
    %v769 = vmax.f32 %v655, 0.0
    %v770 = vmax.f32 %v660, 0.0
    %v771 = vmax.f32 %v665, 0.0
    %v772 = vmax.f32 %v670, 0.0
    %v773 = vmax.f32 %v675, 0.0
    %v774 = vmax.f32 %v680, 0.0
    %v775 = vmax.f32 %v685, 0.0
    %v776 = vmax.f32 %v690, 0.0
    %v777 = vmax.f32 %v695, 0.0
    %v778 = vmax.f32 %v700, 0.0
    %v779 = vmax.f32 %v705, 0.0
    %v780 = vmax.f32 %v710, 0.0
    %v781 = vmax.f32 %v715, 0.0
    %v782 = vsel %vm21, %v718, -inf
    %v783 = vsel %vm21, %v726, -inf
    %v784 = vmax.f32 %v782, %v783
    %v785 = vsel %vm21, %v734, -inf
    %v786 = vmax.f32 %v784, %v785
    %v787 = vsel %vm21, %v742, -inf
    %v788 = vmax.f32 %v786, %v787
    %v789 = vsel %vm21, %v719, -inf
    %v790 = vsel %vm21, %v727, -inf
    %v791 = vmax.f32 %v789, %v790
    %v792 = vsel %vm21, %v735, -inf
    %v793 = vmax.f32 %v791, %v792
    %v794 = vsel %vm21, %v743, -inf
    %v795 = vmax.f32 %v793, %v794
    %v796 = vsel %vm21, %v720, -inf
    %v797 = vsel %vm21, %v728, -inf
    %v798 = vmax.f32 %v796, %v797
    %v799 = vsel %vm21, %v736, -inf
    %v800 = vmax.f32 %v798, %v799
    %v801 = vsel %vm21, %v744, -inf
    %v802 = vmax.f32 %v800, %v801
    %v803 = vsel %vm21, %v721, -inf
    %v804 = vsel %vm21, %v729, -inf
    %v805 = vmax.f32 %v803, %v804
    %v806 = vsel %vm21, %v737, -inf
    %v807 = vmax.f32 %v805, %v806
    %v808 = vsel %vm21, %v745, -inf
    %v809 = vmax.f32 %v807, %v808
    %v810 = vsel %vm21, %v722, -inf
    %v811 = vsel %vm21, %v730, -inf
    %v812 = vmax.f32 %v810, %v811
    %v813 = vsel %vm21, %v738, -inf
    %v814 = vmax.f32 %v812, %v813
    %v815 = vsel %vm21, %v746, -inf
    %v816 = vmax.f32 %v814, %v815
    %v817 = vsel %vm21, %v723, -inf
    %v818 = vsel %vm21, %v731, -inf
    %v819 = vmax.f32 %v817, %v818
    %v820 = vsel %vm21, %v739, -inf
    %v821 = vmax.f32 %v819, %v820
    %v822 = vsel %vm21, %v747, -inf
    %v823 = vmax.f32 %v821, %v822
    %v824 = vsel %vm21, %v724, -inf
    %v825 = vsel %vm21, %v732, -inf
    %v826 = vmax.f32 %v824, %v825
    %v827 = vsel %vm21, %v740, -inf
    %v828 = vmax.f32 %v826, %v827
    %v829 = vsel %vm21, %v748, -inf
    %v830 = vmax.f32 %v828, %v829
    %v831 = vsel %vm21, %v725, -inf
    %v832 = vsel %vm21, %v733, -inf
    %v833 = vmax.f32 %v831, %v832
    %v834 = vsel %vm21, %v741, -inf
    %v835 = vmax.f32 %v833, %v834
    %v836 = vsel %vm21, %v749, -inf
    %v837 = vmax.f32 %v835, %v836
    %v838 = vsel %vm21, %v750, -inf
    %v839 = vsel %vm21, %v758, -inf
    %v840 = vmax.f32 %v838, %v839
    %v841 = vsel %vm21, %v766, -inf
    %v842 = vmax.f32 %v840, %v841
    %v843 = vsel %vm21, %v774, -inf
    %v844 = vmax.f32 %v842, %v843
    %v845 = vsel %vm21, %v751, -inf
    %v846 = vsel %vm21, %v759, -inf
    %v847 = vmax.f32 %v845, %v846
    %v848 = vsel %vm21, %v767, -inf
    %v849 = vmax.f32 %v847, %v848
    %v850 = vsel %vm21, %v775, -inf
    %v851 = vmax.f32 %v849, %v850
    %v852 = vsel %vm21, %v752, -inf
    %v853 = vsel %vm21, %v760, -inf
    %v854 = vmax.f32 %v852, %v853
    %v855 = vsel %vm21, %v768, -inf
    %v856 = vmax.f32 %v854, %v855
    %v857 = vsel %vm21, %v776, -inf
    %v858 = vmax.f32 %v856, %v857
    %v859 = vsel %vm21, %v753, -inf
    %v860 = vsel %vm21, %v761, -inf
    %v861 = vmax.f32 %v859, %v860
    %v862 = vsel %vm21, %v769, -inf
    %v863 = vmax.f32 %v861, %v862
    %v864 = vsel %vm21, %v777, -inf
    %v865 = vmax.f32 %v863, %v864
    %v866 = vsel %vm21, %v754, -inf
    %v867 = vsel %vm21, %v762, -inf
    %v868 = vmax.f32 %v866, %v867
    %v869 = vsel %vm21, %v770, -inf
    %v870 = vmax.f32 %v868, %v869
    %v871 = vsel %vm21, %v778, -inf
    %v872 = vmax.f32 %v870, %v871
    %v873 = vsel %vm21, %v755, -inf
    %v874 = vsel %vm21, %v763, -inf
    %v875 = vmax.f32 %v873, %v874
    %v876 = vsel %vm21, %v771, -inf
    %v877 = vmax.f32 %v875, %v876
    %v878 = vsel %vm21, %v779, -inf
    %v879 = vmax.f32 %v877, %v878
    %v880 = vsel %vm21, %v756, -inf
    %v881 = vsel %vm21, %v764, -inf
    %v882 = vmax.f32 %v880, %v881
    %v883 = vsel %vm21, %v772, -inf
    %v884 = vmax.f32 %v882, %v883
    %v885 = vsel %vm21, %v780, -inf
    %v886 = vmax.f32 %v884, %v885
    %v887 = vsel %vm21, %v757, -inf
    %v888 = vsel %vm21, %v765, -inf
    %v889 = vmax.f32 %v887, %v888
    %v890 = vsel %vm21, %v773, -inf
    %v891 = vmax.f32 %v889, %v890
    %v892 = vsel %vm21, %v781, -inf
    %v893 = vmax.f32 %v891, %v892
    %s894 = scalar_lea.vmem [#allocation2], 16
    %895 = vst.msk [vmem:[%s894 + $0x1] sm:$0xff] %vm21, %v788
    %896 = vst.msk [vmem:[%s894 + $0x11] sm:$0xff] %vm21, %v795
    %897 = vst.msk [vmem:[%s894 + $0x21] sm:$0xff] %vm21, %v802
    %898 = vst.msk [vmem:[%s894 + $0x31] sm:$0xff] %vm21, %v809
    %899 = vst.msk [vmem:[%s894 + $0x41] sm:$0xff] %vm21, %v816
    %900 = vst.msk [vmem:[%s894 + $0x51] sm:$0xff] %vm21, %v823
    %901 = vst.msk [vmem:[%s894 + $0x61] sm:$0xff] %vm21, %v830
    %902 = vst.msk [vmem:[%s894 + $0x71] sm:$0xff] %vm21, %v837
    %903 = vst.msk [vmem:[%s894 + $0xa1] sm:$0xff] %vm21, %v844
    %904 = vst.msk [vmem:[%s894 + $0xb1] sm:$0xff] %vm21, %v851
    %905 = vst.msk [vmem:[%s894 + $0xc1] sm:$0xff] %vm21, %v858
    %906 = vst.msk [vmem:[%s894 + $0xd1] sm:$0xff] %vm21, %v865
    %907 = vst.msk [vmem:[%s894 + $0xe1] sm:$0xff] %vm21, %v872
    %908 = vst.msk [vmem:[%s894 + $0xf1] sm:$0xff] %vm21, %v879
    %909 = vst.msk [vmem:[%s894 + $0x101] sm:$0xff] %vm21, %v886
    %910 = vst.msk [vmem:[%s894 + $0x111] sm:$0xff] %vm21, %v893
    %v911 = vld [vmem:[#allocation2] sm:$0xff]
    %v912 = vld [vmem:[#allocation2 + $0x10] sm:$0xff]
    %v913 = vld [vmem:[#allocation2 + $0x20] sm:$0xff]
    %v914 = vld [vmem:[#allocation2 + $0x30] sm:$0xff]
    %v915 = vld [vmem:[#allocation2 + $0x40] sm:$0xff]
    %v916 = vld [vmem:[#allocation2 + $0x50] sm:$0xff]
    %v917 = vld [vmem:[#allocation2 + $0x60] sm:$0xff]
    %v918 = vld [vmem:[#allocation2 + $0x70] sm:$0xff]
    %v919 = vld [vmem:[#allocation2 + $0xa0] sm:$0xff]
    %v920 = vld [vmem:[#allocation2 + $0xb0] sm:$0xff]
    %v921 = vld [vmem:[#allocation2 + $0xc0] sm:$0xff]
    %v922 = vld [vmem:[#allocation2 + $0xd0] sm:$0xff]
    %v923 = vld [vmem:[#allocation2 + $0xe0] sm:$0xff]
    %v924 = vld [vmem:[#allocation2 + $0xf0] sm:$0xff]
    %v925 = vld [vmem:[#allocation2 + $0x100] sm:$0xff]
    %v926 = vld [vmem:[#allocation2 + $0x110] sm:$0xff]
    %v927 = vld [vmem:[%s3] sm:$0xff]
    %v928 = vld [vmem:[%s3 + $0x8] sm:$0xff]
    %v929 = vld [vmem:[%s3 + $0x10] sm:$0xff]
    %v930 = vld [vmem:[%s3 + $0x18] sm:$0xff]
    %v931 = vld [vmem:[%s3 + $0x20] sm:$0xff]
    %v932 = vld [vmem:[%s3 + $0x28] sm:$0xff]
    %v933 = vld [vmem:[%s3 + $0x30] sm:$0xff]
    %v934 = vld [vmem:[%s3 + $0x38] sm:$0xff]
    %v935 = vld [vmem:[#allocation2 + $0x1] sm:$0xff]
    %v936 = vld [vmem:[#allocation2 + $0x11] sm:$0xff]
    %v937 = vld [vmem:[#allocation2 + $0x21] sm:$0xff]
    %v938 = vld [vmem:[#allocation2 + $0x31] sm:$0xff]
    %v939 = vld [vmem:[#allocation2 + $0x41] sm:$0xff]
    %v940 = vld [vmem:[#allocation2 + $0x51] sm:$0xff]
    %v941 = vld [vmem:[#allocation2 + $0x61] sm:$0xff]
    %v942 = vld [vmem:[#allocation2 + $0x71] sm:$0xff]
    %v943 = vld [vmem:[#allocation2 + $0xa1] sm:$0xff]
    %v944 = vld [vmem:[#allocation2 + $0xb1] sm:$0xff]
    %v945 = vld [vmem:[#allocation2 + $0xc1] sm:$0xff]
    %v946 = vld [vmem:[#allocation2 + $0xd1] sm:$0xff]
    %v947 = vld [vmem:[#allocation2 + $0xe1] sm:$0xff]
    %v948 = vld [vmem:[#allocation2 + $0xf1] sm:$0xff]
    %v949 = vld [vmem:[#allocation2 + $0x101] sm:$0xff]
    %v950 = vld [vmem:[#allocation2 + $0x111] sm:$0xff]
    %s951 = scalar_lea.vmem %s3, 64
    %v952 = vld [vmem:[%s951] sm:$0xff]
    %v953 = vld [vmem:[%s951 + $0x8] sm:$0xff]
    %v954 = vld [vmem:[%s951 + $0x10] sm:$0xff]
    %v955 = vld [vmem:[%s951 + $0x18] sm:$0xff]
    %v956 = vld [vmem:[%s951 + $0x20] sm:$0xff]
    %v957 = vld [vmem:[%s951 + $0x28] sm:$0xff]
    %v958 = vld [vmem:[%s951 + $0x30] sm:$0xff]
    %v959 = vld [vmem:[%s951 + $0x38] sm:$0xff]
    %v961 = vsel %vm21, %v935, 0
    %v964 = vsel %vm21, %v936, 0
    %v967 = vsel %vm21, %v937, 0
    %v970 = vsel %vm21, %v938, 0
    %v973 = vsel %vm21, %v939, 0
    %v976 = vsel %vm21, %v940, 0
    %v979 = vsel %vm21, %v941, 0
    %v982 = vsel %vm21, %v942, 0
    %v985 = vsel %vm21, %v943, 0
    %v988 = vsel %vm21, %v944, 0
    %v991 = vsel %vm21, %v945, 0
    %v994 = vsel %vm21, %v946, 0
    %v997 = vsel %vm21, %v947, 0
    %v1000 = vsel %vm21, %v948, 0
    %v1003 = vsel %vm21, %v949, 0
    %v1006 = vsel %vm21, %v950, 0
    %1008 = vmatprep.subr.mxu0 0.0
    %1009 = vmatpush1.msra.mxu0 %v952
    %1010 = vmatprep.subr.mxu0 0.0
    %1011 = vmatpush1.msra.mxu0 %v953
    %1012 = vmatprep.subr.mxu0 0.0
    %1013 = vmatpush1.msra.mxu0 %v954
    %1014 = vmatprep.subr.mxu0 0.0
    %1015 = vmatpush1.msra.mxu0 %v955
    %1016 = vmatprep.subr.mxu0 0.0
    %1017 = vmatpush1.msra.mxu0 %v956
    %1018 = vmatprep.subr.mxu0 0.0
    %1019 = vmatpush1.msra.mxu0 %v957
    %1020 = vmatprep.subr.mxu0 0.0
    %1021 = vmatpush1.msra.mxu0 %v958
    %1022 = vmatprep.subr.mxu0 0.0
    %1023 = vmatpush1.msra.mxu0 %v959
    %1024 = vmatprep.subr.mxu0 0.0
    %1025 = vmatpush1.msra.mxu0 0.0
    %1026 = vmatprep.subr.mxu0 0.0
    %1027 = vmatpush1.msra.mxu0 0.0
    %1028 = vmatprep.subr.mxu0 0.0
    %1029 = vmatpush1.msra.mxu0 0.0
    %1030 = vmatprep.subr.mxu0 0.0
    %1031 = vmatpush1.msra.mxu0 0.0
    %1032 = vmatprep.subr.mxu0 0.0
    %1033 = vmatpush1.msra.mxu0 0.0
    %1034 = vmatprep.subr.mxu0 0.0
    %1035 = vmatpush1.msra.mxu0 0.0
    %1036 = vmatprep.subr.mxu0 0.0
    %1037 = vmatpush1.msra.mxu0 0.0
    %1038 = vmatprep.subr.mxu0 0.0
    %1039 = vmatpush1.msra.mxu0 0.0
    %1040 = vmatprep.subr.mxu0 0.0
    %1041 = vmatpush1.msra.mxu0 0.0
    %1042 = vmatprep.subr.mxu0 0.0
    %1043 = vmatpush1.msra.mxu0 0.0
    %1044 = vmatprep.subr.mxu0 0.0
    %1045 = vmatpush1.msra.mxu0 0.0
    %1046 = vmatprep.subr.mxu0 0.0
    %1047 = vmatpush1.msra.mxu0 0.0
    %1048 = vmatprep.subr.mxu0 0.0
    %1049 = vmatpush1.msra.mxu0 0.0
    %1050 = vmatprep.subr.mxu0 0.0
    %1051 = vmatpush1.msra.mxu0 0.0
    %1052 = vmatprep.subr.mxu0 0.0
    %1053 = vmatpush1.msra.mxu0 0.0
    %1054 = vmatprep.subr.mxu0 0.0
    %1055 = vmatpush1.msra.mxu0 0.0
    %1056 = vmatprep.subr.mxu0 0.0
    %1057 = vmatpush1.msra.mxu0 0.0
    %1058 = vmatprep.subr.mxu0 0.0
    %1059 = vmatpush1.msra.mxu0 0.0
    %1060 = vmatprep.subr.mxu0 0.0
    %1061 = vmatpush1.msra.mxu0 0.0
    %1062 = vmatprep.subr.mxu0 0.0
    %1063 = vmatpush1.msra.mxu0 0.0
    %1064 = vmatprep.subr.mxu0 0.0
    %1065 = vmatpush1.msra.mxu0 0.0
    %1066 = vmatprep.subr.mxu0 0.0
    %1067 = vmatpush1.msra.mxu0 0.0
    %1068 = vmatprep.subr.mxu0 0.0
    %1069 = vmatpush1.msra.mxu0 0.0
    %1070 = vmatprep.subr.mxu0 0.0
    %1071 = vmatpush1.msra.mxu0 0.0
    %1072 = vmatprep.mubr.f32.mxu0 0.0
    %1073 = vmatmul.mubr.f32.gmra.mrb[0].mxu0 %v961
    %v1074 = vpop.f32.mrb[0].mxu0
    %v1075 = vadd.f32 0.0, %v1074
    %v1076 = vpop.f32.mrb[0].mxu0
    %1077 = vmatprep.mubr.f32.mxu0 0.0
    %1078 = vmatmul.mubr.f32.gmra.mrb[0].mxu0 %v964
    %v1079 = vpop.f32.mrb[0].mxu0
    %v1080 = vadd.f32 0.0, %v1079
    %v1081 = vpop.f32.mrb[0].mxu0
    %1082 = vmatprep.mubr.f32.mxu0 0.0
    %1083 = vmatmul.mubr.f32.gmra.mrb[0].mxu0 %v967
    %v1084 = vpop.f32.mrb[0].mxu0
    %v1085 = vadd.f32 0.0, %v1084
    %v1086 = vpop.f32.mrb[0].mxu0
    %1087 = vmatprep.mubr.f32.mxu0 0.0
    %1088 = vmatmul.mubr.f32.gmra.mrb[0].mxu0 %v970
    %v1089 = vpop.f32.mrb[0].mxu0
    %v1090 = vadd.f32 0.0, %v1089
    %v1091 = vpop.f32.mrb[0].mxu0
    %1092 = vmatprep.mubr.f32.mxu0 0.0
    %1093 = vmatmul.mubr.f32.gmra.mrb[0].mxu0 %v973
    %v1094 = vpop.f32.mrb[0].mxu0
    %v1095 = vadd.f32 0.0, %v1094
    %v1096 = vpop.f32.mrb[0].mxu0
    %1097 = vmatprep.mubr.f32.mxu0 0.0
    %1098 = vmatmul.mubr.f32.gmra.mrb[0].mxu0 %v976
    %v1099 = vpop.f32.mrb[0].mxu0
    %v1100 = vadd.f32 0.0, %v1099
    %v1101 = vpop.f32.mrb[0].mxu0
    %1102 = vmatprep.mubr.f32.mxu0 0.0
    %1103 = vmatmul.mubr.f32.gmra.mrb[0].mxu0 %v979
    %v1104 = vpop.f32.mrb[0].mxu0
    %v1105 = vadd.f32 0.0, %v1104
    %v1106 = vpop.f32.mrb[0].mxu0
    %1107 = vmatprep.mubr.f32.mxu0 0.0
    %1108 = vmatmul.mubr.f32.gmra.mrb[0].mxu0 %v982
    %v1109 = vpop.f32.mrb[0].mxu0
    %v1110 = vadd.f32 0.0, %v1109
    %v1111 = vpop.f32.mrb[0].mxu0
    %1112 = vmatprep.mubr.f32.mxu0 0.0
    %1113 = vmatmul.mubr.f32.gmra.mrb[0].mxu0 %v985
    %v1114 = vpop.f32.mrb[0].mxu0
    %v1115 = vadd.f32 0.0, %v1114
    %v1116 = vpop.f32.mrb[0].mxu0
    %1117 = vmatprep.mubr.f32.mxu0 0.0
    %1118 = vmatmul.mubr.f32.gmra.mrb[0].mxu0 %v988
    %v1119 = vpop.f32.mrb[0].mxu0
    %v1120 = vadd.f32 0.0, %v1119
    %v1121 = vpop.f32.mrb[0].mxu0
    %1122 = vmatprep.mubr.f32.mxu0 0.0
    %1123 = vmatmul.mubr.f32.gmra.mrb[0].mxu0 %v991
    %v1124 = vpop.f32.mrb[0].mxu0
    %v1125 = vadd.f32 0.0, %v1124
    %v1126 = vpop.f32.mrb[0].mxu0
    %1127 = vmatprep.mubr.f32.mxu0 0.0
    %1128 = vmatmul.mubr.f32.gmra.mrb[0].mxu0 %v994
    %v1129 = vpop.f32.mrb[0].mxu0
    %v1130 = vadd.f32 0.0, %v1129
    %v1131 = vpop.f32.mrb[0].mxu0
    %1132 = vmatprep.mubr.f32.mxu0 0.0
    %1133 = vmatmul.mubr.f32.gmra.mrb[0].mxu0 %v997
    %v1134 = vpop.f32.mrb[0].mxu0
    %v1135 = vadd.f32 0.0, %v1134
    %v1136 = vpop.f32.mrb[0].mxu0
    %1137 = vmatprep.mubr.f32.mxu0 0.0
    %1138 = vmatmul.mubr.f32.gmra.mrb[0].mxu0 %v1000
    %v1139 = vpop.f32.mrb[0].mxu0
    %v1140 = vadd.f32 0.0, %v1139
    %v1141 = vpop.f32.mrb[0].mxu0
    %1142 = vmatprep.mubr.f32.mxu0 0.0
    %1143 = vmatmul.mubr.f32.gmra.mrb[0].mxu0 %v1003
    %v1144 = vpop.f32.mrb[0].mxu0
    %v1145 = vadd.f32 0.0, %v1144
    %v1146 = vpop.f32.mrb[0].mxu0
    %1147 = vmatprep.mubr.f32.mxu0 0.0
    %1148 = vmatmul.mubr.f32.gmra.mrb[0].mxu0 %v1006
    %v1149 = vpop.f32.mrb[0].mxu0
    %v1150 = vadd.f32 0.0, %v1149
    %v1151 = vpop.f32.mrb[0].mxu0
    %1152 = vdwg.mxu0
    %v1154 = vsel %vm21, %v911, 0
    %v1157 = vsel %vm21, %v912, 0
    %v1160 = vsel %vm21, %v913, 0
    %v1163 = vsel %vm21, %v914, 0
    %v1166 = vsel %vm21, %v915, 0
    %v1169 = vsel %vm21, %v916, 0
    %v1172 = vsel %vm21, %v917, 0
    %v1175 = vsel %vm21, %v918, 0
    %v1178 = vsel %vm21, %v919, 0
    %v1181 = vsel %vm21, %v920, 0
    %v1184 = vsel %vm21, %v921, 0
    %v1187 = vsel %vm21, %v922, 0
    %v1190 = vsel %vm21, %v923, 0
    %v1193 = vsel %vm21, %v924, 0
    %v1196 = vsel %vm21, %v925, 0
    %v1199 = vsel %vm21, %v926, 0
    %1201 = vmatprep.subr.mxu0 0.0
    %1202 = vmatpush1.msra.mxu0 %v927
    %1203 = vmatprep.subr.mxu0 0.0
    %1204 = vmatpush1.msra.mxu0 %v928
    %1205 = vmatprep.subr.mxu0 0.0
    %1206 = vmatpush1.msra.mxu0 %v929
    %1207 = vmatprep.subr.mxu0 0.0
    %1208 = vmatpush1.msra.mxu0 %v930
    %1209 = vmatprep.subr.mxu0 0.0
    %1210 = vmatpush1.msra.mxu0 %v931
    %1211 = vmatprep.subr.mxu0 0.0
    %1212 = vmatpush1.msra.mxu0 %v932
    %1213 = vmatprep.subr.mxu0 0.0
    %1214 = vmatpush1.msra.mxu0 %v933
    %1215 = vmatprep.subr.mxu0 0.0
    %1216 = vmatpush1.msra.mxu0 %v934
    %1217 = vmatprep.subr.mxu0 0.0
    %1218 = vmatpush1.msra.mxu0 0.0
    %1219 = vmatprep.subr.mxu0 0.0
    %1220 = vmatpush1.msra.mxu0 0.0
    %1221 = vmatprep.subr.mxu0 0.0
    %1222 = vmatpush1.msra.mxu0 0.0
    %1223 = vmatprep.subr.mxu0 0.0
    %1224 = vmatpush1.msra.mxu0 0.0
    %1225 = vmatprep.subr.mxu0 0.0
    %1226 = vmatpush1.msra.mxu0 0.0
    %1227 = vmatprep.subr.mxu0 0.0
    %1228 = vmatpush1.msra.mxu0 0.0
    %1229 = vmatprep.subr.mxu0 0.0
    %1230 = vmatpush1.msra.mxu0 0.0
    %1231 = vmatprep.subr.mxu0 0.0
    %1232 = vmatpush1.msra.mxu0 0.0
    %1233 = vmatprep.subr.mxu0 0.0
    %1234 = vmatpush1.msra.mxu0 0.0
    %1235 = vmatprep.subr.mxu0 0.0
    %1236 = vmatpush1.msra.mxu0 0.0
    %1237 = vmatprep.subr.mxu0 0.0
    %1238 = vmatpush1.msra.mxu0 0.0
    %1239 = vmatprep.subr.mxu0 0.0
    %1240 = vmatpush1.msra.mxu0 0.0
    %1241 = vmatprep.subr.mxu0 0.0
    %1242 = vmatpush1.msra.mxu0 0.0
    %1243 = vmatprep.subr.mxu0 0.0
    %1244 = vmatpush1.msra.mxu0 0.0
    %1245 = vmatprep.subr.mxu0 0.0
    %1246 = vmatpush1.msra.mxu0 0.0
    %1247 = vmatprep.subr.mxu0 0.0
    %1248 = vmatpush1.msra.mxu0 0.0
    %1249 = vmatprep.subr.mxu0 0.0
    %1250 = vmatpush1.msra.mxu0 0.0
    %1251 = vmatprep.subr.mxu0 0.0
    %1252 = vmatpush1.msra.mxu0 0.0
    %1253 = vmatprep.subr.mxu0 0.0
    %1254 = vmatpush1.msra.mxu0 0.0
    %1255 = vmatprep.subr.mxu0 0.0
    %1256 = vmatpush1.msra.mxu0 0.0
    %1257 = vmatprep.subr.mxu0 0.0
    %1258 = vmatpush1.msra.mxu0 0.0
    %1259 = vmatprep.subr.mxu0 0.0
    %1260 = vmatpush1.msra.mxu0 0.0
    %1261 = vmatprep.subr.mxu0 0.0
    %1262 = vmatpush1.msra.mxu0 0.0
    %1263 = vmatprep.subr.mxu0 0.0
    %1264 = vmatpush1.msra.mxu0 0.0
    %1265 = vmatprep.mubr.f32.mxu0 0.0
    %1266 = vmatmul.mubr.f32.gmra.mrb[0].mxu0 %v1154
    %v1267 = vpop.f32.mrb[0].mxu0
    %v1268 = vadd.f32 %v1075, %v1267
    %v1269 = vpop.f32.mrb[0].mxu0
    %1270 = vmatprep.mubr.f32.mxu0 0.0
    %1271 = vmatmul.mubr.f32.gmra.mrb[0].mxu0 %v1157
    %v1272 = vpop.f32.mrb[0].mxu0
    %v1273 = vadd.f32 %v1080, %v1272
    %v1274 = vpop.f32.mrb[0].mxu0
    %1275 = vmatprep.mubr.f32.mxu0 0.0
    %1276 = vmatmul.mubr.f32.gmra.mrb[0].mxu0 %v1160
    %v1277 = vpop.f32.mrb[0].mxu0
    %v1278 = vadd.f32 %v1085, %v1277
    %v1279 = vpop.f32.mrb[0].mxu0
    %1280 = vmatprep.mubr.f32.mxu0 0.0
    %1281 = vmatmul.mubr.f32.gmra.mrb[0].mxu0 %v1163
    %v1282 = vpop.f32.mrb[0].mxu0
    %v1283 = vadd.f32 %v1090, %v1282
    %v1284 = vpop.f32.mrb[0].mxu0
    %1285 = vmatprep.mubr.f32.mxu0 0.0
    %1286 = vmatmul.mubr.f32.gmra.mrb[0].mxu0 %v1166
    %v1287 = vpop.f32.mrb[0].mxu0
    %v1288 = vadd.f32 %v1095, %v1287
    %v1289 = vpop.f32.mrb[0].mxu0
    %1290 = vmatprep.mubr.f32.mxu0 0.0
    %1291 = vmatmul.mubr.f32.gmra.mrb[0].mxu0 %v1169
    %v1292 = vpop.f32.mrb[0].mxu0
    %v1293 = vadd.f32 %v1100, %v1292
    %v1294 = vpop.f32.mrb[0].mxu0
    %1295 = vmatprep.mubr.f32.mxu0 0.0
    %1296 = vmatmul.mubr.f32.gmra.mrb[0].mxu0 %v1172
    %v1297 = vpop.f32.mrb[0].mxu0
    %v1298 = vadd.f32 %v1105, %v1297
    %v1299 = vpop.f32.mrb[0].mxu0
    %1300 = vmatprep.mubr.f32.mxu0 0.0
    %1301 = vmatmul.mubr.f32.gmra.mrb[0].mxu0 %v1175
    %v1302 = vpop.f32.mrb[0].mxu0
    %v1303 = vadd.f32 %v1110, %v1302
    %v1304 = vpop.f32.mrb[0].mxu0
    %1305 = vmatprep.mubr.f32.mxu0 0.0
    %1306 = vmatmul.mubr.f32.gmra.mrb[0].mxu0 %v1178
    %v1307 = vpop.f32.mrb[0].mxu0
    %v1308 = vadd.f32 %v1115, %v1307
    %v1309 = vpop.f32.mrb[0].mxu0
    %1310 = vmatprep.mubr.f32.mxu0 0.0
    %1311 = vmatmul.mubr.f32.gmra.mrb[0].mxu0 %v1181
    %v1312 = vpop.f32.mrb[0].mxu0
    %v1313 = vadd.f32 %v1120, %v1312
    %v1314 = vpop.f32.mrb[0].mxu0
    %1315 = vmatprep.mubr.f32.mxu0 0.0
    %1316 = vmatmul.mubr.f32.gmra.mrb[0].mxu0 %v1184
    %v1317 = vpop.f32.mrb[0].mxu0
    %v1318 = vadd.f32 %v1125, %v1317
    %v1319 = vpop.f32.mrb[0].mxu0
    %1320 = vmatprep.mubr.f32.mxu0 0.0
    %1321 = vmatmul.mubr.f32.gmra.mrb[0].mxu0 %v1187
    %v1322 = vpop.f32.mrb[0].mxu0
    %v1323 = vadd.f32 %v1130, %v1322
    %v1324 = vpop.f32.mrb[0].mxu0
    %1325 = vmatprep.mubr.f32.mxu0 0.0
    %1326 = vmatmul.mubr.f32.gmra.mrb[0].mxu0 %v1190
    %v1327 = vpop.f32.mrb[0].mxu0
    %v1328 = vadd.f32 %v1135, %v1327
    %v1329 = vpop.f32.mrb[0].mxu0
    %1330 = vmatprep.mubr.f32.mxu0 0.0
    %1331 = vmatmul.mubr.f32.gmra.mrb[0].mxu0 %v1193
    %v1332 = vpop.f32.mrb[0].mxu0
    %v1333 = vadd.f32 %v1140, %v1332
    %v1334 = vpop.f32.mrb[0].mxu0
    %1335 = vmatprep.mubr.f32.mxu0 0.0
    %1336 = vmatmul.mubr.f32.gmra.mrb[0].mxu0 %v1196
    %v1337 = vpop.f32.mrb[0].mxu0
    %v1338 = vadd.f32 %v1145, %v1337
    %v1339 = vpop.f32.mrb[0].mxu0
    %1340 = vmatprep.mubr.f32.mxu0 0.0
    %1341 = vmatmul.mubr.f32.gmra.mrb[0].mxu0 %v1199
    %v1342 = vpop.f32.mrb[0].mxu0
    %v1343 = vadd.f32 %v1150, %v1342
    %v1344 = vpop.f32.mrb[0].mxu0
    %1345 = vdwg.mxu0
    %v1346 = vld [vmem:[#allocation2 + $0x2] sm:$0xff]
    %v1347 = vld [vmem:[#allocation2 + $0x12] sm:$0xff]
    %v1348 = vld [vmem:[#allocation2 + $0x22] sm:$0xff]
    %v1349 = vld [vmem:[#allocation2 + $0x32] sm:$0xff]
    %v1350 = vld [vmem:[#allocation2 + $0x42] sm:$0xff]
    %v1351 = vld [vmem:[#allocation2 + $0x52] sm:$0xff]
    %v1352 = vld [vmem:[#allocation2 + $0x62] sm:$0xff]
    %v1353 = vld [vmem:[#allocation2 + $0x72] sm:$0xff]
    %v1354 = vld [vmem:[#allocation2 + $0xa2] sm:$0xff]
    %v1355 = vld [vmem:[#allocation2 + $0xb2] sm:$0xff]
    %v1356 = vld [vmem:[#allocation2 + $0xc2] sm:$0xff]
    %v1357 = vld [vmem:[#allocation2 + $0xd2] sm:$0xff]
    %v1358 = vld [vmem:[#allocation2 + $0xe2] sm:$0xff]
    %v1359 = vld [vmem:[#allocation2 + $0xf2] sm:$0xff]
    %v1360 = vld [vmem:[#allocation2 + $0x102] sm:$0xff]
    %v1361 = vld [vmem:[#allocation2 + $0x112] sm:$0xff]
    %s1362 = scalar_lea.vmem %s3, 128
    %v1363 = vld [vmem:[%s1362] sm:$0xff]
    %v1364 = vld [vmem:[%s1362 + $0x8] sm:$0xff]
    %v1365 = vld [vmem:[%s1362 + $0x10] sm:$0xff]
    %v1366 = vld [vmem:[%s1362 + $0x18] sm:$0xff]
    %v1367 = vld [vmem:[%s1362 + $0x20] sm:$0xff]
    %v1368 = vld [vmem:[%s1362 + $0x28] sm:$0xff]
    %v1369 = vld [vmem:[%s1362 + $0x30] sm:$0xff]
    %v1370 = vld [vmem:[%s1362 + $0x38] sm:$0xff]
    %v1372 = vsel %vm21, %v1346, 0
    %v1375 = vsel %vm21, %v1347, 0
    %v1378 = vsel %vm21, %v1348, 0
    %v1381 = vsel %vm21, %v1349, 0
    %v1384 = vsel %vm21, %v1350, 0
    %v1387 = vsel %vm21, %v1351, 0
    %v1390 = vsel %vm21, %v1352, 0
    %v1393 = vsel %vm21, %v1353, 0
    %v1396 = vsel %vm21, %v1354, 0
    %v1399 = vsel %vm21, %v1355, 0
    %v1402 = vsel %vm21, %v1356, 0
    %v1405 = vsel %vm21, %v1357, 0
    %v1408 = vsel %vm21, %v1358, 0
    %v1411 = vsel %vm21, %v1359, 0
    %v1414 = vsel %vm21, %v1360, 0
    %v1417 = vsel %vm21, %v1361, 0
    %1419 = vmatprep.subr.mxu0 0.0
    %1420 = vmatpush1.msra.mxu0 %v1363
    %1421 = vmatprep.subr.mxu0 0.0
    %1422 = vmatpush1.msra.mxu0 %v1364
    %1423 = vmatprep.subr.mxu0 0.0
    %1424 = vmatpush1.msra.mxu0 %v1365
    %1425 = vmatprep.subr.mxu0 0.0
    %1426 = vmatpush1.msra.mxu0 %v1366
    %1427 = vmatprep.subr.mxu0 0.0
    %1428 = vmatpush1.msra.mxu0 %v1367
    %1429 = vmatprep.subr.mxu0 0.0
    %1430 = vmatpush1.msra.mxu0 %v1368
    %1431 = vmatprep.subr.mxu0 0.0
    %1432 = vmatpush1.msra.mxu0 %v1369
    %1433 = vmatprep.subr.mxu0 0.0
    %1434 = vmatpush1.msra.mxu0 %v1370
    %1435 = vmatprep.subr.mxu0 0.0
    %1436 = vmatpush1.msra.mxu0 0.0
    %1437 = vmatprep.subr.mxu0 0.0
    %1438 = vmatpush1.msra.mxu0 0.0
    %1439 = vmatprep.subr.mxu0 0.0
    %1440 = vmatpush1.msra.mxu0 0.0
    %1441 = vmatprep.subr.mxu0 0.0
    %1442 = vmatpush1.msra.mxu0 0.0
    %1443 = vmatprep.subr.mxu0 0.0
    %1444 = vmatpush1.msra.mxu0 0.0
    %1445 = vmatprep.subr.mxu0 0.0
    %1446 = vmatpush1.msra.mxu0 0.0
    %1447 = vmatprep.subr.mxu0 0.0
    %1448 = vmatpush1.msra.mxu0 0.0
    %1449 = vmatprep.subr.mxu0 0.0
    %1450 = vmatpush1.msra.mxu0 0.0
    %1451 = vmatprep.subr.mxu0 0.0
    %1452 = vmatpush1.msra.mxu0 0.0
    %1453 = vmatprep.subr.mxu0 0.0
    %1454 = vmatpush1.msra.mxu0 0.0
    %1455 = vmatprep.subr.mxu0 0.0
    %1456 = vmatpush1.msra.mxu0 0.0
    %1457 = vmatprep.subr.mxu0 0.0
    %1458 = vmatpush1.msra.mxu0 0.0
    %1459 = vmatprep.subr.mxu0 0.0
    %1460 = vmatpush1.msra.mxu0 0.0
    %1461 = vmatprep.subr.mxu0 0.0
    %1462 = vmatpush1.msra.mxu0 0.0
    %1463 = vmatprep.subr.mxu0 0.0
    %1464 = vmatpush1.msra.mxu0 0.0
    %1465 = vmatprep.subr.mxu0 0.0
    %1466 = vmatpush1.msra.mxu0 0.0
    %1467 = vmatprep.subr.mxu0 0.0
    %1468 = vmatpush1.msra.mxu0 0.0
    %1469 = vmatprep.subr.mxu0 0.0
    %1470 = vmatpush1.msra.mxu0 0.0
    %1471 = vmatprep.subr.mxu0 0.0
    %1472 = vmatpush1.msra.mxu0 0.0
    %1473 = vmatprep.subr.mxu0 0.0
    %1474 = vmatpush1.msra.mxu0 0.0
    %1475 = vmatprep.subr.mxu0 0.0
    %1476 = vmatpush1.msra.mxu0 0.0
    %1477 = vmatprep.subr.mxu0 0.0
    %1478 = vmatpush1.msra.mxu0 0.0
    %1479 = vmatprep.subr.mxu0 0.0
    %1480 = vmatpush1.msra.mxu0 0.0
    %1481 = vmatprep.subr.mxu0 0.0
    %1482 = vmatpush1.msra.mxu0 0.0
    %1483 = vmatprep.mubr.f32.mxu0 0.0
    %1484 = vmatmul.mubr.f32.gmra.mrb[0].mxu0 %v1372
    %v1485 = vpop.f32.mrb[0].mxu0
    %v1486 = vadd.f32 0.0, %v1485
    %v1487 = vpop.f32.mrb[0].mxu0
    %1488 = vmatprep.mubr.f32.mxu0 0.0
    %1489 = vmatmul.mubr.f32.gmra.mrb[0].mxu0 %v1375
    %v1490 = vpop.f32.mrb[0].mxu0
    %v1491 = vadd.f32 0.0, %v1490
    %v1492 = vpop.f32.mrb[0].mxu0
    %1493 = vmatprep.mubr.f32.mxu0 0.0
    %1494 = vmatmul.mubr.f32.gmra.mrb[0].mxu0 %v1378
    %v1495 = vpop.f32.mrb[0].mxu0
    %v1496 = vadd.f32 0.0, %v1495
    %v1497 = vpop.f32.mrb[0].mxu0
    %1498 = vmatprep.mubr.f32.mxu0 0.0
    %1499 = vmatmul.mubr.f32.gmra.mrb[0].mxu0 %v1381
    %v1500 = vpop.f32.mrb[0].mxu0
    %v1501 = vadd.f32 0.0, %v1500
    %v1502 = vpop.f32.mrb[0].mxu0
    %1503 = vmatprep.mubr.f32.mxu0 0.0
    %1504 = vmatmul.mubr.f32.gmra.mrb[0].mxu0 %v1384
    %v1505 = vpop.f32.mrb[0].mxu0
    %v1506 = vadd.f32 0.0, %v1505
    %v1507 = vpop.f32.mrb[0].mxu0
    %1508 = vmatprep.mubr.f32.mxu0 0.0
    %1509 = vmatmul.mubr.f32.gmra.mrb[0].mxu0 %v1387
    %v1510 = vpop.f32.mrb[0].mxu0
    %v1511 = vadd.f32 0.0, %v1510
    %v1512 = vpop.f32.mrb[0].mxu0
    %1513 = vmatprep.mubr.f32.mxu0 0.0
    %1514 = vmatmul.mubr.f32.gmra.mrb[0].mxu0 %v1390
    %v1515 = vpop.f32.mrb[0].mxu0
    %v1516 = vadd.f32 0.0, %v1515
    %v1517 = vpop.f32.mrb[0].mxu0
    %1518 = vmatprep.mubr.f32.mxu0 0.0
    %1519 = vmatmul.mubr.f32.gmra.mrb[0].mxu0 %v1393
    %v1520 = vpop.f32.mrb[0].mxu0
    %v1521 = vadd.f32 0.0, %v1520
    %v1522 = vpop.f32.mrb[0].mxu0
    %1523 = vmatprep.mubr.f32.mxu0 0.0
    %1524 = vmatmul.mubr.f32.gmra.mrb[0].mxu0 %v1396
    %v1525 = vpop.f32.mrb[0].mxu0
    %v1526 = vadd.f32 0.0, %v1525
    %v1527 = vpop.f32.mrb[0].mxu0
    %1528 = vmatprep.mubr.f32.mxu0 0.0
    %1529 = vmatmul.mubr.f32.gmra.mrb[0].mxu0 %v1399
    %v1530 = vpop.f32.mrb[0].mxu0
    %v1531 = vadd.f32 0.0, %v1530
    %v1532 = vpop.f32.mrb[0].mxu0
    %1533 = vmatprep.mubr.f32.mxu0 0.0
    %1534 = vmatmul.mubr.f32.gmra.mrb[0].mxu0 %v1402
    %v1535 = vpop.f32.mrb[0].mxu0
    %v1536 = vadd.f32 0.0, %v1535
    %v1537 = vpop.f32.mrb[0].mxu0
    %1538 = vmatprep.mubr.f32.mxu0 0.0
    %1539 = vmatmul.mubr.f32.gmra.mrb[0].mxu0 %v1405
    %v1540 = vpop.f32.mrb[0].mxu0
    %v1541 = vadd.f32 0.0, %v1540
    %v1542 = vpop.f32.mrb[0].mxu0
    %1543 = vmatprep.mubr.f32.mxu0 0.0
    %1544 = vmatmul.mubr.f32.gmra.mrb[0].mxu0 %v1408
    %v1545 = vpop.f32.mrb[0].mxu0
    %v1546 = vadd.f32 0.0, %v1545
    %v1547 = vpop.f32.mrb[0].mxu0
    %1548 = vmatprep.mubr.f32.mxu0 0.0
    %1549 = vmatmul.mubr.f32.gmra.mrb[0].mxu0 %v1411
    %v1550 = vpop.f32.mrb[0].mxu0
    %v1551 = vadd.f32 0.0, %v1550
    %v1552 = vpop.f32.mrb[0].mxu0
    %1553 = vmatprep.mubr.f32.mxu0 0.0
    %1554 = vmatmul.mubr.f32.gmra.mrb[0].mxu0 %v1414
    %v1555 = vpop.f32.mrb[0].mxu0
    %v1556 = vadd.f32 0.0, %v1555
    %v1557 = vpop.f32.mrb[0].mxu0
    %1558 = vmatprep.mubr.f32.mxu0 0.0
    %1559 = vmatmul.mubr.f32.gmra.mrb[0].mxu0 %v1417
    %v1560 = vpop.f32.mrb[0].mxu0
    %v1561 = vadd.f32 0.0, %v1560
    %v1562 = vpop.f32.mrb[0].mxu0
    %1563 = vdwg.mxu0
    %v1564 = vadd.f32 %v1268, %v1486
    %v1565 = vadd.f32 %v1273, %v1491
    %v1566 = vadd.f32 %v1278, %v1496
    %v1567 = vadd.f32 %v1283, %v1501
    %v1568 = vadd.f32 %v1288, %v1506
    %v1569 = vadd.f32 %v1293, %v1511
    %v1570 = vadd.f32 %v1298, %v1516
    %v1571 = vadd.f32 %v1303, %v1521
    %v1572 = vadd.f32 %v1308, %v1526
    %v1573 = vadd.f32 %v1313, %v1531
    %v1574 = vadd.f32 %v1318, %v1536
    %v1575 = vadd.f32 %v1323, %v1541
    %v1576 = vadd.f32 %v1328, %v1546
    %v1577 = vadd.f32 %v1333, %v1551
    %v1578 = vadd.f32 %v1338, %v1556
    %v1579 = vadd.f32 %v1343, %v1561
    %v1580 = vld [vmem:[%s894] sm:$0xff]
    %v1581 = vld [vmem:[%s894 + $0x10] sm:$0xff]
    %v1582 = vld [vmem:[%s894 + $0x20] sm:$0xff]
    %v1583 = vld [vmem:[%s894 + $0x30] sm:$0xff]
    %v1584 = vld [vmem:[%s894 + $0x40] sm:$0xff]
    %v1585 = vld [vmem:[%s894 + $0x50] sm:$0xff]
    %v1586 = vld [vmem:[%s894 + $0x60] sm:$0xff]
    %v1587 = vld [vmem:[%s894 + $0x70] sm:$0xff]
    %v1588 = vld [vmem:[%s894 + $0xa0] sm:$0xff]
    %v1589 = vld [vmem:[%s894 + $0xb0] sm:$0xff]
    %v1590 = vld [vmem:[%s894 + $0xc0] sm:$0xff]
    %v1591 = vld [vmem:[%s894 + $0xd0] sm:$0xff]
    %v1592 = vld [vmem:[%s894 + $0xe0] sm:$0xff]
    %v1593 = vld [vmem:[%s894 + $0xf0] sm:$0xff]
    %v1594 = vld [vmem:[%s894 + $0x100] sm:$0xff]
    %v1595 = vld [vmem:[%s894 + $0x110] sm:$0xff]
    %s1596 = scalar_lea.vmem %s3, 192
    %v1597 = vld [vmem:[%s1596] sm:$0xff]
    %v1598 = vld [vmem:[%s1596 + $0x8] sm:$0xff]
    %v1599 = vld [vmem:[%s1596 + $0x10] sm:$0xff]
    %v1600 = vld [vmem:[%s1596 + $0x18] sm:$0xff]
    %v1601 = vld [vmem:[%s1596 + $0x20] sm:$0xff]
    %v1602 = vld [vmem:[%s1596 + $0x28] sm:$0xff]
    %v1603 = vld [vmem:[%s1596 + $0x30] sm:$0xff]
    %v1604 = vld [vmem:[%s1596 + $0x38] sm:$0xff]
    %v1606 = vsel %vm21, %v1580, 0
    %v1609 = vsel %vm21, %v1581, 0
    %v1612 = vsel %vm21, %v1582, 0
    %v1615 = vsel %vm21, %v1583, 0
    %v1618 = vsel %vm21, %v1584, 0
    %v1621 = vsel %vm21, %v1585, 0
    %v1624 = vsel %vm21, %v1586, 0
    %v1627 = vsel %vm21, %v1587, 0
    %v1630 = vsel %vm21, %v1588, 0
    %v1633 = vsel %vm21, %v1589, 0
    %v1636 = vsel %vm21, %v1590, 0
    %v1639 = vsel %vm21, %v1591, 0
    %v1642 = vsel %vm21, %v1592, 0
    %v1645 = vsel %vm21, %v1593, 0
    %v1648 = vsel %vm21, %v1594, 0
    %v1651 = vsel %vm21, %v1595, 0
    %1653 = vmatprep.subr.mxu0 0.0
    %1654 = vmatpush1.msra.mxu0 %v1597
    %1655 = vmatprep.subr.mxu0 0.0
    %1656 = vmatpush1.msra.mxu0 %v1598
    %1657 = vmatprep.subr.mxu0 0.0
    %1658 = vmatpush1.msra.mxu0 %v1599
    %1659 = vmatprep.subr.mxu0 0.0
    %1660 = vmatpush1.msra.mxu0 %v1600
    %1661 = vmatprep.subr.mxu0 0.0
    %1662 = vmatpush1.msra.mxu0 %v1601
    %1663 = vmatprep.subr.mxu0 0.0
    %1664 = vmatpush1.msra.mxu0 %v1602
    %1665 = vmatprep.subr.mxu0 0.0
    %1666 = vmatpush1.msra.mxu0 %v1603
    %1667 = vmatprep.subr.mxu0 0.0
    %1668 = vmatpush1.msra.mxu0 %v1604
    %1669 = vmatprep.subr.mxu0 0.0
    %1670 = vmatpush1.msra.mxu0 0.0
    %1671 = vmatprep.subr.mxu0 0.0
    %1672 = vmatpush1.msra.mxu0 0.0
    %1673 = vmatprep.subr.mxu0 0.0
    %1674 = vmatpush1.msra.mxu0 0.0
    %1675 = vmatprep.subr.mxu0 0.0
    %1676 = vmatpush1.msra.mxu0 0.0
    %1677 = vmatprep.subr.mxu0 0.0
    %1678 = vmatpush1.msra.mxu0 0.0
    %1679 = vmatprep.subr.mxu0 0.0
    %1680 = vmatpush1.msra.mxu0 0.0
    %1681 = vmatprep.subr.mxu0 0.0
    %1682 = vmatpush1.msra.mxu0 0.0
    %1683 = vmatprep.subr.mxu0 0.0
    %1684 = vmatpush1.msra.mxu0 0.0
    %1685 = vmatprep.subr.mxu0 0.0
    %1686 = vmatpush1.msra.mxu0 0.0
    %1687 = vmatprep.subr.mxu0 0.0
    %1688 = vmatpush1.msra.mxu0 0.0
    %1689 = vmatprep.subr.mxu0 0.0
    %1690 = vmatpush1.msra.mxu0 0.0
    %1691 = vmatprep.subr.mxu0 0.0
    %1692 = vmatpush1.msra.mxu0 0.0
    %1693 = vmatprep.subr.mxu0 0.0
    %1694 = vmatpush1.msra.mxu0 0.0
    %1695 = vmatprep.subr.mxu0 0.0
    %1696 = vmatpush1.msra.mxu0 0.0
    %1697 = vmatprep.subr.mxu0 0.0
    %1698 = vmatpush1.msra.mxu0 0.0
    %1699 = vmatprep.subr.mxu0 0.0
    %1700 = vmatpush1.msra.mxu0 0.0
    %1701 = vmatprep.subr.mxu0 0.0
    %1702 = vmatpush1.msra.mxu0 0.0
    %1703 = vmatprep.subr.mxu0 0.0
    %1704 = vmatpush1.msra.mxu0 0.0
    %1705 = vmatprep.subr.mxu0 0.0
    %1706 = vmatpush1.msra.mxu0 0.0
    %1707 = vmatprep.subr.mxu0 0.0
    %1708 = vmatpush1.msra.mxu0 0.0
    %1709 = vmatprep.subr.mxu0 0.0
    %1710 = vmatpush1.msra.mxu0 0.0
    %1711 = vmatprep.subr.mxu0 0.0
    %1712 = vmatpush1.msra.mxu0 0.0
    %1713 = vmatprep.subr.mxu0 0.0
    %1714 = vmatpush1.msra.mxu0 0.0
    %1715 = vmatprep.subr.mxu0 0.0
    %1716 = vmatpush1.msra.mxu0 0.0
    %1717 = vmatprep.mubr.f32.mxu0 0.0
    %1718 = vmatmul.mubr.f32.gmra.mrb[0].mxu0 %v1606
    %v1719 = vpop.f32.mrb[0].mxu0
    %v1720 = vadd.f32 0.0, %v1719
    %v1721 = vpop.f32.mrb[0].mxu0
    %1722 = vmatprep.mubr.f32.mxu0 0.0
    %1723 = vmatmul.mubr.f32.gmra.mrb[0].mxu0 %v1609
    %v1724 = vpop.f32.mrb[0].mxu0
    %v1725 = vadd.f32 0.0, %v1724
    %v1726 = vpop.f32.mrb[0].mxu0
    %1727 = vmatprep.mubr.f32.mxu0 0.0
    %1728 = vmatmul.mubr.f32.gmra.mrb[0].mxu0 %v1612
    %v1729 = vpop.f32.mrb[0].mxu0
    %v1730 = vadd.f32 0.0, %v1729
    %v1731 = vpop.f32.mrb[0].mxu0
    %1732 = vmatprep.mubr.f32.mxu0 0.0
    %1733 = vmatmul.mubr.f32.gmra.mrb[0].mxu0 %v1615
    %v1734 = vpop.f32.mrb[0].mxu0
    %v1735 = vadd.f32 0.0, %v1734
    %v1736 = vpop.f32.mrb[0].mxu0
    %1737 = vmatprep.mubr.f32.mxu0 0.0
    %1738 = vmatmul.mubr.f32.gmra.mrb[0].mxu0 %v1618
    %v1739 = vpop.f32.mrb[0].mxu0
    %v1740 = vadd.f32 0.0, %v1739
    %v1741 = vpop.f32.mrb[0].mxu0
    %1742 = vmatprep.mubr.f32.mxu0 0.0
    %1743 = vmatmul.mubr.f32.gmra.mrb[0].mxu0 %v1621
    %v1744 = vpop.f32.mrb[0].mxu0
    %v1745 = vadd.f32 0.0, %v1744
    %v1746 = vpop.f32.mrb[0].mxu0
    %1747 = vmatprep.mubr.f32.mxu0 0.0
    %1748 = vmatmul.mubr.f32.gmra.mrb[0].mxu0 %v1624
    %v1749 = vpop.f32.mrb[0].mxu0
    %v1750 = vadd.f32 0.0, %v1749
    %v1751 = vpop.f32.mrb[0].mxu0
    %1752 = vmatprep.mubr.f32.mxu0 0.0
    %1753 = vmatmul.mubr.f32.gmra.mrb[0].mxu0 %v1627
    %v1754 = vpop.f32.mrb[0].mxu0
    %v1755 = vadd.f32 0.0, %v1754
    %v1756 = vpop.f32.mrb[0].mxu0
    %1757 = vmatprep.mubr.f32.mxu0 0.0
    %1758 = vmatmul.mubr.f32.gmra.mrb[0].mxu0 %v1630
    %v1759 = vpop.f32.mrb[0].mxu0
    %v1760 = vadd.f32 0.0, %v1759
    %v1761 = vpop.f32.mrb[0].mxu0
    %1762 = vmatprep.mubr.f32.mxu0 0.0
    %1763 = vmatmul.mubr.f32.gmra.mrb[0].mxu0 %v1633
    %v1764 = vpop.f32.mrb[0].mxu0
    %v1765 = vadd.f32 0.0, %v1764
    %v1766 = vpop.f32.mrb[0].mxu0
    %1767 = vmatprep.mubr.f32.mxu0 0.0
    %1768 = vmatmul.mubr.f32.gmra.mrb[0].mxu0 %v1636
    %v1769 = vpop.f32.mrb[0].mxu0
    %v1770 = vadd.f32 0.0, %v1769
    %v1771 = vpop.f32.mrb[0].mxu0
    %1772 = vmatprep.mubr.f32.mxu0 0.0
    %1773 = vmatmul.mubr.f32.gmra.mrb[0].mxu0 %v1639
    %v1774 = vpop.f32.mrb[0].mxu0
    %v1775 = vadd.f32 0.0, %v1774
    %v1776 = vpop.f32.mrb[0].mxu0
    %1777 = vmatprep.mubr.f32.mxu0 0.0
    %1778 = vmatmul.mubr.f32.gmra.mrb[0].mxu0 %v1642
    %v1779 = vpop.f32.mrb[0].mxu0
    %v1780 = vadd.f32 0.0, %v1779
    %v1781 = vpop.f32.mrb[0].mxu0
    %1782 = vmatprep.mubr.f32.mxu0 0.0
    %1783 = vmatmul.mubr.f32.gmra.mrb[0].mxu0 %v1645
    %v1784 = vpop.f32.mrb[0].mxu0
    %v1785 = vadd.f32 0.0, %v1784
    %v1786 = vpop.f32.mrb[0].mxu0
    %1787 = vmatprep.mubr.f32.mxu0 0.0
    %1788 = vmatmul.mubr.f32.gmra.mrb[0].mxu0 %v1648
    %v1789 = vpop.f32.mrb[0].mxu0
    %v1790 = vadd.f32 0.0, %v1789
    %v1791 = vpop.f32.mrb[0].mxu0
    %1792 = vmatprep.mubr.f32.mxu0 0.0
    %1793 = vmatmul.mubr.f32.gmra.mrb[0].mxu0 %v1651
    %v1794 = vpop.f32.mrb[0].mxu0
    %v1795 = vadd.f32 0.0, %v1794
    %v1796 = vpop.f32.mrb[0].mxu0
    %1797 = vdwg.mxu0
    %v1798 = vadd.f32 %v1564, %v1720
    %v1799 = vadd.f32 %v1565, %v1725
    %v1800 = vadd.f32 %v1566, %v1730
    %v1801 = vadd.f32 %v1567, %v1735
    %v1802 = vadd.f32 %v1568, %v1740
    %v1803 = vadd.f32 %v1569, %v1745
    %v1804 = vadd.f32 %v1570, %v1750
    %v1805 = vadd.f32 %v1571, %v1755
    %v1806 = vadd.f32 %v1572, %v1760
    %v1807 = vadd.f32 %v1573, %v1765
    %v1808 = vadd.f32 %v1574, %v1770
    %v1809 = vadd.f32 %v1575, %v1775
    %v1810 = vadd.f32 %v1576, %v1780
    %v1811 = vadd.f32 %v1577, %v1785
    %v1812 = vadd.f32 %v1578, %v1790
    %v1813 = vadd.f32 %v1579, %v1795
    %v1814 = vld [vmem:[%s894 + $0x1] sm:$0xff]
    %v1815 = vld [vmem:[%s894 + $0x11] sm:$0xff]
    %v1816 = vld [vmem:[%s894 + $0x21] sm:$0xff]
    %v1817 = vld [vmem:[%s894 + $0x31] sm:$0xff]
    %v1818 = vld [vmem:[%s894 + $0x41] sm:$0xff]
    %v1819 = vld [vmem:[%s894 + $0x51] sm:$0xff]
    %v1820 = vld [vmem:[%s894 + $0x61] sm:$0xff]
    %v1821 = vld [vmem:[%s894 + $0x71] sm:$0xff]
    %v1822 = vld [vmem:[%s894 + $0xa1] sm:$0xff]
    %v1823 = vld [vmem:[%s894 + $0xb1] sm:$0xff]
    %v1824 = vld [vmem:[%s894 + $0xc1] sm:$0xff]
    %v1825 = vld [vmem:[%s894 + $0xd1] sm:$0xff]
    %v1826 = vld [vmem:[%s894 + $0xe1] sm:$0xff]
    %v1827 = vld [vmem:[%s894 + $0xf1] sm:$0xff]
    %v1828 = vld [vmem:[%s894 + $0x101] sm:$0xff]
    %v1829 = vld [vmem:[%s894 + $0x111] sm:$0xff]
    %s1830 = scalar_lea.vmem %s3, 256
    %v1831 = vld [vmem:[%s1830] sm:$0xff]
    %v1832 = vld [vmem:[%s1830 + $0x8] sm:$0xff]
    %v1833 = vld [vmem:[%s1830 + $0x10] sm:$0xff]
    %v1834 = vld [vmem:[%s1830 + $0x18] sm:$0xff]
    %v1835 = vld [vmem:[%s1830 + $0x20] sm:$0xff]
    %v1836 = vld [vmem:[%s1830 + $0x28] sm:$0xff]
    %v1837 = vld [vmem:[%s1830 + $0x30] sm:$0xff]
    %v1838 = vld [vmem:[%s1830 + $0x38] sm:$0xff]
    %v1840 = vsel %vm21, %v1814, 0
    %v1843 = vsel %vm21, %v1815, 0
    %v1846 = vsel %vm21, %v1816, 0
    %v1849 = vsel %vm21, %v1817, 0
    %v1852 = vsel %vm21, %v1818, 0
    %v1855 = vsel %vm21, %v1819, 0
    %v1858 = vsel %vm21, %v1820, 0
    %v1861 = vsel %vm21, %v1821, 0
    %v1864 = vsel %vm21, %v1822, 0
    %v1867 = vsel %vm21, %v1823, 0
    %v1870 = vsel %vm21, %v1824, 0
    %v1873 = vsel %vm21, %v1825, 0
    %v1876 = vsel %vm21, %v1826, 0
    %v1879 = vsel %vm21, %v1827, 0
    %v1882 = vsel %vm21, %v1828, 0
    %v1885 = vsel %vm21, %v1829, 0
    %1887 = vmatprep.subr.mxu0 0.0
    %1888 = vmatpush1.msra.mxu0 %v1831
    %1889 = vmatprep.subr.mxu0 0.0
    %1890 = vmatpush1.msra.mxu0 %v1832
    %1891 = vmatprep.subr.mxu0 0.0
    %1892 = vmatpush1.msra.mxu0 %v1833
    %1893 = vmatprep.subr.mxu0 0.0
    %1894 = vmatpush1.msra.mxu0 %v1834
    %1895 = vmatprep.subr.mxu0 0.0
    %1896 = vmatpush1.msra.mxu0 %v1835
    %1897 = vmatprep.subr.mxu0 0.0
    %1898 = vmatpush1.msra.mxu0 %v1836
    %1899 = vmatprep.subr.mxu0 0.0
    %1900 = vmatpush1.msra.mxu0 %v1837
    %1901 = vmatprep.subr.mxu0 0.0
    %1902 = vmatpush1.msra.mxu0 %v1838
    %1903 = vmatprep.subr.mxu0 0.0
    %1904 = vmatpush1.msra.mxu0 0.0
    %1905 = vmatprep.subr.mxu0 0.0
    %1906 = vmatpush1.msra.mxu0 0.0
    %1907 = vmatprep.subr.mxu0 0.0
    %1908 = vmatpush1.msra.mxu0 0.0
    %1909 = vmatprep.subr.mxu0 0.0
    %1910 = vmatpush1.msra.mxu0 0.0
    %1911 = vmatprep.subr.mxu0 0.0
    %1912 = vmatpush1.msra.mxu0 0.0
    %1913 = vmatprep.subr.mxu0 0.0
    %1914 = vmatpush1.msra.mxu0 0.0
    %1915 = vmatprep.subr.mxu0 0.0
    %1916 = vmatpush1.msra.mxu0 0.0
    %1917 = vmatprep.subr.mxu0 0.0
    %1918 = vmatpush1.msra.mxu0 0.0
    %1919 = vmatprep.subr.mxu0 0.0
    %1920 = vmatpush1.msra.mxu0 0.0
    %1921 = vmatprep.subr.mxu0 0.0
    %1922 = vmatpush1.msra.mxu0 0.0
    %1923 = vmatprep.subr.mxu0 0.0
    %1924 = vmatpush1.msra.mxu0 0.0
    %1925 = vmatprep.subr.mxu0 0.0
    %1926 = vmatpush1.msra.mxu0 0.0
    %1927 = vmatprep.subr.mxu0 0.0
    %1928 = vmatpush1.msra.mxu0 0.0
    %1929 = vmatprep.subr.mxu0 0.0
    %1930 = vmatpush1.msra.mxu0 0.0
    %1931 = vmatprep.subr.mxu0 0.0
    %1932 = vmatpush1.msra.mxu0 0.0
    %1933 = vmatprep.subr.mxu0 0.0
    %1934 = vmatpush1.msra.mxu0 0.0
    %1935 = vmatprep.subr.mxu0 0.0
    %1936 = vmatpush1.msra.mxu0 0.0
    %1937 = vmatprep.subr.mxu0 0.0
    %1938 = vmatpush1.msra.mxu0 0.0
    %1939 = vmatprep.subr.mxu0 0.0
    %1940 = vmatpush1.msra.mxu0 0.0
    %1941 = vmatprep.subr.mxu0 0.0
    %1942 = vmatpush1.msra.mxu0 0.0
    %1943 = vmatprep.subr.mxu0 0.0
    %1944 = vmatpush1.msra.mxu0 0.0
    %1945 = vmatprep.subr.mxu0 0.0
    %1946 = vmatpush1.msra.mxu0 0.0
    %1947 = vmatprep.subr.mxu0 0.0
    %1948 = vmatpush1.msra.mxu0 0.0
    %1949 = vmatprep.subr.mxu0 0.0
    %1950 = vmatpush1.msra.mxu0 0.0
    %1951 = vmatprep.mubr.f32.mxu0 0.0
    %1952 = vmatmul.mubr.f32.gmra.mrb[0].mxu0 %v1840
    %v1953 = vpop.f32.mrb[0].mxu0
    %v1954 = vadd.f32 0.0, %v1953
    %v1955 = vpop.f32.mrb[0].mxu0
    %1956 = vmatprep.mubr.f32.mxu0 0.0
    %1957 = vmatmul.mubr.f32.gmra.mrb[0].mxu0 %v1843
    %v1958 = vpop.f32.mrb[0].mxu0
    %v1959 = vadd.f32 0.0, %v1958
    %v1960 = vpop.f32.mrb[0].mxu0
    %1961 = vmatprep.mubr.f32.mxu0 0.0
    %1962 = vmatmul.mubr.f32.gmra.mrb[0].mxu0 %v1846
    %v1963 = vpop.f32.mrb[0].mxu0
    %v1964 = vadd.f32 0.0, %v1963
    %v1965 = vpop.f32.mrb[0].mxu0
    %1966 = vmatprep.mubr.f32.mxu0 0.0
    %1967 = vmatmul.mubr.f32.gmra.mrb[0].mxu0 %v1849
    %v1968 = vpop.f32.mrb[0].mxu0
    %v1969 = vadd.f32 0.0, %v1968
    %v1970 = vpop.f32.mrb[0].mxu0
    %1971 = vmatprep.mubr.f32.mxu0 0.0
    %1972 = vmatmul.mubr.f32.gmra.mrb[0].mxu0 %v1852
    %v1973 = vpop.f32.mrb[0].mxu0
    %v1974 = vadd.f32 0.0, %v1973
    %v1975 = vpop.f32.mrb[0].mxu0
    %1976 = vmatprep.mubr.f32.mxu0 0.0
    %1977 = vmatmul.mubr.f32.gmra.mrb[0].mxu0 %v1855
    %v1978 = vpop.f32.mrb[0].mxu0
    %v1979 = vadd.f32 0.0, %v1978
    %v1980 = vpop.f32.mrb[0].mxu0
    %1981 = vmatprep.mubr.f32.mxu0 0.0
    %1982 = vmatmul.mubr.f32.gmra.mrb[0].mxu0 %v1858
    %v1983 = vpop.f32.mrb[0].mxu0
    %v1984 = vadd.f32 0.0, %v1983
    %v1985 = vpop.f32.mrb[0].mxu0
    %1986 = vmatprep.mubr.f32.mxu0 0.0
    %1987 = vmatmul.mubr.f32.gmra.mrb[0].mxu0 %v1861
    %v1988 = vpop.f32.mrb[0].mxu0
    %v1989 = vadd.f32 0.0, %v1988
    %v1990 = vpop.f32.mrb[0].mxu0
    %1991 = vmatprep.mubr.f32.mxu0 0.0
    %1992 = vmatmul.mubr.f32.gmra.mrb[0].mxu0 %v1864
    %v1993 = vpop.f32.mrb[0].mxu0
    %v1994 = vadd.f32 0.0, %v1993
    %v1995 = vpop.f32.mrb[0].mxu0
    %1996 = vmatprep.mubr.f32.mxu0 0.0
    %1997 = vmatmul.mubr.f32.gmra.mrb[0].mxu0 %v1867
    %v1998 = vpop.f32.mrb[0].mxu0
    %v1999 = vadd.f32 0.0, %v1998
    %v2000 = vpop.f32.mrb[0].mxu0
    %2001 = vmatprep.mubr.f32.mxu0 0.0
    %2002 = vmatmul.mubr.f32.gmra.mrb[0].mxu0 %v1870
    %v2003 = vpop.f32.mrb[0].mxu0
    %v2004 = vadd.f32 0.0, %v2003
    %v2005 = vpop.f32.mrb[0].mxu0
    %2006 = vmatprep.mubr.f32.mxu0 0.0
    %2007 = vmatmul.mubr.f32.gmra.mrb[0].mxu0 %v1873
    %v2008 = vpop.f32.mrb[0].mxu0
    %v2009 = vadd.f32 0.0, %v2008
    %v2010 = vpop.f32.mrb[0].mxu0
    %2011 = vmatprep.mubr.f32.mxu0 0.0
    %2012 = vmatmul.mubr.f32.gmra.mrb[0].mxu0 %v1876
    %v2013 = vpop.f32.mrb[0].mxu0
    %v2014 = vadd.f32 0.0, %v2013
    %v2015 = vpop.f32.mrb[0].mxu0
    %2016 = vmatprep.mubr.f32.mxu0 0.0
    %2017 = vmatmul.mubr.f32.gmra.mrb[0].mxu0 %v1879
    %v2018 = vpop.f32.mrb[0].mxu0
    %v2019 = vadd.f32 0.0, %v2018
    %v2020 = vpop.f32.mrb[0].mxu0
    %2021 = vmatprep.mubr.f32.mxu0 0.0
    %2022 = vmatmul.mubr.f32.gmra.mrb[0].mxu0 %v1882
    %v2023 = vpop.f32.mrb[0].mxu0
    %v2024 = vadd.f32 0.0, %v2023
    %v2025 = vpop.f32.mrb[0].mxu0
    %2026 = vmatprep.mubr.f32.mxu0 0.0
    %2027 = vmatmul.mubr.f32.gmra.mrb[0].mxu0 %v1885
    %v2028 = vpop.f32.mrb[0].mxu0
    %v2029 = vadd.f32 0.0, %v2028
    %v2030 = vpop.f32.mrb[0].mxu0
    %2031 = vdwg.mxu0
    %v2032 = vadd.f32 %v1798, %v1954
    %v2033 = vadd.f32 %v1799, %v1959
    %v2034 = vadd.f32 %v1800, %v1964
    %v2035 = vadd.f32 %v1801, %v1969
    %v2036 = vadd.f32 %v1802, %v1974
    %v2037 = vadd.f32 %v1803, %v1979
    %v2038 = vadd.f32 %v1804, %v1984
    %v2039 = vadd.f32 %v1805, %v1989
    %v2040 = vadd.f32 %v1806, %v1994
    %v2041 = vadd.f32 %v1807, %v1999
    %v2042 = vadd.f32 %v1808, %v2004
    %v2043 = vadd.f32 %v1809, %v2009
    %v2044 = vadd.f32 %v1810, %v2014
    %v2045 = vadd.f32 %v1811, %v2019
    %v2046 = vadd.f32 %v1812, %v2024
    %v2047 = vadd.f32 %v1813, %v2029
    %v2048 = vld [vmem:[%s894 + $0x2] sm:$0xff]
    %v2049 = vld [vmem:[%s894 + $0x12] sm:$0xff]
    %v2050 = vld [vmem:[%s894 + $0x22] sm:$0xff]
    %v2051 = vld [vmem:[%s894 + $0x32] sm:$0xff]
    %v2052 = vld [vmem:[%s894 + $0x42] sm:$0xff]
    %v2053 = vld [vmem:[%s894 + $0x52] sm:$0xff]
    %v2054 = vld [vmem:[%s894 + $0x62] sm:$0xff]
    %v2055 = vld [vmem:[%s894 + $0x72] sm:$0xff]
    %v2056 = vld [vmem:[%s894 + $0xa2] sm:$0xff]
    %v2057 = vld [vmem:[%s894 + $0xb2] sm:$0xff]
    %v2058 = vld [vmem:[%s894 + $0xc2] sm:$0xff]
    %v2059 = vld [vmem:[%s894 + $0xd2] sm:$0xff]
    %v2060 = vld [vmem:[%s894 + $0xe2] sm:$0xff]
    %v2061 = vld [vmem:[%s894 + $0xf2] sm:$0xff]
    %v2062 = vld [vmem:[%s894 + $0x102] sm:$0xff]
    %v2063 = vld [vmem:[%s894 + $0x112] sm:$0xff]
    %s2064 = scalar_lea.vmem %s3, 320
    %v2065 = vld [vmem:[%s2064] sm:$0xff]
    %v2066 = vld [vmem:[%s2064 + $0x8] sm:$0xff]
    %v2067 = vld [vmem:[%s2064 + $0x10] sm:$0xff]
    %v2068 = vld [vmem:[%s2064 + $0x18] sm:$0xff]
    %v2069 = vld [vmem:[%s2064 + $0x20] sm:$0xff]
    %v2070 = vld [vmem:[%s2064 + $0x28] sm:$0xff]
    %v2071 = vld [vmem:[%s2064 + $0x30] sm:$0xff]
    %v2072 = vld [vmem:[%s2064 + $0x38] sm:$0xff]
    %v2074 = vsel %vm21, %v2048, 0
    %v2077 = vsel %vm21, %v2049, 0
    %v2080 = vsel %vm21, %v2050, 0
    %v2083 = vsel %vm21, %v2051, 0
    %v2086 = vsel %vm21, %v2052, 0
    %v2089 = vsel %vm21, %v2053, 0
    %v2092 = vsel %vm21, %v2054, 0
    %v2095 = vsel %vm21, %v2055, 0
    %v2098 = vsel %vm21, %v2056, 0
    %v2101 = vsel %vm21, %v2057, 0
    %v2104 = vsel %vm21, %v2058, 0
    %v2107 = vsel %vm21, %v2059, 0
    %v2110 = vsel %vm21, %v2060, 0
    %v2113 = vsel %vm21, %v2061, 0
    %v2116 = vsel %vm21, %v2062, 0
    %v2119 = vsel %vm21, %v2063, 0
    %2121 = vmatprep.subr.mxu0 0.0
    %2122 = vmatpush1.msra.mxu0 %v2065
    %2123 = vmatprep.subr.mxu0 0.0
    %2124 = vmatpush1.msra.mxu0 %v2066
    %2125 = vmatprep.subr.mxu0 0.0
    %2126 = vmatpush1.msra.mxu0 %v2067
    %2127 = vmatprep.subr.mxu0 0.0
    %2128 = vmatpush1.msra.mxu0 %v2068
    %2129 = vmatprep.subr.mxu0 0.0
    %2130 = vmatpush1.msra.mxu0 %v2069
    %2131 = vmatprep.subr.mxu0 0.0
    %2132 = vmatpush1.msra.mxu0 %v2070
    %2133 = vmatprep.subr.mxu0 0.0
    %2134 = vmatpush1.msra.mxu0 %v2071
    %2135 = vmatprep.subr.mxu0 0.0
    %2136 = vmatpush1.msra.mxu0 %v2072
    %2137 = vmatprep.subr.mxu0 0.0
    %2138 = vmatpush1.msra.mxu0 0.0
    %2139 = vmatprep.subr.mxu0 0.0
    %2140 = vmatpush1.msra.mxu0 0.0
    %2141 = vmatprep.subr.mxu0 0.0
    %2142 = vmatpush1.msra.mxu0 0.0
    %2143 = vmatprep.subr.mxu0 0.0
    %2144 = vmatpush1.msra.mxu0 0.0
    %2145 = vmatprep.subr.mxu0 0.0
    %2146 = vmatpush1.msra.mxu0 0.0
    %2147 = vmatprep.subr.mxu0 0.0
    %2148 = vmatpush1.msra.mxu0 0.0
    %2149 = vmatprep.subr.mxu0 0.0
    %2150 = vmatpush1.msra.mxu0 0.0
    %2151 = vmatprep.subr.mxu0 0.0
    %2152 = vmatpush1.msra.mxu0 0.0
    %2153 = vmatprep.subr.mxu0 0.0
    %2154 = vmatpush1.msra.mxu0 0.0
    %2155 = vmatprep.subr.mxu0 0.0
    %2156 = vmatpush1.msra.mxu0 0.0
    %2157 = vmatprep.subr.mxu0 0.0
    %2158 = vmatpush1.msra.mxu0 0.0
    %2159 = vmatprep.subr.mxu0 0.0
    %2160 = vmatpush1.msra.mxu0 0.0
    %2161 = vmatprep.subr.mxu0 0.0
    %2162 = vmatpush1.msra.mxu0 0.0
    %2163 = vmatprep.subr.mxu0 0.0
    %2164 = vmatpush1.msra.mxu0 0.0
    %2165 = vmatprep.subr.mxu0 0.0
    %2166 = vmatpush1.msra.mxu0 0.0
    %2167 = vmatprep.subr.mxu0 0.0
    %2168 = vmatpush1.msra.mxu0 0.0
    %2169 = vmatprep.subr.mxu0 0.0
    %2170 = vmatpush1.msra.mxu0 0.0
    %2171 = vmatprep.subr.mxu0 0.0
    %2172 = vmatpush1.msra.mxu0 0.0
    %2173 = vmatprep.subr.mxu0 0.0
    %2174 = vmatpush1.msra.mxu0 0.0
    %2175 = vmatprep.subr.mxu0 0.0
    %2176 = vmatpush1.msra.mxu0 0.0
    %2177 = vmatprep.subr.mxu0 0.0
    %2178 = vmatpush1.msra.mxu0 0.0
    %2179 = vmatprep.subr.mxu0 0.0
    %2180 = vmatpush1.msra.mxu0 0.0
    %2181 = vmatprep.subr.mxu0 0.0
    %2182 = vmatpush1.msra.mxu0 0.0
    %2183 = vmatprep.subr.mxu0 0.0
    %2184 = vmatpush1.msra.mxu0 0.0
    %2185 = vmatprep.mubr.f32.mxu0 0.0
    %2186 = vmatmul.mubr.f32.gmra.mrb[0].mxu0 %v2074
    %v2187 = vpop.f32.mrb[0].mxu0
    %v2188 = vadd.f32 0.0, %v2187
    %v2189 = vpop.f32.mrb[0].mxu0
    %2190 = vmatprep.mubr.f32.mxu0 0.0
    %2191 = vmatmul.mubr.f32.gmra.mrb[0].mxu0 %v2077
    %v2192 = vpop.f32.mrb[0].mxu0
    %v2193 = vadd.f32 0.0, %v2192
    %v2194 = vpop.f32.mrb[0].mxu0
    %2195 = vmatprep.mubr.f32.mxu0 0.0
    %2196 = vmatmul.mubr.f32.gmra.mrb[0].mxu0 %v2080
    %v2197 = vpop.f32.mrb[0].mxu0
    %v2198 = vadd.f32 0.0, %v2197
    %v2199 = vpop.f32.mrb[0].mxu0
    %2200 = vmatprep.mubr.f32.mxu0 0.0
    %2201 = vmatmul.mubr.f32.gmra.mrb[0].mxu0 %v2083
    %v2202 = vpop.f32.mrb[0].mxu0
    %v2203 = vadd.f32 0.0, %v2202
    %v2204 = vpop.f32.mrb[0].mxu0
    %2205 = vmatprep.mubr.f32.mxu0 0.0
    %2206 = vmatmul.mubr.f32.gmra.mrb[0].mxu0 %v2086
    %v2207 = vpop.f32.mrb[0].mxu0
    %v2208 = vadd.f32 0.0, %v2207
    %v2209 = vpop.f32.mrb[0].mxu0
    %2210 = vmatprep.mubr.f32.mxu0 0.0
    %2211 = vmatmul.mubr.f32.gmra.mrb[0].mxu0 %v2089
    %v2212 = vpop.f32.mrb[0].mxu0
    %v2213 = vadd.f32 0.0, %v2212
    %v2214 = vpop.f32.mrb[0].mxu0
    %2215 = vmatprep.mubr.f32.mxu0 0.0
    %2216 = vmatmul.mubr.f32.gmra.mrb[0].mxu0 %v2092
    %v2217 = vpop.f32.mrb[0].mxu0
    %v2218 = vadd.f32 0.0, %v2217
    %v2219 = vpop.f32.mrb[0].mxu0
    %2220 = vmatprep.mubr.f32.mxu0 0.0
    %2221 = vmatmul.mubr.f32.gmra.mrb[0].mxu0 %v2095
    %v2222 = vpop.f32.mrb[0].mxu0
    %v2223 = vadd.f32 0.0, %v2222
    %v2224 = vpop.f32.mrb[0].mxu0
    %2225 = vmatprep.mubr.f32.mxu0 0.0
    %2226 = vmatmul.mubr.f32.gmra.mrb[0].mxu0 %v2098
    %v2227 = vpop.f32.mrb[0].mxu0
    %v2228 = vadd.f32 0.0, %v2227
    %v2229 = vpop.f32.mrb[0].mxu0
    %2230 = vmatprep.mubr.f32.mxu0 0.0
    %2231 = vmatmul.mubr.f32.gmra.mrb[0].mxu0 %v2101
    %v2232 = vpop.f32.mrb[0].mxu0
    %v2233 = vadd.f32 0.0, %v2232
    %v2234 = vpop.f32.mrb[0].mxu0
    %2235 = vmatprep.mubr.f32.mxu0 0.0
    %2236 = vmatmul.mubr.f32.gmra.mrb[0].mxu0 %v2104
    %v2237 = vpop.f32.mrb[0].mxu0
    %v2238 = vadd.f32 0.0, %v2237
    %v2239 = vpop.f32.mrb[0].mxu0
    %2240 = vmatprep.mubr.f32.mxu0 0.0
    %2241 = vmatmul.mubr.f32.gmra.mrb[0].mxu0 %v2107
    %v2242 = vpop.f32.mrb[0].mxu0
    %v2243 = vadd.f32 0.0, %v2242
    %v2244 = vpop.f32.mrb[0].mxu0
    %2245 = vmatprep.mubr.f32.mxu0 0.0
    %2246 = vmatmul.mubr.f32.gmra.mrb[0].mxu0 %v2110
    %v2247 = vpop.f32.mrb[0].mxu0
    %v2248 = vadd.f32 0.0, %v2247
    %v2249 = vpop.f32.mrb[0].mxu0
    %2250 = vmatprep.mubr.f32.mxu0 0.0
    %2251 = vmatmul.mubr.f32.gmra.mrb[0].mxu0 %v2113
    %v2252 = vpop.f32.mrb[0].mxu0
    %v2253 = vadd.f32 0.0, %v2252
    %v2254 = vpop.f32.mrb[0].mxu0
    %2255 = vmatprep.mubr.f32.mxu0 0.0
    %2256 = vmatmul.mubr.f32.gmra.mrb[0].mxu0 %v2116
    %v2257 = vpop.f32.mrb[0].mxu0
    %v2258 = vadd.f32 0.0, %v2257
    %v2259 = vpop.f32.mrb[0].mxu0
    %2260 = vmatprep.mubr.f32.mxu0 0.0
    %2261 = vmatmul.mubr.f32.gmra.mrb[0].mxu0 %v2119
    %v2262 = vpop.f32.mrb[0].mxu0
    %v2263 = vadd.f32 0.0, %v2262
    %v2264 = vpop.f32.mrb[0].mxu0
    %2265 = vdwg.mxu0
    %v2266 = vadd.f32 %v2032, %v2188
    %v2267 = vadd.f32 %v2033, %v2193
    %v2268 = vadd.f32 %v2034, %v2198
    %v2269 = vadd.f32 %v2035, %v2203
    %v2270 = vadd.f32 %v2036, %v2208
    %v2271 = vadd.f32 %v2037, %v2213
    %v2272 = vadd.f32 %v2038, %v2218
    %v2273 = vadd.f32 %v2039, %v2223
    %v2274 = vadd.f32 %v2040, %v2228
    %v2275 = vadd.f32 %v2041, %v2233
    %v2276 = vadd.f32 %v2042, %v2238
    %v2277 = vadd.f32 %v2043, %v2243
    %v2278 = vadd.f32 %v2044, %v2248
    %v2279 = vadd.f32 %v2045, %v2253
    %v2280 = vadd.f32 %v2046, %v2258
    %v2281 = vadd.f32 %v2047, %v2263
    %s2282 = scalar_lea.vmem [#allocation2], 32
    %v2283 = vld [vmem:[%s2282] sm:$0xff]
    %v2284 = vld [vmem:[%s2282 + $0x10] sm:$0xff]
    %v2285 = vld [vmem:[%s2282 + $0x20] sm:$0xff]
    %v2286 = vld [vmem:[%s2282 + $0x30] sm:$0xff]
    %v2287 = vld [vmem:[%s2282 + $0x40] sm:$0xff]
    %v2288 = vld [vmem:[%s2282 + $0x50] sm:$0xff]
    %v2289 = vld [vmem:[%s2282 + $0x60] sm:$0xff]
    %v2290 = vld [vmem:[%s2282 + $0x70] sm:$0xff]
    %v2291 = vld [vmem:[%s2282 + $0xa0] sm:$0xff]
    %v2292 = vld [vmem:[%s2282 + $0xb0] sm:$0xff]
    %v2293 = vld [vmem:[%s2282 + $0xc0] sm:$0xff]
    %v2294 = vld [vmem:[%s2282 + $0xd0] sm:$0xff]
    %v2295 = vld [vmem:[%s2282 + $0xe0] sm:$0xff]
    %v2296 = vld [vmem:[%s2282 + $0xf0] sm:$0xff]
    %v2297 = vld [vmem:[%s2282 + $0x100] sm:$0xff]
    %v2298 = vld [vmem:[%s2282 + $0x110] sm:$0xff]
    %s2299 = scalar_lea.vmem %s3, 384
    %v2300 = vld [vmem:[%s2299] sm:$0xff]
    %v2301 = vld [vmem:[%s2299 + $0x8] sm:$0xff]
    %v2302 = vld [vmem:[%s2299 + $0x10] sm:$0xff]
    %v2303 = vld [vmem:[%s2299 + $0x18] sm:$0xff]
    %v2304 = vld [vmem:[%s2299 + $0x20] sm:$0xff]
    %v2305 = vld [vmem:[%s2299 + $0x28] sm:$0xff]
    %v2306 = vld [vmem:[%s2299 + $0x30] sm:$0xff]
    %v2307 = vld [vmem:[%s2299 + $0x38] sm:$0xff]
    %v2309 = vsel %vm21, %v2283, 0
    %v2312 = vsel %vm21, %v2284, 0
    %v2315 = vsel %vm21, %v2285, 0
    %v2318 = vsel %vm21, %v2286, 0
    %v2321 = vsel %vm21, %v2287, 0
    %v2324 = vsel %vm21, %v2288, 0
    %v2327 = vsel %vm21, %v2289, 0
    %v2330 = vsel %vm21, %v2290, 0
    %v2333 = vsel %vm21, %v2291, 0
    %v2336 = vsel %vm21, %v2292, 0
    %v2339 = vsel %vm21, %v2293, 0
    %v2342 = vsel %vm21, %v2294, 0
    %v2345 = vsel %vm21, %v2295, 0
    %v2348 = vsel %vm21, %v2296, 0
    %v2351 = vsel %vm21, %v2297, 0
    %v2354 = vsel %vm21, %v2298, 0
    %2356 = vmatprep.subr.mxu0 0.0
    %2357 = vmatpush1.msra.mxu0 %v2300
    %2358 = vmatprep.subr.mxu0 0.0
    %2359 = vmatpush1.msra.mxu0 %v2301
    %2360 = vmatprep.subr.mxu0 0.0
    %2361 = vmatpush1.msra.mxu0 %v2302
    %2362 = vmatprep.subr.mxu0 0.0
    %2363 = vmatpush1.msra.mxu0 %v2303
    %2364 = vmatprep.subr.mxu0 0.0
    %2365 = vmatpush1.msra.mxu0 %v2304
    %2366 = vmatprep.subr.mxu0 0.0
    %2367 = vmatpush1.msra.mxu0 %v2305
    %2368 = vmatprep.subr.mxu0 0.0
    %2369 = vmatpush1.msra.mxu0 %v2306
    %2370 = vmatprep.subr.mxu0 0.0
    %2371 = vmatpush1.msra.mxu0 %v2307
    %2372 = vmatprep.subr.mxu0 0.0
    %2373 = vmatpush1.msra.mxu0 0.0
    %2374 = vmatprep.subr.mxu0 0.0
    %2375 = vmatpush1.msra.mxu0 0.0
    %2376 = vmatprep.subr.mxu0 0.0
    %2377 = vmatpush1.msra.mxu0 0.0
    %2378 = vmatprep.subr.mxu0 0.0
    %2379 = vmatpush1.msra.mxu0 0.0
    %2380 = vmatprep.subr.mxu0 0.0
    %2381 = vmatpush1.msra.mxu0 0.0
    %2382 = vmatprep.subr.mxu0 0.0
    %2383 = vmatpush1.msra.mxu0 0.0
    %2384 = vmatprep.subr.mxu0 0.0
    %2385 = vmatpush1.msra.mxu0 0.0
    %2386 = vmatprep.subr.mxu0 0.0
    %2387 = vmatpush1.msra.mxu0 0.0
    %2388 = vmatprep.subr.mxu0 0.0
    %2389 = vmatpush1.msra.mxu0 0.0
    %2390 = vmatprep.subr.mxu0 0.0
    %2391 = vmatpush1.msra.mxu0 0.0
    %2392 = vmatprep.subr.mxu0 0.0
    %2393 = vmatpush1.msra.mxu0 0.0
    %2394 = vmatprep.subr.mxu0 0.0
    %2395 = vmatpush1.msra.mxu0 0.0
    %2396 = vmatprep.subr.mxu0 0.0
    %2397 = vmatpush1.msra.mxu0 0.0
    %2398 = vmatprep.subr.mxu0 0.0
    %2399 = vmatpush1.msra.mxu0 0.0
    %2400 = vmatprep.subr.mxu0 0.0
    %2401 = vmatpush1.msra.mxu0 0.0
    %2402 = vmatprep.subr.mxu0 0.0
    %2403 = vmatpush1.msra.mxu0 0.0
    %2404 = vmatprep.subr.mxu0 0.0
    %2405 = vmatpush1.msra.mxu0 0.0
    %2406 = vmatprep.subr.mxu0 0.0
    %2407 = vmatpush1.msra.mxu0 0.0
    %2408 = vmatprep.subr.mxu0 0.0
    %2409 = vmatpush1.msra.mxu0 0.0
    %2410 = vmatprep.subr.mxu0 0.0
    %2411 = vmatpush1.msra.mxu0 0.0
    %2412 = vmatprep.subr.mxu0 0.0
    %2413 = vmatpush1.msra.mxu0 0.0
    %2414 = vmatprep.subr.mxu0 0.0
    %2415 = vmatpush1.msra.mxu0 0.0
    %2416 = vmatprep.subr.mxu0 0.0
    %2417 = vmatpush1.msra.mxu0 0.0
    %2418 = vmatprep.subr.mxu0 0.0
    %2419 = vmatpush1.msra.mxu0 0.0
    %2420 = vmatprep.mubr.f32.mxu0 0.0
    %2421 = vmatmul.mubr.f32.gmra.mrb[0].mxu0 %v2309
    %v2422 = vpop.f32.mrb[0].mxu0
    %v2423 = vadd.f32 0.0, %v2422
    %v2424 = vpop.f32.mrb[0].mxu0
    %2425 = vmatprep.mubr.f32.mxu0 0.0
    %2426 = vmatmul.mubr.f32.gmra.mrb[0].mxu0 %v2312
    %v2427 = vpop.f32.mrb[0].mxu0
    %v2428 = vadd.f32 0.0, %v2427
    %v2429 = vpop.f32.mrb[0].mxu0
    %2430 = vmatprep.mubr.f32.mxu0 0.0
    %2431 = vmatmul.mubr.f32.gmra.mrb[0].mxu0 %v2315
    %v2432 = vpop.f32.mrb[0].mxu0
    %v2433 = vadd.f32 0.0, %v2432
    %v2434 = vpop.f32.mrb[0].mxu0
    %2435 = vmatprep.mubr.f32.mxu0 0.0
    %2436 = vmatmul.mubr.f32.gmra.mrb[0].mxu0 %v2318
    %v2437 = vpop.f32.mrb[0].mxu0
    %v2438 = vadd.f32 0.0, %v2437
    %v2439 = vpop.f32.mrb[0].mxu0
    %2440 = vmatprep.mubr.f32.mxu0 0.0
    %2441 = vmatmul.mubr.f32.gmra.mrb[0].mxu0 %v2321
    %v2442 = vpop.f32.mrb[0].mxu0
    %v2443 = vadd.f32 0.0, %v2442
    %v2444 = vpop.f32.mrb[0].mxu0
    %2445 = vmatprep.mubr.f32.mxu0 0.0
    %2446 = vmatmul.mubr.f32.gmra.mrb[0].mxu0 %v2324
    %v2447 = vpop.f32.mrb[0].mxu0
    %v2448 = vadd.f32 0.0, %v2447
    %v2449 = vpop.f32.mrb[0].mxu0
    %2450 = vmatprep.mubr.f32.mxu0 0.0
    %2451 = vmatmul.mubr.f32.gmra.mrb[0].mxu0 %v2327
    %v2452 = vpop.f32.mrb[0].mxu0
    %v2453 = vadd.f32 0.0, %v2452
    %v2454 = vpop.f32.mrb[0].mxu0
    %2455 = vmatprep.mubr.f32.mxu0 0.0
    %2456 = vmatmul.mubr.f32.gmra.mrb[0].mxu0 %v2330
    %v2457 = vpop.f32.mrb[0].mxu0
    %v2458 = vadd.f32 0.0, %v2457
    %v2459 = vpop.f32.mrb[0].mxu0
    %2460 = vmatprep.mubr.f32.mxu0 0.0
    %2461 = vmatmul.mubr.f32.gmra.mrb[0].mxu0 %v2333
    %v2462 = vpop.f32.mrb[0].mxu0
    %v2463 = vadd.f32 0.0, %v2462
    %v2464 = vpop.f32.mrb[0].mxu0
    %2465 = vmatprep.mubr.f32.mxu0 0.0
    %2466 = vmatmul.mubr.f32.gmra.mrb[0].mxu0 %v2336
    %v2467 = vpop.f32.mrb[0].mxu0
    %v2468 = vadd.f32 0.0, %v2467
    %v2469 = vpop.f32.mrb[0].mxu0
    %2470 = vmatprep.mubr.f32.mxu0 0.0
    %2471 = vmatmul.mubr.f32.gmra.mrb[0].mxu0 %v2339
    %v2472 = vpop.f32.mrb[0].mxu0
    %v2473 = vadd.f32 0.0, %v2472
    %v2474 = vpop.f32.mrb[0].mxu0
    %2475 = vmatprep.mubr.f32.mxu0 0.0
    %2476 = vmatmul.mubr.f32.gmra.mrb[0].mxu0 %v2342
    %v2477 = vpop.f32.mrb[0].mxu0
    %v2478 = vadd.f32 0.0, %v2477
    %v2479 = vpop.f32.mrb[0].mxu0
    %2480 = vmatprep.mubr.f32.mxu0 0.0
    %2481 = vmatmul.mubr.f32.gmra.mrb[0].mxu0 %v2345
    %v2482 = vpop.f32.mrb[0].mxu0
    %v2483 = vadd.f32 0.0, %v2482
    %v2484 = vpop.f32.mrb[0].mxu0
    %2485 = vmatprep.mubr.f32.mxu0 0.0
    %2486 = vmatmul.mubr.f32.gmra.mrb[0].mxu0 %v2348
    %v2487 = vpop.f32.mrb[0].mxu0
    %v2488 = vadd.f32 0.0, %v2487
    %v2489 = vpop.f32.mrb[0].mxu0
    %2490 = vmatprep.mubr.f32.mxu0 0.0
    %2491 = vmatmul.mubr.f32.gmra.mrb[0].mxu0 %v2351
    %v2492 = vpop.f32.mrb[0].mxu0
    %v2493 = vadd.f32 0.0, %v2492
    %v2494 = vpop.f32.mrb[0].mxu0
    %2495 = vmatprep.mubr.f32.mxu0 0.0
    %2496 = vmatmul.mubr.f32.gmra.mrb[0].mxu0 %v2354
    %v2497 = vpop.f32.mrb[0].mxu0
    %v2498 = vadd.f32 0.0, %v2497
    %v2499 = vpop.f32.mrb[0].mxu0
    %2500 = vdwg.mxu0
    %v2501 = vadd.f32 %v2266, %v2423
    %v2502 = vadd.f32 %v2267, %v2428
    %v2503 = vadd.f32 %v2268, %v2433
    %v2504 = vadd.f32 %v2269, %v2438
    %v2505 = vadd.f32 %v2270, %v2443
    %v2506 = vadd.f32 %v2271, %v2448
    %v2507 = vadd.f32 %v2272, %v2453
    %v2508 = vadd.f32 %v2273, %v2458
    %v2509 = vadd.f32 %v2274, %v2463
    %v2510 = vadd.f32 %v2275, %v2468
    %v2511 = vadd.f32 %v2276, %v2473
    %v2512 = vadd.f32 %v2277, %v2478
    %v2513 = vadd.f32 %v2278, %v2483
    %v2514 = vadd.f32 %v2279, %v2488
    %v2515 = vadd.f32 %v2280, %v2493
    %v2516 = vadd.f32 %v2281, %v2498
    %v2517 = vld [vmem:[%s2282 + $0x1] sm:$0xff]
    %v2518 = vld [vmem:[%s2282 + $0x11] sm:$0xff]
    %v2519 = vld [vmem:[%s2282 + $0x21] sm:$0xff]
    %v2520 = vld [vmem:[%s2282 + $0x31] sm:$0xff]
    %v2521 = vld [vmem:[%s2282 + $0x41] sm:$0xff]
    %v2522 = vld [vmem:[%s2282 + $0x51] sm:$0xff]
    %v2523 = vld [vmem:[%s2282 + $0x61] sm:$0xff]
    %v2524 = vld [vmem:[%s2282 + $0x71] sm:$0xff]
    %v2525 = vld [vmem:[%s2282 + $0xa1] sm:$0xff]
    %v2526 = vld [vmem:[%s2282 + $0xb1] sm:$0xff]
    %v2527 = vld [vmem:[%s2282 + $0xc1] sm:$0xff]
    %v2528 = vld [vmem:[%s2282 + $0xd1] sm:$0xff]
    %v2529 = vld [vmem:[%s2282 + $0xe1] sm:$0xff]
    %v2530 = vld [vmem:[%s2282 + $0xf1] sm:$0xff]
    %v2531 = vld [vmem:[%s2282 + $0x101] sm:$0xff]
    %v2532 = vld [vmem:[%s2282 + $0x111] sm:$0xff]
    %s2533 = scalar_lea.vmem %s3, 448
    %v2534 = vld [vmem:[%s2533] sm:$0xff]
    %v2535 = vld [vmem:[%s2533 + $0x8] sm:$0xff]
    %v2536 = vld [vmem:[%s2533 + $0x10] sm:$0xff]
    %v2537 = vld [vmem:[%s2533 + $0x18] sm:$0xff]
    %v2538 = vld [vmem:[%s2533 + $0x20] sm:$0xff]
    %v2539 = vld [vmem:[%s2533 + $0x28] sm:$0xff]
    %v2540 = vld [vmem:[%s2533 + $0x30] sm:$0xff]
    %v2541 = vld [vmem:[%s2533 + $0x38] sm:$0xff]
    %v2543 = vsel %vm21, %v2517, 0
    %v2546 = vsel %vm21, %v2518, 0
    %v2549 = vsel %vm21, %v2519, 0
    %v2552 = vsel %vm21, %v2520, 0
    %v2555 = vsel %vm21, %v2521, 0
    %v2558 = vsel %vm21, %v2522, 0
    %v2561 = vsel %vm21, %v2523, 0
    %v2564 = vsel %vm21, %v2524, 0
    %v2567 = vsel %vm21, %v2525, 0
    %v2570 = vsel %vm21, %v2526, 0
    %v2573 = vsel %vm21, %v2527, 0
    %v2576 = vsel %vm21, %v2528, 0
    %v2579 = vsel %vm21, %v2529, 0
    %v2582 = vsel %vm21, %v2530, 0
    %v2585 = vsel %vm21, %v2531, 0
    %v2588 = vsel %vm21, %v2532, 0
    %2590 = vmatprep.subr.mxu0 0.0
    %2591 = vmatpush1.msra.mxu0 %v2534
    %2592 = vmatprep.subr.mxu0 0.0
    %2593 = vmatpush1.msra.mxu0 %v2535
    %2594 = vmatprep.subr.mxu0 0.0
    %2595 = vmatpush1.msra.mxu0 %v2536
    %2596 = vmatprep.subr.mxu0 0.0
    %2597 = vmatpush1.msra.mxu0 %v2537
    %2598 = vmatprep.subr.mxu0 0.0
    %2599 = vmatpush1.msra.mxu0 %v2538
    %2600 = vmatprep.subr.mxu0 0.0
    %2601 = vmatpush1.msra.mxu0 %v2539
    %2602 = vmatprep.subr.mxu0 0.0
    %2603 = vmatpush1.msra.mxu0 %v2540
    %2604 = vmatprep.subr.mxu0 0.0
    %2605 = vmatpush1.msra.mxu0 %v2541
    %2606 = vmatprep.subr.mxu0 0.0
    %2607 = vmatpush1.msra.mxu0 0.0
    %2608 = vmatprep.subr.mxu0 0.0
    %2609 = vmatpush1.msra.mxu0 0.0
    %2610 = vmatprep.subr.mxu0 0.0
    %2611 = vmatpush1.msra.mxu0 0.0
    %2612 = vmatprep.subr.mxu0 0.0
    %2613 = vmatpush1.msra.mxu0 0.0
    %2614 = vmatprep.subr.mxu0 0.0
    %2615 = vmatpush1.msra.mxu0 0.0
    %2616 = vmatprep.subr.mxu0 0.0
    %2617 = vmatpush1.msra.mxu0 0.0
    %2618 = vmatprep.subr.mxu0 0.0
    %2619 = vmatpush1.msra.mxu0 0.0
    %2620 = vmatprep.subr.mxu0 0.0
    %2621 = vmatpush1.msra.mxu0 0.0
    %2622 = vmatprep.subr.mxu0 0.0
    %2623 = vmatpush1.msra.mxu0 0.0
    %2624 = vmatprep.subr.mxu0 0.0
    %2625 = vmatpush1.msra.mxu0 0.0
    %2626 = vmatprep.subr.mxu0 0.0
    %2627 = vmatpush1.msra.mxu0 0.0
    %2628 = vmatprep.subr.mxu0 0.0
    %2629 = vmatpush1.msra.mxu0 0.0
    %2630 = vmatprep.subr.mxu0 0.0
    %2631 = vmatpush1.msra.mxu0 0.0
    %2632 = vmatprep.subr.mxu0 0.0
    %2633 = vmatpush1.msra.mxu0 0.0
    %2634 = vmatprep.subr.mxu0 0.0
    %2635 = vmatpush1.msra.mxu0 0.0
    %2636 = vmatprep.subr.mxu0 0.0
    %2637 = vmatpush1.msra.mxu0 0.0
    %2638 = vmatprep.subr.mxu0 0.0
    %2639 = vmatpush1.msra.mxu0 0.0
    %2640 = vmatprep.subr.mxu0 0.0
    %2641 = vmatpush1.msra.mxu0 0.0
    %2642 = vmatprep.subr.mxu0 0.0
    %2643 = vmatpush1.msra.mxu0 0.0
    %2644 = vmatprep.subr.mxu0 0.0
    %2645 = vmatpush1.msra.mxu0 0.0
    %2646 = vmatprep.subr.mxu0 0.0
    %2647 = vmatpush1.msra.mxu0 0.0
    %2648 = vmatprep.subr.mxu0 0.0
    %2649 = vmatpush1.msra.mxu0 0.0
    %2650 = vmatprep.subr.mxu0 0.0
    %2651 = vmatpush1.msra.mxu0 0.0
    %2652 = vmatprep.subr.mxu0 0.0
    %2653 = vmatpush1.msra.mxu0 0.0
    %2654 = vmatprep.mubr.f32.mxu0 0.0
    %2655 = vmatmul.mubr.f32.gmra.mrb[0].mxu0 %v2543
    %v2656 = vpop.f32.mrb[0].mxu0
    %v2657 = vadd.f32 0.0, %v2656
    %v2658 = vpop.f32.mrb[0].mxu0
    %2659 = vmatprep.mubr.f32.mxu0 0.0
    %2660 = vmatmul.mubr.f32.gmra.mrb[0].mxu0 %v2546
    %v2661 = vpop.f32.mrb[0].mxu0
    %v2662 = vadd.f32 0.0, %v2661
    %v2663 = vpop.f32.mrb[0].mxu0
    %2664 = vmatprep.mubr.f32.mxu0 0.0
    %2665 = vmatmul.mubr.f32.gmra.mrb[0].mxu0 %v2549
    %v2666 = vpop.f32.mrb[0].mxu0
    %v2667 = vadd.f32 0.0, %v2666
    %v2668 = vpop.f32.mrb[0].mxu0
    %2669 = vmatprep.mubr.f32.mxu0 0.0
    %2670 = vmatmul.mubr.f32.gmra.mrb[0].mxu0 %v2552
    %v2671 = vpop.f32.mrb[0].mxu0
    %v2672 = vadd.f32 0.0, %v2671
    %v2673 = vpop.f32.mrb[0].mxu0
    %2674 = vmatprep.mubr.f32.mxu0 0.0
    %2675 = vmatmul.mubr.f32.gmra.mrb[0].mxu0 %v2555
    %v2676 = vpop.f32.mrb[0].mxu0
    %v2677 = vadd.f32 0.0, %v2676
    %v2678 = vpop.f32.mrb[0].mxu0
    %2679 = vmatprep.mubr.f32.mxu0 0.0
    %2680 = vmatmul.mubr.f32.gmra.mrb[0].mxu0 %v2558
    %v2681 = vpop.f32.mrb[0].mxu0
    %v2682 = vadd.f32 0.0, %v2681
    %v2683 = vpop.f32.mrb[0].mxu0
    %2684 = vmatprep.mubr.f32.mxu0 0.0
    %2685 = vmatmul.mubr.f32.gmra.mrb[0].mxu0 %v2561
    %v2686 = vpop.f32.mrb[0].mxu0
    %v2687 = vadd.f32 0.0, %v2686
    %v2688 = vpop.f32.mrb[0].mxu0
    %2689 = vmatprep.mubr.f32.mxu0 0.0
    %2690 = vmatmul.mubr.f32.gmra.mrb[0].mxu0 %v2564
    %v2691 = vpop.f32.mrb[0].mxu0
    %v2692 = vadd.f32 0.0, %v2691
    %v2693 = vpop.f32.mrb[0].mxu0
    %2694 = vmatprep.mubr.f32.mxu0 0.0
    %2695 = vmatmul.mubr.f32.gmra.mrb[0].mxu0 %v2567
    %v2696 = vpop.f32.mrb[0].mxu0
    %v2697 = vadd.f32 0.0, %v2696
    %v2698 = vpop.f32.mrb[0].mxu0
    %2699 = vmatprep.mubr.f32.mxu0 0.0
    %2700 = vmatmul.mubr.f32.gmra.mrb[0].mxu0 %v2570
    %v2701 = vpop.f32.mrb[0].mxu0
    %v2702 = vadd.f32 0.0, %v2701
    %v2703 = vpop.f32.mrb[0].mxu0
    %2704 = vmatprep.mubr.f32.mxu0 0.0
    %2705 = vmatmul.mubr.f32.gmra.mrb[0].mxu0 %v2573
    %v2706 = vpop.f32.mrb[0].mxu0
    %v2707 = vadd.f32 0.0, %v2706
    %v2708 = vpop.f32.mrb[0].mxu0
    %2709 = vmatprep.mubr.f32.mxu0 0.0
    %2710 = vmatmul.mubr.f32.gmra.mrb[0].mxu0 %v2576
    %v2711 = vpop.f32.mrb[0].mxu0
    %v2712 = vadd.f32 0.0, %v2711
    %v2713 = vpop.f32.mrb[0].mxu0
    %2714 = vmatprep.mubr.f32.mxu0 0.0
    %2715 = vmatmul.mubr.f32.gmra.mrb[0].mxu0 %v2579
    %v2716 = vpop.f32.mrb[0].mxu0
    %v2717 = vadd.f32 0.0, %v2716
    %v2718 = vpop.f32.mrb[0].mxu0
    %2719 = vmatprep.mubr.f32.mxu0 0.0
    %2720 = vmatmul.mubr.f32.gmra.mrb[0].mxu0 %v2582
    %v2721 = vpop.f32.mrb[0].mxu0
    %v2722 = vadd.f32 0.0, %v2721
    %v2723 = vpop.f32.mrb[0].mxu0
    %2724 = vmatprep.mubr.f32.mxu0 0.0
    %2725 = vmatmul.mubr.f32.gmra.mrb[0].mxu0 %v2585
    %v2726 = vpop.f32.mrb[0].mxu0
    %v2727 = vadd.f32 0.0, %v2726
    %v2728 = vpop.f32.mrb[0].mxu0
    %2729 = vmatprep.mubr.f32.mxu0 0.0
    %2730 = vmatmul.mubr.f32.gmra.mrb[0].mxu0 %v2588
    %v2731 = vpop.f32.mrb[0].mxu0
    %v2732 = vadd.f32 0.0, %v2731
    %v2733 = vpop.f32.mrb[0].mxu0
    %2734 = vdwg.mxu0
    %v2735 = vadd.f32 %v2501, %v2657
    %v2736 = vadd.f32 %v2502, %v2662
    %v2737 = vadd.f32 %v2503, %v2667
    %v2738 = vadd.f32 %v2504, %v2672
    %v2739 = vadd.f32 %v2505, %v2677
    %v2740 = vadd.f32 %v2506, %v2682
    %v2741 = vadd.f32 %v2507, %v2687
    %v2742 = vadd.f32 %v2508, %v2692
    %v2743 = vadd.f32 %v2509, %v2697
    %v2744 = vadd.f32 %v2510, %v2702
    %v2745 = vadd.f32 %v2511, %v2707
    %v2746 = vadd.f32 %v2512, %v2712
    %v2747 = vadd.f32 %v2513, %v2717
    %v2748 = vadd.f32 %v2514, %v2722
    %v2749 = vadd.f32 %v2515, %v2727
    %v2750 = vadd.f32 %v2516, %v2732
    %v2751 = vld [vmem:[%s2282 + $0x2] sm:$0xff]
    %v2752 = vld [vmem:[%s2282 + $0x12] sm:$0xff]
    %v2753 = vld [vmem:[%s2282 + $0x22] sm:$0xff]
    %v2754 = vld [vmem:[%s2282 + $0x32] sm:$0xff]
    %v2755 = vld [vmem:[%s2282 + $0x42] sm:$0xff]
    %v2756 = vld [vmem:[%s2282 + $0x52] sm:$0xff]
    %v2757 = vld [vmem:[%s2282 + $0x62] sm:$0xff]
    %v2758 = vld [vmem:[%s2282 + $0x72] sm:$0xff]
    %v2759 = vld [vmem:[%s2282 + $0xa2] sm:$0xff]
    %v2760 = vld [vmem:[%s2282 + $0xb2] sm:$0xff]
    %v2761 = vld [vmem:[%s2282 + $0xc2] sm:$0xff]
    %v2762 = vld [vmem:[%s2282 + $0xd2] sm:$0xff]
    %v2763 = vld [vmem:[%s2282 + $0xe2] sm:$0xff]
    %v2764 = vld [vmem:[%s2282 + $0xf2] sm:$0xff]
    %v2765 = vld [vmem:[%s2282 + $0x102] sm:$0xff]
    %v2766 = vld [vmem:[%s2282 + $0x112] sm:$0xff]
    %s2767 = scalar_lea.vmem %s3, 512
    %v2768 = vld [vmem:[%s2767] sm:$0xff]
    %v2769 = vld [vmem:[%s2767 + $0x8] sm:$0xff]
    %v2770 = vld [vmem:[%s2767 + $0x10] sm:$0xff]
    %v2771 = vld [vmem:[%s2767 + $0x18] sm:$0xff]
    %v2772 = vld [vmem:[%s2767 + $0x20] sm:$0xff]
    %v2773 = vld [vmem:[%s2767 + $0x28] sm:$0xff]
    %v2774 = vld [vmem:[%s2767 + $0x30] sm:$0xff]
    %v2775 = vld [vmem:[%s2767 + $0x38] sm:$0xff]
    %v2777 = vsel %vm21, %v2751, 0
    %v2780 = vsel %vm21, %v2752, 0
    %v2783 = vsel %vm21, %v2753, 0
    %v2786 = vsel %vm21, %v2754, 0
    %v2789 = vsel %vm21, %v2755, 0
    %v2792 = vsel %vm21, %v2756, 0
    %v2795 = vsel %vm21, %v2757, 0
    %v2798 = vsel %vm21, %v2758, 0
    %v2801 = vsel %vm21, %v2759, 0
    %v2804 = vsel %vm21, %v2760, 0
    %v2807 = vsel %vm21, %v2761, 0
    %v2810 = vsel %vm21, %v2762, 0
    %v2813 = vsel %vm21, %v2763, 0
    %v2816 = vsel %vm21, %v2764, 0
    %v2819 = vsel %vm21, %v2765, 0
    %v2822 = vsel %vm21, %v2766, 0
    %2824 = vmatprep.subr.mxu0 0.0
    %2825 = vmatpush1.msra.mxu0 %v2768
    %2826 = vmatprep.subr.mxu0 0.0
    %2827 = vmatpush1.msra.mxu0 %v2769
    %2828 = vmatprep.subr.mxu0 0.0
    %2829 = vmatpush1.msra.mxu0 %v2770
    %2830 = vmatprep.subr.mxu0 0.0
    %2831 = vmatpush1.msra.mxu0 %v2771
    %2832 = vmatprep.subr.mxu0 0.0
    %2833 = vmatpush1.msra.mxu0 %v2772
    %2834 = vmatprep.subr.mxu0 0.0
    %2835 = vmatpush1.msra.mxu0 %v2773
    %2836 = vmatprep.subr.mxu0 0.0
    %2837 = vmatpush1.msra.mxu0 %v2774
    %2838 = vmatprep.subr.mxu0 0.0
    %2839 = vmatpush1.msra.mxu0 %v2775
    %2840 = vmatprep.subr.mxu0 0.0
    %2841 = vmatpush1.msra.mxu0 0.0
    %2842 = vmatprep.subr.mxu0 0.0
    %2843 = vmatpush1.msra.mxu0 0.0
    %2844 = vmatprep.subr.mxu0 0.0
    %2845 = vmatpush1.msra.mxu0 0.0
    %2846 = vmatprep.subr.mxu0 0.0
    %2847 = vmatpush1.msra.mxu0 0.0
    %2848 = vmatprep.subr.mxu0 0.0
    %2849 = vmatpush1.msra.mxu0 0.0
    %2850 = vmatprep.subr.mxu0 0.0
    %2851 = vmatpush1.msra.mxu0 0.0
    %2852 = vmatprep.subr.mxu0 0.0
    %2853 = vmatpush1.msra.mxu0 0.0
    %2854 = vmatprep.subr.mxu0 0.0
    %2855 = vmatpush1.msra.mxu0 0.0
    %2856 = vmatprep.subr.mxu0 0.0
    %2857 = vmatpush1.msra.mxu0 0.0
    %2858 = vmatprep.subr.mxu0 0.0
    %2859 = vmatpush1.msra.mxu0 0.0
    %2860 = vmatprep.subr.mxu0 0.0
    %2861 = vmatpush1.msra.mxu0 0.0
    %2862 = vmatprep.subr.mxu0 0.0
    %2863 = vmatpush1.msra.mxu0 0.0
    %2864 = vmatprep.subr.mxu0 0.0
    %2865 = vmatpush1.msra.mxu0 0.0
    %2866 = vmatprep.subr.mxu0 0.0
    %2867 = vmatpush1.msra.mxu0 0.0
    %2868 = vmatprep.subr.mxu0 0.0
    %2869 = vmatpush1.msra.mxu0 0.0
    %2870 = vmatprep.subr.mxu0 0.0
    %2871 = vmatpush1.msra.mxu0 0.0
    %2872 = vmatprep.subr.mxu0 0.0
    %2873 = vmatpush1.msra.mxu0 0.0
    %2874 = vmatprep.subr.mxu0 0.0
    %2875 = vmatpush1.msra.mxu0 0.0
    %2876 = vmatprep.subr.mxu0 0.0
    %2877 = vmatpush1.msra.mxu0 0.0
    %2878 = vmatprep.subr.mxu0 0.0
    %2879 = vmatpush1.msra.mxu0 0.0
    %2880 = vmatprep.subr.mxu0 0.0
    %2881 = vmatpush1.msra.mxu0 0.0
    %2882 = vmatprep.subr.mxu0 0.0
    %2883 = vmatpush1.msra.mxu0 0.0
    %2884 = vmatprep.subr.mxu0 0.0
    %2885 = vmatpush1.msra.mxu0 0.0
    %2886 = vmatprep.subr.mxu0 0.0
    %2887 = vmatpush1.msra.mxu0 0.0
    %2888 = vmatprep.mubr.f32.mxu0 0.0
    %2889 = vmatmul.mubr.f32.gmra.mrb[0].mxu0 %v2777
    %v2890 = vpop.f32.mrb[0].mxu0
    %v2891 = vadd.f32 0.0, %v2890
    %v2892 = vpop.f32.mrb[0].mxu0
    %2893 = vmatprep.mubr.f32.mxu0 0.0
    %2894 = vmatmul.mubr.f32.gmra.mrb[0].mxu0 %v2780
    %v2895 = vpop.f32.mrb[0].mxu0
    %v2896 = vadd.f32 0.0, %v2895
    %v2897 = vpop.f32.mrb[0].mxu0
    %2898 = vmatprep.mubr.f32.mxu0 0.0
    %2899 = vmatmul.mubr.f32.gmra.mrb[0].mxu0 %v2783
    %v2900 = vpop.f32.mrb[0].mxu0
    %v2901 = vadd.f32 0.0, %v2900
    %v2902 = vpop.f32.mrb[0].mxu0
    %2903 = vmatprep.mubr.f32.mxu0 0.0
    %2904 = vmatmul.mubr.f32.gmra.mrb[0].mxu0 %v2786
    %v2905 = vpop.f32.mrb[0].mxu0
    %v2906 = vadd.f32 0.0, %v2905
    %v2907 = vpop.f32.mrb[0].mxu0
    %2908 = vmatprep.mubr.f32.mxu0 0.0
    %2909 = vmatmul.mubr.f32.gmra.mrb[0].mxu0 %v2789
    %v2910 = vpop.f32.mrb[0].mxu0
    %v2911 = vadd.f32 0.0, %v2910
    %v2912 = vpop.f32.mrb[0].mxu0
    %2913 = vmatprep.mubr.f32.mxu0 0.0
    %2914 = vmatmul.mubr.f32.gmra.mrb[0].mxu0 %v2792
    %v2915 = vpop.f32.mrb[0].mxu0
    %v2916 = vadd.f32 0.0, %v2915
    %v2917 = vpop.f32.mrb[0].mxu0
    %2918 = vmatprep.mubr.f32.mxu0 0.0
    %2919 = vmatmul.mubr.f32.gmra.mrb[0].mxu0 %v2795
    %v2920 = vpop.f32.mrb[0].mxu0
    %v2921 = vadd.f32 0.0, %v2920
    %v2922 = vpop.f32.mrb[0].mxu0
    %2923 = vmatprep.mubr.f32.mxu0 0.0
    %2924 = vmatmul.mubr.f32.gmra.mrb[0].mxu0 %v2798
    %v2925 = vpop.f32.mrb[0].mxu0
    %v2926 = vadd.f32 0.0, %v2925
    %v2927 = vpop.f32.mrb[0].mxu0
    %2928 = vmatprep.mubr.f32.mxu0 0.0
    %2929 = vmatmul.mubr.f32.gmra.mrb[0].mxu0 %v2801
    %v2930 = vpop.f32.mrb[0].mxu0
    %v2931 = vadd.f32 0.0, %v2930
    %v2932 = vpop.f32.mrb[0].mxu0
    %2933 = vmatprep.mubr.f32.mxu0 0.0
    %2934 = vmatmul.mubr.f32.gmra.mrb[0].mxu0 %v2804
    %v2935 = vpop.f32.mrb[0].mxu0
    %v2936 = vadd.f32 0.0, %v2935
    %v2937 = vpop.f32.mrb[0].mxu0
    %2938 = vmatprep.mubr.f32.mxu0 0.0
    %2939 = vmatmul.mubr.f32.gmra.mrb[0].mxu0 %v2807
    %v2940 = vpop.f32.mrb[0].mxu0
    %v2941 = vadd.f32 0.0, %v2940
    %v2942 = vpop.f32.mrb[0].mxu0
    %2943 = vmatprep.mubr.f32.mxu0 0.0
    %2944 = vmatmul.mubr.f32.gmra.mrb[0].mxu0 %v2810
    %v2945 = vpop.f32.mrb[0].mxu0
    %v2946 = vadd.f32 0.0, %v2945
    %v2947 = vpop.f32.mrb[0].mxu0
    %2948 = vmatprep.mubr.f32.mxu0 0.0
    %2949 = vmatmul.mubr.f32.gmra.mrb[0].mxu0 %v2813
    %v2950 = vpop.f32.mrb[0].mxu0
    %v2951 = vadd.f32 0.0, %v2950
    %v2952 = vpop.f32.mrb[0].mxu0
    %2953 = vmatprep.mubr.f32.mxu0 0.0
    %2954 = vmatmul.mubr.f32.gmra.mrb[0].mxu0 %v2816
    %v2955 = vpop.f32.mrb[0].mxu0
    %v2956 = vadd.f32 0.0, %v2955
    %v2957 = vpop.f32.mrb[0].mxu0
    %2958 = vmatprep.mubr.f32.mxu0 0.0
    %2959 = vmatmul.mubr.f32.gmra.mrb[0].mxu0 %v2819
    %v2960 = vpop.f32.mrb[0].mxu0
    %v2961 = vadd.f32 0.0, %v2960
    %v2962 = vpop.f32.mrb[0].mxu0
    %2963 = vmatprep.mubr.f32.mxu0 0.0
    %2964 = vmatmul.mubr.f32.gmra.mrb[0].mxu0 %v2822
    %v2965 = vpop.f32.mrb[0].mxu0
    %v2966 = vadd.f32 0.0, %v2965
    %v2967 = vpop.f32.mrb[0].mxu0
    %2968 = vdwg.mxu0
    %v2969 = vadd.f32 %v2735, %v2891
    %v2970 = vadd.f32 %v2736, %v2896
    %v2971 = vadd.f32 %v2737, %v2901
    %v2972 = vadd.f32 %v2738, %v2906
    %v2973 = vadd.f32 %v2739, %v2911
    %v2974 = vadd.f32 %v2740, %v2916
    %v2975 = vadd.f32 %v2741, %v2921
    %v2976 = vadd.f32 %v2742, %v2926
    %v2977 = vadd.f32 %v2743, %v2931
    %v2978 = vadd.f32 %v2744, %v2936
    %v2979 = vadd.f32 %v2745, %v2941
    %v2980 = vadd.f32 %v2746, %v2946
    %v2981 = vadd.f32 %v2747, %v2951
    %v2982 = vadd.f32 %v2748, %v2956
    %v2983 = vadd.f32 %v2749, %v2961
    %v2984 = vadd.f32 %v2750, %v2966
    %v2985 = vld [vmem:[%s4] sm:$0x1]
    %v2987 = vlaneseq
    %v2988 = vshrl.u32 %v2987, 7
    %v2989 = vsub.s32 0, %v2988
    %v2990 = vrot.slane %v2985, %v2989
    %v2992 = vadd.f32 %v2969, %v2990
    %v2993 = vadd.f32 %v2970, %v2990
    %v2994 = vadd.f32 %v2971, %v2990
    %v2995 = vadd.f32 %v2972, %v2990
    %v2996 = vadd.f32 %v2973, %v2990
    %v2997 = vadd.f32 %v2974, %v2990
    %v2998 = vadd.f32 %v2975, %v2990
    %v2999 = vadd.f32 %v2976, %v2990
    %v3000 = vadd.f32 %v2977, %v2990
    %v3001 = vadd.f32 %v2978, %v2990
    %v3002 = vadd.f32 %v2979, %v2990
    %v3003 = vadd.f32 %v2980, %v2990
    %v3004 = vadd.f32 %v2981, %v2990
    %v3005 = vadd.f32 %v2982, %v2990
    %v3006 = vadd.f32 %v2983, %v2990
    %v3007 = vadd.f32 %v2984, %v2990
    %v3008 = vmax.f32 %v2992, 0.0
    %v3009 = vmax.f32 %v2993, 0.0
    %v3010 = vmax.f32 %v2994, 0.0
    %v3011 = vmax.f32 %v2995, 0.0
    %v3012 = vmax.f32 %v2996, 0.0
    %v3013 = vmax.f32 %v2997, 0.0
    %v3014 = vmax.f32 %v2998, 0.0
    %v3015 = vmax.f32 %v2999, 0.0
    %v3016 = vmax.f32 %v3000, 0.0
    %v3017 = vmax.f32 %v3001, 0.0
    %v3018 = vmax.f32 %v3002, 0.0
    %v3019 = vmax.f32 %v3003, 0.0
    %v3020 = vmax.f32 %v3004, 0.0
    %v3021 = vmax.f32 %v3005, 0.0
    %v3022 = vmax.f32 %v3006, 0.0
    %v3023 = vmax.f32 %v3007, 0.0
    %3024 = vst.msk [vmem:[%s894 + $0x1] sm:$0xff] %vm21, %v3008
    %3025 = vst.msk [vmem:[%s894 + $0x11] sm:$0xff] %vm21, %v3009
    %3026 = vst.msk [vmem:[%s894 + $0x21] sm:$0xff] %vm21, %v3010
    %3027 = vst.msk [vmem:[%s894 + $0x31] sm:$0xff] %vm21, %v3011
    %3028 = vst.msk [vmem:[%s894 + $0x41] sm:$0xff] %vm21, %v3012
    %3029 = vst.msk [vmem:[%s894 + $0x51] sm:$0xff] %vm21, %v3013
    %3030 = vst.msk [vmem:[%s894 + $0x61] sm:$0xff] %vm21, %v3014
    %3031 = vst.msk [vmem:[%s894 + $0x71] sm:$0xff] %vm21, %v3015
    %3032 = vst.msk [vmem:[%s894 + $0xa1] sm:$0xff] %vm21, %v3016
    %3033 = vst.msk [vmem:[%s894 + $0xb1] sm:$0xff] %vm21, %v3017
    %3034 = vst.msk [vmem:[%s894 + $0xc1] sm:$0xff] %vm21, %v3018
    %3035 = vst.msk [vmem:[%s894 + $0xd1] sm:$0xff] %vm21, %v3019
    %3036 = vst.msk [vmem:[%s894 + $0xe1] sm:$0xff] %vm21, %v3020
    %3037 = vst.msk [vmem:[%s894 + $0xf1] sm:$0xff] %vm21, %v3021
    %3038 = vst.msk [vmem:[%s894 + $0x101] sm:$0xff] %vm21, %v3022
    %3039 = vst.msk [vmem:[%s894 + $0x111] sm:$0xff] %vm21, %v3023
    %v3040 = vld [vmem:[#allocation2] sm:$0xff]
    %v3041 = vld [vmem:[#allocation2 + $0x10] sm:$0xff]
    %v3042 = vld [vmem:[#allocation2 + $0x20] sm:$0xff]
    %v3043 = vld [vmem:[#allocation2 + $0x30] sm:$0xff]
    %v3044 = vld [vmem:[#allocation2 + $0x40] sm:$0xff]
    %v3045 = vld [vmem:[#allocation2 + $0x50] sm:$0xff]
    %v3046 = vld [vmem:[#allocation2 + $0x60] sm:$0xff]
    %v3047 = vld [vmem:[#allocation2 + $0x70] sm:$0xff]
    %v3048 = vld [vmem:[#allocation2 + $0xa0] sm:$0xff]
    %v3049 = vld [vmem:[#allocation2 + $0xb0] sm:$0xff]
    %v3050 = vld [vmem:[#allocation2 + $0xc0] sm:$0xff]
    %v3051 = vld [vmem:[#allocation2 + $0xd0] sm:$0xff]
    %v3052 = vld [vmem:[#allocation2 + $0xe0] sm:$0xff]
    %v3053 = vld [vmem:[#allocation2 + $0xf0] sm:$0xff]
    %v3054 = vld [vmem:[#allocation2 + $0x100] sm:$0xff]
    %v3055 = vld [vmem:[#allocation2 + $0x110] sm:$0xff]
    %s3056 = scalar_lea.vmem %s3, 576
    %v3057 = vld [vmem:[%s3056] sm:$0xff]
    %v3058 = vld [vmem:[%s3056 + $0x8] sm:$0xff]
    %v3059 = vld [vmem:[%s3056 + $0x10] sm:$0xff]
    %v3060 = vld [vmem:[%s3056 + $0x18] sm:$0xff]
    %v3061 = vld [vmem:[%s3056 + $0x20] sm:$0xff]
    %v3062 = vld [vmem:[%s3056 + $0x28] sm:$0xff]
    %v3063 = vld [vmem:[%s3056 + $0x30] sm:$0xff]
    %v3064 = vld [vmem:[%s3056 + $0x38] sm:$0xff]
    %v3065 = vld [vmem:[#allocation2 + $0x1] sm:$0xff]
    %v3066 = vld [vmem:[#allocation2 + $0x11] sm:$0xff]
    %v3067 = vld [vmem:[#allocation2 + $0x21] sm:$0xff]
    %v3068 = vld [vmem:[#allocation2 + $0x31] sm:$0xff]
    %v3069 = vld [vmem:[#allocation2 + $0x41] sm:$0xff]
    %v3070 = vld [vmem:[#allocation2 + $0x51] sm:$0xff]
    %v3071 = vld [vmem:[#allocation2 + $0x61] sm:$0xff]
    %v3072 = vld [vmem:[#allocation2 + $0x71] sm:$0xff]
    %v3073 = vld [vmem:[#allocation2 + $0xa1] sm:$0xff]
    %v3074 = vld [vmem:[#allocation2 + $0xb1] sm:$0xff]
    %v3075 = vld [vmem:[#allocation2 + $0xc1] sm:$0xff]
    %v3076 = vld [vmem:[#allocation2 + $0xd1] sm:$0xff]
    %v3077 = vld [vmem:[#allocation2 + $0xe1] sm:$0xff]
    %v3078 = vld [vmem:[#allocation2 + $0xf1] sm:$0xff]
    %v3079 = vld [vmem:[#allocation2 + $0x101] sm:$0xff]
    %v3080 = vld [vmem:[#allocation2 + $0x111] sm:$0xff]
    %s3081 = scalar_lea.vmem %s3, 640
    %v3082 = vld [vmem:[%s3081] sm:$0xff]
    %v3083 = vld [vmem:[%s3081 + $0x8] sm:$0xff]
    %v3084 = vld [vmem:[%s3081 + $0x10] sm:$0xff]
    %v3085 = vld [vmem:[%s3081 + $0x18] sm:$0xff]
    %v3086 = vld [vmem:[%s3081 + $0x20] sm:$0xff]
    %v3087 = vld [vmem:[%s3081 + $0x28] sm:$0xff]
    %v3088 = vld [vmem:[%s3081 + $0x30] sm:$0xff]
    %v3089 = vld [vmem:[%s3081 + $0x38] sm:$0xff]
    %v3091 = vsel %vm21, %v3065, 0
    %v3094 = vsel %vm21, %v3066, 0
    %v3097 = vsel %vm21, %v3067, 0
    %v3100 = vsel %vm21, %v3068, 0
    %v3103 = vsel %vm21, %v3069, 0
    %v3106 = vsel %vm21, %v3070, 0
    %v3109 = vsel %vm21, %v3071, 0
    %v3112 = vsel %vm21, %v3072, 0
    %v3115 = vsel %vm21, %v3073, 0
    %v3118 = vsel %vm21, %v3074, 0
    %v3121 = vsel %vm21, %v3075, 0
    %v3124 = vsel %vm21, %v3076, 0
    %v3127 = vsel %vm21, %v3077, 0
    %v3130 = vsel %vm21, %v3078, 0
    %v3133 = vsel %vm21, %v3079, 0
    %v3136 = vsel %vm21, %v3080, 0
    %3138 = vmatprep.subr.mxu0 0.0
    %3139 = vmatpush1.msra.mxu0 %v3082
    %3140 = vmatprep.subr.mxu0 0.0
    %3141 = vmatpush1.msra.mxu0 %v3083
    %3142 = vmatprep.subr.mxu0 0.0
    %3143 = vmatpush1.msra.mxu0 %v3084
    %3144 = vmatprep.subr.mxu0 0.0
    %3145 = vmatpush1.msra.mxu0 %v3085
    %3146 = vmatprep.subr.mxu0 0.0
    %3147 = vmatpush1.msra.mxu0 %v3086
    %3148 = vmatprep.subr.mxu0 0.0
    %3149 = vmatpush1.msra.mxu0 %v3087
    %3150 = vmatprep.subr.mxu0 0.0
    %3151 = vmatpush1.msra.mxu0 %v3088
    %3152 = vmatprep.subr.mxu0 0.0
    %3153 = vmatpush1.msra.mxu0 %v3089
    %3154 = vmatprep.subr.mxu0 0.0
    %3155 = vmatpush1.msra.mxu0 0.0
    %3156 = vmatprep.subr.mxu0 0.0
    %3157 = vmatpush1.msra.mxu0 0.0
    %3158 = vmatprep.subr.mxu0 0.0
    %3159 = vmatpush1.msra.mxu0 0.0
    %3160 = vmatprep.subr.mxu0 0.0
    %3161 = vmatpush1.msra.mxu0 0.0
    %3162 = vmatprep.subr.mxu0 0.0
    %3163 = vmatpush1.msra.mxu0 0.0
    %3164 = vmatprep.subr.mxu0 0.0
    %3165 = vmatpush1.msra.mxu0 0.0
    %3166 = vmatprep.subr.mxu0 0.0
    %3167 = vmatpush1.msra.mxu0 0.0
    %3168 = vmatprep.subr.mxu0 0.0
    %3169 = vmatpush1.msra.mxu0 0.0
    %3170 = vmatprep.subr.mxu0 0.0
    %3171 = vmatpush1.msra.mxu0 0.0
    %3172 = vmatprep.subr.mxu0 0.0
    %3173 = vmatpush1.msra.mxu0 0.0
    %3174 = vmatprep.subr.mxu0 0.0
    %3175 = vmatpush1.msra.mxu0 0.0
    %3176 = vmatprep.subr.mxu0 0.0
    %3177 = vmatpush1.msra.mxu0 0.0
    %3178 = vmatprep.subr.mxu0 0.0
    %3179 = vmatpush1.msra.mxu0 0.0
    %3180 = vmatprep.subr.mxu0 0.0
    %3181 = vmatpush1.msra.mxu0 0.0
    %3182 = vmatprep.subr.mxu0 0.0
    %3183 = vmatpush1.msra.mxu0 0.0
    %3184 = vmatprep.subr.mxu0 0.0
    %3185 = vmatpush1.msra.mxu0 0.0
    %3186 = vmatprep.subr.mxu0 0.0
    %3187 = vmatpush1.msra.mxu0 0.0
    %3188 = vmatprep.subr.mxu0 0.0
    %3189 = vmatpush1.msra.mxu0 0.0
    %3190 = vmatprep.subr.mxu0 0.0
    %3191 = vmatpush1.msra.mxu0 0.0
    %3192 = vmatprep.subr.mxu0 0.0
    %3193 = vmatpush1.msra.mxu0 0.0
    %3194 = vmatprep.subr.mxu0 0.0
    %3195 = vmatpush1.msra.mxu0 0.0
    %3196 = vmatprep.subr.mxu0 0.0
    %3197 = vmatpush1.msra.mxu0 0.0
    %3198 = vmatprep.subr.mxu0 0.0
    %3199 = vmatpush1.msra.mxu0 0.0
    %3200 = vmatprep.subr.mxu0 0.0
    %3201 = vmatpush1.msra.mxu0 0.0
    %3202 = vmatprep.mubr.f32.mxu0 0.0
    %3203 = vmatmul.mubr.f32.gmra.mrb[0].mxu0 %v3091
    %v3204 = vpop.f32.mrb[0].mxu0
    %v3205 = vadd.f32 0.0, %v3204
    %v3206 = vpop.f32.mrb[0].mxu0
    %3207 = vmatprep.mubr.f32.mxu0 0.0
    %3208 = vmatmul.mubr.f32.gmra.mrb[0].mxu0 %v3094
    %v3209 = vpop.f32.mrb[0].mxu0
    %v3210 = vadd.f32 0.0, %v3209
    %v3211 = vpop.f32.mrb[0].mxu0
    %3212 = vmatprep.mubr.f32.mxu0 0.0
    %3213 = vmatmul.mubr.f32.gmra.mrb[0].mxu0 %v3097
    %v3214 = vpop.f32.mrb[0].mxu0
    %v3215 = vadd.f32 0.0, %v3214
    %v3216 = vpop.f32.mrb[0].mxu0
    %3217 = vmatprep.mubr.f32.mxu0 0.0
    %3218 = vmatmul.mubr.f32.gmra.mrb[0].mxu0 %v3100
    %v3219 = vpop.f32.mrb[0].mxu0
    %v3220 = vadd.f32 0.0, %v3219
    %v3221 = vpop.f32.mrb[0].mxu0
    %3222 = vmatprep.mubr.f32.mxu0 0.0
    %3223 = vmatmul.mubr.f32.gmra.mrb[0].mxu0 %v3103
    %v3224 = vpop.f32.mrb[0].mxu0
    %v3225 = vadd.f32 0.0, %v3224
    %v3226 = vpop.f32.mrb[0].mxu0
    %3227 = vmatprep.mubr.f32.mxu0 0.0
    %3228 = vmatmul.mubr.f32.gmra.mrb[0].mxu0 %v3106
    %v3229 = vpop.f32.mrb[0].mxu0
    %v3230 = vadd.f32 0.0, %v3229
    %v3231 = vpop.f32.mrb[0].mxu0
    %3232 = vmatprep.mubr.f32.mxu0 0.0
    %3233 = vmatmul.mubr.f32.gmra.mrb[0].mxu0 %v3109
    %v3234 = vpop.f32.mrb[0].mxu0
    %v3235 = vadd.f32 0.0, %v3234
    %v3236 = vpop.f32.mrb[0].mxu0
    %3237 = vmatprep.mubr.f32.mxu0 0.0
    %3238 = vmatmul.mubr.f32.gmra.mrb[0].mxu0 %v3112
    %v3239 = vpop.f32.mrb[0].mxu0
    %v3240 = vadd.f32 0.0, %v3239
    %v3241 = vpop.f32.mrb[0].mxu0
    %3242 = vmatprep.mubr.f32.mxu0 0.0
    %3243 = vmatmul.mubr.f32.gmra.mrb[0].mxu0 %v3115
    %v3244 = vpop.f32.mrb[0].mxu0
    %v3245 = vadd.f32 0.0, %v3244
    %v3246 = vpop.f32.mrb[0].mxu0
    %3247 = vmatprep.mubr.f32.mxu0 0.0
    %3248 = vmatmul.mubr.f32.gmra.mrb[0].mxu0 %v3118
    %v3249 = vpop.f32.mrb[0].mxu0
    %v3250 = vadd.f32 0.0, %v3249
    %v3251 = vpop.f32.mrb[0].mxu0
    %3252 = vmatprep.mubr.f32.mxu0 0.0
    %3253 = vmatmul.mubr.f32.gmra.mrb[0].mxu0 %v3121
    %v3254 = vpop.f32.mrb[0].mxu0
    %v3255 = vadd.f32 0.0, %v3254
    %v3256 = vpop.f32.mrb[0].mxu0
    %3257 = vmatprep.mubr.f32.mxu0 0.0
    %3258 = vmatmul.mubr.f32.gmra.mrb[0].mxu0 %v3124
    %v3259 = vpop.f32.mrb[0].mxu0
    %v3260 = vadd.f32 0.0, %v3259
    %v3261 = vpop.f32.mrb[0].mxu0
    %3262 = vmatprep.mubr.f32.mxu0 0.0
    %3263 = vmatmul.mubr.f32.gmra.mrb[0].mxu0 %v3127
    %v3264 = vpop.f32.mrb[0].mxu0
    %v3265 = vadd.f32 0.0, %v3264
    %v3266 = vpop.f32.mrb[0].mxu0
    %3267 = vmatprep.mubr.f32.mxu0 0.0
    %3268 = vmatmul.mubr.f32.gmra.mrb[0].mxu0 %v3130
    %v3269 = vpop.f32.mrb[0].mxu0
    %v3270 = vadd.f32 0.0, %v3269
    %v3271 = vpop.f32.mrb[0].mxu0
    %3272 = vmatprep.mubr.f32.mxu0 0.0
    %3273 = vmatmul.mubr.f32.gmra.mrb[0].mxu0 %v3133
    %v3274 = vpop.f32.mrb[0].mxu0
    %v3275 = vadd.f32 0.0, %v3274
    %v3276 = vpop.f32.mrb[0].mxu0
    %3277 = vmatprep.mubr.f32.mxu0 0.0
    %3278 = vmatmul.mubr.f32.gmra.mrb[0].mxu0 %v3136
    %v3279 = vpop.f32.mrb[0].mxu0
    %v3280 = vadd.f32 0.0, %v3279
    %v3281 = vpop.f32.mrb[0].mxu0
    %3282 = vdwg.mxu0
    %v3284 = vsel %vm21, %v3040, 0
    %v3287 = vsel %vm21, %v3041, 0
    %v3290 = vsel %vm21, %v3042, 0
    %v3293 = vsel %vm21, %v3043, 0
    %v3296 = vsel %vm21, %v3044, 0
    %v3299 = vsel %vm21, %v3045, 0
    %v3302 = vsel %vm21, %v3046, 0
    %v3305 = vsel %vm21, %v3047, 0
    %v3308 = vsel %vm21, %v3048, 0
    %v3311 = vsel %vm21, %v3049, 0
    %v3314 = vsel %vm21, %v3050, 0
    %v3317 = vsel %vm21, %v3051, 0
    %v3320 = vsel %vm21, %v3052, 0
    %v3323 = vsel %vm21, %v3053, 0
    %v3326 = vsel %vm21, %v3054, 0
    %v3329 = vsel %vm21, %v3055, 0
    %3331 = vmatprep.subr.mxu0 0.0
    %3332 = vmatpush1.msra.mxu0 %v3057
    %3333 = vmatprep.subr.mxu0 0.0
    %3334 = vmatpush1.msra.mxu0 %v3058
    %3335 = vmatprep.subr.mxu0 0.0
    %3336 = vmatpush1.msra.mxu0 %v3059
    %3337 = vmatprep.subr.mxu0 0.0
    %3338 = vmatpush1.msra.mxu0 %v3060
    %3339 = vmatprep.subr.mxu0 0.0
    %3340 = vmatpush1.msra.mxu0 %v3061
    %3341 = vmatprep.subr.mxu0 0.0
    %3342 = vmatpush1.msra.mxu0 %v3062
    %3343 = vmatprep.subr.mxu0 0.0
    %3344 = vmatpush1.msra.mxu0 %v3063
    %3345 = vmatprep.subr.mxu0 0.0
    %3346 = vmatpush1.msra.mxu0 %v3064
    %3347 = vmatprep.subr.mxu0 0.0
    %3348 = vmatpush1.msra.mxu0 0.0
    %3349 = vmatprep.subr.mxu0 0.0
    %3350 = vmatpush1.msra.mxu0 0.0
    %3351 = vmatprep.subr.mxu0 0.0
    %3352 = vmatpush1.msra.mxu0 0.0
    %3353 = vmatprep.subr.mxu0 0.0
    %3354 = vmatpush1.msra.mxu0 0.0
    %3355 = vmatprep.subr.mxu0 0.0
    %3356 = vmatpush1.msra.mxu0 0.0
    %3357 = vmatprep.subr.mxu0 0.0
    %3358 = vmatpush1.msra.mxu0 0.0
    %3359 = vmatprep.subr.mxu0 0.0
    %3360 = vmatpush1.msra.mxu0 0.0
    %3361 = vmatprep.subr.mxu0 0.0
    %3362 = vmatpush1.msra.mxu0 0.0
    %3363 = vmatprep.subr.mxu0 0.0
    %3364 = vmatpush1.msra.mxu0 0.0
    %3365 = vmatprep.subr.mxu0 0.0
    %3366 = vmatpush1.msra.mxu0 0.0
    %3367 = vmatprep.subr.mxu0 0.0
    %3368 = vmatpush1.msra.mxu0 0.0
    %3369 = vmatprep.subr.mxu0 0.0
    %3370 = vmatpush1.msra.mxu0 0.0
    %3371 = vmatprep.subr.mxu0 0.0
    %3372 = vmatpush1.msra.mxu0 0.0
    %3373 = vmatprep.subr.mxu0 0.0
    %3374 = vmatpush1.msra.mxu0 0.0
    %3375 = vmatprep.subr.mxu0 0.0
    %3376 = vmatpush1.msra.mxu0 0.0
    %3377 = vmatprep.subr.mxu0 0.0
    %3378 = vmatpush1.msra.mxu0 0.0
    %3379 = vmatprep.subr.mxu0 0.0
    %3380 = vmatpush1.msra.mxu0 0.0
    %3381 = vmatprep.subr.mxu0 0.0
    %3382 = vmatpush1.msra.mxu0 0.0
    %3383 = vmatprep.subr.mxu0 0.0
    %3384 = vmatpush1.msra.mxu0 0.0
    %3385 = vmatprep.subr.mxu0 0.0
    %3386 = vmatpush1.msra.mxu0 0.0
    %3387 = vmatprep.subr.mxu0 0.0
    %3388 = vmatpush1.msra.mxu0 0.0
    %3389 = vmatprep.subr.mxu0 0.0
    %3390 = vmatpush1.msra.mxu0 0.0
    %3391 = vmatprep.subr.mxu0 0.0
    %3392 = vmatpush1.msra.mxu0 0.0
    %3393 = vmatprep.subr.mxu0 0.0
    %3394 = vmatpush1.msra.mxu0 0.0
    %3395 = vmatprep.mubr.f32.mxu0 0.0
    %3396 = vmatmul.mubr.f32.gmra.mrb[0].mxu0 %v3284
    %v3397 = vpop.f32.mrb[0].mxu0
    %v3398 = vadd.f32 %v3205, %v3397
    %v3399 = vpop.f32.mrb[0].mxu0
    %3400 = vmatprep.mubr.f32.mxu0 0.0
    %3401 = vmatmul.mubr.f32.gmra.mrb[0].mxu0 %v3287
    %v3402 = vpop.f32.mrb[0].mxu0
    %v3403 = vadd.f32 %v3210, %v3402
    %v3404 = vpop.f32.mrb[0].mxu0
    %3405 = vmatprep.mubr.f32.mxu0 0.0
    %3406 = vmatmul.mubr.f32.gmra.mrb[0].mxu0 %v3290
    %v3407 = vpop.f32.mrb[0].mxu0
    %v3408 = vadd.f32 %v3215, %v3407
    %v3409 = vpop.f32.mrb[0].mxu0
    %3410 = vmatprep.mubr.f32.mxu0 0.0
    %3411 = vmatmul.mubr.f32.gmra.mrb[0].mxu0 %v3293
    %v3412 = vpop.f32.mrb[0].mxu0
    %v3413 = vadd.f32 %v3220, %v3412
    %v3414 = vpop.f32.mrb[0].mxu0
    %3415 = vmatprep.mubr.f32.mxu0 0.0
    %3416 = vmatmul.mubr.f32.gmra.mrb[0].mxu0 %v3296
    %v3417 = vpop.f32.mrb[0].mxu0
    %v3418 = vadd.f32 %v3225, %v3417
    %v3419 = vpop.f32.mrb[0].mxu0
    %3420 = vmatprep.mubr.f32.mxu0 0.0
    %3421 = vmatmul.mubr.f32.gmra.mrb[0].mxu0 %v3299
    %v3422 = vpop.f32.mrb[0].mxu0
    %v3423 = vadd.f32 %v3230, %v3422
    %v3424 = vpop.f32.mrb[0].mxu0
    %3425 = vmatprep.mubr.f32.mxu0 0.0
    %3426 = vmatmul.mubr.f32.gmra.mrb[0].mxu0 %v3302
    %v3427 = vpop.f32.mrb[0].mxu0
    %v3428 = vadd.f32 %v3235, %v3427
    %v3429 = vpop.f32.mrb[0].mxu0
    %3430 = vmatprep.mubr.f32.mxu0 0.0
    %3431 = vmatmul.mubr.f32.gmra.mrb[0].mxu0 %v3305
    %v3432 = vpop.f32.mrb[0].mxu0
    %v3433 = vadd.f32 %v3240, %v3432
    %v3434 = vpop.f32.mrb[0].mxu0
    %3435 = vmatprep.mubr.f32.mxu0 0.0
    %3436 = vmatmul.mubr.f32.gmra.mrb[0].mxu0 %v3308
    %v3437 = vpop.f32.mrb[0].mxu0
    %v3438 = vadd.f32 %v3245, %v3437
    %v3439 = vpop.f32.mrb[0].mxu0
    %3440 = vmatprep.mubr.f32.mxu0 0.0
    %3441 = vmatmul.mubr.f32.gmra.mrb[0].mxu0 %v3311
    %v3442 = vpop.f32.mrb[0].mxu0
    %v3443 = vadd.f32 %v3250, %v3442
    %v3444 = vpop.f32.mrb[0].mxu0
    %3445 = vmatprep.mubr.f32.mxu0 0.0
    %3446 = vmatmul.mubr.f32.gmra.mrb[0].mxu0 %v3314
    %v3447 = vpop.f32.mrb[0].mxu0
    %v3448 = vadd.f32 %v3255, %v3447
    %v3449 = vpop.f32.mrb[0].mxu0
    %3450 = vmatprep.mubr.f32.mxu0 0.0
    %3451 = vmatmul.mubr.f32.gmra.mrb[0].mxu0 %v3317
    %v3452 = vpop.f32.mrb[0].mxu0
    %v3453 = vadd.f32 %v3260, %v3452
    %v3454 = vpop.f32.mrb[0].mxu0
    %3455 = vmatprep.mubr.f32.mxu0 0.0
    %3456 = vmatmul.mubr.f32.gmra.mrb[0].mxu0 %v3320
    %v3457 = vpop.f32.mrb[0].mxu0
    %v3458 = vadd.f32 %v3265, %v3457
    %v3459 = vpop.f32.mrb[0].mxu0
    %3460 = vmatprep.mubr.f32.mxu0 0.0
    %3461 = vmatmul.mubr.f32.gmra.mrb[0].mxu0 %v3323
    %v3462 = vpop.f32.mrb[0].mxu0
    %v3463 = vadd.f32 %v3270, %v3462
    %v3464 = vpop.f32.mrb[0].mxu0
    %3465 = vmatprep.mubr.f32.mxu0 0.0
    %3466 = vmatmul.mubr.f32.gmra.mrb[0].mxu0 %v3326
    %v3467 = vpop.f32.mrb[0].mxu0
    %v3468 = vadd.f32 %v3275, %v3467
    %v3469 = vpop.f32.mrb[0].mxu0
    %3470 = vmatprep.mubr.f32.mxu0 0.0
    %3471 = vmatmul.mubr.f32.gmra.mrb[0].mxu0 %v3329
    %v3472 = vpop.f32.mrb[0].mxu0
    %v3473 = vadd.f32 %v3280, %v3472
    %v3474 = vpop.f32.mrb[0].mxu0
    %3475 = vdwg.mxu0
    %v3476 = vld [vmem:[#allocation2 + $0x2] sm:$0xff]
    %v3477 = vld [vmem:[#allocation2 + $0x12] sm:$0xff]
    %v3478 = vld [vmem:[#allocation2 + $0x22] sm:$0xff]
    %v3479 = vld [vmem:[#allocation2 + $0x32] sm:$0xff]
    %v3480 = vld [vmem:[#allocation2 + $0x42] sm:$0xff]
    %v3481 = vld [vmem:[#allocation2 + $0x52] sm:$0xff]
    %v3482 = vld [vmem:[#allocation2 + $0x62] sm:$0xff]
    %v3483 = vld [vmem:[#allocation2 + $0x72] sm:$0xff]
    %v3484 = vld [vmem:[#allocation2 + $0xa2] sm:$0xff]
    %v3485 = vld [vmem:[#allocation2 + $0xb2] sm:$0xff]
    %v3486 = vld [vmem:[#allocation2 + $0xc2] sm:$0xff]
    %v3487 = vld [vmem:[#allocation2 + $0xd2] sm:$0xff]
    %v3488 = vld [vmem:[#allocation2 + $0xe2] sm:$0xff]
    %v3489 = vld [vmem:[#allocation2 + $0xf2] sm:$0xff]
    %v3490 = vld [vmem:[#allocation2 + $0x102] sm:$0xff]
    %v3491 = vld [vmem:[#allocation2 + $0x112] sm:$0xff]
    %s3492 = scalar_lea.vmem %s3, 704
    %v3493 = vld [vmem:[%s3492] sm:$0xff]
    %v3494 = vld [vmem:[%s3492 + $0x8] sm:$0xff]
    %v3495 = vld [vmem:[%s3492 + $0x10] sm:$0xff]
    %v3496 = vld [vmem:[%s3492 + $0x18] sm:$0xff]
    %v3497 = vld [vmem:[%s3492 + $0x20] sm:$0xff]
    %v3498 = vld [vmem:[%s3492 + $0x28] sm:$0xff]
    %v3499 = vld [vmem:[%s3492 + $0x30] sm:$0xff]
    %v3500 = vld [vmem:[%s3492 + $0x38] sm:$0xff]
    %v3502 = vsel %vm21, %v3476, 0
    %v3505 = vsel %vm21, %v3477, 0
    %v3508 = vsel %vm21, %v3478, 0
    %v3511 = vsel %vm21, %v3479, 0
    %v3514 = vsel %vm21, %v3480, 0
    %v3517 = vsel %vm21, %v3481, 0
    %v3520 = vsel %vm21, %v3482, 0
    %v3523 = vsel %vm21, %v3483, 0
    %v3526 = vsel %vm21, %v3484, 0
    %v3529 = vsel %vm21, %v3485, 0
    %v3532 = vsel %vm21, %v3486, 0
    %v3535 = vsel %vm21, %v3487, 0
    %v3538 = vsel %vm21, %v3488, 0
    %v3541 = vsel %vm21, %v3489, 0
    %v3544 = vsel %vm21, %v3490, 0
    %v3547 = vsel %vm21, %v3491, 0
    %3549 = vmatprep.subr.mxu0 0.0
    %3550 = vmatpush1.msra.mxu0 %v3493
    %3551 = vmatprep.subr.mxu0 0.0
    %3552 = vmatpush1.msra.mxu0 %v3494
    %3553 = vmatprep.subr.mxu0 0.0
    %3554 = vmatpush1.msra.mxu0 %v3495
    %3555 = vmatprep.subr.mxu0 0.0
    %3556 = vmatpush1.msra.mxu0 %v3496
    %3557 = vmatprep.subr.mxu0 0.0
    %3558 = vmatpush1.msra.mxu0 %v3497
    %3559 = vmatprep.subr.mxu0 0.0
    %3560 = vmatpush1.msra.mxu0 %v3498
    %3561 = vmatprep.subr.mxu0 0.0
    %3562 = vmatpush1.msra.mxu0 %v3499
    %3563 = vmatprep.subr.mxu0 0.0
    %3564 = vmatpush1.msra.mxu0 %v3500
    %3565 = vmatprep.subr.mxu0 0.0
    %3566 = vmatpush1.msra.mxu0 0.0
    %3567 = vmatprep.subr.mxu0 0.0
    %3568 = vmatpush1.msra.mxu0 0.0
    %3569 = vmatprep.subr.mxu0 0.0
    %3570 = vmatpush1.msra.mxu0 0.0
    %3571 = vmatprep.subr.mxu0 0.0
    %3572 = vmatpush1.msra.mxu0 0.0
    %3573 = vmatprep.subr.mxu0 0.0
    %3574 = vmatpush1.msra.mxu0 0.0
    %3575 = vmatprep.subr.mxu0 0.0
    %3576 = vmatpush1.msra.mxu0 0.0
    %3577 = vmatprep.subr.mxu0 0.0
    %3578 = vmatpush1.msra.mxu0 0.0
    %3579 = vmatprep.subr.mxu0 0.0
    %3580 = vmatpush1.msra.mxu0 0.0
    %3581 = vmatprep.subr.mxu0 0.0
    %3582 = vmatpush1.msra.mxu0 0.0
    %3583 = vmatprep.subr.mxu0 0.0
    %3584 = vmatpush1.msra.mxu0 0.0
    %3585 = vmatprep.subr.mxu0 0.0
    %3586 = vmatpush1.msra.mxu0 0.0
    %3587 = vmatprep.subr.mxu0 0.0
    %3588 = vmatpush1.msra.mxu0 0.0
    %3589 = vmatprep.subr.mxu0 0.0
    %3590 = vmatpush1.msra.mxu0 0.0
    %3591 = vmatprep.subr.mxu0 0.0
    %3592 = vmatpush1.msra.mxu0 0.0
    %3593 = vmatprep.subr.mxu0 0.0
    %3594 = vmatpush1.msra.mxu0 0.0
    %3595 = vmatprep.subr.mxu0 0.0
    %3596 = vmatpush1.msra.mxu0 0.0
    %3597 = vmatprep.subr.mxu0 0.0
    %3598 = vmatpush1.msra.mxu0 0.0
    %3599 = vmatprep.subr.mxu0 0.0
    %3600 = vmatpush1.msra.mxu0 0.0
    %3601 = vmatprep.subr.mxu0 0.0
    %3602 = vmatpush1.msra.mxu0 0.0
    %3603 = vmatprep.subr.mxu0 0.0
    %3604 = vmatpush1.msra.mxu0 0.0
    %3605 = vmatprep.subr.mxu0 0.0
    %3606 = vmatpush1.msra.mxu0 0.0
    %3607 = vmatprep.subr.mxu0 0.0
    %3608 = vmatpush1.msra.mxu0 0.0
    %3609 = vmatprep.subr.mxu0 0.0
    %3610 = vmatpush1.msra.mxu0 0.0
    %3611 = vmatprep.subr.mxu0 0.0
    %3612 = vmatpush1.msra.mxu0 0.0
    %3613 = vmatprep.mubr.f32.mxu0 0.0
    %3614 = vmatmul.mubr.f32.gmra.mrb[0].mxu0 %v3502
    %v3615 = vpop.f32.mrb[0].mxu0
    %v3616 = vadd.f32 0.0, %v3615
    %v3617 = vpop.f32.mrb[0].mxu0
    %3618 = vmatprep.mubr.f32.mxu0 0.0
    %3619 = vmatmul.mubr.f32.gmra.mrb[0].mxu0 %v3505
    %v3620 = vpop.f32.mrb[0].mxu0
    %v3621 = vadd.f32 0.0, %v3620
    %v3622 = vpop.f32.mrb[0].mxu0
    %3623 = vmatprep.mubr.f32.mxu0 0.0
    %3624 = vmatmul.mubr.f32.gmra.mrb[0].mxu0 %v3508
    %v3625 = vpop.f32.mrb[0].mxu0
    %v3626 = vadd.f32 0.0, %v3625
    %v3627 = vpop.f32.mrb[0].mxu0
    %3628 = vmatprep.mubr.f32.mxu0 0.0
    %3629 = vmatmul.mubr.f32.gmra.mrb[0].mxu0 %v3511
    %v3630 = vpop.f32.mrb[0].mxu0
    %v3631 = vadd.f32 0.0, %v3630
    %v3632 = vpop.f32.mrb[0].mxu0
    %3633 = vmatprep.mubr.f32.mxu0 0.0
    %3634 = vmatmul.mubr.f32.gmra.mrb[0].mxu0 %v3514
    %v3635 = vpop.f32.mrb[0].mxu0
    %v3636 = vadd.f32 0.0, %v3635
    %v3637 = vpop.f32.mrb[0].mxu0
    %3638 = vmatprep.mubr.f32.mxu0 0.0
    %3639 = vmatmul.mubr.f32.gmra.mrb[0].mxu0 %v3517
    %v3640 = vpop.f32.mrb[0].mxu0
    %v3641 = vadd.f32 0.0, %v3640
    %v3642 = vpop.f32.mrb[0].mxu0
    %3643 = vmatprep.mubr.f32.mxu0 0.0
    %3644 = vmatmul.mubr.f32.gmra.mrb[0].mxu0 %v3520
    %v3645 = vpop.f32.mrb[0].mxu0
    %v3646 = vadd.f32 0.0, %v3645
    %v3647 = vpop.f32.mrb[0].mxu0
    %3648 = vmatprep.mubr.f32.mxu0 0.0
    %3649 = vmatmul.mubr.f32.gmra.mrb[0].mxu0 %v3523
    %v3650 = vpop.f32.mrb[0].mxu0
    %v3651 = vadd.f32 0.0, %v3650
    %v3652 = vpop.f32.mrb[0].mxu0
    %3653 = vmatprep.mubr.f32.mxu0 0.0
    %3654 = vmatmul.mubr.f32.gmra.mrb[0].mxu0 %v3526
    %v3655 = vpop.f32.mrb[0].mxu0
    %v3656 = vadd.f32 0.0, %v3655
    %v3657 = vpop.f32.mrb[0].mxu0
    %3658 = vmatprep.mubr.f32.mxu0 0.0
    %3659 = vmatmul.mubr.f32.gmra.mrb[0].mxu0 %v3529
    %v3660 = vpop.f32.mrb[0].mxu0
    %v3661 = vadd.f32 0.0, %v3660
    %v3662 = vpop.f32.mrb[0].mxu0
    %3663 = vmatprep.mubr.f32.mxu0 0.0
    %3664 = vmatmul.mubr.f32.gmra.mrb[0].mxu0 %v3532
    %v3665 = vpop.f32.mrb[0].mxu0
    %v3666 = vadd.f32 0.0, %v3665
    %v3667 = vpop.f32.mrb[0].mxu0
    %3668 = vmatprep.mubr.f32.mxu0 0.0
    %3669 = vmatmul.mubr.f32.gmra.mrb[0].mxu0 %v3535
    %v3670 = vpop.f32.mrb[0].mxu0
    %v3671 = vadd.f32 0.0, %v3670
    %v3672 = vpop.f32.mrb[0].mxu0
    %3673 = vmatprep.mubr.f32.mxu0 0.0
    %3674 = vmatmul.mubr.f32.gmra.mrb[0].mxu0 %v3538
    %v3675 = vpop.f32.mrb[0].mxu0
    %v3676 = vadd.f32 0.0, %v3675
    %v3677 = vpop.f32.mrb[0].mxu0
    %3678 = vmatprep.mubr.f32.mxu0 0.0
    %3679 = vmatmul.mubr.f32.gmra.mrb[0].mxu0 %v3541
    %v3680 = vpop.f32.mrb[0].mxu0
    %v3681 = vadd.f32 0.0, %v3680
    %v3682 = vpop.f32.mrb[0].mxu0
    %3683 = vmatprep.mubr.f32.mxu0 0.0
    %3684 = vmatmul.mubr.f32.gmra.mrb[0].mxu0 %v3544
    %v3685 = vpop.f32.mrb[0].mxu0
    %v3686 = vadd.f32 0.0, %v3685
    %v3687 = vpop.f32.mrb[0].mxu0
    %3688 = vmatprep.mubr.f32.mxu0 0.0
    %3689 = vmatmul.mubr.f32.gmra.mrb[0].mxu0 %v3547
    %v3690 = vpop.f32.mrb[0].mxu0
    %v3691 = vadd.f32 0.0, %v3690
    %v3692 = vpop.f32.mrb[0].mxu0
    %3693 = vdwg.mxu0
    %v3694 = vadd.f32 %v3398, %v3616
    %v3695 = vadd.f32 %v3403, %v3621
    %v3696 = vadd.f32 %v3408, %v3626
    %v3697 = vadd.f32 %v3413, %v3631
    %v3698 = vadd.f32 %v3418, %v3636
    %v3699 = vadd.f32 %v3423, %v3641
    %v3700 = vadd.f32 %v3428, %v3646
    %v3701 = vadd.f32 %v3433, %v3651
    %v3702 = vadd.f32 %v3438, %v3656
    %v3703 = vadd.f32 %v3443, %v3661
    %v3704 = vadd.f32 %v3448, %v3666
    %v3705 = vadd.f32 %v3453, %v3671
    %v3706 = vadd.f32 %v3458, %v3676
    %v3707 = vadd.f32 %v3463, %v3681
    %v3708 = vadd.f32 %v3468, %v3686
    %v3709 = vadd.f32 %v3473, %v3691
    %v3710 = vld [vmem:[%s894] sm:$0xff]
    %v3711 = vld [vmem:[%s894 + $0x10] sm:$0xff]
    %v3712 = vld [vmem:[%s894 + $0x20] sm:$0xff]
    %v3713 = vld [vmem:[%s894 + $0x30] sm:$0xff]
    %v3714 = vld [vmem:[%s894 + $0x40] sm:$0xff]
    %v3715 = vld [vmem:[%s894 + $0x50] sm:$0xff]
    %v3716 = vld [vmem:[%s894 + $0x60] sm:$0xff]
    %v3717 = vld [vmem:[%s894 + $0x70] sm:$0xff]
    %v3718 = vld [vmem:[%s894 + $0xa0] sm:$0xff]
    %v3719 = vld [vmem:[%s894 + $0xb0] sm:$0xff]
    %v3720 = vld [vmem:[%s894 + $0xc0] sm:$0xff]
    %v3721 = vld [vmem:[%s894 + $0xd0] sm:$0xff]
    %v3722 = vld [vmem:[%s894 + $0xe0] sm:$0xff]
    %v3723 = vld [vmem:[%s894 + $0xf0] sm:$0xff]
    %v3724 = vld [vmem:[%s894 + $0x100] sm:$0xff]
    %v3725 = vld [vmem:[%s894 + $0x110] sm:$0xff]
    %s3726 = scalar_lea.vmem %s3, 768
    %v3727 = vld [vmem:[%s3726] sm:$0xff]
    %v3728 = vld [vmem:[%s3726 + $0x8] sm:$0xff]
    %v3729 = vld [vmem:[%s3726 + $0x10] sm:$0xff]
    %v3730 = vld [vmem:[%s3726 + $0x18] sm:$0xff]
    %v3731 = vld [vmem:[%s3726 + $0x20] sm:$0xff]
    %v3732 = vld [vmem:[%s3726 + $0x28] sm:$0xff]
    %v3733 = vld [vmem:[%s3726 + $0x30] sm:$0xff]
    %v3734 = vld [vmem:[%s3726 + $0x38] sm:$0xff]
    %v3736 = vsel %vm21, %v3710, 0
    %v3739 = vsel %vm21, %v3711, 0
    %v3742 = vsel %vm21, %v3712, 0
    %v3745 = vsel %vm21, %v3713, 0
    %v3748 = vsel %vm21, %v3714, 0
    %v3751 = vsel %vm21, %v3715, 0
    %v3754 = vsel %vm21, %v3716, 0
    %v3757 = vsel %vm21, %v3717, 0
    %v3760 = vsel %vm21, %v3718, 0
    %v3763 = vsel %vm21, %v3719, 0
    %v3766 = vsel %vm21, %v3720, 0
    %v3769 = vsel %vm21, %v3721, 0
    %v3772 = vsel %vm21, %v3722, 0
    %v3775 = vsel %vm21, %v3723, 0
    %v3778 = vsel %vm21, %v3724, 0
    %v3781 = vsel %vm21, %v3725, 0
    %3783 = vmatprep.subr.mxu0 0.0
    %3784 = vmatpush1.msra.mxu0 %v3727
    %3785 = vmatprep.subr.mxu0 0.0
    %3786 = vmatpush1.msra.mxu0 %v3728
    %3787 = vmatprep.subr.mxu0 0.0
    %3788 = vmatpush1.msra.mxu0 %v3729
    %3789 = vmatprep.subr.mxu0 0.0
    %3790 = vmatpush1.msra.mxu0 %v3730
    %3791 = vmatprep.subr.mxu0 0.0
    %3792 = vmatpush1.msra.mxu0 %v3731
    %3793 = vmatprep.subr.mxu0 0.0
    %3794 = vmatpush1.msra.mxu0 %v3732
    %3795 = vmatprep.subr.mxu0 0.0
    %3796 = vmatpush1.msra.mxu0 %v3733
    %3797 = vmatprep.subr.mxu0 0.0
    %3798 = vmatpush1.msra.mxu0 %v3734
    %3799 = vmatprep.subr.mxu0 0.0
    %3800 = vmatpush1.msra.mxu0 0.0
    %3801 = vmatprep.subr.mxu0 0.0
    %3802 = vmatpush1.msra.mxu0 0.0
    %3803 = vmatprep.subr.mxu0 0.0
    %3804 = vmatpush1.msra.mxu0 0.0
    %3805 = vmatprep.subr.mxu0 0.0
    %3806 = vmatpush1.msra.mxu0 0.0
    %3807 = vmatprep.subr.mxu0 0.0
    %3808 = vmatpush1.msra.mxu0 0.0
    %3809 = vmatprep.subr.mxu0 0.0
    %3810 = vmatpush1.msra.mxu0 0.0
    %3811 = vmatprep.subr.mxu0 0.0
    %3812 = vmatpush1.msra.mxu0 0.0
    %3813 = vmatprep.subr.mxu0 0.0
    %3814 = vmatpush1.msra.mxu0 0.0
    %3815 = vmatprep.subr.mxu0 0.0
    %3816 = vmatpush1.msra.mxu0 0.0
    %3817 = vmatprep.subr.mxu0 0.0
    %3818 = vmatpush1.msra.mxu0 0.0
    %3819 = vmatprep.subr.mxu0 0.0
    %3820 = vmatpush1.msra.mxu0 0.0
    %3821 = vmatprep.subr.mxu0 0.0
    %3822 = vmatpush1.msra.mxu0 0.0
    %3823 = vmatprep.subr.mxu0 0.0
    %3824 = vmatpush1.msra.mxu0 0.0
    %3825 = vmatprep.subr.mxu0 0.0
    %3826 = vmatpush1.msra.mxu0 0.0
    %3827 = vmatprep.subr.mxu0 0.0
    %3828 = vmatpush1.msra.mxu0 0.0
    %3829 = vmatprep.subr.mxu0 0.0
    %3830 = vmatpush1.msra.mxu0 0.0
    %3831 = vmatprep.subr.mxu0 0.0
    %3832 = vmatpush1.msra.mxu0 0.0
    %3833 = vmatprep.subr.mxu0 0.0
    %3834 = vmatpush1.msra.mxu0 0.0
    %3835 = vmatprep.subr.mxu0 0.0
    %3836 = vmatpush1.msra.mxu0 0.0
    %3837 = vmatprep.subr.mxu0 0.0
    %3838 = vmatpush1.msra.mxu0 0.0
    %3839 = vmatprep.subr.mxu0 0.0
    %3840 = vmatpush1.msra.mxu0 0.0
    %3841 = vmatprep.subr.mxu0 0.0
    %3842 = vmatpush1.msra.mxu0 0.0
    %3843 = vmatprep.subr.mxu0 0.0
    %3844 = vmatpush1.msra.mxu0 0.0
    %3845 = vmatprep.subr.mxu0 0.0
    %3846 = vmatpush1.msra.mxu0 0.0
    %3847 = vmatprep.mubr.f32.mxu0 0.0
    %3848 = vmatmul.mubr.f32.gmra.mrb[0].mxu0 %v3736
    %v3849 = vpop.f32.mrb[0].mxu0
    %v3850 = vadd.f32 0.0, %v3849
    %v3851 = vpop.f32.mrb[0].mxu0
    %3852 = vmatprep.mubr.f32.mxu0 0.0
    %3853 = vmatmul.mubr.f32.gmra.mrb[0].mxu0 %v3739
    %v3854 = vpop.f32.mrb[0].mxu0
    %v3855 = vadd.f32 0.0, %v3854
    %v3856 = vpop.f32.mrb[0].mxu0
    %3857 = vmatprep.mubr.f32.mxu0 0.0
    %3858 = vmatmul.mubr.f32.gmra.mrb[0].mxu0 %v3742
    %v3859 = vpop.f32.mrb[0].mxu0
    %v3860 = vadd.f32 0.0, %v3859
    %v3861 = vpop.f32.mrb[0].mxu0
    %3862 = vmatprep.mubr.f32.mxu0 0.0
    %3863 = vmatmul.mubr.f32.gmra.mrb[0].mxu0 %v3745
    %v3864 = vpop.f32.mrb[0].mxu0
    %v3865 = vadd.f32 0.0, %v3864
    %v3866 = vpop.f32.mrb[0].mxu0
    %3867 = vmatprep.mubr.f32.mxu0 0.0
    %3868 = vmatmul.mubr.f32.gmra.mrb[0].mxu0 %v3748
    %v3869 = vpop.f32.mrb[0].mxu0
    %v3870 = vadd.f32 0.0, %v3869
    %v3871 = vpop.f32.mrb[0].mxu0
    %3872 = vmatprep.mubr.f32.mxu0 0.0
    %3873 = vmatmul.mubr.f32.gmra.mrb[0].mxu0 %v3751
    %v3874 = vpop.f32.mrb[0].mxu0
    %v3875 = vadd.f32 0.0, %v3874
    %v3876 = vpop.f32.mrb[0].mxu0
    %3877 = vmatprep.mubr.f32.mxu0 0.0
    %3878 = vmatmul.mubr.f32.gmra.mrb[0].mxu0 %v3754
    %v3879 = vpop.f32.mrb[0].mxu0
    %v3880 = vadd.f32 0.0, %v3879
    %v3881 = vpop.f32.mrb[0].mxu0
    %3882 = vmatprep.mubr.f32.mxu0 0.0
    %3883 = vmatmul.mubr.f32.gmra.mrb[0].mxu0 %v3757
    %v3884 = vpop.f32.mrb[0].mxu0
    %v3885 = vadd.f32 0.0, %v3884
    %v3886 = vpop.f32.mrb[0].mxu0
    %3887 = vmatprep.mubr.f32.mxu0 0.0
    %3888 = vmatmul.mubr.f32.gmra.mrb[0].mxu0 %v3760
    %v3889 = vpop.f32.mrb[0].mxu0
    %v3890 = vadd.f32 0.0, %v3889
    %v3891 = vpop.f32.mrb[0].mxu0
    %3892 = vmatprep.mubr.f32.mxu0 0.0
    %3893 = vmatmul.mubr.f32.gmra.mrb[0].mxu0 %v3763
    %v3894 = vpop.f32.mrb[0].mxu0
    %v3895 = vadd.f32 0.0, %v3894
    %v3896 = vpop.f32.mrb[0].mxu0
    %3897 = vmatprep.mubr.f32.mxu0 0.0
    %3898 = vmatmul.mubr.f32.gmra.mrb[0].mxu0 %v3766
    %v3899 = vpop.f32.mrb[0].mxu0
    %v3900 = vadd.f32 0.0, %v3899
    %v3901 = vpop.f32.mrb[0].mxu0
    %3902 = vmatprep.mubr.f32.mxu0 0.0
    %3903 = vmatmul.mubr.f32.gmra.mrb[0].mxu0 %v3769
    %v3904 = vpop.f32.mrb[0].mxu0
    %v3905 = vadd.f32 0.0, %v3904
    %v3906 = vpop.f32.mrb[0].mxu0
    %3907 = vmatprep.mubr.f32.mxu0 0.0
    %3908 = vmatmul.mubr.f32.gmra.mrb[0].mxu0 %v3772
    %v3909 = vpop.f32.mrb[0].mxu0
    %v3910 = vadd.f32 0.0, %v3909
    %v3911 = vpop.f32.mrb[0].mxu0
    %3912 = vmatprep.mubr.f32.mxu0 0.0
    %3913 = vmatmul.mubr.f32.gmra.mrb[0].mxu0 %v3775
    %v3914 = vpop.f32.mrb[0].mxu0
    %v3915 = vadd.f32 0.0, %v3914
    %v3916 = vpop.f32.mrb[0].mxu0
    %3917 = vmatprep.mubr.f32.mxu0 0.0
    %3918 = vmatmul.mubr.f32.gmra.mrb[0].mxu0 %v3778
    %v3919 = vpop.f32.mrb[0].mxu0
    %v3920 = vadd.f32 0.0, %v3919
    %v3921 = vpop.f32.mrb[0].mxu0
    %3922 = vmatprep.mubr.f32.mxu0 0.0
    %3923 = vmatmul.mubr.f32.gmra.mrb[0].mxu0 %v3781
    %v3924 = vpop.f32.mrb[0].mxu0
    %v3925 = vadd.f32 0.0, %v3924
    %v3926 = vpop.f32.mrb[0].mxu0
    %3927 = vdwg.mxu0
    %v3928 = vadd.f32 %v3694, %v3850
    %v3929 = vadd.f32 %v3695, %v3855
    %v3930 = vadd.f32 %v3696, %v3860
    %v3931 = vadd.f32 %v3697, %v3865
    %v3932 = vadd.f32 %v3698, %v3870
    %v3933 = vadd.f32 %v3699, %v3875
    %v3934 = vadd.f32 %v3700, %v3880
    %v3935 = vadd.f32 %v3701, %v3885
    %v3936 = vadd.f32 %v3702, %v3890
    %v3937 = vadd.f32 %v3703, %v3895
    %v3938 = vadd.f32 %v3704, %v3900
    %v3939 = vadd.f32 %v3705, %v3905
    %v3940 = vadd.f32 %v3706, %v3910
    %v3941 = vadd.f32 %v3707, %v3915
    %v3942 = vadd.f32 %v3708, %v3920
    %v3943 = vadd.f32 %v3709, %v3925
    %v3944 = vld [vmem:[%s894 + $0x1] sm:$0xff]
    %v3945 = vld [vmem:[%s894 + $0x11] sm:$0xff]
    %v3946 = vld [vmem:[%s894 + $0x21] sm:$0xff]
    %v3947 = vld [vmem:[%s894 + $0x31] sm:$0xff]
    %v3948 = vld [vmem:[%s894 + $0x41] sm:$0xff]
    %v3949 = vld [vmem:[%s894 + $0x51] sm:$0xff]
    %v3950 = vld [vmem:[%s894 + $0x61] sm:$0xff]
    %v3951 = vld [vmem:[%s894 + $0x71] sm:$0xff]
    %v3952 = vld [vmem:[%s894 + $0xa1] sm:$0xff]
    %v3953 = vld [vmem:[%s894 + $0xb1] sm:$0xff]
    %v3954 = vld [vmem:[%s894 + $0xc1] sm:$0xff]
    %v3955 = vld [vmem:[%s894 + $0xd1] sm:$0xff]
    %v3956 = vld [vmem:[%s894 + $0xe1] sm:$0xff]
    %v3957 = vld [vmem:[%s894 + $0xf1] sm:$0xff]
    %v3958 = vld [vmem:[%s894 + $0x101] sm:$0xff]
    %v3959 = vld [vmem:[%s894 + $0x111] sm:$0xff]
    %s3960 = scalar_lea.vmem %s3, 832
    %v3961 = vld [vmem:[%s3960] sm:$0xff]
    %v3962 = vld [vmem:[%s3960 + $0x8] sm:$0xff]
    %v3963 = vld [vmem:[%s3960 + $0x10] sm:$0xff]
    %v3964 = vld [vmem:[%s3960 + $0x18] sm:$0xff]
    %v3965 = vld [vmem:[%s3960 + $0x20] sm:$0xff]
    %v3966 = vld [vmem:[%s3960 + $0x28] sm:$0xff]
    %v3967 = vld [vmem:[%s3960 + $0x30] sm:$0xff]
    %v3968 = vld [vmem:[%s3960 + $0x38] sm:$0xff]
    %v3970 = vsel %vm21, %v3944, 0
    %v3973 = vsel %vm21, %v3945, 0
    %v3976 = vsel %vm21, %v3946, 0
    %v3979 = vsel %vm21, %v3947, 0
    %v3982 = vsel %vm21, %v3948, 0
    %v3985 = vsel %vm21, %v3949, 0
    %v3988 = vsel %vm21, %v3950, 0
    %v3991 = vsel %vm21, %v3951, 0
    %v3994 = vsel %vm21, %v3952, 0
    %v3997 = vsel %vm21, %v3953, 0
    %v4000 = vsel %vm21, %v3954, 0
    %v4003 = vsel %vm21, %v3955, 0
    %v4006 = vsel %vm21, %v3956, 0
    %v4009 = vsel %vm21, %v3957, 0
    %v4012 = vsel %vm21, %v3958, 0
    %v4015 = vsel %vm21, %v3959, 0
    %4017 = vmatprep.subr.mxu0 0.0
    %4018 = vmatpush1.msra.mxu0 %v3961
    %4019 = vmatprep.subr.mxu0 0.0
    %4020 = vmatpush1.msra.mxu0 %v3962
    %4021 = vmatprep.subr.mxu0 0.0
    %4022 = vmatpush1.msra.mxu0 %v3963
    %4023 = vmatprep.subr.mxu0 0.0
    %4024 = vmatpush1.msra.mxu0 %v3964
    %4025 = vmatprep.subr.mxu0 0.0
    %4026 = vmatpush1.msra.mxu0 %v3965
    %4027 = vmatprep.subr.mxu0 0.0
    %4028 = vmatpush1.msra.mxu0 %v3966
    %4029 = vmatprep.subr.mxu0 0.0
    %4030 = vmatpush1.msra.mxu0 %v3967
    %4031 = vmatprep.subr.mxu0 0.0
    %4032 = vmatpush1.msra.mxu0 %v3968
    %4033 = vmatprep.subr.mxu0 0.0
    %4034 = vmatpush1.msra.mxu0 0.0
    %4035 = vmatprep.subr.mxu0 0.0
    %4036 = vmatpush1.msra.mxu0 0.0
    %4037 = vmatprep.subr.mxu0 0.0
    %4038 = vmatpush1.msra.mxu0 0.0
    %4039 = vmatprep.subr.mxu0 0.0
    %4040 = vmatpush1.msra.mxu0 0.0
    %4041 = vmatprep.subr.mxu0 0.0
    %4042 = vmatpush1.msra.mxu0 0.0
    %4043 = vmatprep.subr.mxu0 0.0
    %4044 = vmatpush1.msra.mxu0 0.0
    %4045 = vmatprep.subr.mxu0 0.0
    %4046 = vmatpush1.msra.mxu0 0.0
    %4047 = vmatprep.subr.mxu0 0.0
    %4048 = vmatpush1.msra.mxu0 0.0
    %4049 = vmatprep.subr.mxu0 0.0
    %4050 = vmatpush1.msra.mxu0 0.0
    %4051 = vmatprep.subr.mxu0 0.0
    %4052 = vmatpush1.msra.mxu0 0.0
    %4053 = vmatprep.subr.mxu0 0.0
    %4054 = vmatpush1.msra.mxu0 0.0
    %4055 = vmatprep.subr.mxu0 0.0
    %4056 = vmatpush1.msra.mxu0 0.0
    %4057 = vmatprep.subr.mxu0 0.0
    %4058 = vmatpush1.msra.mxu0 0.0
    %4059 = vmatprep.subr.mxu0 0.0
    %4060 = vmatpush1.msra.mxu0 0.0
    %4061 = vmatprep.subr.mxu0 0.0
    %4062 = vmatpush1.msra.mxu0 0.0
    %4063 = vmatprep.subr.mxu0 0.0
    %4064 = vmatpush1.msra.mxu0 0.0
    %4065 = vmatprep.subr.mxu0 0.0
    %4066 = vmatpush1.msra.mxu0 0.0
    %4067 = vmatprep.subr.mxu0 0.0
    %4068 = vmatpush1.msra.mxu0 0.0
    %4069 = vmatprep.subr.mxu0 0.0
    %4070 = vmatpush1.msra.mxu0 0.0
    %4071 = vmatprep.subr.mxu0 0.0
    %4072 = vmatpush1.msra.mxu0 0.0
    %4073 = vmatprep.subr.mxu0 0.0
    %4074 = vmatpush1.msra.mxu0 0.0
    %4075 = vmatprep.subr.mxu0 0.0
    %4076 = vmatpush1.msra.mxu0 0.0
    %4077 = vmatprep.subr.mxu0 0.0
    %4078 = vmatpush1.msra.mxu0 0.0
    %4079 = vmatprep.subr.mxu0 0.0
    %4080 = vmatpush1.msra.mxu0 0.0
    %4081 = vmatprep.mubr.f32.mxu0 0.0
    %4082 = vmatmul.mubr.f32.gmra.mrb[0].mxu0 %v3970
    %v4083 = vpop.f32.mrb[0].mxu0
    %v4084 = vadd.f32 0.0, %v4083
    %v4085 = vpop.f32.mrb[0].mxu0
    %4086 = vmatprep.mubr.f32.mxu0 0.0
    %4087 = vmatmul.mubr.f32.gmra.mrb[0].mxu0 %v3973
    %v4088 = vpop.f32.mrb[0].mxu0
    %v4089 = vadd.f32 0.0, %v4088
    %v4090 = vpop.f32.mrb[0].mxu0
    %4091 = vmatprep.mubr.f32.mxu0 0.0
    %4092 = vmatmul.mubr.f32.gmra.mrb[0].mxu0 %v3976
    %v4093 = vpop.f32.mrb[0].mxu0
    %v4094 = vadd.f32 0.0, %v4093
    %v4095 = vpop.f32.mrb[0].mxu0
    %4096 = vmatprep.mubr.f32.mxu0 0.0
    %4097 = vmatmul.mubr.f32.gmra.mrb[0].mxu0 %v3979
    %v4098 = vpop.f32.mrb[0].mxu0
    %v4099 = vadd.f32 0.0, %v4098
    %v4100 = vpop.f32.mrb[0].mxu0
    %4101 = vmatprep.mubr.f32.mxu0 0.0
    %4102 = vmatmul.mubr.f32.gmra.mrb[0].mxu0 %v3982
    %v4103 = vpop.f32.mrb[0].mxu0
    %v4104 = vadd.f32 0.0, %v4103
    %v4105 = vpop.f32.mrb[0].mxu0
    %4106 = vmatprep.mubr.f32.mxu0 0.0
    %4107 = vmatmul.mubr.f32.gmra.mrb[0].mxu0 %v3985
    %v4108 = vpop.f32.mrb[0].mxu0
    %v4109 = vadd.f32 0.0, %v4108
    %v4110 = vpop.f32.mrb[0].mxu0
    %4111 = vmatprep.mubr.f32.mxu0 0.0
    %4112 = vmatmul.mubr.f32.gmra.mrb[0].mxu0 %v3988
    %v4113 = vpop.f32.mrb[0].mxu0
    %v4114 = vadd.f32 0.0, %v4113
    %v4115 = vpop.f32.mrb[0].mxu0
    %4116 = vmatprep.mubr.f32.mxu0 0.0
    %4117 = vmatmul.mubr.f32.gmra.mrb[0].mxu0 %v3991
    %v4118 = vpop.f32.mrb[0].mxu0
    %v4119 = vadd.f32 0.0, %v4118
    %v4120 = vpop.f32.mrb[0].mxu0
    %4121 = vmatprep.mubr.f32.mxu0 0.0
    %4122 = vmatmul.mubr.f32.gmra.mrb[0].mxu0 %v3994
    %v4123 = vpop.f32.mrb[0].mxu0
    %v4124 = vadd.f32 0.0, %v4123
    %v4125 = vpop.f32.mrb[0].mxu0
    %4126 = vmatprep.mubr.f32.mxu0 0.0
    %4127 = vmatmul.mubr.f32.gmra.mrb[0].mxu0 %v3997
    %v4128 = vpop.f32.mrb[0].mxu0
    %v4129 = vadd.f32 0.0, %v4128
    %v4130 = vpop.f32.mrb[0].mxu0
    %4131 = vmatprep.mubr.f32.mxu0 0.0
    %4132 = vmatmul.mubr.f32.gmra.mrb[0].mxu0 %v4000
    %v4133 = vpop.f32.mrb[0].mxu0
    %v4134 = vadd.f32 0.0, %v4133
    %v4135 = vpop.f32.mrb[0].mxu0
    %4136 = vmatprep.mubr.f32.mxu0 0.0
    %4137 = vmatmul.mubr.f32.gmra.mrb[0].mxu0 %v4003
    %v4138 = vpop.f32.mrb[0].mxu0
    %v4139 = vadd.f32 0.0, %v4138
    %v4140 = vpop.f32.mrb[0].mxu0
    %4141 = vmatprep.mubr.f32.mxu0 0.0
    %4142 = vmatmul.mubr.f32.gmra.mrb[0].mxu0 %v4006
    %v4143 = vpop.f32.mrb[0].mxu0
    %v4144 = vadd.f32 0.0, %v4143
    %v4145 = vpop.f32.mrb[0].mxu0
    %4146 = vmatprep.mubr.f32.mxu0 0.0
    %4147 = vmatmul.mubr.f32.gmra.mrb[0].mxu0 %v4009
    %v4148 = vpop.f32.mrb[0].mxu0
    %v4149 = vadd.f32 0.0, %v4148
    %v4150 = vpop.f32.mrb[0].mxu0
    %4151 = vmatprep.mubr.f32.mxu0 0.0
    %4152 = vmatmul.mubr.f32.gmra.mrb[0].mxu0 %v4012
    %v4153 = vpop.f32.mrb[0].mxu0
    %v4154 = vadd.f32 0.0, %v4153
    %v4155 = vpop.f32.mrb[0].mxu0
    %4156 = vmatprep.mubr.f32.mxu0 0.0
    %4157 = vmatmul.mubr.f32.gmra.mrb[0].mxu0 %v4015
    %v4158 = vpop.f32.mrb[0].mxu0
    %v4159 = vadd.f32 0.0, %v4158
    %v4160 = vpop.f32.mrb[0].mxu0
    %4161 = vdwg.mxu0
    %v4162 = vadd.f32 %v3928, %v4084
    %v4163 = vadd.f32 %v3929, %v4089
    %v4164 = vadd.f32 %v3930, %v4094
    %v4165 = vadd.f32 %v3931, %v4099
    %v4166 = vadd.f32 %v3932, %v4104
    %v4167 = vadd.f32 %v3933, %v4109
    %v4168 = vadd.f32 %v3934, %v4114
    %v4169 = vadd.f32 %v3935, %v4119
    %v4170 = vadd.f32 %v3936, %v4124
    %v4171 = vadd.f32 %v3937, %v4129
    %v4172 = vadd.f32 %v3938, %v4134
    %v4173 = vadd.f32 %v3939, %v4139
    %v4174 = vadd.f32 %v3940, %v4144
    %v4175 = vadd.f32 %v3941, %v4149
    %v4176 = vadd.f32 %v3942, %v4154
    %v4177 = vadd.f32 %v3943, %v4159
    %v4178 = vld [vmem:[%s894 + $0x2] sm:$0xff]
    %v4179 = vld [vmem:[%s894 + $0x12] sm:$0xff]
    %v4180 = vld [vmem:[%s894 + $0x22] sm:$0xff]
    %v4181 = vld [vmem:[%s894 + $0x32] sm:$0xff]
    %v4182 = vld [vmem:[%s894 + $0x42] sm:$0xff]
    %v4183 = vld [vmem:[%s894 + $0x52] sm:$0xff]
    %v4184 = vld [vmem:[%s894 + $0x62] sm:$0xff]
    %v4185 = vld [vmem:[%s894 + $0x72] sm:$0xff]
    %v4186 = vld [vmem:[%s894 + $0xa2] sm:$0xff]
    %v4187 = vld [vmem:[%s894 + $0xb2] sm:$0xff]
    %v4188 = vld [vmem:[%s894 + $0xc2] sm:$0xff]
    %v4189 = vld [vmem:[%s894 + $0xd2] sm:$0xff]
    %v4190 = vld [vmem:[%s894 + $0xe2] sm:$0xff]
    %v4191 = vld [vmem:[%s894 + $0xf2] sm:$0xff]
    %v4192 = vld [vmem:[%s894 + $0x102] sm:$0xff]
    %v4193 = vld [vmem:[%s894 + $0x112] sm:$0xff]
    %s4194 = scalar_lea.vmem %s3, 896
    %v4195 = vld [vmem:[%s4194] sm:$0xff]
    %v4196 = vld [vmem:[%s4194 + $0x8] sm:$0xff]
    %v4197 = vld [vmem:[%s4194 + $0x10] sm:$0xff]
    %v4198 = vld [vmem:[%s4194 + $0x18] sm:$0xff]
    %v4199 = vld [vmem:[%s4194 + $0x20] sm:$0xff]
    %v4200 = vld [vmem:[%s4194 + $0x28] sm:$0xff]
    %v4201 = vld [vmem:[%s4194 + $0x30] sm:$0xff]
    %v4202 = vld [vmem:[%s4194 + $0x38] sm:$0xff]
    %v4204 = vsel %vm21, %v4178, 0
    %v4207 = vsel %vm21, %v4179, 0
    %v4210 = vsel %vm21, %v4180, 0
    %v4213 = vsel %vm21, %v4181, 0
    %v4216 = vsel %vm21, %v4182, 0
    %v4219 = vsel %vm21, %v4183, 0
    %v4222 = vsel %vm21, %v4184, 0
    %v4225 = vsel %vm21, %v4185, 0
    %v4228 = vsel %vm21, %v4186, 0
    %v4231 = vsel %vm21, %v4187, 0
    %v4234 = vsel %vm21, %v4188, 0
    %v4237 = vsel %vm21, %v4189, 0
    %v4240 = vsel %vm21, %v4190, 0
    %v4243 = vsel %vm21, %v4191, 0
    %v4246 = vsel %vm21, %v4192, 0
    %v4249 = vsel %vm21, %v4193, 0
    %4251 = vmatprep.subr.mxu0 0.0
    %4252 = vmatpush1.msra.mxu0 %v4195
    %4253 = vmatprep.subr.mxu0 0.0
    %4254 = vmatpush1.msra.mxu0 %v4196
    %4255 = vmatprep.subr.mxu0 0.0
    %4256 = vmatpush1.msra.mxu0 %v4197
    %4257 = vmatprep.subr.mxu0 0.0
    %4258 = vmatpush1.msra.mxu0 %v4198
    %4259 = vmatprep.subr.mxu0 0.0
    %4260 = vmatpush1.msra.mxu0 %v4199
    %4261 = vmatprep.subr.mxu0 0.0
    %4262 = vmatpush1.msra.mxu0 %v4200
    %4263 = vmatprep.subr.mxu0 0.0
    %4264 = vmatpush1.msra.mxu0 %v4201
    %4265 = vmatprep.subr.mxu0 0.0
    %4266 = vmatpush1.msra.mxu0 %v4202
    %4267 = vmatprep.subr.mxu0 0.0
    %4268 = vmatpush1.msra.mxu0 0.0
    %4269 = vmatprep.subr.mxu0 0.0
    %4270 = vmatpush1.msra.mxu0 0.0
    %4271 = vmatprep.subr.mxu0 0.0
    %4272 = vmatpush1.msra.mxu0 0.0
    %4273 = vmatprep.subr.mxu0 0.0
    %4274 = vmatpush1.msra.mxu0 0.0
    %4275 = vmatprep.subr.mxu0 0.0
    %4276 = vmatpush1.msra.mxu0 0.0
    %4277 = vmatprep.subr.mxu0 0.0
    %4278 = vmatpush1.msra.mxu0 0.0
    %4279 = vmatprep.subr.mxu0 0.0
    %4280 = vmatpush1.msra.mxu0 0.0
    %4281 = vmatprep.subr.mxu0 0.0
    %4282 = vmatpush1.msra.mxu0 0.0
    %4283 = vmatprep.subr.mxu0 0.0
    %4284 = vmatpush1.msra.mxu0 0.0
    %4285 = vmatprep.subr.mxu0 0.0
    %4286 = vmatpush1.msra.mxu0 0.0
    %4287 = vmatprep.subr.mxu0 0.0
    %4288 = vmatpush1.msra.mxu0 0.0
    %4289 = vmatprep.subr.mxu0 0.0
    %4290 = vmatpush1.msra.mxu0 0.0
    %4291 = vmatprep.subr.mxu0 0.0
    %4292 = vmatpush1.msra.mxu0 0.0
    %4293 = vmatprep.subr.mxu0 0.0
    %4294 = vmatpush1.msra.mxu0 0.0
    %4295 = vmatprep.subr.mxu0 0.0
    %4296 = vmatpush1.msra.mxu0 0.0
    %4297 = vmatprep.subr.mxu0 0.0
    %4298 = vmatpush1.msra.mxu0 0.0
    %4299 = vmatprep.subr.mxu0 0.0
    %4300 = vmatpush1.msra.mxu0 0.0
    %4301 = vmatprep.subr.mxu0 0.0
    %4302 = vmatpush1.msra.mxu0 0.0
    %4303 = vmatprep.subr.mxu0 0.0
    %4304 = vmatpush1.msra.mxu0 0.0
    %4305 = vmatprep.subr.mxu0 0.0
    %4306 = vmatpush1.msra.mxu0 0.0
    %4307 = vmatprep.subr.mxu0 0.0
    %4308 = vmatpush1.msra.mxu0 0.0
    %4309 = vmatprep.subr.mxu0 0.0
    %4310 = vmatpush1.msra.mxu0 0.0
    %4311 = vmatprep.subr.mxu0 0.0
    %4312 = vmatpush1.msra.mxu0 0.0
    %4313 = vmatprep.subr.mxu0 0.0
    %4314 = vmatpush1.msra.mxu0 0.0
    %4315 = vmatprep.mubr.f32.mxu0 0.0
    %4316 = vmatmul.mubr.f32.gmra.mrb[0].mxu0 %v4204
    %v4317 = vpop.f32.mrb[0].mxu0
    %v4318 = vadd.f32 0.0, %v4317
    %v4319 = vpop.f32.mrb[0].mxu0
    %4320 = vmatprep.mubr.f32.mxu0 0.0
    %4321 = vmatmul.mubr.f32.gmra.mrb[0].mxu0 %v4207
    %v4322 = vpop.f32.mrb[0].mxu0
    %v4323 = vadd.f32 0.0, %v4322
    %v4324 = vpop.f32.mrb[0].mxu0
    %4325 = vmatprep.mubr.f32.mxu0 0.0
    %4326 = vmatmul.mubr.f32.gmra.mrb[0].mxu0 %v4210
    %v4327 = vpop.f32.mrb[0].mxu0
    %v4328 = vadd.f32 0.0, %v4327
    %v4329 = vpop.f32.mrb[0].mxu0
    %4330 = vmatprep.mubr.f32.mxu0 0.0
    %4331 = vmatmul.mubr.f32.gmra.mrb[0].mxu0 %v4213
    %v4332 = vpop.f32.mrb[0].mxu0
    %v4333 = vadd.f32 0.0, %v4332
    %v4334 = vpop.f32.mrb[0].mxu0
    %4335 = vmatprep.mubr.f32.mxu0 0.0
    %4336 = vmatmul.mubr.f32.gmra.mrb[0].mxu0 %v4216
    %v4337 = vpop.f32.mrb[0].mxu0
    %v4338 = vadd.f32 0.0, %v4337
    %v4339 = vpop.f32.mrb[0].mxu0
    %4340 = vmatprep.mubr.f32.mxu0 0.0
    %4341 = vmatmul.mubr.f32.gmra.mrb[0].mxu0 %v4219
    %v4342 = vpop.f32.mrb[0].mxu0
    %v4343 = vadd.f32 0.0, %v4342
    %v4344 = vpop.f32.mrb[0].mxu0
    %4345 = vmatprep.mubr.f32.mxu0 0.0
    %4346 = vmatmul.mubr.f32.gmra.mrb[0].mxu0 %v4222
    %v4347 = vpop.f32.mrb[0].mxu0
    %v4348 = vadd.f32 0.0, %v4347
    %v4349 = vpop.f32.mrb[0].mxu0
    %4350 = vmatprep.mubr.f32.mxu0 0.0
    %4351 = vmatmul.mubr.f32.gmra.mrb[0].mxu0 %v4225
    %v4352 = vpop.f32.mrb[0].mxu0
    %v4353 = vadd.f32 0.0, %v4352
    %v4354 = vpop.f32.mrb[0].mxu0
    %4355 = vmatprep.mubr.f32.mxu0 0.0
    %4356 = vmatmul.mubr.f32.gmra.mrb[0].mxu0 %v4228
    %v4357 = vpop.f32.mrb[0].mxu0
    %v4358 = vadd.f32 0.0, %v4357
    %v4359 = vpop.f32.mrb[0].mxu0
    %4360 = vmatprep.mubr.f32.mxu0 0.0
    %4361 = vmatmul.mubr.f32.gmra.mrb[0].mxu0 %v4231
    %v4362 = vpop.f32.mrb[0].mxu0
    %v4363 = vadd.f32 0.0, %v4362
    %v4364 = vpop.f32.mrb[0].mxu0
    %4365 = vmatprep.mubr.f32.mxu0 0.0
    %4366 = vmatmul.mubr.f32.gmra.mrb[0].mxu0 %v4234
    %v4367 = vpop.f32.mrb[0].mxu0
    %v4368 = vadd.f32 0.0, %v4367
    %v4369 = vpop.f32.mrb[0].mxu0
    %4370 = vmatprep.mubr.f32.mxu0 0.0
    %4371 = vmatmul.mubr.f32.gmra.mrb[0].mxu0 %v4237
    %v4372 = vpop.f32.mrb[0].mxu0
    %v4373 = vadd.f32 0.0, %v4372
    %v4374 = vpop.f32.mrb[0].mxu0
    %4375 = vmatprep.mubr.f32.mxu0 0.0
    %4376 = vmatmul.mubr.f32.gmra.mrb[0].mxu0 %v4240
    %v4377 = vpop.f32.mrb[0].mxu0
    %v4378 = vadd.f32 0.0, %v4377
    %v4379 = vpop.f32.mrb[0].mxu0
    %4380 = vmatprep.mubr.f32.mxu0 0.0
    %4381 = vmatmul.mubr.f32.gmra.mrb[0].mxu0 %v4243
    %v4382 = vpop.f32.mrb[0].mxu0
    %v4383 = vadd.f32 0.0, %v4382
    %v4384 = vpop.f32.mrb[0].mxu0
    %4385 = vmatprep.mubr.f32.mxu0 0.0
    %4386 = vmatmul.mubr.f32.gmra.mrb[0].mxu0 %v4246
    %v4387 = vpop.f32.mrb[0].mxu0
    %v4388 = vadd.f32 0.0, %v4387
    %v4389 = vpop.f32.mrb[0].mxu0
    %4390 = vmatprep.mubr.f32.mxu0 0.0
    %4391 = vmatmul.mubr.f32.gmra.mrb[0].mxu0 %v4249
    %v4392 = vpop.f32.mrb[0].mxu0
    %v4393 = vadd.f32 0.0, %v4392
    %v4394 = vpop.f32.mrb[0].mxu0
    %4395 = vdwg.mxu0
    %v4396 = vadd.f32 %v4162, %v4318
    %v4397 = vadd.f32 %v4163, %v4323
    %v4398 = vadd.f32 %v4164, %v4328
    %v4399 = vadd.f32 %v4165, %v4333
    %v4400 = vadd.f32 %v4166, %v4338
    %v4401 = vadd.f32 %v4167, %v4343
    %v4402 = vadd.f32 %v4168, %v4348
    %v4403 = vadd.f32 %v4169, %v4353
    %v4404 = vadd.f32 %v4170, %v4358
    %v4405 = vadd.f32 %v4171, %v4363
    %v4406 = vadd.f32 %v4172, %v4368
    %v4407 = vadd.f32 %v4173, %v4373
    %v4408 = vadd.f32 %v4174, %v4378
    %v4409 = vadd.f32 %v4175, %v4383
    %v4410 = vadd.f32 %v4176, %v4388
    %v4411 = vadd.f32 %v4177, %v4393
    %v4412 = vld [vmem:[%s2282] sm:$0xff]
    %v4413 = vld [vmem:[%s2282 + $0x10] sm:$0xff]
    %v4414 = vld [vmem:[%s2282 + $0x20] sm:$0xff]
    %v4415 = vld [vmem:[%s2282 + $0x30] sm:$0xff]
    %v4416 = vld [vmem:[%s2282 + $0x40] sm:$0xff]
    %v4417 = vld [vmem:[%s2282 + $0x50] sm:$0xff]
    %v4418 = vld [vmem:[%s2282 + $0x60] sm:$0xff]
    %v4419 = vld [vmem:[%s2282 + $0x70] sm:$0xff]
    %v4420 = vld [vmem:[%s2282 + $0xa0] sm:$0xff]
    %v4421 = vld [vmem:[%s2282 + $0xb0] sm:$0xff]
    %v4422 = vld [vmem:[%s2282 + $0xc0] sm:$0xff]
    %v4423 = vld [vmem:[%s2282 + $0xd0] sm:$0xff]
    %v4424 = vld [vmem:[%s2282 + $0xe0] sm:$0xff]
    %v4425 = vld [vmem:[%s2282 + $0xf0] sm:$0xff]
    %v4426 = vld [vmem:[%s2282 + $0x100] sm:$0xff]
    %v4427 = vld [vmem:[%s2282 + $0x110] sm:$0xff]
    %s4428 = scalar_lea.vmem %s3, 960
    %v4429 = vld [vmem:[%s4428] sm:$0xff]
    %v4430 = vld [vmem:[%s4428 + $0x8] sm:$0xff]
    %v4431 = vld [vmem:[%s4428 + $0x10] sm:$0xff]
    %v4432 = vld [vmem:[%s4428 + $0x18] sm:$0xff]
    %v4433 = vld [vmem:[%s4428 + $0x20] sm:$0xff]
    %v4434 = vld [vmem:[%s4428 + $0x28] sm:$0xff]
    %v4435 = vld [vmem:[%s4428 + $0x30] sm:$0xff]
    %v4436 = vld [vmem:[%s4428 + $0x38] sm:$0xff]
    %v4438 = vsel %vm21, %v4412, 0
    %v4441 = vsel %vm21, %v4413, 0
    %v4444 = vsel %vm21, %v4414, 0
    %v4447 = vsel %vm21, %v4415, 0
    %v4450 = vsel %vm21, %v4416, 0
    %v4453 = vsel %vm21, %v4417, 0
    %v4456 = vsel %vm21, %v4418, 0
    %v4459 = vsel %vm21, %v4419, 0
    %v4462 = vsel %vm21, %v4420, 0
    %v4465 = vsel %vm21, %v4421, 0
    %v4468 = vsel %vm21, %v4422, 0
    %v4471 = vsel %vm21, %v4423, 0
    %v4474 = vsel %vm21, %v4424, 0
    %v4477 = vsel %vm21, %v4425, 0
    %v4480 = vsel %vm21, %v4426, 0
    %v4483 = vsel %vm21, %v4427, 0
    %4485 = vmatprep.subr.mxu0 0.0
    %4486 = vmatpush1.msra.mxu0 %v4429
    %4487 = vmatprep.subr.mxu0 0.0
    %4488 = vmatpush1.msra.mxu0 %v4430
    %4489 = vmatprep.subr.mxu0 0.0
    %4490 = vmatpush1.msra.mxu0 %v4431
    %4491 = vmatprep.subr.mxu0 0.0
    %4492 = vmatpush1.msra.mxu0 %v4432
    %4493 = vmatprep.subr.mxu0 0.0
    %4494 = vmatpush1.msra.mxu0 %v4433
    %4495 = vmatprep.subr.mxu0 0.0
    %4496 = vmatpush1.msra.mxu0 %v4434
    %4497 = vmatprep.subr.mxu0 0.0
    %4498 = vmatpush1.msra.mxu0 %v4435
    %4499 = vmatprep.subr.mxu0 0.0
    %4500 = vmatpush1.msra.mxu0 %v4436
    %4501 = vmatprep.subr.mxu0 0.0
    %4502 = vmatpush1.msra.mxu0 0.0
    %4503 = vmatprep.subr.mxu0 0.0
    %4504 = vmatpush1.msra.mxu0 0.0
    %4505 = vmatprep.subr.mxu0 0.0
    %4506 = vmatpush1.msra.mxu0 0.0
    %4507 = vmatprep.subr.mxu0 0.0
    %4508 = vmatpush1.msra.mxu0 0.0
    %4509 = vmatprep.subr.mxu0 0.0
    %4510 = vmatpush1.msra.mxu0 0.0
    %4511 = vmatprep.subr.mxu0 0.0
    %4512 = vmatpush1.msra.mxu0 0.0
    %4513 = vmatprep.subr.mxu0 0.0
    %4514 = vmatpush1.msra.mxu0 0.0
    %4515 = vmatprep.subr.mxu0 0.0
    %4516 = vmatpush1.msra.mxu0 0.0
    %4517 = vmatprep.subr.mxu0 0.0
    %4518 = vmatpush1.msra.mxu0 0.0
    %4519 = vmatprep.subr.mxu0 0.0
    %4520 = vmatpush1.msra.mxu0 0.0
    %4521 = vmatprep.subr.mxu0 0.0
    %4522 = vmatpush1.msra.mxu0 0.0
    %4523 = vmatprep.subr.mxu0 0.0
    %4524 = vmatpush1.msra.mxu0 0.0
    %4525 = vmatprep.subr.mxu0 0.0
    %4526 = vmatpush1.msra.mxu0 0.0
    %4527 = vmatprep.subr.mxu0 0.0
    %4528 = vmatpush1.msra.mxu0 0.0
    %4529 = vmatprep.subr.mxu0 0.0
    %4530 = vmatpush1.msra.mxu0 0.0
    %4531 = vmatprep.subr.mxu0 0.0
    %4532 = vmatpush1.msra.mxu0 0.0
    %4533 = vmatprep.subr.mxu0 0.0
    %4534 = vmatpush1.msra.mxu0 0.0
    %4535 = vmatprep.subr.mxu0 0.0
    %4536 = vmatpush1.msra.mxu0 0.0
    %4537 = vmatprep.subr.mxu0 0.0
    %4538 = vmatpush1.msra.mxu0 0.0
    %4539 = vmatprep.subr.mxu0 0.0
    %4540 = vmatpush1.msra.mxu0 0.0
    %4541 = vmatprep.subr.mxu0 0.0
    %4542 = vmatpush1.msra.mxu0 0.0
    %4543 = vmatprep.subr.mxu0 0.0
    %4544 = vmatpush1.msra.mxu0 0.0
    %4545 = vmatprep.subr.mxu0 0.0
    %4546 = vmatpush1.msra.mxu0 0.0
    %4547 = vmatprep.subr.mxu0 0.0
    %4548 = vmatpush1.msra.mxu0 0.0
    %4549 = vmatprep.mubr.f32.mxu0 0.0
    %4550 = vmatmul.mubr.f32.gmra.mrb[0].mxu0 %v4438
    %v4551 = vpop.f32.mrb[0].mxu0
    %v4552 = vadd.f32 0.0, %v4551
    %v4553 = vpop.f32.mrb[0].mxu0
    %4554 = vmatprep.mubr.f32.mxu0 0.0
    %4555 = vmatmul.mubr.f32.gmra.mrb[0].mxu0 %v4441
    %v4556 = vpop.f32.mrb[0].mxu0
    %v4557 = vadd.f32 0.0, %v4556
    %v4558 = vpop.f32.mrb[0].mxu0
    %4559 = vmatprep.mubr.f32.mxu0 0.0
    %4560 = vmatmul.mubr.f32.gmra.mrb[0].mxu0 %v4444
    %v4561 = vpop.f32.mrb[0].mxu0
    %v4562 = vadd.f32 0.0, %v4561
    %v4563 = vpop.f32.mrb[0].mxu0
    %4564 = vmatprep.mubr.f32.mxu0 0.0
    %4565 = vmatmul.mubr.f32.gmra.mrb[0].mxu0 %v4447
    %v4566 = vpop.f32.mrb[0].mxu0
    %v4567 = vadd.f32 0.0, %v4566
    %v4568 = vpop.f32.mrb[0].mxu0
    %4569 = vmatprep.mubr.f32.mxu0 0.0
    %4570 = vmatmul.mubr.f32.gmra.mrb[0].mxu0 %v4450
    %v4571 = vpop.f32.mrb[0].mxu0
    %v4572 = vadd.f32 0.0, %v4571
    %v4573 = vpop.f32.mrb[0].mxu0
    %4574 = vmatprep.mubr.f32.mxu0 0.0
    %4575 = vmatmul.mubr.f32.gmra.mrb[0].mxu0 %v4453
    %v4576 = vpop.f32.mrb[0].mxu0
    %v4577 = vadd.f32 0.0, %v4576
    %v4578 = vpop.f32.mrb[0].mxu0
    %4579 = vmatprep.mubr.f32.mxu0 0.0
    %4580 = vmatmul.mubr.f32.gmra.mrb[0].mxu0 %v4456
    %v4581 = vpop.f32.mrb[0].mxu0
    %v4582 = vadd.f32 0.0, %v4581
    %v4583 = vpop.f32.mrb[0].mxu0
    %4584 = vmatprep.mubr.f32.mxu0 0.0
    %4585 = vmatmul.mubr.f32.gmra.mrb[0].mxu0 %v4459
    %v4586 = vpop.f32.mrb[0].mxu0
    %v4587 = vadd.f32 0.0, %v4586
    %v4588 = vpop.f32.mrb[0].mxu0
    %4589 = vmatprep.mubr.f32.mxu0 0.0
    %4590 = vmatmul.mubr.f32.gmra.mrb[0].mxu0 %v4462
    %v4591 = vpop.f32.mrb[0].mxu0
    %v4592 = vadd.f32 0.0, %v4591
    %v4593 = vpop.f32.mrb[0].mxu0
    %4594 = vmatprep.mubr.f32.mxu0 0.0
    %4595 = vmatmul.mubr.f32.gmra.mrb[0].mxu0 %v4465
    %v4596 = vpop.f32.mrb[0].mxu0
    %v4597 = vadd.f32 0.0, %v4596
    %v4598 = vpop.f32.mrb[0].mxu0
    %4599 = vmatprep.mubr.f32.mxu0 0.0
    %4600 = vmatmul.mubr.f32.gmra.mrb[0].mxu0 %v4468
    %v4601 = vpop.f32.mrb[0].mxu0
    %v4602 = vadd.f32 0.0, %v4601
    %v4603 = vpop.f32.mrb[0].mxu0
    %4604 = vmatprep.mubr.f32.mxu0 0.0
    %4605 = vmatmul.mubr.f32.gmra.mrb[0].mxu0 %v4471
    %v4606 = vpop.f32.mrb[0].mxu0
    %v4607 = vadd.f32 0.0, %v4606
    %v4608 = vpop.f32.mrb[0].mxu0
    %4609 = vmatprep.mubr.f32.mxu0 0.0
    %4610 = vmatmul.mubr.f32.gmra.mrb[0].mxu0 %v4474
    %v4611 = vpop.f32.mrb[0].mxu0
    %v4612 = vadd.f32 0.0, %v4611
    %v4613 = vpop.f32.mrb[0].mxu0
    %4614 = vmatprep.mubr.f32.mxu0 0.0
    %4615 = vmatmul.mubr.f32.gmra.mrb[0].mxu0 %v4477
    %v4616 = vpop.f32.mrb[0].mxu0
    %v4617 = vadd.f32 0.0, %v4616
    %v4618 = vpop.f32.mrb[0].mxu0
    %4619 = vmatprep.mubr.f32.mxu0 0.0
    %4620 = vmatmul.mubr.f32.gmra.mrb[0].mxu0 %v4480
    %v4621 = vpop.f32.mrb[0].mxu0
    %v4622 = vadd.f32 0.0, %v4621
    %v4623 = vpop.f32.mrb[0].mxu0
    %4624 = vmatprep.mubr.f32.mxu0 0.0
    %4625 = vmatmul.mubr.f32.gmra.mrb[0].mxu0 %v4483
    %v4626 = vpop.f32.mrb[0].mxu0
    %v4627 = vadd.f32 0.0, %v4626
    %v4628 = vpop.f32.mrb[0].mxu0
    %4629 = vdwg.mxu0
    %v4630 = vadd.f32 %v4396, %v4552
    %v4631 = vadd.f32 %v4397, %v4557
    %v4632 = vadd.f32 %v4398, %v4562
    %v4633 = vadd.f32 %v4399, %v4567
    %v4634 = vadd.f32 %v4400, %v4572
    %v4635 = vadd.f32 %v4401, %v4577
    %v4636 = vadd.f32 %v4402, %v4582
    %v4637 = vadd.f32 %v4403, %v4587
    %v4638 = vadd.f32 %v4404, %v4592
    %v4639 = vadd.f32 %v4405, %v4597
    %v4640 = vadd.f32 %v4406, %v4602
    %v4641 = vadd.f32 %v4407, %v4607
    %v4642 = vadd.f32 %v4408, %v4612
    %v4643 = vadd.f32 %v4409, %v4617
    %v4644 = vadd.f32 %v4410, %v4622
    %v4645 = vadd.f32 %v4411, %v4627
    %v4646 = vld [vmem:[%s2282 + $0x1] sm:$0xff]
    %v4647 = vld [vmem:[%s2282 + $0x11] sm:$0xff]
    %v4648 = vld [vmem:[%s2282 + $0x21] sm:$0xff]
    %v4649 = vld [vmem:[%s2282 + $0x31] sm:$0xff]
    %v4650 = vld [vmem:[%s2282 + $0x41] sm:$0xff]
    %v4651 = vld [vmem:[%s2282 + $0x51] sm:$0xff]
    %v4652 = vld [vmem:[%s2282 + $0x61] sm:$0xff]
    %v4653 = vld [vmem:[%s2282 + $0x71] sm:$0xff]
    %v4654 = vld [vmem:[%s2282 + $0xa1] sm:$0xff]
    %v4655 = vld [vmem:[%s2282 + $0xb1] sm:$0xff]
    %v4656 = vld [vmem:[%s2282 + $0xc1] sm:$0xff]
    %v4657 = vld [vmem:[%s2282 + $0xd1] sm:$0xff]
    %v4658 = vld [vmem:[%s2282 + $0xe1] sm:$0xff]
    %v4659 = vld [vmem:[%s2282 + $0xf1] sm:$0xff]
    %v4660 = vld [vmem:[%s2282 + $0x101] sm:$0xff]
    %v4661 = vld [vmem:[%s2282 + $0x111] sm:$0xff]
    %s4662 = scalar_lea.vmem %s3, 1024
    %v4663 = vld [vmem:[%s4662] sm:$0xff]
    %v4664 = vld [vmem:[%s4662 + $0x8] sm:$0xff]
    %v4665 = vld [vmem:[%s4662 + $0x10] sm:$0xff]
    %v4666 = vld [vmem:[%s4662 + $0x18] sm:$0xff]
    %v4667 = vld [vmem:[%s4662 + $0x20] sm:$0xff]
    %v4668 = vld [vmem:[%s4662 + $0x28] sm:$0xff]
    %v4669 = vld [vmem:[%s4662 + $0x30] sm:$0xff]
    %v4670 = vld [vmem:[%s4662 + $0x38] sm:$0xff]
    %v4672 = vsel %vm21, %v4646, 0
    %v4675 = vsel %vm21, %v4647, 0
    %v4678 = vsel %vm21, %v4648, 0
    %v4681 = vsel %vm21, %v4649, 0
    %v4684 = vsel %vm21, %v4650, 0
    %v4687 = vsel %vm21, %v4651, 0
    %v4690 = vsel %vm21, %v4652, 0
    %v4693 = vsel %vm21, %v4653, 0
    %v4696 = vsel %vm21, %v4654, 0
    %v4699 = vsel %vm21, %v4655, 0
    %v4702 = vsel %vm21, %v4656, 0
    %v4705 = vsel %vm21, %v4657, 0
    %v4708 = vsel %vm21, %v4658, 0
    %v4711 = vsel %vm21, %v4659, 0
    %v4714 = vsel %vm21, %v4660, 0
    %v4717 = vsel %vm21, %v4661, 0
    %4719 = vmatprep.subr.mxu0 0.0
    %4720 = vmatpush1.msra.mxu0 %v4663
    %4721 = vmatprep.subr.mxu0 0.0
    %4722 = vmatpush1.msra.mxu0 %v4664
    %4723 = vmatprep.subr.mxu0 0.0
    %4724 = vmatpush1.msra.mxu0 %v4665
    %4725 = vmatprep.subr.mxu0 0.0
    %4726 = vmatpush1.msra.mxu0 %v4666
    %4727 = vmatprep.subr.mxu0 0.0
    %4728 = vmatpush1.msra.mxu0 %v4667
    %4729 = vmatprep.subr.mxu0 0.0
    %4730 = vmatpush1.msra.mxu0 %v4668
    %4731 = vmatprep.subr.mxu0 0.0
    %4732 = vmatpush1.msra.mxu0 %v4669
    %4733 = vmatprep.subr.mxu0 0.0
    %4734 = vmatpush1.msra.mxu0 %v4670
    %4735 = vmatprep.subr.mxu0 0.0
    %4736 = vmatpush1.msra.mxu0 0.0
    %4737 = vmatprep.subr.mxu0 0.0
    %4738 = vmatpush1.msra.mxu0 0.0
    %4739 = vmatprep.subr.mxu0 0.0
    %4740 = vmatpush1.msra.mxu0 0.0
    %4741 = vmatprep.subr.mxu0 0.0
    %4742 = vmatpush1.msra.mxu0 0.0
    %4743 = vmatprep.subr.mxu0 0.0
    %4744 = vmatpush1.msra.mxu0 0.0
    %4745 = vmatprep.subr.mxu0 0.0
    %4746 = vmatpush1.msra.mxu0 0.0
    %4747 = vmatprep.subr.mxu0 0.0
    %4748 = vmatpush1.msra.mxu0 0.0
    %4749 = vmatprep.subr.mxu0 0.0
    %4750 = vmatpush1.msra.mxu0 0.0
    %4751 = vmatprep.subr.mxu0 0.0
    %4752 = vmatpush1.msra.mxu0 0.0
    %4753 = vmatprep.subr.mxu0 0.0
    %4754 = vmatpush1.msra.mxu0 0.0
    %4755 = vmatprep.subr.mxu0 0.0
    %4756 = vmatpush1.msra.mxu0 0.0
    %4757 = vmatprep.subr.mxu0 0.0
    %4758 = vmatpush1.msra.mxu0 0.0
    %4759 = vmatprep.subr.mxu0 0.0
    %4760 = vmatpush1.msra.mxu0 0.0
    %4761 = vmatprep.subr.mxu0 0.0
    %4762 = vmatpush1.msra.mxu0 0.0
    %4763 = vmatprep.subr.mxu0 0.0
    %4764 = vmatpush1.msra.mxu0 0.0
    %4765 = vmatprep.subr.mxu0 0.0
    %4766 = vmatpush1.msra.mxu0 0.0
    %4767 = vmatprep.subr.mxu0 0.0
    %4768 = vmatpush1.msra.mxu0 0.0
    %4769 = vmatprep.subr.mxu0 0.0
    %4770 = vmatpush1.msra.mxu0 0.0
    %4771 = vmatprep.subr.mxu0 0.0
    %4772 = vmatpush1.msra.mxu0 0.0
    %4773 = vmatprep.subr.mxu0 0.0
    %4774 = vmatpush1.msra.mxu0 0.0
    %4775 = vmatprep.subr.mxu0 0.0
    %4776 = vmatpush1.msra.mxu0 0.0
    %4777 = vmatprep.subr.mxu0 0.0
    %4778 = vmatpush1.msra.mxu0 0.0
    %4779 = vmatprep.subr.mxu0 0.0
    %4780 = vmatpush1.msra.mxu0 0.0
    %4781 = vmatprep.subr.mxu0 0.0
    %4782 = vmatpush1.msra.mxu0 0.0
    %4783 = vmatprep.mubr.f32.mxu0 0.0
    %4784 = vmatmul.mubr.f32.gmra.mrb[0].mxu0 %v4672
    %v4785 = vpop.f32.mrb[0].mxu0
    %v4786 = vadd.f32 0.0, %v4785
    %v4787 = vpop.f32.mrb[0].mxu0
    %4788 = vmatprep.mubr.f32.mxu0 0.0
    %4789 = vmatmul.mubr.f32.gmra.mrb[0].mxu0 %v4675
    %v4790 = vpop.f32.mrb[0].mxu0
    %v4791 = vadd.f32 0.0, %v4790
    %v4792 = vpop.f32.mrb[0].mxu0
    %4793 = vmatprep.mubr.f32.mxu0 0.0
    %4794 = vmatmul.mubr.f32.gmra.mrb[0].mxu0 %v4678
    %v4795 = vpop.f32.mrb[0].mxu0
    %v4796 = vadd.f32 0.0, %v4795
    %v4797 = vpop.f32.mrb[0].mxu0
    %4798 = vmatprep.mubr.f32.mxu0 0.0
    %4799 = vmatmul.mubr.f32.gmra.mrb[0].mxu0 %v4681
    %v4800 = vpop.f32.mrb[0].mxu0
    %v4801 = vadd.f32 0.0, %v4800
    %v4802 = vpop.f32.mrb[0].mxu0
    %4803 = vmatprep.mubr.f32.mxu0 0.0
    %4804 = vmatmul.mubr.f32.gmra.mrb[0].mxu0 %v4684
    %v4805 = vpop.f32.mrb[0].mxu0
    %v4806 = vadd.f32 0.0, %v4805
    %v4807 = vpop.f32.mrb[0].mxu0
    %4808 = vmatprep.mubr.f32.mxu0 0.0
    %4809 = vmatmul.mubr.f32.gmra.mrb[0].mxu0 %v4687
    %v4810 = vpop.f32.mrb[0].mxu0
    %v4811 = vadd.f32 0.0, %v4810
    %v4812 = vpop.f32.mrb[0].mxu0
    %4813 = vmatprep.mubr.f32.mxu0 0.0
    %4814 = vmatmul.mubr.f32.gmra.mrb[0].mxu0 %v4690
    %v4815 = vpop.f32.mrb[0].mxu0
    %v4816 = vadd.f32 0.0, %v4815
    %v4817 = vpop.f32.mrb[0].mxu0
    %4818 = vmatprep.mubr.f32.mxu0 0.0
    %4819 = vmatmul.mubr.f32.gmra.mrb[0].mxu0 %v4693
    %v4820 = vpop.f32.mrb[0].mxu0
    %v4821 = vadd.f32 0.0, %v4820
    %v4822 = vpop.f32.mrb[0].mxu0
    %4823 = vmatprep.mubr.f32.mxu0 0.0
    %4824 = vmatmul.mubr.f32.gmra.mrb[0].mxu0 %v4696
    %v4825 = vpop.f32.mrb[0].mxu0
    %v4826 = vadd.f32 0.0, %v4825
    %v4827 = vpop.f32.mrb[0].mxu0
    %4828 = vmatprep.mubr.f32.mxu0 0.0
    %4829 = vmatmul.mubr.f32.gmra.mrb[0].mxu0 %v4699
    %v4830 = vpop.f32.mrb[0].mxu0
    %v4831 = vadd.f32 0.0, %v4830
    %v4832 = vpop.f32.mrb[0].mxu0
    %4833 = vmatprep.mubr.f32.mxu0 0.0
    %4834 = vmatmul.mubr.f32.gmra.mrb[0].mxu0 %v4702
    %v4835 = vpop.f32.mrb[0].mxu0
    %v4836 = vadd.f32 0.0, %v4835
    %v4837 = vpop.f32.mrb[0].mxu0
    %4838 = vmatprep.mubr.f32.mxu0 0.0
    %4839 = vmatmul.mubr.f32.gmra.mrb[0].mxu0 %v4705
    %v4840 = vpop.f32.mrb[0].mxu0
    %v4841 = vadd.f32 0.0, %v4840
    %v4842 = vpop.f32.mrb[0].mxu0
    %4843 = vmatprep.mubr.f32.mxu0 0.0
    %4844 = vmatmul.mubr.f32.gmra.mrb[0].mxu0 %v4708
    %v4845 = vpop.f32.mrb[0].mxu0
    %v4846 = vadd.f32 0.0, %v4845
    %v4847 = vpop.f32.mrb[0].mxu0
    %4848 = vmatprep.mubr.f32.mxu0 0.0
    %4849 = vmatmul.mubr.f32.gmra.mrb[0].mxu0 %v4711
    %v4850 = vpop.f32.mrb[0].mxu0
    %v4851 = vadd.f32 0.0, %v4850
    %v4852 = vpop.f32.mrb[0].mxu0
    %4853 = vmatprep.mubr.f32.mxu0 0.0
    %4854 = vmatmul.mubr.f32.gmra.mrb[0].mxu0 %v4714
    %v4855 = vpop.f32.mrb[0].mxu0
    %v4856 = vadd.f32 0.0, %v4855
    %v4857 = vpop.f32.mrb[0].mxu0
    %4858 = vmatprep.mubr.f32.mxu0 0.0
    %4859 = vmatmul.mubr.f32.gmra.mrb[0].mxu0 %v4717
    %v4860 = vpop.f32.mrb[0].mxu0
    %v4861 = vadd.f32 0.0, %v4860
    %v4862 = vpop.f32.mrb[0].mxu0
    %4863 = vdwg.mxu0
    %v4864 = vadd.f32 %v4630, %v4786
    %v4865 = vadd.f32 %v4631, %v4791
    %v4866 = vadd.f32 %v4632, %v4796
    %v4867 = vadd.f32 %v4633, %v4801
    %v4868 = vadd.f32 %v4634, %v4806
    %v4869 = vadd.f32 %v4635, %v4811
    %v4870 = vadd.f32 %v4636, %v4816
    %v4871 = vadd.f32 %v4637, %v4821
    %v4872 = vadd.f32 %v4638, %v4826
    %v4873 = vadd.f32 %v4639, %v4831
    %v4874 = vadd.f32 %v4640, %v4836
    %v4875 = vadd.f32 %v4641, %v4841
    %v4876 = vadd.f32 %v4642, %v4846
    %v4877 = vadd.f32 %v4643, %v4851
    %v4878 = vadd.f32 %v4644, %v4856
    %v4879 = vadd.f32 %v4645, %v4861
    %v4880 = vld [vmem:[%s2282 + $0x2] sm:$0xff]
    %v4881 = vld [vmem:[%s2282 + $0x12] sm:$0xff]
    %v4882 = vld [vmem:[%s2282 + $0x22] sm:$0xff]
    %v4883 = vld [vmem:[%s2282 + $0x32] sm:$0xff]
    %v4884 = vld [vmem:[%s2282 + $0x42] sm:$0xff]
    %v4885 = vld [vmem:[%s2282 + $0x52] sm:$0xff]
    %v4886 = vld [vmem:[%s2282 + $0x62] sm:$0xff]
    %v4887 = vld [vmem:[%s2282 + $0x72] sm:$0xff]
    %v4888 = vld [vmem:[%s2282 + $0xa2] sm:$0xff]
    %v4889 = vld [vmem:[%s2282 + $0xb2] sm:$0xff]
    %v4890 = vld [vmem:[%s2282 + $0xc2] sm:$0xff]
    %v4891 = vld [vmem:[%s2282 + $0xd2] sm:$0xff]
    %v4892 = vld [vmem:[%s2282 + $0xe2] sm:$0xff]
    %v4893 = vld [vmem:[%s2282 + $0xf2] sm:$0xff]
    %v4894 = vld [vmem:[%s2282 + $0x102] sm:$0xff]
    %v4895 = vld [vmem:[%s2282 + $0x112] sm:$0xff]
    %s4896 = scalar_lea.vmem %s3, 1088
    %v4897 = vld [vmem:[%s4896] sm:$0xff]
    %v4898 = vld [vmem:[%s4896 + $0x8] sm:$0xff]
    %v4899 = vld [vmem:[%s4896 + $0x10] sm:$0xff]
    %v4900 = vld [vmem:[%s4896 + $0x18] sm:$0xff]
    %v4901 = vld [vmem:[%s4896 + $0x20] sm:$0xff]
    %v4902 = vld [vmem:[%s4896 + $0x28] sm:$0xff]
    %v4903 = vld [vmem:[%s4896 + $0x30] sm:$0xff]
    %v4904 = vld [vmem:[%s4896 + $0x38] sm:$0xff]
    %v4906 = vsel %vm21, %v4880, 0
    %v4909 = vsel %vm21, %v4881, 0
    %v4912 = vsel %vm21, %v4882, 0
    %v4915 = vsel %vm21, %v4883, 0
    %v4918 = vsel %vm21, %v4884, 0
    %v4921 = vsel %vm21, %v4885, 0
    %v4924 = vsel %vm21, %v4886, 0
    %v4927 = vsel %vm21, %v4887, 0
    %v4930 = vsel %vm21, %v4888, 0
    %v4933 = vsel %vm21, %v4889, 0
    %v4936 = vsel %vm21, %v4890, 0
    %v4939 = vsel %vm21, %v4891, 0
    %v4942 = vsel %vm21, %v4892, 0
    %v4945 = vsel %vm21, %v4893, 0
    %v4948 = vsel %vm21, %v4894, 0
    %v4951 = vsel %vm21, %v4895, 0
    %4953 = vmatprep.subr.mxu0 0.0
    %4954 = vmatpush1.msra.mxu0 %v4897
    %4955 = vmatprep.subr.mxu0 0.0
    %4956 = vmatpush1.msra.mxu0 %v4898
    %4957 = vmatprep.subr.mxu0 0.0
    %4958 = vmatpush1.msra.mxu0 %v4899
    %4959 = vmatprep.subr.mxu0 0.0
    %4960 = vmatpush1.msra.mxu0 %v4900
    %4961 = vmatprep.subr.mxu0 0.0
    %4962 = vmatpush1.msra.mxu0 %v4901
    %4963 = vmatprep.subr.mxu0 0.0
    %4964 = vmatpush1.msra.mxu0 %v4902
    %4965 = vmatprep.subr.mxu0 0.0
    %4966 = vmatpush1.msra.mxu0 %v4903
    %4967 = vmatprep.subr.mxu0 0.0
    %4968 = vmatpush1.msra.mxu0 %v4904
    %4969 = vmatprep.subr.mxu0 0.0
    %4970 = vmatpush1.msra.mxu0 0.0
    %4971 = vmatprep.subr.mxu0 0.0
    %4972 = vmatpush1.msra.mxu0 0.0
    %4973 = vmatprep.subr.mxu0 0.0
    %4974 = vmatpush1.msra.mxu0 0.0
    %4975 = vmatprep.subr.mxu0 0.0
    %4976 = vmatpush1.msra.mxu0 0.0
    %4977 = vmatprep.subr.mxu0 0.0
    %4978 = vmatpush1.msra.mxu0 0.0
    %4979 = vmatprep.subr.mxu0 0.0
    %4980 = vmatpush1.msra.mxu0 0.0
    %4981 = vmatprep.subr.mxu0 0.0
    %4982 = vmatpush1.msra.mxu0 0.0
    %4983 = vmatprep.subr.mxu0 0.0
    %4984 = vmatpush1.msra.mxu0 0.0
    %4985 = vmatprep.subr.mxu0 0.0
    %4986 = vmatpush1.msra.mxu0 0.0
    %4987 = vmatprep.subr.mxu0 0.0
    %4988 = vmatpush1.msra.mxu0 0.0
    %4989 = vmatprep.subr.mxu0 0.0
    %4990 = vmatpush1.msra.mxu0 0.0
    %4991 = vmatprep.subr.mxu0 0.0
    %4992 = vmatpush1.msra.mxu0 0.0
    %4993 = vmatprep.subr.mxu0 0.0
    %4994 = vmatpush1.msra.mxu0 0.0
    %4995 = vmatprep.subr.mxu0 0.0
    %4996 = vmatpush1.msra.mxu0 0.0
    %4997 = vmatprep.subr.mxu0 0.0
    %4998 = vmatpush1.msra.mxu0 0.0
    %4999 = vmatprep.subr.mxu0 0.0
    %5000 = vmatpush1.msra.mxu0 0.0
    %5001 = vmatprep.subr.mxu0 0.0
    %5002 = vmatpush1.msra.mxu0 0.0
    %5003 = vmatprep.subr.mxu0 0.0
    %5004 = vmatpush1.msra.mxu0 0.0
    %5005 = vmatprep.subr.mxu0 0.0
    %5006 = vmatpush1.msra.mxu0 0.0
    %5007 = vmatprep.subr.mxu0 0.0
    %5008 = vmatpush1.msra.mxu0 0.0
    %5009 = vmatprep.subr.mxu0 0.0
    %5010 = vmatpush1.msra.mxu0 0.0
    %5011 = vmatprep.subr.mxu0 0.0
    %5012 = vmatpush1.msra.mxu0 0.0
    %5013 = vmatprep.subr.mxu0 0.0
    %5014 = vmatpush1.msra.mxu0 0.0
    %5015 = vmatprep.subr.mxu0 0.0
    %5016 = vmatpush1.msra.mxu0 0.0
    %5017 = vmatprep.mubr.f32.mxu0 0.0
    %5018 = vmatmul.mubr.f32.gmra.mrb[0].mxu0 %v4906
    %v5019 = vpop.f32.mrb[0].mxu0
    %v5020 = vadd.f32 0.0, %v5019
    %v5021 = vpop.f32.mrb[0].mxu0
    %5022 = vmatprep.mubr.f32.mxu0 0.0
    %5023 = vmatmul.mubr.f32.gmra.mrb[0].mxu0 %v4909
    %v5024 = vpop.f32.mrb[0].mxu0
    %v5025 = vadd.f32 0.0, %v5024
    %v5026 = vpop.f32.mrb[0].mxu0
    %5027 = vmatprep.mubr.f32.mxu0 0.0
    %5028 = vmatmul.mubr.f32.gmra.mrb[0].mxu0 %v4912
    %v5029 = vpop.f32.mrb[0].mxu0
    %v5030 = vadd.f32 0.0, %v5029
    %v5031 = vpop.f32.mrb[0].mxu0
    %5032 = vmatprep.mubr.f32.mxu0 0.0
    %5033 = vmatmul.mubr.f32.gmra.mrb[0].mxu0 %v4915
    %v5034 = vpop.f32.mrb[0].mxu0
    %v5035 = vadd.f32 0.0, %v5034
    %v5036 = vpop.f32.mrb[0].mxu0
    %5037 = vmatprep.mubr.f32.mxu0 0.0
    %5038 = vmatmul.mubr.f32.gmra.mrb[0].mxu0 %v4918
    %v5039 = vpop.f32.mrb[0].mxu0
    %v5040 = vadd.f32 0.0, %v5039
    %v5041 = vpop.f32.mrb[0].mxu0
    %5042 = vmatprep.mubr.f32.mxu0 0.0
    %5043 = vmatmul.mubr.f32.gmra.mrb[0].mxu0 %v4921
    %v5044 = vpop.f32.mrb[0].mxu0
    %v5045 = vadd.f32 0.0, %v5044
    %v5046 = vpop.f32.mrb[0].mxu0
    %5047 = vmatprep.mubr.f32.mxu0 0.0
    %5048 = vmatmul.mubr.f32.gmra.mrb[0].mxu0 %v4924
    %v5049 = vpop.f32.mrb[0].mxu0
    %v5050 = vadd.f32 0.0, %v5049
    %v5051 = vpop.f32.mrb[0].mxu0
    %5052 = vmatprep.mubr.f32.mxu0 0.0
    %5053 = vmatmul.mubr.f32.gmra.mrb[0].mxu0 %v4927
    %v5054 = vpop.f32.mrb[0].mxu0
    %v5055 = vadd.f32 0.0, %v5054
    %v5056 = vpop.f32.mrb[0].mxu0
    %5057 = vmatprep.mubr.f32.mxu0 0.0
    %5058 = vmatmul.mubr.f32.gmra.mrb[0].mxu0 %v4930
    %v5059 = vpop.f32.mrb[0].mxu0
    %v5060 = vadd.f32 0.0, %v5059
    %v5061 = vpop.f32.mrb[0].mxu0
    %5062 = vmatprep.mubr.f32.mxu0 0.0
    %5063 = vmatmul.mubr.f32.gmra.mrb[0].mxu0 %v4933
    %v5064 = vpop.f32.mrb[0].mxu0
    %v5065 = vadd.f32 0.0, %v5064
    %v5066 = vpop.f32.mrb[0].mxu0
    %5067 = vmatprep.mubr.f32.mxu0 0.0
    %5068 = vmatmul.mubr.f32.gmra.mrb[0].mxu0 %v4936
    %v5069 = vpop.f32.mrb[0].mxu0
    %v5070 = vadd.f32 0.0, %v5069
    %v5071 = vpop.f32.mrb[0].mxu0
    %5072 = vmatprep.mubr.f32.mxu0 0.0
    %5073 = vmatmul.mubr.f32.gmra.mrb[0].mxu0 %v4939
    %v5074 = vpop.f32.mrb[0].mxu0
    %v5075 = vadd.f32 0.0, %v5074
    %v5076 = vpop.f32.mrb[0].mxu0
    %5077 = vmatprep.mubr.f32.mxu0 0.0
    %5078 = vmatmul.mubr.f32.gmra.mrb[0].mxu0 %v4942
    %v5079 = vpop.f32.mrb[0].mxu0
    %v5080 = vadd.f32 0.0, %v5079
    %v5081 = vpop.f32.mrb[0].mxu0
    %5082 = vmatprep.mubr.f32.mxu0 0.0
    %5083 = vmatmul.mubr.f32.gmra.mrb[0].mxu0 %v4945
    %v5084 = vpop.f32.mrb[0].mxu0
    %v5085 = vadd.f32 0.0, %v5084
    %v5086 = vpop.f32.mrb[0].mxu0
    %5087 = vmatprep.mubr.f32.mxu0 0.0
    %5088 = vmatmul.mubr.f32.gmra.mrb[0].mxu0 %v4948
    %v5089 = vpop.f32.mrb[0].mxu0
    %v5090 = vadd.f32 0.0, %v5089
    %v5091 = vpop.f32.mrb[0].mxu0
    %5092 = vmatprep.mubr.f32.mxu0 0.0
    %5093 = vmatmul.mubr.f32.gmra.mrb[0].mxu0 %v4951
    %v5094 = vpop.f32.mrb[0].mxu0
    %v5095 = vadd.f32 0.0, %v5094
    %v5096 = vpop.f32.mrb[0].mxu0
    %5097 = vdwg.mxu0
    %v5098 = vadd.f32 %v4864, %v5020
    %v5099 = vadd.f32 %v4865, %v5025
    %v5100 = vadd.f32 %v4866, %v5030
    %v5101 = vadd.f32 %v4867, %v5035
    %v5102 = vadd.f32 %v4868, %v5040
    %v5103 = vadd.f32 %v4869, %v5045
    %v5104 = vadd.f32 %v4870, %v5050
    %v5105 = vadd.f32 %v4871, %v5055
    %v5106 = vadd.f32 %v4872, %v5060
    %v5107 = vadd.f32 %v4873, %v5065
    %v5108 = vadd.f32 %v4874, %v5070
    %v5109 = vadd.f32 %v4875, %v5075
    %v5110 = vadd.f32 %v4876, %v5080
    %v5111 = vadd.f32 %v4877, %v5085
    %v5112 = vadd.f32 %v4878, %v5090
    %v5113 = vadd.f32 %v4879, %v5095
    %s5114 = scalar_lea.vmem %s4, 1
    %v5115 = vld [vmem:[%s5114] sm:$0x1]
    %v5117 = vlaneseq
    %v5118 = vshrl.u32 %v5117, 7
    %v5119 = vsub.s32 0, %v5118
    %v5120 = vrot.slane %v5115, %v5119
    %v5122 = vadd.f32 %v5098, %v5120
    %v5123 = vadd.f32 %v5099, %v5120
    %v5124 = vadd.f32 %v5100, %v5120
    %v5125 = vadd.f32 %v5101, %v5120
    %v5126 = vadd.f32 %v5102, %v5120
    %v5127 = vadd.f32 %v5103, %v5120
    %v5128 = vadd.f32 %v5104, %v5120
    %v5129 = vadd.f32 %v5105, %v5120
    %v5130 = vadd.f32 %v5106, %v5120
    %v5131 = vadd.f32 %v5107, %v5120
    %v5132 = vadd.f32 %v5108, %v5120
    %v5133 = vadd.f32 %v5109, %v5120
    %v5134 = vadd.f32 %v5110, %v5120
    %v5135 = vadd.f32 %v5111, %v5120
    %v5136 = vadd.f32 %v5112, %v5120
    %v5137 = vadd.f32 %v5113, %v5120
    %v5138 = vmax.f32 %v5122, 0.0
    %v5139 = vmax.f32 %v5123, 0.0
    %v5140 = vmax.f32 %v5124, 0.0
    %v5141 = vmax.f32 %v5125, 0.0
    %v5142 = vmax.f32 %v5126, 0.0
    %v5143 = vmax.f32 %v5127, 0.0
    %v5144 = vmax.f32 %v5128, 0.0
    %v5145 = vmax.f32 %v5129, 0.0
    %v5146 = vmax.f32 %v5130, 0.0
    %v5147 = vmax.f32 %v5131, 0.0
    %v5148 = vmax.f32 %v5132, 0.0
    %v5149 = vmax.f32 %v5133, 0.0
    %v5150 = vmax.f32 %v5134, 0.0
    %v5151 = vmax.f32 %v5135, 0.0
    %v5152 = vmax.f32 %v5136, 0.0
    %v5153 = vmax.f32 %v5137, 0.0
    %5154 = vst.msk [vmem:[%s894 + $0x1] sm:$0xff] %vm21, %v5138
    %5155 = vst.msk [vmem:[%s894 + $0x11] sm:$0xff] %vm21, %v5139
    %5156 = vst.msk [vmem:[%s894 + $0x21] sm:$0xff] %vm21, %v5140
    %5157 = vst.msk [vmem:[%s894 + $0x31] sm:$0xff] %vm21, %v5141
    %5158 = vst.msk [vmem:[%s894 + $0x41] sm:$0xff] %vm21, %v5142
    %5159 = vst.msk [vmem:[%s894 + $0x51] sm:$0xff] %vm21, %v5143
    %5160 = vst.msk [vmem:[%s894 + $0x61] sm:$0xff] %vm21, %v5144
    %5161 = vst.msk [vmem:[%s894 + $0x71] sm:$0xff] %vm21, %v5145
    %5162 = vst.msk [vmem:[%s894 + $0xa1] sm:$0xff] %vm21, %v5146
    %5163 = vst.msk [vmem:[%s894 + $0xb1] sm:$0xff] %vm21, %v5147
    %5164 = vst.msk [vmem:[%s894 + $0xc1] sm:$0xff] %vm21, %v5148
    %5165 = vst.msk [vmem:[%s894 + $0xd1] sm:$0xff] %vm21, %v5149
    %5166 = vst.msk [vmem:[%s894 + $0xe1] sm:$0xff] %vm21, %v5150
    %5167 = vst.msk [vmem:[%s894 + $0xf1] sm:$0xff] %vm21, %v5151
    %5168 = vst.msk [vmem:[%s894 + $0x101] sm:$0xff] %vm21, %v5152
    %5169 = vst.msk [vmem:[%s894 + $0x111] sm:$0xff] %vm21, %v5153
    %v5170 = vld [vmem:[#allocation2] sm:$0xff]
    %v5171 = vld [vmem:[#allocation2 + $0x10] sm:$0xff]
    %v5172 = vld [vmem:[#allocation2 + $0x20] sm:$0xff]
    %v5173 = vld [vmem:[#allocation2 + $0x30] sm:$0xff]
    %v5174 = vld [vmem:[#allocation2 + $0x40] sm:$0xff]
    %v5175 = vld [vmem:[#allocation2 + $0x50] sm:$0xff]
    %v5176 = vld [vmem:[#allocation2 + $0x60] sm:$0xff]
    %v5177 = vld [vmem:[#allocation2 + $0x70] sm:$0xff]
    %v5178 = vld [vmem:[#allocation2 + $0xa0] sm:$0xff]
    %v5179 = vld [vmem:[#allocation2 + $0xb0] sm:$0xff]
    %v5180 = vld [vmem:[#allocation2 + $0xc0] sm:$0xff]
    %v5181 = vld [vmem:[#allocation2 + $0xd0] sm:$0xff]
    %v5182 = vld [vmem:[#allocation2 + $0xe0] sm:$0xff]
    %v5183 = vld [vmem:[#allocation2 + $0xf0] sm:$0xff]
    %v5184 = vld [vmem:[#allocation2 + $0x100] sm:$0xff]
    %v5185 = vld [vmem:[#allocation2 + $0x110] sm:$0xff]
    %s5186 = scalar_lea.vmem %s3, 1152
    %v5187 = vld [vmem:[%s5186] sm:$0xff]
    %v5188 = vld [vmem:[%s5186 + $0x8] sm:$0xff]
    %v5189 = vld [vmem:[%s5186 + $0x10] sm:$0xff]
    %v5190 = vld [vmem:[%s5186 + $0x18] sm:$0xff]
    %v5191 = vld [vmem:[%s5186 + $0x20] sm:$0xff]
    %v5192 = vld [vmem:[%s5186 + $0x28] sm:$0xff]
    %v5193 = vld [vmem:[%s5186 + $0x30] sm:$0xff]
    %v5194 = vld [vmem:[%s5186 + $0x38] sm:$0xff]
    %v5195 = vld [vmem:[#allocation2 + $0x1] sm:$0xff]
    %v5196 = vld [vmem:[#allocation2 + $0x11] sm:$0xff]
    %v5197 = vld [vmem:[#allocation2 + $0x21] sm:$0xff]
    %v5198 = vld [vmem:[#allocation2 + $0x31] sm:$0xff]
    %v5199 = vld [vmem:[#allocation2 + $0x41] sm:$0xff]
    %v5200 = vld [vmem:[#allocation2 + $0x51] sm:$0xff]
    %v5201 = vld [vmem:[#allocation2 + $0x61] sm:$0xff]
    %v5202 = vld [vmem:[#allocation2 + $0x71] sm:$0xff]
    %v5203 = vld [vmem:[#allocation2 + $0xa1] sm:$0xff]
    %v5204 = vld [vmem:[#allocation2 + $0xb1] sm:$0xff]
    %v5205 = vld [vmem:[#allocation2 + $0xc1] sm:$0xff]
    %v5206 = vld [vmem:[#allocation2 + $0xd1] sm:$0xff]
    %v5207 = vld [vmem:[#allocation2 + $0xe1] sm:$0xff]
    %v5208 = vld [vmem:[#allocation2 + $0xf1] sm:$0xff]
    %v5209 = vld [vmem:[#allocation2 + $0x101] sm:$0xff]
    %v5210 = vld [vmem:[#allocation2 + $0x111] sm:$0xff]
    %s5211 = scalar_lea.vmem %s3, 1216
    %v5212 = vld [vmem:[%s5211] sm:$0xff]
    %v5213 = vld [vmem:[%s5211 + $0x8] sm:$0xff]
    %v5214 = vld [vmem:[%s5211 + $0x10] sm:$0xff]
    %v5215 = vld [vmem:[%s5211 + $0x18] sm:$0xff]
    %v5216 = vld [vmem:[%s5211 + $0x20] sm:$0xff]
    %v5217 = vld [vmem:[%s5211 + $0x28] sm:$0xff]
    %v5218 = vld [vmem:[%s5211 + $0x30] sm:$0xff]
    %v5219 = vld [vmem:[%s5211 + $0x38] sm:$0xff]
    %v5221 = vsel %vm21, %v5195, 0
    %v5224 = vsel %vm21, %v5196, 0
    %v5227 = vsel %vm21, %v5197, 0
    %v5230 = vsel %vm21, %v5198, 0
    %v5233 = vsel %vm21, %v5199, 0
    %v5236 = vsel %vm21, %v5200, 0
    %v5239 = vsel %vm21, %v5201, 0
    %v5242 = vsel %vm21, %v5202, 0
    %v5245 = vsel %vm21, %v5203, 0
    %v5248 = vsel %vm21, %v5204, 0
    %v5251 = vsel %vm21, %v5205, 0
    %v5254 = vsel %vm21, %v5206, 0
    %v5257 = vsel %vm21, %v5207, 0
    %v5260 = vsel %vm21, %v5208, 0
    %v5263 = vsel %vm21, %v5209, 0
    %v5266 = vsel %vm21, %v5210, 0
    %5268 = vmatprep.subr.mxu0 0.0
    %5269 = vmatpush1.msra.mxu0 %v5212
    %5270 = vmatprep.subr.mxu0 0.0
    %5271 = vmatpush1.msra.mxu0 %v5213
    %5272 = vmatprep.subr.mxu0 0.0
    %5273 = vmatpush1.msra.mxu0 %v5214
    %5274 = vmatprep.subr.mxu0 0.0
    %5275 = vmatpush1.msra.mxu0 %v5215
    %5276 = vmatprep.subr.mxu0 0.0
    %5277 = vmatpush1.msra.mxu0 %v5216
    %5278 = vmatprep.subr.mxu0 0.0
    %5279 = vmatpush1.msra.mxu0 %v5217
    %5280 = vmatprep.subr.mxu0 0.0
    %5281 = vmatpush1.msra.mxu0 %v5218
    %5282 = vmatprep.subr.mxu0 0.0
    %5283 = vmatpush1.msra.mxu0 %v5219
    %5284 = vmatprep.subr.mxu0 0.0
    %5285 = vmatpush1.msra.mxu0 0.0
    %5286 = vmatprep.subr.mxu0 0.0
    %5287 = vmatpush1.msra.mxu0 0.0
    %5288 = vmatprep.subr.mxu0 0.0
    %5289 = vmatpush1.msra.mxu0 0.0
    %5290 = vmatprep.subr.mxu0 0.0
    %5291 = vmatpush1.msra.mxu0 0.0
    %5292 = vmatprep.subr.mxu0 0.0
    %5293 = vmatpush1.msra.mxu0 0.0
    %5294 = vmatprep.subr.mxu0 0.0
    %5295 = vmatpush1.msra.mxu0 0.0
    %5296 = vmatprep.subr.mxu0 0.0
    %5297 = vmatpush1.msra.mxu0 0.0
    %5298 = vmatprep.subr.mxu0 0.0
    %5299 = vmatpush1.msra.mxu0 0.0
    %5300 = vmatprep.subr.mxu0 0.0
    %5301 = vmatpush1.msra.mxu0 0.0
    %5302 = vmatprep.subr.mxu0 0.0
    %5303 = vmatpush1.msra.mxu0 0.0
    %5304 = vmatprep.subr.mxu0 0.0
    %5305 = vmatpush1.msra.mxu0 0.0
    %5306 = vmatprep.subr.mxu0 0.0
    %5307 = vmatpush1.msra.mxu0 0.0
    %5308 = vmatprep.subr.mxu0 0.0
    %5309 = vmatpush1.msra.mxu0 0.0
    %5310 = vmatprep.subr.mxu0 0.0
    %5311 = vmatpush1.msra.mxu0 0.0
    %5312 = vmatprep.subr.mxu0 0.0
    %5313 = vmatpush1.msra.mxu0 0.0
    %5314 = vmatprep.subr.mxu0 0.0
    %5315 = vmatpush1.msra.mxu0 0.0
    %5316 = vmatprep.subr.mxu0 0.0
    %5317 = vmatpush1.msra.mxu0 0.0
    %5318 = vmatprep.subr.mxu0 0.0
    %5319 = vmatpush1.msra.mxu0 0.0
    %5320 = vmatprep.subr.mxu0 0.0
    %5321 = vmatpush1.msra.mxu0 0.0
    %5322 = vmatprep.subr.mxu0 0.0
    %5323 = vmatpush1.msra.mxu0 0.0
    %5324 = vmatprep.subr.mxu0 0.0
    %5325 = vmatpush1.msra.mxu0 0.0
    %5326 = vmatprep.subr.mxu0 0.0
    %5327 = vmatpush1.msra.mxu0 0.0
    %5328 = vmatprep.subr.mxu0 0.0
    %5329 = vmatpush1.msra.mxu0 0.0
    %5330 = vmatprep.subr.mxu0 0.0
    %5331 = vmatpush1.msra.mxu0 0.0
    %5332 = vmatprep.mubr.f32.mxu0 0.0
    %5333 = vmatmul.mubr.f32.gmra.mrb[0].mxu0 %v5221
    %v5334 = vpop.f32.mrb[0].mxu0
    %v5335 = vadd.f32 0.0, %v5334
    %v5336 = vpop.f32.mrb[0].mxu0
    %5337 = vmatprep.mubr.f32.mxu0 0.0
    %5338 = vmatmul.mubr.f32.gmra.mrb[0].mxu0 %v5224
    %v5339 = vpop.f32.mrb[0].mxu0
    %v5340 = vadd.f32 0.0, %v5339
    %v5341 = vpop.f32.mrb[0].mxu0
    %5342 = vmatprep.mubr.f32.mxu0 0.0
    %5343 = vmatmul.mubr.f32.gmra.mrb[0].mxu0 %v5227
    %v5344 = vpop.f32.mrb[0].mxu0
    %v5345 = vadd.f32 0.0, %v5344
    %v5346 = vpop.f32.mrb[0].mxu0
    %5347 = vmatprep.mubr.f32.mxu0 0.0
    %5348 = vmatmul.mubr.f32.gmra.mrb[0].mxu0 %v5230
    %v5349 = vpop.f32.mrb[0].mxu0
    %v5350 = vadd.f32 0.0, %v5349
    %v5351 = vpop.f32.mrb[0].mxu0
    %5352 = vmatprep.mubr.f32.mxu0 0.0
    %5353 = vmatmul.mubr.f32.gmra.mrb[0].mxu0 %v5233
    %v5354 = vpop.f32.mrb[0].mxu0
    %v5355 = vadd.f32 0.0, %v5354
    %v5356 = vpop.f32.mrb[0].mxu0
    %5357 = vmatprep.mubr.f32.mxu0 0.0
    %5358 = vmatmul.mubr.f32.gmra.mrb[0].mxu0 %v5236
    %v5359 = vpop.f32.mrb[0].mxu0
    %v5360 = vadd.f32 0.0, %v5359
    %v5361 = vpop.f32.mrb[0].mxu0
    %5362 = vmatprep.mubr.f32.mxu0 0.0
    %5363 = vmatmul.mubr.f32.gmra.mrb[0].mxu0 %v5239
    %v5364 = vpop.f32.mrb[0].mxu0
    %v5365 = vadd.f32 0.0, %v5364
    %v5366 = vpop.f32.mrb[0].mxu0
    %5367 = vmatprep.mubr.f32.mxu0 0.0
    %5368 = vmatmul.mubr.f32.gmra.mrb[0].mxu0 %v5242
    %v5369 = vpop.f32.mrb[0].mxu0
    %v5370 = vadd.f32 0.0, %v5369
    %v5371 = vpop.f32.mrb[0].mxu0
    %5372 = vmatprep.mubr.f32.mxu0 0.0
    %5373 = vmatmul.mubr.f32.gmra.mrb[0].mxu0 %v5245
    %v5374 = vpop.f32.mrb[0].mxu0
    %v5375 = vadd.f32 0.0, %v5374
    %v5376 = vpop.f32.mrb[0].mxu0
    %5377 = vmatprep.mubr.f32.mxu0 0.0
    %5378 = vmatmul.mubr.f32.gmra.mrb[0].mxu0 %v5248
    %v5379 = vpop.f32.mrb[0].mxu0
    %v5380 = vadd.f32 0.0, %v5379
    %v5381 = vpop.f32.mrb[0].mxu0
    %5382 = vmatprep.mubr.f32.mxu0 0.0
    %5383 = vmatmul.mubr.f32.gmra.mrb[0].mxu0 %v5251
    %v5384 = vpop.f32.mrb[0].mxu0
    %v5385 = vadd.f32 0.0, %v5384
    %v5386 = vpop.f32.mrb[0].mxu0
    %5387 = vmatprep.mubr.f32.mxu0 0.0
    %5388 = vmatmul.mubr.f32.gmra.mrb[0].mxu0 %v5254
    %v5389 = vpop.f32.mrb[0].mxu0
    %v5390 = vadd.f32 0.0, %v5389
    %v5391 = vpop.f32.mrb[0].mxu0
    %5392 = vmatprep.mubr.f32.mxu0 0.0
    %5393 = vmatmul.mubr.f32.gmra.mrb[0].mxu0 %v5257
    %v5394 = vpop.f32.mrb[0].mxu0
    %v5395 = vadd.f32 0.0, %v5394
    %v5396 = vpop.f32.mrb[0].mxu0
    %5397 = vmatprep.mubr.f32.mxu0 0.0
    %5398 = vmatmul.mubr.f32.gmra.mrb[0].mxu0 %v5260
    %v5399 = vpop.f32.mrb[0].mxu0
    %v5400 = vadd.f32 0.0, %v5399
    %v5401 = vpop.f32.mrb[0].mxu0
    %5402 = vmatprep.mubr.f32.mxu0 0.0
    %5403 = vmatmul.mubr.f32.gmra.mrb[0].mxu0 %v5263
    %v5404 = vpop.f32.mrb[0].mxu0
    %v5405 = vadd.f32 0.0, %v5404
    %v5406 = vpop.f32.mrb[0].mxu0
    %5407 = vmatprep.mubr.f32.mxu0 0.0
    %5408 = vmatmul.mubr.f32.gmra.mrb[0].mxu0 %v5266
    %v5409 = vpop.f32.mrb[0].mxu0
    %v5410 = vadd.f32 0.0, %v5409
    %v5411 = vpop.f32.mrb[0].mxu0
    %5412 = vdwg.mxu0
    %v5414 = vsel %vm21, %v5170, 0
    %v5417 = vsel %vm21, %v5171, 0
    %v5420 = vsel %vm21, %v5172, 0
    %v5423 = vsel %vm21, %v5173, 0
    %v5426 = vsel %vm21, %v5174, 0
    %v5429 = vsel %vm21, %v5175, 0
    %v5432 = vsel %vm21, %v5176, 0
    %v5435 = vsel %vm21, %v5177, 0
    %v5438 = vsel %vm21, %v5178, 0
    %v5441 = vsel %vm21, %v5179, 0
    %v5444 = vsel %vm21, %v5180, 0
    %v5447 = vsel %vm21, %v5181, 0
    %v5450 = vsel %vm21, %v5182, 0
    %v5453 = vsel %vm21, %v5183, 0
    %v5456 = vsel %vm21, %v5184, 0
    %v5459 = vsel %vm21, %v5185, 0
    %5461 = vmatprep.subr.mxu0 0.0
    %5462 = vmatpush1.msra.mxu0 %v5187
    %5463 = vmatprep.subr.mxu0 0.0
    %5464 = vmatpush1.msra.mxu0 %v5188
    %5465 = vmatprep.subr.mxu0 0.0
    %5466 = vmatpush1.msra.mxu0 %v5189
    %5467 = vmatprep.subr.mxu0 0.0
    %5468 = vmatpush1.msra.mxu0 %v5190
    %5469 = vmatprep.subr.mxu0 0.0
    %5470 = vmatpush1.msra.mxu0 %v5191
    %5471 = vmatprep.subr.mxu0 0.0
    %5472 = vmatpush1.msra.mxu0 %v5192
    %5473 = vmatprep.subr.mxu0 0.0
    %5474 = vmatpush1.msra.mxu0 %v5193
    %5475 = vmatprep.subr.mxu0 0.0
    %5476 = vmatpush1.msra.mxu0 %v5194
    %5477 = vmatprep.subr.mxu0 0.0
    %5478 = vmatpush1.msra.mxu0 0.0
    %5479 = vmatprep.subr.mxu0 0.0
    %5480 = vmatpush1.msra.mxu0 0.0
    %5481 = vmatprep.subr.mxu0 0.0
    %5482 = vmatpush1.msra.mxu0 0.0
    %5483 = vmatprep.subr.mxu0 0.0
    %5484 = vmatpush1.msra.mxu0 0.0
    %5485 = vmatprep.subr.mxu0 0.0
    %5486 = vmatpush1.msra.mxu0 0.0
    %5487 = vmatprep.subr.mxu0 0.0
    %5488 = vmatpush1.msra.mxu0 0.0
    %5489 = vmatprep.subr.mxu0 0.0
    %5490 = vmatpush1.msra.mxu0 0.0
    %5491 = vmatprep.subr.mxu0 0.0
    %5492 = vmatpush1.msra.mxu0 0.0
    %5493 = vmatprep.subr.mxu0 0.0
    %5494 = vmatpush1.msra.mxu0 0.0
    %5495 = vmatprep.subr.mxu0 0.0
    %5496 = vmatpush1.msra.mxu0 0.0
    %5497 = vmatprep.subr.mxu0 0.0
    %5498 = vmatpush1.msra.mxu0 0.0
    %5499 = vmatprep.subr.mxu0 0.0
    %5500 = vmatpush1.msra.mxu0 0.0
    %5501 = vmatprep.subr.mxu0 0.0
    %5502 = vmatpush1.msra.mxu0 0.0
    %5503 = vmatprep.subr.mxu0 0.0
    %5504 = vmatpush1.msra.mxu0 0.0
    %5505 = vmatprep.subr.mxu0 0.0
    %5506 = vmatpush1.msra.mxu0 0.0
    %5507 = vmatprep.subr.mxu0 0.0
    %5508 = vmatpush1.msra.mxu0 0.0
    %5509 = vmatprep.subr.mxu0 0.0
    %5510 = vmatpush1.msra.mxu0 0.0
    %5511 = vmatprep.subr.mxu0 0.0
    %5512 = vmatpush1.msra.mxu0 0.0
    %5513 = vmatprep.subr.mxu0 0.0
    %5514 = vmatpush1.msra.mxu0 0.0
    %5515 = vmatprep.subr.mxu0 0.0
    %5516 = vmatpush1.msra.mxu0 0.0
    %5517 = vmatprep.subr.mxu0 0.0
    %5518 = vmatpush1.msra.mxu0 0.0
    %5519 = vmatprep.subr.mxu0 0.0
    %5520 = vmatpush1.msra.mxu0 0.0
    %5521 = vmatprep.subr.mxu0 0.0
    %5522 = vmatpush1.msra.mxu0 0.0
    %5523 = vmatprep.subr.mxu0 0.0
    %5524 = vmatpush1.msra.mxu0 0.0
    %5525 = vmatprep.mubr.f32.mxu0 0.0
    %5526 = vmatmul.mubr.f32.gmra.mrb[0].mxu0 %v5414
    %v5527 = vpop.f32.mrb[0].mxu0
    %v5528 = vadd.f32 %v5335, %v5527
    %v5529 = vpop.f32.mrb[0].mxu0
    %5530 = vmatprep.mubr.f32.mxu0 0.0
    %5531 = vmatmul.mubr.f32.gmra.mrb[0].mxu0 %v5417
    %v5532 = vpop.f32.mrb[0].mxu0
    %v5533 = vadd.f32 %v5340, %v5532
    %v5534 = vpop.f32.mrb[0].mxu0
    %5535 = vmatprep.mubr.f32.mxu0 0.0
    %5536 = vmatmul.mubr.f32.gmra.mrb[0].mxu0 %v5420
    %v5537 = vpop.f32.mrb[0].mxu0
    %v5538 = vadd.f32 %v5345, %v5537
    %v5539 = vpop.f32.mrb[0].mxu0
    %5540 = vmatprep.mubr.f32.mxu0 0.0
    %5541 = vmatmul.mubr.f32.gmra.mrb[0].mxu0 %v5423
    %v5542 = vpop.f32.mrb[0].mxu0
    %v5543 = vadd.f32 %v5350, %v5542
    %v5544 = vpop.f32.mrb[0].mxu0
    %5545 = vmatprep.mubr.f32.mxu0 0.0
    %5546 = vmatmul.mubr.f32.gmra.mrb[0].mxu0 %v5426
    %v5547 = vpop.f32.mrb[0].mxu0
    %v5548 = vadd.f32 %v5355, %v5547
    %v5549 = vpop.f32.mrb[0].mxu0
    %5550 = vmatprep.mubr.f32.mxu0 0.0
    %5551 = vmatmul.mubr.f32.gmra.mrb[0].mxu0 %v5429
    %v5552 = vpop.f32.mrb[0].mxu0
    %v5553 = vadd.f32 %v5360, %v5552
    %v5554 = vpop.f32.mrb[0].mxu0
    %5555 = vmatprep.mubr.f32.mxu0 0.0
    %5556 = vmatmul.mubr.f32.gmra.mrb[0].mxu0 %v5432
    %v5557 = vpop.f32.mrb[0].mxu0
    %v5558 = vadd.f32 %v5365, %v5557
    %v5559 = vpop.f32.mrb[0].mxu0
    %5560 = vmatprep.mubr.f32.mxu0 0.0
    %5561 = vmatmul.mubr.f32.gmra.mrb[0].mxu0 %v5435
    %v5562 = vpop.f32.mrb[0].mxu0
    %v5563 = vadd.f32 %v5370, %v5562
    %v5564 = vpop.f32.mrb[0].mxu0
    %5565 = vmatprep.mubr.f32.mxu0 0.0
    %5566 = vmatmul.mubr.f32.gmra.mrb[0].mxu0 %v5438
    %v5567 = vpop.f32.mrb[0].mxu0
    %v5568 = vadd.f32 %v5375, %v5567
    %v5569 = vpop.f32.mrb[0].mxu0
    %5570 = vmatprep.mubr.f32.mxu0 0.0
    %5571 = vmatmul.mubr.f32.gmra.mrb[0].mxu0 %v5441
    %v5572 = vpop.f32.mrb[0].mxu0
    %v5573 = vadd.f32 %v5380, %v5572
    %v5574 = vpop.f32.mrb[0].mxu0
    %5575 = vmatprep.mubr.f32.mxu0 0.0
    %5576 = vmatmul.mubr.f32.gmra.mrb[0].mxu0 %v5444
    %v5577 = vpop.f32.mrb[0].mxu0
    %v5578 = vadd.f32 %v5385, %v5577
    %v5579 = vpop.f32.mrb[0].mxu0
    %5580 = vmatprep.mubr.f32.mxu0 0.0
    %5581 = vmatmul.mubr.f32.gmra.mrb[0].mxu0 %v5447
    %v5582 = vpop.f32.mrb[0].mxu0
    %v5583 = vadd.f32 %v5390, %v5582
    %v5584 = vpop.f32.mrb[0].mxu0
    %5585 = vmatprep.mubr.f32.mxu0 0.0
    %5586 = vmatmul.mubr.f32.gmra.mrb[0].mxu0 %v5450
    %v5587 = vpop.f32.mrb[0].mxu0
    %v5588 = vadd.f32 %v5395, %v5587
    %v5589 = vpop.f32.mrb[0].mxu0
    %5590 = vmatprep.mubr.f32.mxu0 0.0
    %5591 = vmatmul.mubr.f32.gmra.mrb[0].mxu0 %v5453
    %v5592 = vpop.f32.mrb[0].mxu0
    %v5593 = vadd.f32 %v5400, %v5592
    %v5594 = vpop.f32.mrb[0].mxu0
    %5595 = vmatprep.mubr.f32.mxu0 0.0
    %5596 = vmatmul.mubr.f32.gmra.mrb[0].mxu0 %v5456
    %v5597 = vpop.f32.mrb[0].mxu0
    %v5598 = vadd.f32 %v5405, %v5597
    %v5599 = vpop.f32.mrb[0].mxu0
    %5600 = vmatprep.mubr.f32.mxu0 0.0
    %5601 = vmatmul.mubr.f32.gmra.mrb[0].mxu0 %v5459
    %v5602 = vpop.f32.mrb[0].mxu0
    %v5603 = vadd.f32 %v5410, %v5602
    %v5604 = vpop.f32.mrb[0].mxu0
    %5605 = vdwg.mxu0
    %v5606 = vld [vmem:[#allocation2 + $0x2] sm:$0xff]
    %v5607 = vld [vmem:[#allocation2 + $0x12] sm:$0xff]
    %v5608 = vld [vmem:[#allocation2 + $0x22] sm:$0xff]
    %v5609 = vld [vmem:[#allocation2 + $0x32] sm:$0xff]
    %v5610 = vld [vmem:[#allocation2 + $0x42] sm:$0xff]
    %v5611 = vld [vmem:[#allocation2 + $0x52] sm:$0xff]
    %v5612 = vld [vmem:[#allocation2 + $0x62] sm:$0xff]
    %v5613 = vld [vmem:[#allocation2 + $0x72] sm:$0xff]
    %v5614 = vld [vmem:[#allocation2 + $0xa2] sm:$0xff]
    %v5615 = vld [vmem:[#allocation2 + $0xb2] sm:$0xff]
    %v5616 = vld [vmem:[#allocation2 + $0xc2] sm:$0xff]
    %v5617 = vld [vmem:[#allocation2 + $0xd2] sm:$0xff]
    %v5618 = vld [vmem:[#allocation2 + $0xe2] sm:$0xff]
    %v5619 = vld [vmem:[#allocation2 + $0xf2] sm:$0xff]
    %v5620 = vld [vmem:[#allocation2 + $0x102] sm:$0xff]
    %v5621 = vld [vmem:[#allocation2 + $0x112] sm:$0xff]
    %s5622 = scalar_lea.vmem %s3, 1280
    %v5623 = vld [vmem:[%s5622] sm:$0xff]
    %v5624 = vld [vmem:[%s5622 + $0x8] sm:$0xff]
    %v5625 = vld [vmem:[%s5622 + $0x10] sm:$0xff]
    %v5626 = vld [vmem:[%s5622 + $0x18] sm:$0xff]
    %v5627 = vld [vmem:[%s5622 + $0x20] sm:$0xff]
    %v5628 = vld [vmem:[%s5622 + $0x28] sm:$0xff]
    %v5629 = vld [vmem:[%s5622 + $0x30] sm:$0xff]
    %v5630 = vld [vmem:[%s5622 + $0x38] sm:$0xff]
    %v5632 = vsel %vm21, %v5606, 0
    %v5635 = vsel %vm21, %v5607, 0
    %v5638 = vsel %vm21, %v5608, 0
    %v5641 = vsel %vm21, %v5609, 0
    %v5644 = vsel %vm21, %v5610, 0
    %v5647 = vsel %vm21, %v5611, 0
    %v5650 = vsel %vm21, %v5612, 0
    %v5653 = vsel %vm21, %v5613, 0
    %v5656 = vsel %vm21, %v5614, 0
    %v5659 = vsel %vm21, %v5615, 0
    %v5662 = vsel %vm21, %v5616, 0
    %v5665 = vsel %vm21, %v5617, 0
    %v5668 = vsel %vm21, %v5618, 0
    %v5671 = vsel %vm21, %v5619, 0
    %v5674 = vsel %vm21, %v5620, 0
    %v5677 = vsel %vm21, %v5621, 0
    %5679 = vmatprep.subr.mxu0 0.0
    %5680 = vmatpush1.msra.mxu0 %v5623
    %5681 = vmatprep.subr.mxu0 0.0
    %5682 = vmatpush1.msra.mxu0 %v5624
    %5683 = vmatprep.subr.mxu0 0.0
    %5684 = vmatpush1.msra.mxu0 %v5625
    %5685 = vmatprep.subr.mxu0 0.0
    %5686 = vmatpush1.msra.mxu0 %v5626
    %5687 = vmatprep.subr.mxu0 0.0
    %5688 = vmatpush1.msra.mxu0 %v5627
    %5689 = vmatprep.subr.mxu0 0.0
    %5690 = vmatpush1.msra.mxu0 %v5628
    %5691 = vmatprep.subr.mxu0 0.0
    %5692 = vmatpush1.msra.mxu0 %v5629
    %5693 = vmatprep.subr.mxu0 0.0
    %5694 = vmatpush1.msra.mxu0 %v5630
    %5695 = vmatprep.subr.mxu0 0.0
    %5696 = vmatpush1.msra.mxu0 0.0
    %5697 = vmatprep.subr.mxu0 0.0
    %5698 = vmatpush1.msra.mxu0 0.0
    %5699 = vmatprep.subr.mxu0 0.0
    %5700 = vmatpush1.msra.mxu0 0.0
    %5701 = vmatprep.subr.mxu0 0.0
    %5702 = vmatpush1.msra.mxu0 0.0
    %5703 = vmatprep.subr.mxu0 0.0
    %5704 = vmatpush1.msra.mxu0 0.0
    %5705 = vmatprep.subr.mxu0 0.0
    %5706 = vmatpush1.msra.mxu0 0.0
    %5707 = vmatprep.subr.mxu0 0.0
    %5708 = vmatpush1.msra.mxu0 0.0
    %5709 = vmatprep.subr.mxu0 0.0
    %5710 = vmatpush1.msra.mxu0 0.0
    %5711 = vmatprep.subr.mxu0 0.0
    %5712 = vmatpush1.msra.mxu0 0.0
    %5713 = vmatprep.subr.mxu0 0.0
    %5714 = vmatpush1.msra.mxu0 0.0
    %5715 = vmatprep.subr.mxu0 0.0
    %5716 = vmatpush1.msra.mxu0 0.0
    %5717 = vmatprep.subr.mxu0 0.0
    %5718 = vmatpush1.msra.mxu0 0.0
    %5719 = vmatprep.subr.mxu0 0.0
    %5720 = vmatpush1.msra.mxu0 0.0
    %5721 = vmatprep.subr.mxu0 0.0
    %5722 = vmatpush1.msra.mxu0 0.0
    %5723 = vmatprep.subr.mxu0 0.0
    %5724 = vmatpush1.msra.mxu0 0.0
    %5725 = vmatprep.subr.mxu0 0.0
    %5726 = vmatpush1.msra.mxu0 0.0
    %5727 = vmatprep.subr.mxu0 0.0
    %5728 = vmatpush1.msra.mxu0 0.0
    %5729 = vmatprep.subr.mxu0 0.0
    %5730 = vmatpush1.msra.mxu0 0.0
    %5731 = vmatprep.subr.mxu0 0.0
    %5732 = vmatpush1.msra.mxu0 0.0
    %5733 = vmatprep.subr.mxu0 0.0
    %5734 = vmatpush1.msra.mxu0 0.0
    %5735 = vmatprep.subr.mxu0 0.0
    %5736 = vmatpush1.msra.mxu0 0.0
    %5737 = vmatprep.subr.mxu0 0.0
    %5738 = vmatpush1.msra.mxu0 0.0
    %5739 = vmatprep.subr.mxu0 0.0
    %5740 = vmatpush1.msra.mxu0 0.0
    %5741 = vmatprep.subr.mxu0 0.0
    %5742 = vmatpush1.msra.mxu0 0.0
    %5743 = vmatprep.mubr.f32.mxu0 0.0
    %5744 = vmatmul.mubr.f32.gmra.mrb[0].mxu0 %v5632
    %v5745 = vpop.f32.mrb[0].mxu0
    %v5746 = vadd.f32 0.0, %v5745
    %v5747 = vpop.f32.mrb[0].mxu0
    %5748 = vmatprep.mubr.f32.mxu0 0.0
    %5749 = vmatmul.mubr.f32.gmra.mrb[0].mxu0 %v5635
    %v5750 = vpop.f32.mrb[0].mxu0
    %v5751 = vadd.f32 0.0, %v5750
    %v5752 = vpop.f32.mrb[0].mxu0
    %5753 = vmatprep.mubr.f32.mxu0 0.0
    %5754 = vmatmul.mubr.f32.gmra.mrb[0].mxu0 %v5638
    %v5755 = vpop.f32.mrb[0].mxu0
    %v5756 = vadd.f32 0.0, %v5755
    %v5757 = vpop.f32.mrb[0].mxu0
    %5758 = vmatprep.mubr.f32.mxu0 0.0
    %5759 = vmatmul.mubr.f32.gmra.mrb[0].mxu0 %v5641
    %v5760 = vpop.f32.mrb[0].mxu0
    %v5761 = vadd.f32 0.0, %v5760
    %v5762 = vpop.f32.mrb[0].mxu0
    %5763 = vmatprep.mubr.f32.mxu0 0.0
    %5764 = vmatmul.mubr.f32.gmra.mrb[0].mxu0 %v5644
    %v5765 = vpop.f32.mrb[0].mxu0
    %v5766 = vadd.f32 0.0, %v5765
    %v5767 = vpop.f32.mrb[0].mxu0
    %5768 = vmatprep.mubr.f32.mxu0 0.0
    %5769 = vmatmul.mubr.f32.gmra.mrb[0].mxu0 %v5647
    %v5770 = vpop.f32.mrb[0].mxu0
    %v5771 = vadd.f32 0.0, %v5770
    %v5772 = vpop.f32.mrb[0].mxu0
    %5773 = vmatprep.mubr.f32.mxu0 0.0
    %5774 = vmatmul.mubr.f32.gmra.mrb[0].mxu0 %v5650
    %v5775 = vpop.f32.mrb[0].mxu0
    %v5776 = vadd.f32 0.0, %v5775
    %v5777 = vpop.f32.mrb[0].mxu0
    %5778 = vmatprep.mubr.f32.mxu0 0.0
    %5779 = vmatmul.mubr.f32.gmra.mrb[0].mxu0 %v5653
    %v5780 = vpop.f32.mrb[0].mxu0
    %v5781 = vadd.f32 0.0, %v5780
    %v5782 = vpop.f32.mrb[0].mxu0
    %5783 = vmatprep.mubr.f32.mxu0 0.0
    %5784 = vmatmul.mubr.f32.gmra.mrb[0].mxu0 %v5656
    %v5785 = vpop.f32.mrb[0].mxu0
    %v5786 = vadd.f32 0.0, %v5785
    %v5787 = vpop.f32.mrb[0].mxu0
    %5788 = vmatprep.mubr.f32.mxu0 0.0
    %5789 = vmatmul.mubr.f32.gmra.mrb[0].mxu0 %v5659
    %v5790 = vpop.f32.mrb[0].mxu0
    %v5791 = vadd.f32 0.0, %v5790
    %v5792 = vpop.f32.mrb[0].mxu0
    %5793 = vmatprep.mubr.f32.mxu0 0.0
    %5794 = vmatmul.mubr.f32.gmra.mrb[0].mxu0 %v5662
    %v5795 = vpop.f32.mrb[0].mxu0
    %v5796 = vadd.f32 0.0, %v5795
    %v5797 = vpop.f32.mrb[0].mxu0
    %5798 = vmatprep.mubr.f32.mxu0 0.0
    %5799 = vmatmul.mubr.f32.gmra.mrb[0].mxu0 %v5665
    %v5800 = vpop.f32.mrb[0].mxu0
    %v5801 = vadd.f32 0.0, %v5800
    %v5802 = vpop.f32.mrb[0].mxu0
    %5803 = vmatprep.mubr.f32.mxu0 0.0
    %5804 = vmatmul.mubr.f32.gmra.mrb[0].mxu0 %v5668
    %v5805 = vpop.f32.mrb[0].mxu0
    %v5806 = vadd.f32 0.0, %v5805
    %v5807 = vpop.f32.mrb[0].mxu0
    %5808 = vmatprep.mubr.f32.mxu0 0.0
    %5809 = vmatmul.mubr.f32.gmra.mrb[0].mxu0 %v5671
    %v5810 = vpop.f32.mrb[0].mxu0
    %v5811 = vadd.f32 0.0, %v5810
    %v5812 = vpop.f32.mrb[0].mxu0
    %5813 = vmatprep.mubr.f32.mxu0 0.0
    %5814 = vmatmul.mubr.f32.gmra.mrb[0].mxu0 %v5674
    %v5815 = vpop.f32.mrb[0].mxu0
    %v5816 = vadd.f32 0.0, %v5815
    %v5817 = vpop.f32.mrb[0].mxu0
    %5818 = vmatprep.mubr.f32.mxu0 0.0
    %5819 = vmatmul.mubr.f32.gmra.mrb[0].mxu0 %v5677
    %v5820 = vpop.f32.mrb[0].mxu0
    %v5821 = vadd.f32 0.0, %v5820
    %v5822 = vpop.f32.mrb[0].mxu0
    %5823 = vdwg.mxu0
    %v5824 = vadd.f32 %v5528, %v5746
    %v5825 = vadd.f32 %v5533, %v5751
    %v5826 = vadd.f32 %v5538, %v5756
    %v5827 = vadd.f32 %v5543, %v5761
    %v5828 = vadd.f32 %v5548, %v5766
    %v5829 = vadd.f32 %v5553, %v5771
    %v5830 = vadd.f32 %v5558, %v5776
    %v5831 = vadd.f32 %v5563, %v5781
    %v5832 = vadd.f32 %v5568, %v5786
    %v5833 = vadd.f32 %v5573, %v5791
    %v5834 = vadd.f32 %v5578, %v5796
    %v5835 = vadd.f32 %v5583, %v5801
    %v5836 = vadd.f32 %v5588, %v5806
    %v5837 = vadd.f32 %v5593, %v5811
    %v5838 = vadd.f32 %v5598, %v5816
    %v5839 = vadd.f32 %v5603, %v5821
    %v5840 = vld [vmem:[%s894] sm:$0xff]
    %v5841 = vld [vmem:[%s894 + $0x10] sm:$0xff]
    %v5842 = vld [vmem:[%s894 + $0x20] sm:$0xff]
    %v5843 = vld [vmem:[%s894 + $0x30] sm:$0xff]
    %v5844 = vld [vmem:[%s894 + $0x40] sm:$0xff]
    %v5845 = vld [vmem:[%s894 + $0x50] sm:$0xff]
    %v5846 = vld [vmem:[%s894 + $0x60] sm:$0xff]
    %v5847 = vld [vmem:[%s894 + $0x70] sm:$0xff]
    %v5848 = vld [vmem:[%s894 + $0xa0] sm:$0xff]
    %v5849 = vld [vmem:[%s894 + $0xb0] sm:$0xff]
    %v5850 = vld [vmem:[%s894 + $0xc0] sm:$0xff]
    %v5851 = vld [vmem:[%s894 + $0xd0] sm:$0xff]
    %v5852 = vld [vmem:[%s894 + $0xe0] sm:$0xff]
    %v5853 = vld [vmem:[%s894 + $0xf0] sm:$0xff]
    %v5854 = vld [vmem:[%s894 + $0x100] sm:$0xff]
    %v5855 = vld [vmem:[%s894 + $0x110] sm:$0xff]
    %s5856 = scalar_lea.vmem %s3, 1344
    %v5857 = vld [vmem:[%s5856] sm:$0xff]
    %v5858 = vld [vmem:[%s5856 + $0x8] sm:$0xff]
    %v5859 = vld [vmem:[%s5856 + $0x10] sm:$0xff]
    %v5860 = vld [vmem:[%s5856 + $0x18] sm:$0xff]
    %v5861 = vld [vmem:[%s5856 + $0x20] sm:$0xff]
    %v5862 = vld [vmem:[%s5856 + $0x28] sm:$0xff]
    %v5863 = vld [vmem:[%s5856 + $0x30] sm:$0xff]
    %v5864 = vld [vmem:[%s5856 + $0x38] sm:$0xff]
    %v5866 = vsel %vm21, %v5840, 0
    %v5869 = vsel %vm21, %v5841, 0
    %v5872 = vsel %vm21, %v5842, 0
    %v5875 = vsel %vm21, %v5843, 0
    %v5878 = vsel %vm21, %v5844, 0
    %v5881 = vsel %vm21, %v5845, 0
    %v5884 = vsel %vm21, %v5846, 0
    %v5887 = vsel %vm21, %v5847, 0
    %v5890 = vsel %vm21, %v5848, 0
    %v5893 = vsel %vm21, %v5849, 0
    %v5896 = vsel %vm21, %v5850, 0
    %v5899 = vsel %vm21, %v5851, 0
    %v5902 = vsel %vm21, %v5852, 0
    %v5905 = vsel %vm21, %v5853, 0
    %v5908 = vsel %vm21, %v5854, 0
    %v5911 = vsel %vm21, %v5855, 0
    %5913 = vmatprep.subr.mxu0 0.0
    %5914 = vmatpush1.msra.mxu0 %v5857
    %5915 = vmatprep.subr.mxu0 0.0
    %5916 = vmatpush1.msra.mxu0 %v5858
    %5917 = vmatprep.subr.mxu0 0.0
    %5918 = vmatpush1.msra.mxu0 %v5859
    %5919 = vmatprep.subr.mxu0 0.0
    %5920 = vmatpush1.msra.mxu0 %v5860
    %5921 = vmatprep.subr.mxu0 0.0
    %5922 = vmatpush1.msra.mxu0 %v5861
    %5923 = vmatprep.subr.mxu0 0.0
    %5924 = vmatpush1.msra.mxu0 %v5862
    %5925 = vmatprep.subr.mxu0 0.0
    %5926 = vmatpush1.msra.mxu0 %v5863
    %5927 = vmatprep.subr.mxu0 0.0
    %5928 = vmatpush1.msra.mxu0 %v5864
    %5929 = vmatprep.subr.mxu0 0.0
    %5930 = vmatpush1.msra.mxu0 0.0
    %5931 = vmatprep.subr.mxu0 0.0
    %5932 = vmatpush1.msra.mxu0 0.0
    %5933 = vmatprep.subr.mxu0 0.0
    %5934 = vmatpush1.msra.mxu0 0.0
    %5935 = vmatprep.subr.mxu0 0.0
    %5936 = vmatpush1.msra.mxu0 0.0
    %5937 = vmatprep.subr.mxu0 0.0
    %5938 = vmatpush1.msra.mxu0 0.0
    %5939 = vmatprep.subr.mxu0 0.0
    %5940 = vmatpush1.msra.mxu0 0.0
    %5941 = vmatprep.subr.mxu0 0.0
    %5942 = vmatpush1.msra.mxu0 0.0
    %5943 = vmatprep.subr.mxu0 0.0
    %5944 = vmatpush1.msra.mxu0 0.0
    %5945 = vmatprep.subr.mxu0 0.0
    %5946 = vmatpush1.msra.mxu0 0.0
    %5947 = vmatprep.subr.mxu0 0.0
    %5948 = vmatpush1.msra.mxu0 0.0
    %5949 = vmatprep.subr.mxu0 0.0
    %5950 = vmatpush1.msra.mxu0 0.0
    %5951 = vmatprep.subr.mxu0 0.0
    %5952 = vmatpush1.msra.mxu0 0.0
    %5953 = vmatprep.subr.mxu0 0.0
    %5954 = vmatpush1.msra.mxu0 0.0
    %5955 = vmatprep.subr.mxu0 0.0
    %5956 = vmatpush1.msra.mxu0 0.0
    %5957 = vmatprep.subr.mxu0 0.0
    %5958 = vmatpush1.msra.mxu0 0.0
    %5959 = vmatprep.subr.mxu0 0.0
    %5960 = vmatpush1.msra.mxu0 0.0
    %5961 = vmatprep.subr.mxu0 0.0
    %5962 = vmatpush1.msra.mxu0 0.0
    %5963 = vmatprep.subr.mxu0 0.0
    %5964 = vmatpush1.msra.mxu0 0.0
    %5965 = vmatprep.subr.mxu0 0.0
    %5966 = vmatpush1.msra.mxu0 0.0
    %5967 = vmatprep.subr.mxu0 0.0
    %5968 = vmatpush1.msra.mxu0 0.0
    %5969 = vmatprep.subr.mxu0 0.0
    %5970 = vmatpush1.msra.mxu0 0.0
    %5971 = vmatprep.subr.mxu0 0.0
    %5972 = vmatpush1.msra.mxu0 0.0
    %5973 = vmatprep.subr.mxu0 0.0
    %5974 = vmatpush1.msra.mxu0 0.0
    %5975 = vmatprep.subr.mxu0 0.0
    %5976 = vmatpush1.msra.mxu0 0.0
    %5977 = vmatprep.mubr.f32.mxu0 0.0
    %5978 = vmatmul.mubr.f32.gmra.mrb[0].mxu0 %v5866
    %v5979 = vpop.f32.mrb[0].mxu0
    %v5980 = vadd.f32 0.0, %v5979
    %v5981 = vpop.f32.mrb[0].mxu0
    %5982 = vmatprep.mubr.f32.mxu0 0.0
    %5983 = vmatmul.mubr.f32.gmra.mrb[0].mxu0 %v5869
    %v5984 = vpop.f32.mrb[0].mxu0
    %v5985 = vadd.f32 0.0, %v5984
    %v5986 = vpop.f32.mrb[0].mxu0
    %5987 = vmatprep.mubr.f32.mxu0 0.0
    %5988 = vmatmul.mubr.f32.gmra.mrb[0].mxu0 %v5872
    %v5989 = vpop.f32.mrb[0].mxu0
    %v5990 = vadd.f32 0.0, %v5989
    %v5991 = vpop.f32.mrb[0].mxu0
    %5992 = vmatprep.mubr.f32.mxu0 0.0
    %5993 = vmatmul.mubr.f32.gmra.mrb[0].mxu0 %v5875
    %v5994 = vpop.f32.mrb[0].mxu0
    %v5995 = vadd.f32 0.0, %v5994
    %v5996 = vpop.f32.mrb[0].mxu0
    %5997 = vmatprep.mubr.f32.mxu0 0.0
    %5998 = vmatmul.mubr.f32.gmra.mrb[0].mxu0 %v5878
    %v5999 = vpop.f32.mrb[0].mxu0
    %v6000 = vadd.f32 0.0, %v5999
    %v6001 = vpop.f32.mrb[0].mxu0
    %6002 = vmatprep.mubr.f32.mxu0 0.0
    %6003 = vmatmul.mubr.f32.gmra.mrb[0].mxu0 %v5881
    %v6004 = vpop.f32.mrb[0].mxu0
    %v6005 = vadd.f32 0.0, %v6004
    %v6006 = vpop.f32.mrb[0].mxu0
    %6007 = vmatprep.mubr.f32.mxu0 0.0
    %6008 = vmatmul.mubr.f32.gmra.mrb[0].mxu0 %v5884
    %v6009 = vpop.f32.mrb[0].mxu0
    %v6010 = vadd.f32 0.0, %v6009
    %v6011 = vpop.f32.mrb[0].mxu0
    %6012 = vmatprep.mubr.f32.mxu0 0.0
    %6013 = vmatmul.mubr.f32.gmra.mrb[0].mxu0 %v5887
    %v6014 = vpop.f32.mrb[0].mxu0
    %v6015 = vadd.f32 0.0, %v6014
    %v6016 = vpop.f32.mrb[0].mxu0
    %6017 = vmatprep.mubr.f32.mxu0 0.0
    %6018 = vmatmul.mubr.f32.gmra.mrb[0].mxu0 %v5890
    %v6019 = vpop.f32.mrb[0].mxu0
    %v6020 = vadd.f32 0.0, %v6019
    %v6021 = vpop.f32.mrb[0].mxu0
    %6022 = vmatprep.mubr.f32.mxu0 0.0
    %6023 = vmatmul.mubr.f32.gmra.mrb[0].mxu0 %v5893
    %v6024 = vpop.f32.mrb[0].mxu0
    %v6025 = vadd.f32 0.0, %v6024
    %v6026 = vpop.f32.mrb[0].mxu0
    %6027 = vmatprep.mubr.f32.mxu0 0.0
    %6028 = vmatmul.mubr.f32.gmra.mrb[0].mxu0 %v5896
    %v6029 = vpop.f32.mrb[0].mxu0
    %v6030 = vadd.f32 0.0, %v6029
    %v6031 = vpop.f32.mrb[0].mxu0
    %6032 = vmatprep.mubr.f32.mxu0 0.0
    %6033 = vmatmul.mubr.f32.gmra.mrb[0].mxu0 %v5899
    %v6034 = vpop.f32.mrb[0].mxu0
    %v6035 = vadd.f32 0.0, %v6034
    %v6036 = vpop.f32.mrb[0].mxu0
    %6037 = vmatprep.mubr.f32.mxu0 0.0
    %6038 = vmatmul.mubr.f32.gmra.mrb[0].mxu0 %v5902
    %v6039 = vpop.f32.mrb[0].mxu0
    %v6040 = vadd.f32 0.0, %v6039
    %v6041 = vpop.f32.mrb[0].mxu0
    %6042 = vmatprep.mubr.f32.mxu0 0.0
    %6043 = vmatmul.mubr.f32.gmra.mrb[0].mxu0 %v5905
    %v6044 = vpop.f32.mrb[0].mxu0
    %v6045 = vadd.f32 0.0, %v6044
    %v6046 = vpop.f32.mrb[0].mxu0
    %6047 = vmatprep.mubr.f32.mxu0 0.0
    %6048 = vmatmul.mubr.f32.gmra.mrb[0].mxu0 %v5908
    %v6049 = vpop.f32.mrb[0].mxu0
    %v6050 = vadd.f32 0.0, %v6049
    %v6051 = vpop.f32.mrb[0].mxu0
    %6052 = vmatprep.mubr.f32.mxu0 0.0
    %6053 = vmatmul.mubr.f32.gmra.mrb[0].mxu0 %v5911
    %v6054 = vpop.f32.mrb[0].mxu0
    %v6055 = vadd.f32 0.0, %v6054
    %v6056 = vpop.f32.mrb[0].mxu0
    %6057 = vdwg.mxu0
    %v6058 = vadd.f32 %v5824, %v5980
    %v6059 = vadd.f32 %v5825, %v5985
    %v6060 = vadd.f32 %v5826, %v5990
    %v6061 = vadd.f32 %v5827, %v5995
    %v6062 = vadd.f32 %v5828, %v6000
    %v6063 = vadd.f32 %v5829, %v6005
    %v6064 = vadd.f32 %v5830, %v6010
    %v6065 = vadd.f32 %v5831, %v6015
    %v6066 = vadd.f32 %v5832, %v6020
    %v6067 = vadd.f32 %v5833, %v6025
    %v6068 = vadd.f32 %v5834, %v6030
    %v6069 = vadd.f32 %v5835, %v6035
    %v6070 = vadd.f32 %v5836, %v6040
    %v6071 = vadd.f32 %v5837, %v6045
    %v6072 = vadd.f32 %v5838, %v6050
    %v6073 = vadd.f32 %v5839, %v6055
    %v6074 = vld [vmem:[%s894 + $0x1] sm:$0xff]
    %v6075 = vld [vmem:[%s894 + $0x11] sm:$0xff]
    %v6076 = vld [vmem:[%s894 + $0x21] sm:$0xff]
    %v6077 = vld [vmem:[%s894 + $0x31] sm:$0xff]
    %v6078 = vld [vmem:[%s894 + $0x41] sm:$0xff]
    %v6079 = vld [vmem:[%s894 + $0x51] sm:$0xff]
    %v6080 = vld [vmem:[%s894 + $0x61] sm:$0xff]
    %v6081 = vld [vmem:[%s894 + $0x71] sm:$0xff]
    %v6082 = vld [vmem:[%s894 + $0xa1] sm:$0xff]
    %v6083 = vld [vmem:[%s894 + $0xb1] sm:$0xff]
    %v6084 = vld [vmem:[%s894 + $0xc1] sm:$0xff]
    %v6085 = vld [vmem:[%s894 + $0xd1] sm:$0xff]
    %v6086 = vld [vmem:[%s894 + $0xe1] sm:$0xff]
    %v6087 = vld [vmem:[%s894 + $0xf1] sm:$0xff]
    %v6088 = vld [vmem:[%s894 + $0x101] sm:$0xff]
    %v6089 = vld [vmem:[%s894 + $0x111] sm:$0xff]
    %s6090 = scalar_lea.vmem %s3, 1408
    %v6091 = vld [vmem:[%s6090] sm:$0xff]
    %v6092 = vld [vmem:[%s6090 + $0x8] sm:$0xff]
    %v6093 = vld [vmem:[%s6090 + $0x10] sm:$0xff]
    %v6094 = vld [vmem:[%s6090 + $0x18] sm:$0xff]
    %v6095 = vld [vmem:[%s6090 + $0x20] sm:$0xff]
    %v6096 = vld [vmem:[%s6090 + $0x28] sm:$0xff]
    %v6097 = vld [vmem:[%s6090 + $0x30] sm:$0xff]
    %v6098 = vld [vmem:[%s6090 + $0x38] sm:$0xff]
    %v6100 = vsel %vm21, %v6074, 0
    %v6103 = vsel %vm21, %v6075, 0
    %v6106 = vsel %vm21, %v6076, 0
    %v6109 = vsel %vm21, %v6077, 0
    %v6112 = vsel %vm21, %v6078, 0
    %v6115 = vsel %vm21, %v6079, 0
    %v6118 = vsel %vm21, %v6080, 0
    %v6121 = vsel %vm21, %v6081, 0
    %v6124 = vsel %vm21, %v6082, 0
    %v6127 = vsel %vm21, %v6083, 0
    %v6130 = vsel %vm21, %v6084, 0
    %v6133 = vsel %vm21, %v6085, 0
    %v6136 = vsel %vm21, %v6086, 0
    %v6139 = vsel %vm21, %v6087, 0
    %v6142 = vsel %vm21, %v6088, 0
    %v6145 = vsel %vm21, %v6089, 0
    %6147 = vmatprep.subr.mxu0 0.0
    %6148 = vmatpush1.msra.mxu0 %v6091
    %6149 = vmatprep.subr.mxu0 0.0
    %6150 = vmatpush1.msra.mxu0 %v6092
    %6151 = vmatprep.subr.mxu0 0.0
    %6152 = vmatpush1.msra.mxu0 %v6093
    %6153 = vmatprep.subr.mxu0 0.0
    %6154 = vmatpush1.msra.mxu0 %v6094
    %6155 = vmatprep.subr.mxu0 0.0
    %6156 = vmatpush1.msra.mxu0 %v6095
    %6157 = vmatprep.subr.mxu0 0.0
    %6158 = vmatpush1.msra.mxu0 %v6096
    %6159 = vmatprep.subr.mxu0 0.0
    %6160 = vmatpush1.msra.mxu0 %v6097
    %6161 = vmatprep.subr.mxu0 0.0
    %6162 = vmatpush1.msra.mxu0 %v6098
    %6163 = vmatprep.subr.mxu0 0.0
    %6164 = vmatpush1.msra.mxu0 0.0
    %6165 = vmatprep.subr.mxu0 0.0
    %6166 = vmatpush1.msra.mxu0 0.0
    %6167 = vmatprep.subr.mxu0 0.0
    %6168 = vmatpush1.msra.mxu0 0.0
    %6169 = vmatprep.subr.mxu0 0.0
    %6170 = vmatpush1.msra.mxu0 0.0
    %6171 = vmatprep.subr.mxu0 0.0
    %6172 = vmatpush1.msra.mxu0 0.0
    %6173 = vmatprep.subr.mxu0 0.0
    %6174 = vmatpush1.msra.mxu0 0.0
    %6175 = vmatprep.subr.mxu0 0.0
    %6176 = vmatpush1.msra.mxu0 0.0
    %6177 = vmatprep.subr.mxu0 0.0
    %6178 = vmatpush1.msra.mxu0 0.0
    %6179 = vmatprep.subr.mxu0 0.0
    %6180 = vmatpush1.msra.mxu0 0.0
    %6181 = vmatprep.subr.mxu0 0.0
    %6182 = vmatpush1.msra.mxu0 0.0
    %6183 = vmatprep.subr.mxu0 0.0
    %6184 = vmatpush1.msra.mxu0 0.0
    %6185 = vmatprep.subr.mxu0 0.0
    %6186 = vmatpush1.msra.mxu0 0.0
    %6187 = vmatprep.subr.mxu0 0.0
    %6188 = vmatpush1.msra.mxu0 0.0
    %6189 = vmatprep.subr.mxu0 0.0
    %6190 = vmatpush1.msra.mxu0 0.0
    %6191 = vmatprep.subr.mxu0 0.0
    %6192 = vmatpush1.msra.mxu0 0.0
    %6193 = vmatprep.subr.mxu0 0.0
    %6194 = vmatpush1.msra.mxu0 0.0
    %6195 = vmatprep.subr.mxu0 0.0
    %6196 = vmatpush1.msra.mxu0 0.0
    %6197 = vmatprep.subr.mxu0 0.0
    %6198 = vmatpush1.msra.mxu0 0.0
    %6199 = vmatprep.subr.mxu0 0.0
    %6200 = vmatpush1.msra.mxu0 0.0
    %6201 = vmatprep.subr.mxu0 0.0
    %6202 = vmatpush1.msra.mxu0 0.0
    %6203 = vmatprep.subr.mxu0 0.0
    %6204 = vmatpush1.msra.mxu0 0.0
    %6205 = vmatprep.subr.mxu0 0.0
    %6206 = vmatpush1.msra.mxu0 0.0
    %6207 = vmatprep.subr.mxu0 0.0
    %6208 = vmatpush1.msra.mxu0 0.0
    %6209 = vmatprep.subr.mxu0 0.0
    %6210 = vmatpush1.msra.mxu0 0.0
    %6211 = vmatprep.mubr.f32.mxu0 0.0
    %6212 = vmatmul.mubr.f32.gmra.mrb[0].mxu0 %v6100
    %v6213 = vpop.f32.mrb[0].mxu0
    %v6214 = vadd.f32 0.0, %v6213
    %v6215 = vpop.f32.mrb[0].mxu0
    %6216 = vmatprep.mubr.f32.mxu0 0.0
    %6217 = vmatmul.mubr.f32.gmra.mrb[0].mxu0 %v6103
    %v6218 = vpop.f32.mrb[0].mxu0
    %v6219 = vadd.f32 0.0, %v6218
    %v6220 = vpop.f32.mrb[0].mxu0
    %6221 = vmatprep.mubr.f32.mxu0 0.0
    %6222 = vmatmul.mubr.f32.gmra.mrb[0].mxu0 %v6106
    %v6223 = vpop.f32.mrb[0].mxu0
    %v6224 = vadd.f32 0.0, %v6223
    %v6225 = vpop.f32.mrb[0].mxu0
    %6226 = vmatprep.mubr.f32.mxu0 0.0
    %6227 = vmatmul.mubr.f32.gmra.mrb[0].mxu0 %v6109
    %v6228 = vpop.f32.mrb[0].mxu0
    %v6229 = vadd.f32 0.0, %v6228
    %v6230 = vpop.f32.mrb[0].mxu0
    %6231 = vmatprep.mubr.f32.mxu0 0.0
    %6232 = vmatmul.mubr.f32.gmra.mrb[0].mxu0 %v6112
    %v6233 = vpop.f32.mrb[0].mxu0
    %v6234 = vadd.f32 0.0, %v6233
    %v6235 = vpop.f32.mrb[0].mxu0
    %6236 = vmatprep.mubr.f32.mxu0 0.0
    %6237 = vmatmul.mubr.f32.gmra.mrb[0].mxu0 %v6115
    %v6238 = vpop.f32.mrb[0].mxu0
    %v6239 = vadd.f32 0.0, %v6238
    %v6240 = vpop.f32.mrb[0].mxu0
    %6241 = vmatprep.mubr.f32.mxu0 0.0
    %6242 = vmatmul.mubr.f32.gmra.mrb[0].mxu0 %v6118
    %v6243 = vpop.f32.mrb[0].mxu0
    %v6244 = vadd.f32 0.0, %v6243
    %v6245 = vpop.f32.mrb[0].mxu0
    %6246 = vmatprep.mubr.f32.mxu0 0.0
    %6247 = vmatmul.mubr.f32.gmra.mrb[0].mxu0 %v6121
    %v6248 = vpop.f32.mrb[0].mxu0
    %v6249 = vadd.f32 0.0, %v6248
    %v6250 = vpop.f32.mrb[0].mxu0
    %6251 = vmatprep.mubr.f32.mxu0 0.0
    %6252 = vmatmul.mubr.f32.gmra.mrb[0].mxu0 %v6124
    %v6253 = vpop.f32.mrb[0].mxu0
    %v6254 = vadd.f32 0.0, %v6253
    %v6255 = vpop.f32.mrb[0].mxu0
    %6256 = vmatprep.mubr.f32.mxu0 0.0
    %6257 = vmatmul.mubr.f32.gmra.mrb[0].mxu0 %v6127
    %v6258 = vpop.f32.mrb[0].mxu0
    %v6259 = vadd.f32 0.0, %v6258
    %v6260 = vpop.f32.mrb[0].mxu0
    %6261 = vmatprep.mubr.f32.mxu0 0.0
    %6262 = vmatmul.mubr.f32.gmra.mrb[0].mxu0 %v6130
    %v6263 = vpop.f32.mrb[0].mxu0
    %v6264 = vadd.f32 0.0, %v6263
    %v6265 = vpop.f32.mrb[0].mxu0
    %6266 = vmatprep.mubr.f32.mxu0 0.0
    %6267 = vmatmul.mubr.f32.gmra.mrb[0].mxu0 %v6133
    %v6268 = vpop.f32.mrb[0].mxu0
    %v6269 = vadd.f32 0.0, %v6268
    %v6270 = vpop.f32.mrb[0].mxu0
    %6271 = vmatprep.mubr.f32.mxu0 0.0
    %6272 = vmatmul.mubr.f32.gmra.mrb[0].mxu0 %v6136
    %v6273 = vpop.f32.mrb[0].mxu0
    %v6274 = vadd.f32 0.0, %v6273
    %v6275 = vpop.f32.mrb[0].mxu0
    %6276 = vmatprep.mubr.f32.mxu0 0.0
    %6277 = vmatmul.mubr.f32.gmra.mrb[0].mxu0 %v6139
    %v6278 = vpop.f32.mrb[0].mxu0
    %v6279 = vadd.f32 0.0, %v6278
    %v6280 = vpop.f32.mrb[0].mxu0
    %6281 = vmatprep.mubr.f32.mxu0 0.0
    %6282 = vmatmul.mubr.f32.gmra.mrb[0].mxu0 %v6142
    %v6283 = vpop.f32.mrb[0].mxu0
    %v6284 = vadd.f32 0.0, %v6283
    %v6285 = vpop.f32.mrb[0].mxu0
    %6286 = vmatprep.mubr.f32.mxu0 0.0
    %6287 = vmatmul.mubr.f32.gmra.mrb[0].mxu0 %v6145
    %v6288 = vpop.f32.mrb[0].mxu0
    %v6289 = vadd.f32 0.0, %v6288
    %v6290 = vpop.f32.mrb[0].mxu0
    %6291 = vdwg.mxu0
    %v6292 = vadd.f32 %v6058, %v6214
    %v6293 = vadd.f32 %v6059, %v6219
    %v6294 = vadd.f32 %v6060, %v6224
    %v6295 = vadd.f32 %v6061, %v6229
    %v6296 = vadd.f32 %v6062, %v6234
    %v6297 = vadd.f32 %v6063, %v6239
    %v6298 = vadd.f32 %v6064, %v6244
    %v6299 = vadd.f32 %v6065, %v6249
    %v6300 = vadd.f32 %v6066, %v6254
    %v6301 = vadd.f32 %v6067, %v6259
    %v6302 = vadd.f32 %v6068, %v6264
    %v6303 = vadd.f32 %v6069, %v6269
    %v6304 = vadd.f32 %v6070, %v6274
    %v6305 = vadd.f32 %v6071, %v6279
    %v6306 = vadd.f32 %v6072, %v6284
    %v6307 = vadd.f32 %v6073, %v6289
    %v6308 = vld [vmem:[%s894 + $0x2] sm:$0xff]
    %v6309 = vld [vmem:[%s894 + $0x12] sm:$0xff]
    %v6310 = vld [vmem:[%s894 + $0x22] sm:$0xff]
    %v6311 = vld [vmem:[%s894 + $0x32] sm:$0xff]
    %v6312 = vld [vmem:[%s894 + $0x42] sm:$0xff]
    %v6313 = vld [vmem:[%s894 + $0x52] sm:$0xff]
    %v6314 = vld [vmem:[%s894 + $0x62] sm:$0xff]
    %v6315 = vld [vmem:[%s894 + $0x72] sm:$0xff]
    %v6316 = vld [vmem:[%s894 + $0xa2] sm:$0xff]
    %v6317 = vld [vmem:[%s894 + $0xb2] sm:$0xff]
    %v6318 = vld [vmem:[%s894 + $0xc2] sm:$0xff]
    %v6319 = vld [vmem:[%s894 + $0xd2] sm:$0xff]
    %v6320 = vld [vmem:[%s894 + $0xe2] sm:$0xff]
    %v6321 = vld [vmem:[%s894 + $0xf2] sm:$0xff]
    %v6322 = vld [vmem:[%s894 + $0x102] sm:$0xff]
    %v6323 = vld [vmem:[%s894 + $0x112] sm:$0xff]
    %s6324 = scalar_lea.vmem %s3, 1472
    %v6325 = vld [vmem:[%s6324] sm:$0xff]
    %v6326 = vld [vmem:[%s6324 + $0x8] sm:$0xff]
    %v6327 = vld [vmem:[%s6324 + $0x10] sm:$0xff]
    %v6328 = vld [vmem:[%s6324 + $0x18] sm:$0xff]
    %v6329 = vld [vmem:[%s6324 + $0x20] sm:$0xff]
    %v6330 = vld [vmem:[%s6324 + $0x28] sm:$0xff]
    %v6331 = vld [vmem:[%s6324 + $0x30] sm:$0xff]
    %v6332 = vld [vmem:[%s6324 + $0x38] sm:$0xff]
    %v6334 = vsel %vm21, %v6308, 0
    %v6337 = vsel %vm21, %v6309, 0
    %v6340 = vsel %vm21, %v6310, 0
    %v6343 = vsel %vm21, %v6311, 0
    %v6346 = vsel %vm21, %v6312, 0
    %v6349 = vsel %vm21, %v6313, 0
    %v6352 = vsel %vm21, %v6314, 0
    %v6355 = vsel %vm21, %v6315, 0
    %v6358 = vsel %vm21, %v6316, 0
    %v6361 = vsel %vm21, %v6317, 0
    %v6364 = vsel %vm21, %v6318, 0
    %v6367 = vsel %vm21, %v6319, 0
    %v6370 = vsel %vm21, %v6320, 0
    %v6373 = vsel %vm21, %v6321, 0
    %v6376 = vsel %vm21, %v6322, 0
    %v6379 = vsel %vm21, %v6323, 0
    %6381 = vmatprep.subr.mxu0 0.0
    %6382 = vmatpush1.msra.mxu0 %v6325
    %6383 = vmatprep.subr.mxu0 0.0
    %6384 = vmatpush1.msra.mxu0 %v6326
    %6385 = vmatprep.subr.mxu0 0.0
    %6386 = vmatpush1.msra.mxu0 %v6327
    %6387 = vmatprep.subr.mxu0 0.0
    %6388 = vmatpush1.msra.mxu0 %v6328
    %6389 = vmatprep.subr.mxu0 0.0
    %6390 = vmatpush1.msra.mxu0 %v6329
    %6391 = vmatprep.subr.mxu0 0.0
    %6392 = vmatpush1.msra.mxu0 %v6330
    %6393 = vmatprep.subr.mxu0 0.0
    %6394 = vmatpush1.msra.mxu0 %v6331
    %6395 = vmatprep.subr.mxu0 0.0
    %6396 = vmatpush1.msra.mxu0 %v6332
    %6397 = vmatprep.subr.mxu0 0.0
    %6398 = vmatpush1.msra.mxu0 0.0
    %6399 = vmatprep.subr.mxu0 0.0
    %6400 = vmatpush1.msra.mxu0 0.0
    %6401 = vmatprep.subr.mxu0 0.0
    %6402 = vmatpush1.msra.mxu0 0.0
    %6403 = vmatprep.subr.mxu0 0.0
    %6404 = vmatpush1.msra.mxu0 0.0
    %6405 = vmatprep.subr.mxu0 0.0
    %6406 = vmatpush1.msra.mxu0 0.0
    %6407 = vmatprep.subr.mxu0 0.0
    %6408 = vmatpush1.msra.mxu0 0.0
    %6409 = vmatprep.subr.mxu0 0.0
    %6410 = vmatpush1.msra.mxu0 0.0
    %6411 = vmatprep.subr.mxu0 0.0
    %6412 = vmatpush1.msra.mxu0 0.0
    %6413 = vmatprep.subr.mxu0 0.0
    %6414 = vmatpush1.msra.mxu0 0.0
    %6415 = vmatprep.subr.mxu0 0.0
    %6416 = vmatpush1.msra.mxu0 0.0
    %6417 = vmatprep.subr.mxu0 0.0
    %6418 = vmatpush1.msra.mxu0 0.0
    %6419 = vmatprep.subr.mxu0 0.0
    %6420 = vmatpush1.msra.mxu0 0.0
    %6421 = vmatprep.subr.mxu0 0.0
    %6422 = vmatpush1.msra.mxu0 0.0
    %6423 = vmatprep.subr.mxu0 0.0
    %6424 = vmatpush1.msra.mxu0 0.0
    %6425 = vmatprep.subr.mxu0 0.0
    %6426 = vmatpush1.msra.mxu0 0.0
    %6427 = vmatprep.subr.mxu0 0.0
    %6428 = vmatpush1.msra.mxu0 0.0
    %6429 = vmatprep.subr.mxu0 0.0
    %6430 = vmatpush1.msra.mxu0 0.0
    %6431 = vmatprep.subr.mxu0 0.0
    %6432 = vmatpush1.msra.mxu0 0.0
    %6433 = vmatprep.subr.mxu0 0.0
    %6434 = vmatpush1.msra.mxu0 0.0
    %6435 = vmatprep.subr.mxu0 0.0
    %6436 = vmatpush1.msra.mxu0 0.0
    %6437 = vmatprep.subr.mxu0 0.0
    %6438 = vmatpush1.msra.mxu0 0.0
    %6439 = vmatprep.subr.mxu0 0.0
    %6440 = vmatpush1.msra.mxu0 0.0
    %6441 = vmatprep.subr.mxu0 0.0
    %6442 = vmatpush1.msra.mxu0 0.0
    %6443 = vmatprep.subr.mxu0 0.0
    %6444 = vmatpush1.msra.mxu0 0.0
    %6445 = vmatprep.mubr.f32.mxu0 0.0
    %6446 = vmatmul.mubr.f32.gmra.mrb[0].mxu0 %v6334
    %v6447 = vpop.f32.mrb[0].mxu0
    %v6448 = vadd.f32 0.0, %v6447
    %v6449 = vpop.f32.mrb[0].mxu0
    %6450 = vmatprep.mubr.f32.mxu0 0.0
    %6451 = vmatmul.mubr.f32.gmra.mrb[0].mxu0 %v6337
    %v6452 = vpop.f32.mrb[0].mxu0
    %v6453 = vadd.f32 0.0, %v6452
    %v6454 = vpop.f32.mrb[0].mxu0
    %6455 = vmatprep.mubr.f32.mxu0 0.0
    %6456 = vmatmul.mubr.f32.gmra.mrb[0].mxu0 %v6340
    %v6457 = vpop.f32.mrb[0].mxu0
    %v6458 = vadd.f32 0.0, %v6457
    %v6459 = vpop.f32.mrb[0].mxu0
    %6460 = vmatprep.mubr.f32.mxu0 0.0
    %6461 = vmatmul.mubr.f32.gmra.mrb[0].mxu0 %v6343
    %v6462 = vpop.f32.mrb[0].mxu0
    %v6463 = vadd.f32 0.0, %v6462
    %v6464 = vpop.f32.mrb[0].mxu0
    %6465 = vmatprep.mubr.f32.mxu0 0.0
    %6466 = vmatmul.mubr.f32.gmra.mrb[0].mxu0 %v6346
    %v6467 = vpop.f32.mrb[0].mxu0
    %v6468 = vadd.f32 0.0, %v6467
    %v6469 = vpop.f32.mrb[0].mxu0
    %6470 = vmatprep.mubr.f32.mxu0 0.0
    %6471 = vmatmul.mubr.f32.gmra.mrb[0].mxu0 %v6349
    %v6472 = vpop.f32.mrb[0].mxu0
    %v6473 = vadd.f32 0.0, %v6472
    %v6474 = vpop.f32.mrb[0].mxu0
    %6475 = vmatprep.mubr.f32.mxu0 0.0
    %6476 = vmatmul.mubr.f32.gmra.mrb[0].mxu0 %v6352
    %v6477 = vpop.f32.mrb[0].mxu0
    %v6478 = vadd.f32 0.0, %v6477
    %v6479 = vpop.f32.mrb[0].mxu0
    %6480 = vmatprep.mubr.f32.mxu0 0.0
    %6481 = vmatmul.mubr.f32.gmra.mrb[0].mxu0 %v6355
    %v6482 = vpop.f32.mrb[0].mxu0
    %v6483 = vadd.f32 0.0, %v6482
    %v6484 = vpop.f32.mrb[0].mxu0
    %6485 = vmatprep.mubr.f32.mxu0 0.0
    %6486 = vmatmul.mubr.f32.gmra.mrb[0].mxu0 %v6358
    %v6487 = vpop.f32.mrb[0].mxu0
    %v6488 = vadd.f32 0.0, %v6487
    %v6489 = vpop.f32.mrb[0].mxu0
    %6490 = vmatprep.mubr.f32.mxu0 0.0
    %6491 = vmatmul.mubr.f32.gmra.mrb[0].mxu0 %v6361
    %v6492 = vpop.f32.mrb[0].mxu0
    %v6493 = vadd.f32 0.0, %v6492
    %v6494 = vpop.f32.mrb[0].mxu0
    %6495 = vmatprep.mubr.f32.mxu0 0.0
    %6496 = vmatmul.mubr.f32.gmra.mrb[0].mxu0 %v6364
    %v6497 = vpop.f32.mrb[0].mxu0
    %v6498 = vadd.f32 0.0, %v6497
    %v6499 = vpop.f32.mrb[0].mxu0
    %6500 = vmatprep.mubr.f32.mxu0 0.0
    %6501 = vmatmul.mubr.f32.gmra.mrb[0].mxu0 %v6367
    %v6502 = vpop.f32.mrb[0].mxu0
    %v6503 = vadd.f32 0.0, %v6502
    %v6504 = vpop.f32.mrb[0].mxu0
    %6505 = vmatprep.mubr.f32.mxu0 0.0
    %6506 = vmatmul.mubr.f32.gmra.mrb[0].mxu0 %v6370
    %v6507 = vpop.f32.mrb[0].mxu0
    %v6508 = vadd.f32 0.0, %v6507
    %v6509 = vpop.f32.mrb[0].mxu0
    %6510 = vmatprep.mubr.f32.mxu0 0.0
    %6511 = vmatmul.mubr.f32.gmra.mrb[0].mxu0 %v6373
    %v6512 = vpop.f32.mrb[0].mxu0
    %v6513 = vadd.f32 0.0, %v6512
    %v6514 = vpop.f32.mrb[0].mxu0
    %6515 = vmatprep.mubr.f32.mxu0 0.0
    %6516 = vmatmul.mubr.f32.gmra.mrb[0].mxu0 %v6376
    %v6517 = vpop.f32.mrb[0].mxu0
    %v6518 = vadd.f32 0.0, %v6517
    %v6519 = vpop.f32.mrb[0].mxu0
    %6520 = vmatprep.mubr.f32.mxu0 0.0
    %6521 = vmatmul.mubr.f32.gmra.mrb[0].mxu0 %v6379
    %v6522 = vpop.f32.mrb[0].mxu0
    %v6523 = vadd.f32 0.0, %v6522
    %v6524 = vpop.f32.mrb[0].mxu0
    %6525 = vdwg.mxu0
    %v6526 = vadd.f32 %v6292, %v6448
    %v6527 = vadd.f32 %v6293, %v6453
    %v6528 = vadd.f32 %v6294, %v6458
    %v6529 = vadd.f32 %v6295, %v6463
    %v6530 = vadd.f32 %v6296, %v6468
    %v6531 = vadd.f32 %v6297, %v6473
    %v6532 = vadd.f32 %v6298, %v6478
    %v6533 = vadd.f32 %v6299, %v6483
    %v6534 = vadd.f32 %v6300, %v6488
    %v6535 = vadd.f32 %v6301, %v6493
    %v6536 = vadd.f32 %v6302, %v6498
    %v6537 = vadd.f32 %v6303, %v6503
    %v6538 = vadd.f32 %v6304, %v6508
    %v6539 = vadd.f32 %v6305, %v6513
    %v6540 = vadd.f32 %v6306, %v6518
    %v6541 = vadd.f32 %v6307, %v6523
    %v6542 = vld [vmem:[%s2282] sm:$0xff]
    %v6543 = vld [vmem:[%s2282 + $0x10] sm:$0xff]
    %v6544 = vld [vmem:[%s2282 + $0x20] sm:$0xff]
    %v6545 = vld [vmem:[%s2282 + $0x30] sm:$0xff]
    %v6546 = vld [vmem:[%s2282 + $0x40] sm:$0xff]
    %v6547 = vld [vmem:[%s2282 + $0x50] sm:$0xff]
    %v6548 = vld [vmem:[%s2282 + $0x60] sm:$0xff]
    %v6549 = vld [vmem:[%s2282 + $0x70] sm:$0xff]
    %v6550 = vld [vmem:[%s2282 + $0xa0] sm:$0xff]
    %v6551 = vld [vmem:[%s2282 + $0xb0] sm:$0xff]
    %v6552 = vld [vmem:[%s2282 + $0xc0] sm:$0xff]
    %v6553 = vld [vmem:[%s2282 + $0xd0] sm:$0xff]
    %v6554 = vld [vmem:[%s2282 + $0xe0] sm:$0xff]
    %v6555 = vld [vmem:[%s2282 + $0xf0] sm:$0xff]
    %v6556 = vld [vmem:[%s2282 + $0x100] sm:$0xff]
    %v6557 = vld [vmem:[%s2282 + $0x110] sm:$0xff]
    %s6558 = scalar_lea.vmem %s3, 1536
    %v6559 = vld [vmem:[%s6558] sm:$0xff]
    %v6560 = vld [vmem:[%s6558 + $0x8] sm:$0xff]
    %v6561 = vld [vmem:[%s6558 + $0x10] sm:$0xff]
    %v6562 = vld [vmem:[%s6558 + $0x18] sm:$0xff]
    %v6563 = vld [vmem:[%s6558 + $0x20] sm:$0xff]
    %v6564 = vld [vmem:[%s6558 + $0x28] sm:$0xff]
    %v6565 = vld [vmem:[%s6558 + $0x30] sm:$0xff]
    %v6566 = vld [vmem:[%s6558 + $0x38] sm:$0xff]
    %v6568 = vsel %vm21, %v6542, 0
    %v6571 = vsel %vm21, %v6543, 0
    %v6574 = vsel %vm21, %v6544, 0
    %v6577 = vsel %vm21, %v6545, 0
    %v6580 = vsel %vm21, %v6546, 0
    %v6583 = vsel %vm21, %v6547, 0
    %v6586 = vsel %vm21, %v6548, 0
    %v6589 = vsel %vm21, %v6549, 0
    %v6592 = vsel %vm21, %v6550, 0
    %v6595 = vsel %vm21, %v6551, 0
    %v6598 = vsel %vm21, %v6552, 0
    %v6601 = vsel %vm21, %v6553, 0
    %v6604 = vsel %vm21, %v6554, 0
    %v6607 = vsel %vm21, %v6555, 0
    %v6610 = vsel %vm21, %v6556, 0
    %v6613 = vsel %vm21, %v6557, 0
    %6615 = vmatprep.subr.mxu0 0.0
    %6616 = vmatpush1.msra.mxu0 %v6559
    %6617 = vmatprep.subr.mxu0 0.0
    %6618 = vmatpush1.msra.mxu0 %v6560
    %6619 = vmatprep.subr.mxu0 0.0
    %6620 = vmatpush1.msra.mxu0 %v6561
    %6621 = vmatprep.subr.mxu0 0.0
    %6622 = vmatpush1.msra.mxu0 %v6562
    %6623 = vmatprep.subr.mxu0 0.0
    %6624 = vmatpush1.msra.mxu0 %v6563
    %6625 = vmatprep.subr.mxu0 0.0
    %6626 = vmatpush1.msra.mxu0 %v6564
    %6627 = vmatprep.subr.mxu0 0.0
    %6628 = vmatpush1.msra.mxu0 %v6565
    %6629 = vmatprep.subr.mxu0 0.0
    %6630 = vmatpush1.msra.mxu0 %v6566
    %6631 = vmatprep.subr.mxu0 0.0
    %6632 = vmatpush1.msra.mxu0 0.0
    %6633 = vmatprep.subr.mxu0 0.0
    %6634 = vmatpush1.msra.mxu0 0.0
    %6635 = vmatprep.subr.mxu0 0.0
    %6636 = vmatpush1.msra.mxu0 0.0
    %6637 = vmatprep.subr.mxu0 0.0
    %6638 = vmatpush1.msra.mxu0 0.0
    %6639 = vmatprep.subr.mxu0 0.0
    %6640 = vmatpush1.msra.mxu0 0.0
    %6641 = vmatprep.subr.mxu0 0.0
    %6642 = vmatpush1.msra.mxu0 0.0
    %6643 = vmatprep.subr.mxu0 0.0
    %6644 = vmatpush1.msra.mxu0 0.0
    %6645 = vmatprep.subr.mxu0 0.0
    %6646 = vmatpush1.msra.mxu0 0.0
    %6647 = vmatprep.subr.mxu0 0.0
    %6648 = vmatpush1.msra.mxu0 0.0
    %6649 = vmatprep.subr.mxu0 0.0
    %6650 = vmatpush1.msra.mxu0 0.0
    %6651 = vmatprep.subr.mxu0 0.0
    %6652 = vmatpush1.msra.mxu0 0.0
    %6653 = vmatprep.subr.mxu0 0.0
    %6654 = vmatpush1.msra.mxu0 0.0
    %6655 = vmatprep.subr.mxu0 0.0
    %6656 = vmatpush1.msra.mxu0 0.0
    %6657 = vmatprep.subr.mxu0 0.0
    %6658 = vmatpush1.msra.mxu0 0.0
    %6659 = vmatprep.subr.mxu0 0.0
    %6660 = vmatpush1.msra.mxu0 0.0
    %6661 = vmatprep.subr.mxu0 0.0
    %6662 = vmatpush1.msra.mxu0 0.0
    %6663 = vmatprep.subr.mxu0 0.0
    %6664 = vmatpush1.msra.mxu0 0.0
    %6665 = vmatprep.subr.mxu0 0.0
    %6666 = vmatpush1.msra.mxu0 0.0
    %6667 = vmatprep.subr.mxu0 0.0
    %6668 = vmatpush1.msra.mxu0 0.0
    %6669 = vmatprep.subr.mxu0 0.0
    %6670 = vmatpush1.msra.mxu0 0.0
    %6671 = vmatprep.subr.mxu0 0.0
    %6672 = vmatpush1.msra.mxu0 0.0
    %6673 = vmatprep.subr.mxu0 0.0
    %6674 = vmatpush1.msra.mxu0 0.0
    %6675 = vmatprep.subr.mxu0 0.0
    %6676 = vmatpush1.msra.mxu0 0.0
    %6677 = vmatprep.subr.mxu0 0.0
    %6678 = vmatpush1.msra.mxu0 0.0
    %6679 = vmatprep.mubr.f32.mxu0 0.0
    %6680 = vmatmul.mubr.f32.gmra.mrb[0].mxu0 %v6568
    %v6681 = vpop.f32.mrb[0].mxu0
    %v6682 = vadd.f32 0.0, %v6681
    %v6683 = vpop.f32.mrb[0].mxu0
    %6684 = vmatprep.mubr.f32.mxu0 0.0
    %6685 = vmatmul.mubr.f32.gmra.mrb[0].mxu0 %v6571
    %v6686 = vpop.f32.mrb[0].mxu0
    %v6687 = vadd.f32 0.0, %v6686
    %v6688 = vpop.f32.mrb[0].mxu0
    %6689 = vmatprep.mubr.f32.mxu0 0.0
    %6690 = vmatmul.mubr.f32.gmra.mrb[0].mxu0 %v6574
    %v6691 = vpop.f32.mrb[0].mxu0
    %v6692 = vadd.f32 0.0, %v6691
    %v6693 = vpop.f32.mrb[0].mxu0
    %6694 = vmatprep.mubr.f32.mxu0 0.0
    %6695 = vmatmul.mubr.f32.gmra.mrb[0].mxu0 %v6577
    %v6696 = vpop.f32.mrb[0].mxu0
    %v6697 = vadd.f32 0.0, %v6696
    %v6698 = vpop.f32.mrb[0].mxu0
    %6699 = vmatprep.mubr.f32.mxu0 0.0
    %6700 = vmatmul.mubr.f32.gmra.mrb[0].mxu0 %v6580
    %v6701 = vpop.f32.mrb[0].mxu0
    %v6702 = vadd.f32 0.0, %v6701
    %v6703 = vpop.f32.mrb[0].mxu0
    %6704 = vmatprep.mubr.f32.mxu0 0.0
    %6705 = vmatmul.mubr.f32.gmra.mrb[0].mxu0 %v6583
    %v6706 = vpop.f32.mrb[0].mxu0
    %v6707 = vadd.f32 0.0, %v6706
    %v6708 = vpop.f32.mrb[0].mxu0
    %6709 = vmatprep.mubr.f32.mxu0 0.0
    %6710 = vmatmul.mubr.f32.gmra.mrb[0].mxu0 %v6586
    %v6711 = vpop.f32.mrb[0].mxu0
    %v6712 = vadd.f32 0.0, %v6711
    %v6713 = vpop.f32.mrb[0].mxu0
    %6714 = vmatprep.mubr.f32.mxu0 0.0
    %6715 = vmatmul.mubr.f32.gmra.mrb[0].mxu0 %v6589
    %v6716 = vpop.f32.mrb[0].mxu0
    %v6717 = vadd.f32 0.0, %v6716
    %v6718 = vpop.f32.mrb[0].mxu0
    %6719 = vmatprep.mubr.f32.mxu0 0.0
    %6720 = vmatmul.mubr.f32.gmra.mrb[0].mxu0 %v6592
    %v6721 = vpop.f32.mrb[0].mxu0
    %v6722 = vadd.f32 0.0, %v6721
    %v6723 = vpop.f32.mrb[0].mxu0
    %6724 = vmatprep.mubr.f32.mxu0 0.0
    %6725 = vmatmul.mubr.f32.gmra.mrb[0].mxu0 %v6595
    %v6726 = vpop.f32.mrb[0].mxu0
    %v6727 = vadd.f32 0.0, %v6726
    %v6728 = vpop.f32.mrb[0].mxu0
    %6729 = vmatprep.mubr.f32.mxu0 0.0
    %6730 = vmatmul.mubr.f32.gmra.mrb[0].mxu0 %v6598
    %v6731 = vpop.f32.mrb[0].mxu0
    %v6732 = vadd.f32 0.0, %v6731
    %v6733 = vpop.f32.mrb[0].mxu0
    %6734 = vmatprep.mubr.f32.mxu0 0.0
    %6735 = vmatmul.mubr.f32.gmra.mrb[0].mxu0 %v6601
    %v6736 = vpop.f32.mrb[0].mxu0
    %v6737 = vadd.f32 0.0, %v6736
    %v6738 = vpop.f32.mrb[0].mxu0
    %6739 = vmatprep.mubr.f32.mxu0 0.0
    %6740 = vmatmul.mubr.f32.gmra.mrb[0].mxu0 %v6604
    %v6741 = vpop.f32.mrb[0].mxu0
    %v6742 = vadd.f32 0.0, %v6741
    %v6743 = vpop.f32.mrb[0].mxu0
    %6744 = vmatprep.mubr.f32.mxu0 0.0
    %6745 = vmatmul.mubr.f32.gmra.mrb[0].mxu0 %v6607
    %v6746 = vpop.f32.mrb[0].mxu0
    %v6747 = vadd.f32 0.0, %v6746
    %v6748 = vpop.f32.mrb[0].mxu0
    %6749 = vmatprep.mubr.f32.mxu0 0.0
    %6750 = vmatmul.mubr.f32.gmra.mrb[0].mxu0 %v6610
    %v6751 = vpop.f32.mrb[0].mxu0
    %v6752 = vadd.f32 0.0, %v6751
    %v6753 = vpop.f32.mrb[0].mxu0
    %6754 = vmatprep.mubr.f32.mxu0 0.0
    %6755 = vmatmul.mubr.f32.gmra.mrb[0].mxu0 %v6613
    %v6756 = vpop.f32.mrb[0].mxu0
    %v6757 = vadd.f32 0.0, %v6756
    %v6758 = vpop.f32.mrb[0].mxu0
    %6759 = vdwg.mxu0
    %v6760 = vadd.f32 %v6526, %v6682
    %v6761 = vadd.f32 %v6527, %v6687
    %v6762 = vadd.f32 %v6528, %v6692
    %v6763 = vadd.f32 %v6529, %v6697
    %v6764 = vadd.f32 %v6530, %v6702
    %v6765 = vadd.f32 %v6531, %v6707
    %v6766 = vadd.f32 %v6532, %v6712
    %v6767 = vadd.f32 %v6533, %v6717
    %v6768 = vadd.f32 %v6534, %v6722
    %v6769 = vadd.f32 %v6535, %v6727
    %v6770 = vadd.f32 %v6536, %v6732
    %v6771 = vadd.f32 %v6537, %v6737
    %v6772 = vadd.f32 %v6538, %v6742
    %v6773 = vadd.f32 %v6539, %v6747
    %v6774 = vadd.f32 %v6540, %v6752
    %v6775 = vadd.f32 %v6541, %v6757
    %v6776 = vld [vmem:[%s2282 + $0x1] sm:$0xff]
    %v6777 = vld [vmem:[%s2282 + $0x11] sm:$0xff]
    %v6778 = vld [vmem:[%s2282 + $0x21] sm:$0xff]
    %v6779 = vld [vmem:[%s2282 + $0x31] sm:$0xff]
    %v6780 = vld [vmem:[%s2282 + $0x41] sm:$0xff]
    %v6781 = vld [vmem:[%s2282 + $0x51] sm:$0xff]
    %v6782 = vld [vmem:[%s2282 + $0x61] sm:$0xff]
    %v6783 = vld [vmem:[%s2282 + $0x71] sm:$0xff]
    %v6784 = vld [vmem:[%s2282 + $0xa1] sm:$0xff]
    %v6785 = vld [vmem:[%s2282 + $0xb1] sm:$0xff]
    %v6786 = vld [vmem:[%s2282 + $0xc1] sm:$0xff]
    %v6787 = vld [vmem:[%s2282 + $0xd1] sm:$0xff]
    %v6788 = vld [vmem:[%s2282 + $0xe1] sm:$0xff]
    %v6789 = vld [vmem:[%s2282 + $0xf1] sm:$0xff]
    %v6790 = vld [vmem:[%s2282 + $0x101] sm:$0xff]
    %v6791 = vld [vmem:[%s2282 + $0x111] sm:$0xff]
    %s6792 = scalar_lea.vmem %s3, 1600
    %v6793 = vld [vmem:[%s6792] sm:$0xff]
    %v6794 = vld [vmem:[%s6792 + $0x8] sm:$0xff]
    %v6795 = vld [vmem:[%s6792 + $0x10] sm:$0xff]
    %v6796 = vld [vmem:[%s6792 + $0x18] sm:$0xff]
    %v6797 = vld [vmem:[%s6792 + $0x20] sm:$0xff]
    %v6798 = vld [vmem:[%s6792 + $0x28] sm:$0xff]
    %v6799 = vld [vmem:[%s6792 + $0x30] sm:$0xff]
    %v6800 = vld [vmem:[%s6792 + $0x38] sm:$0xff]
    %v6802 = vsel %vm21, %v6776, 0
    %v6805 = vsel %vm21, %v6777, 0
    %v6808 = vsel %vm21, %v6778, 0
    %v6811 = vsel %vm21, %v6779, 0
    %v6814 = vsel %vm21, %v6780, 0
    %v6817 = vsel %vm21, %v6781, 0
    %v6820 = vsel %vm21, %v6782, 0
    %v6823 = vsel %vm21, %v6783, 0
    %v6826 = vsel %vm21, %v6784, 0
    %v6829 = vsel %vm21, %v6785, 0
    %v6832 = vsel %vm21, %v6786, 0
    %v6835 = vsel %vm21, %v6787, 0
    %v6838 = vsel %vm21, %v6788, 0
    %v6841 = vsel %vm21, %v6789, 0
    %v6844 = vsel %vm21, %v6790, 0
    %v6847 = vsel %vm21, %v6791, 0
    %6849 = vmatprep.subr.mxu0 0.0
    %6850 = vmatpush1.msra.mxu0 %v6793
    %6851 = vmatprep.subr.mxu0 0.0
    %6852 = vmatpush1.msra.mxu0 %v6794
    %6853 = vmatprep.subr.mxu0 0.0
    %6854 = vmatpush1.msra.mxu0 %v6795
    %6855 = vmatprep.subr.mxu0 0.0
    %6856 = vmatpush1.msra.mxu0 %v6796
    %6857 = vmatprep.subr.mxu0 0.0
    %6858 = vmatpush1.msra.mxu0 %v6797
    %6859 = vmatprep.subr.mxu0 0.0
    %6860 = vmatpush1.msra.mxu0 %v6798
    %6861 = vmatprep.subr.mxu0 0.0
    %6862 = vmatpush1.msra.mxu0 %v6799
    %6863 = vmatprep.subr.mxu0 0.0
    %6864 = vmatpush1.msra.mxu0 %v6800
    %6865 = vmatprep.subr.mxu0 0.0
    %6866 = vmatpush1.msra.mxu0 0.0
    %6867 = vmatprep.subr.mxu0 0.0
    %6868 = vmatpush1.msra.mxu0 0.0
    %6869 = vmatprep.subr.mxu0 0.0
    %6870 = vmatpush1.msra.mxu0 0.0
    %6871 = vmatprep.subr.mxu0 0.0
    %6872 = vmatpush1.msra.mxu0 0.0
    %6873 = vmatprep.subr.mxu0 0.0
    %6874 = vmatpush1.msra.mxu0 0.0
    %6875 = vmatprep.subr.mxu0 0.0
    %6876 = vmatpush1.msra.mxu0 0.0
    %6877 = vmatprep.subr.mxu0 0.0
    %6878 = vmatpush1.msra.mxu0 0.0
    %6879 = vmatprep.subr.mxu0 0.0
    %6880 = vmatpush1.msra.mxu0 0.0
    %6881 = vmatprep.subr.mxu0 0.0
    %6882 = vmatpush1.msra.mxu0 0.0
    %6883 = vmatprep.subr.mxu0 0.0
    %6884 = vmatpush1.msra.mxu0 0.0
    %6885 = vmatprep.subr.mxu0 0.0
    %6886 = vmatpush1.msra.mxu0 0.0
    %6887 = vmatprep.subr.mxu0 0.0
    %6888 = vmatpush1.msra.mxu0 0.0
    %6889 = vmatprep.subr.mxu0 0.0
    %6890 = vmatpush1.msra.mxu0 0.0
    %6891 = vmatprep.subr.mxu0 0.0
    %6892 = vmatpush1.msra.mxu0 0.0
    %6893 = vmatprep.subr.mxu0 0.0
    %6894 = vmatpush1.msra.mxu0 0.0
    %6895 = vmatprep.subr.mxu0 0.0
    %6896 = vmatpush1.msra.mxu0 0.0
    %6897 = vmatprep.subr.mxu0 0.0
    %6898 = vmatpush1.msra.mxu0 0.0
    %6899 = vmatprep.subr.mxu0 0.0
    %6900 = vmatpush1.msra.mxu0 0.0
    %6901 = vmatprep.subr.mxu0 0.0
    %6902 = vmatpush1.msra.mxu0 0.0
    %6903 = vmatprep.subr.mxu0 0.0
    %6904 = vmatpush1.msra.mxu0 0.0
    %6905 = vmatprep.subr.mxu0 0.0
    %6906 = vmatpush1.msra.mxu0 0.0
    %6907 = vmatprep.subr.mxu0 0.0
    %6908 = vmatpush1.msra.mxu0 0.0
    %6909 = vmatprep.subr.mxu0 0.0
    %6910 = vmatpush1.msra.mxu0 0.0
    %6911 = vmatprep.subr.mxu0 0.0
    %6912 = vmatpush1.msra.mxu0 0.0
    %6913 = vmatprep.mubr.f32.mxu0 0.0
    %6914 = vmatmul.mubr.f32.gmra.mrb[0].mxu0 %v6802
    %v6915 = vpop.f32.mrb[0].mxu0
    %v6916 = vadd.f32 0.0, %v6915
    %v6917 = vpop.f32.mrb[0].mxu0
    %6918 = vmatprep.mubr.f32.mxu0 0.0
    %6919 = vmatmul.mubr.f32.gmra.mrb[0].mxu0 %v6805
    %v6920 = vpop.f32.mrb[0].mxu0
    %v6921 = vadd.f32 0.0, %v6920
    %v6922 = vpop.f32.mrb[0].mxu0
    %6923 = vmatprep.mubr.f32.mxu0 0.0
    %6924 = vmatmul.mubr.f32.gmra.mrb[0].mxu0 %v6808
    %v6925 = vpop.f32.mrb[0].mxu0
    %v6926 = vadd.f32 0.0, %v6925
    %v6927 = vpop.f32.mrb[0].mxu0
    %6928 = vmatprep.mubr.f32.mxu0 0.0
    %6929 = vmatmul.mubr.f32.gmra.mrb[0].mxu0 %v6811
    %v6930 = vpop.f32.mrb[0].mxu0
    %v6931 = vadd.f32 0.0, %v6930
    %v6932 = vpop.f32.mrb[0].mxu0
    %6933 = vmatprep.mubr.f32.mxu0 0.0
    %6934 = vmatmul.mubr.f32.gmra.mrb[0].mxu0 %v6814
    %v6935 = vpop.f32.mrb[0].mxu0
    %v6936 = vadd.f32 0.0, %v6935
    %v6937 = vpop.f32.mrb[0].mxu0
    %6938 = vmatprep.mubr.f32.mxu0 0.0
    %6939 = vmatmul.mubr.f32.gmra.mrb[0].mxu0 %v6817
    %v6940 = vpop.f32.mrb[0].mxu0
    %v6941 = vadd.f32 0.0, %v6940
    %v6942 = vpop.f32.mrb[0].mxu0
    %6943 = vmatprep.mubr.f32.mxu0 0.0
    %6944 = vmatmul.mubr.f32.gmra.mrb[0].mxu0 %v6820
    %v6945 = vpop.f32.mrb[0].mxu0
    %v6946 = vadd.f32 0.0, %v6945
    %v6947 = vpop.f32.mrb[0].mxu0
    %6948 = vmatprep.mubr.f32.mxu0 0.0
    %6949 = vmatmul.mubr.f32.gmra.mrb[0].mxu0 %v6823
    %v6950 = vpop.f32.mrb[0].mxu0
    %v6951 = vadd.f32 0.0, %v6950
    %v6952 = vpop.f32.mrb[0].mxu0
    %6953 = vmatprep.mubr.f32.mxu0 0.0
    %6954 = vmatmul.mubr.f32.gmra.mrb[0].mxu0 %v6826
    %v6955 = vpop.f32.mrb[0].mxu0
    %v6956 = vadd.f32 0.0, %v6955
    %v6957 = vpop.f32.mrb[0].mxu0
    %6958 = vmatprep.mubr.f32.mxu0 0.0
    %6959 = vmatmul.mubr.f32.gmra.mrb[0].mxu0 %v6829
    %v6960 = vpop.f32.mrb[0].mxu0
    %v6961 = vadd.f32 0.0, %v6960
    %v6962 = vpop.f32.mrb[0].mxu0
    %6963 = vmatprep.mubr.f32.mxu0 0.0
    %6964 = vmatmul.mubr.f32.gmra.mrb[0].mxu0 %v6832
    %v6965 = vpop.f32.mrb[0].mxu0
    %v6966 = vadd.f32 0.0, %v6965
    %v6967 = vpop.f32.mrb[0].mxu0
    %6968 = vmatprep.mubr.f32.mxu0 0.0
    %6969 = vmatmul.mubr.f32.gmra.mrb[0].mxu0 %v6835
    %v6970 = vpop.f32.mrb[0].mxu0
    %v6971 = vadd.f32 0.0, %v6970
    %v6972 = vpop.f32.mrb[0].mxu0
    %6973 = vmatprep.mubr.f32.mxu0 0.0
    %6974 = vmatmul.mubr.f32.gmra.mrb[0].mxu0 %v6838
    %v6975 = vpop.f32.mrb[0].mxu0
    %v6976 = vadd.f32 0.0, %v6975
    %v6977 = vpop.f32.mrb[0].mxu0
    %6978 = vmatprep.mubr.f32.mxu0 0.0
    %6979 = vmatmul.mubr.f32.gmra.mrb[0].mxu0 %v6841
    %v6980 = vpop.f32.mrb[0].mxu0
    %v6981 = vadd.f32 0.0, %v6980
    %v6982 = vpop.f32.mrb[0].mxu0
    %6983 = vmatprep.mubr.f32.mxu0 0.0
    %6984 = vmatmul.mubr.f32.gmra.mrb[0].mxu0 %v6844
    %v6985 = vpop.f32.mrb[0].mxu0
    %v6986 = vadd.f32 0.0, %v6985
    %v6987 = vpop.f32.mrb[0].mxu0
    %6988 = vmatprep.mubr.f32.mxu0 0.0
    %6989 = vmatmul.mubr.f32.gmra.mrb[0].mxu0 %v6847
    %v6990 = vpop.f32.mrb[0].mxu0
    %v6991 = vadd.f32 0.0, %v6990
    %v6992 = vpop.f32.mrb[0].mxu0
    %6993 = vdwg.mxu0
    %v6994 = vadd.f32 %v6760, %v6916
    %v6995 = vadd.f32 %v6761, %v6921
    %v6996 = vadd.f32 %v6762, %v6926
    %v6997 = vadd.f32 %v6763, %v6931
    %v6998 = vadd.f32 %v6764, %v6936
    %v6999 = vadd.f32 %v6765, %v6941
    %v7000 = vadd.f32 %v6766, %v6946
    %v7001 = vadd.f32 %v6767, %v6951
    %v7002 = vadd.f32 %v6768, %v6956
    %v7003 = vadd.f32 %v6769, %v6961
    %v7004 = vadd.f32 %v6770, %v6966
    %v7005 = vadd.f32 %v6771, %v6971
    %v7006 = vadd.f32 %v6772, %v6976
    %v7007 = vadd.f32 %v6773, %v6981
    %v7008 = vadd.f32 %v6774, %v6986
    %v7009 = vadd.f32 %v6775, %v6991
    %v7010 = vld [vmem:[%s2282 + $0x2] sm:$0xff]
    %v7011 = vld [vmem:[%s2282 + $0x12] sm:$0xff]
    %v7012 = vld [vmem:[%s2282 + $0x22] sm:$0xff]
    %v7013 = vld [vmem:[%s2282 + $0x32] sm:$0xff]
    %v7014 = vld [vmem:[%s2282 + $0x42] sm:$0xff]
    %v7015 = vld [vmem:[%s2282 + $0x52] sm:$0xff]
    %v7016 = vld [vmem:[%s2282 + $0x62] sm:$0xff]
    %v7017 = vld [vmem:[%s2282 + $0x72] sm:$0xff]
    %v7018 = vld [vmem:[%s2282 + $0xa2] sm:$0xff]
    %v7019 = vld [vmem:[%s2282 + $0xb2] sm:$0xff]
    %v7020 = vld [vmem:[%s2282 + $0xc2] sm:$0xff]
    %v7021 = vld [vmem:[%s2282 + $0xd2] sm:$0xff]
    %v7022 = vld [vmem:[%s2282 + $0xe2] sm:$0xff]
    %v7023 = vld [vmem:[%s2282 + $0xf2] sm:$0xff]
    %v7024 = vld [vmem:[%s2282 + $0x102] sm:$0xff]
    %v7025 = vld [vmem:[%s2282 + $0x112] sm:$0xff]
    %s7026 = scalar_lea.vmem %s3, 1664
    %v7027 = vld [vmem:[%s7026] sm:$0xff]
    %v7028 = vld [vmem:[%s7026 + $0x8] sm:$0xff]
    %v7029 = vld [vmem:[%s7026 + $0x10] sm:$0xff]
    %v7030 = vld [vmem:[%s7026 + $0x18] sm:$0xff]
    %v7031 = vld [vmem:[%s7026 + $0x20] sm:$0xff]
    %v7032 = vld [vmem:[%s7026 + $0x28] sm:$0xff]
    %v7033 = vld [vmem:[%s7026 + $0x30] sm:$0xff]
    %v7034 = vld [vmem:[%s7026 + $0x38] sm:$0xff]
    %v7036 = vsel %vm21, %v7010, 0
    %v7039 = vsel %vm21, %v7011, 0
    %v7042 = vsel %vm21, %v7012, 0
    %v7045 = vsel %vm21, %v7013, 0
    %v7048 = vsel %vm21, %v7014, 0
    %v7051 = vsel %vm21, %v7015, 0
    %v7054 = vsel %vm21, %v7016, 0
    %v7057 = vsel %vm21, %v7017, 0
    %v7060 = vsel %vm21, %v7018, 0
    %v7063 = vsel %vm21, %v7019, 0
    %v7066 = vsel %vm21, %v7020, 0
    %v7069 = vsel %vm21, %v7021, 0
    %v7072 = vsel %vm21, %v7022, 0
    %v7075 = vsel %vm21, %v7023, 0
    %v7078 = vsel %vm21, %v7024, 0
    %v7081 = vsel %vm21, %v7025, 0
    %7083 = vmatprep.subr.mxu0 0.0
    %7084 = vmatpush1.msra.mxu0 %v7027
    %7085 = vmatprep.subr.mxu0 0.0
    %7086 = vmatpush1.msra.mxu0 %v7028
    %7087 = vmatprep.subr.mxu0 0.0
    %7088 = vmatpush1.msra.mxu0 %v7029
    %7089 = vmatprep.subr.mxu0 0.0
    %7090 = vmatpush1.msra.mxu0 %v7030
    %7091 = vmatprep.subr.mxu0 0.0
    %7092 = vmatpush1.msra.mxu0 %v7031
    %7093 = vmatprep.subr.mxu0 0.0
    %7094 = vmatpush1.msra.mxu0 %v7032
    %7095 = vmatprep.subr.mxu0 0.0
    %7096 = vmatpush1.msra.mxu0 %v7033
    %7097 = vmatprep.subr.mxu0 0.0
    %7098 = vmatpush1.msra.mxu0 %v7034
    %7099 = vmatprep.subr.mxu0 0.0
    %7100 = vmatpush1.msra.mxu0 0.0
    %7101 = vmatprep.subr.mxu0 0.0
    %7102 = vmatpush1.msra.mxu0 0.0
    %7103 = vmatprep.subr.mxu0 0.0
    %7104 = vmatpush1.msra.mxu0 0.0
    %7105 = vmatprep.subr.mxu0 0.0
    %7106 = vmatpush1.msra.mxu0 0.0
    %7107 = vmatprep.subr.mxu0 0.0
    %7108 = vmatpush1.msra.mxu0 0.0
    %7109 = vmatprep.subr.mxu0 0.0
    %7110 = vmatpush1.msra.mxu0 0.0
    %7111 = vmatprep.subr.mxu0 0.0
    %7112 = vmatpush1.msra.mxu0 0.0
    %7113 = vmatprep.subr.mxu0 0.0
    %7114 = vmatpush1.msra.mxu0 0.0
    %7115 = vmatprep.subr.mxu0 0.0
    %7116 = vmatpush1.msra.mxu0 0.0
    %7117 = vmatprep.subr.mxu0 0.0
    %7118 = vmatpush1.msra.mxu0 0.0
    %7119 = vmatprep.subr.mxu0 0.0
    %7120 = vmatpush1.msra.mxu0 0.0
    %7121 = vmatprep.subr.mxu0 0.0
    %7122 = vmatpush1.msra.mxu0 0.0
    %7123 = vmatprep.subr.mxu0 0.0
    %7124 = vmatpush1.msra.mxu0 0.0
    %7125 = vmatprep.subr.mxu0 0.0
    %7126 = vmatpush1.msra.mxu0 0.0
    %7127 = vmatprep.subr.mxu0 0.0
    %7128 = vmatpush1.msra.mxu0 0.0
    %7129 = vmatprep.subr.mxu0 0.0
    %7130 = vmatpush1.msra.mxu0 0.0
    %7131 = vmatprep.subr.mxu0 0.0
    %7132 = vmatpush1.msra.mxu0 0.0
    %7133 = vmatprep.subr.mxu0 0.0
    %7134 = vmatpush1.msra.mxu0 0.0
    %7135 = vmatprep.subr.mxu0 0.0
    %7136 = vmatpush1.msra.mxu0 0.0
    %7137 = vmatprep.subr.mxu0 0.0
    %7138 = vmatpush1.msra.mxu0 0.0
    %7139 = vmatprep.subr.mxu0 0.0
    %7140 = vmatpush1.msra.mxu0 0.0
    %7141 = vmatprep.subr.mxu0 0.0
    %7142 = vmatpush1.msra.mxu0 0.0
    %7143 = vmatprep.subr.mxu0 0.0
    %7144 = vmatpush1.msra.mxu0 0.0
    %7145 = vmatprep.subr.mxu0 0.0
    %7146 = vmatpush1.msra.mxu0 0.0
    %7147 = vmatprep.mubr.f32.mxu0 0.0
    %7148 = vmatmul.mubr.f32.gmra.mrb[0].mxu0 %v7036
    %v7149 = vpop.f32.mrb[0].mxu0
    %v7150 = vadd.f32 0.0, %v7149
    %v7151 = vpop.f32.mrb[0].mxu0
    %7152 = vmatprep.mubr.f32.mxu0 0.0
    %7153 = vmatmul.mubr.f32.gmra.mrb[0].mxu0 %v7039
    %v7154 = vpop.f32.mrb[0].mxu0
    %v7155 = vadd.f32 0.0, %v7154
    %v7156 = vpop.f32.mrb[0].mxu0
    %7157 = vmatprep.mubr.f32.mxu0 0.0
    %7158 = vmatmul.mubr.f32.gmra.mrb[0].mxu0 %v7042
    %v7159 = vpop.f32.mrb[0].mxu0
    %v7160 = vadd.f32 0.0, %v7159
    %v7161 = vpop.f32.mrb[0].mxu0
    %7162 = vmatprep.mubr.f32.mxu0 0.0
    %7163 = vmatmul.mubr.f32.gmra.mrb[0].mxu0 %v7045
    %v7164 = vpop.f32.mrb[0].mxu0
    %v7165 = vadd.f32 0.0, %v7164
    %v7166 = vpop.f32.mrb[0].mxu0
    %7167 = vmatprep.mubr.f32.mxu0 0.0
    %7168 = vmatmul.mubr.f32.gmra.mrb[0].mxu0 %v7048
    %v7169 = vpop.f32.mrb[0].mxu0
    %v7170 = vadd.f32 0.0, %v7169
    %v7171 = vpop.f32.mrb[0].mxu0
    %7172 = vmatprep.mubr.f32.mxu0 0.0
    %7173 = vmatmul.mubr.f32.gmra.mrb[0].mxu0 %v7051
    %v7174 = vpop.f32.mrb[0].mxu0
    %v7175 = vadd.f32 0.0, %v7174
    %v7176 = vpop.f32.mrb[0].mxu0
    %7177 = vmatprep.mubr.f32.mxu0 0.0
    %7178 = vmatmul.mubr.f32.gmra.mrb[0].mxu0 %v7054
    %v7179 = vpop.f32.mrb[0].mxu0
    %v7180 = vadd.f32 0.0, %v7179
    %v7181 = vpop.f32.mrb[0].mxu0
    %7182 = vmatprep.mubr.f32.mxu0 0.0
    %7183 = vmatmul.mubr.f32.gmra.mrb[0].mxu0 %v7057
    %v7184 = vpop.f32.mrb[0].mxu0
    %v7185 = vadd.f32 0.0, %v7184
    %v7186 = vpop.f32.mrb[0].mxu0
    %7187 = vmatprep.mubr.f32.mxu0 0.0
    %7188 = vmatmul.mubr.f32.gmra.mrb[0].mxu0 %v7060
    %v7189 = vpop.f32.mrb[0].mxu0
    %v7190 = vadd.f32 0.0, %v7189
    %v7191 = vpop.f32.mrb[0].mxu0
    %7192 = vmatprep.mubr.f32.mxu0 0.0
    %7193 = vmatmul.mubr.f32.gmra.mrb[0].mxu0 %v7063
    %v7194 = vpop.f32.mrb[0].mxu0
    %v7195 = vadd.f32 0.0, %v7194
    %v7196 = vpop.f32.mrb[0].mxu0
    %7197 = vmatprep.mubr.f32.mxu0 0.0
    %7198 = vmatmul.mubr.f32.gmra.mrb[0].mxu0 %v7066
    %v7199 = vpop.f32.mrb[0].mxu0
    %v7200 = vadd.f32 0.0, %v7199
    %v7201 = vpop.f32.mrb[0].mxu0
    %7202 = vmatprep.mubr.f32.mxu0 0.0
    %7203 = vmatmul.mubr.f32.gmra.mrb[0].mxu0 %v7069
    %v7204 = vpop.f32.mrb[0].mxu0
    %v7205 = vadd.f32 0.0, %v7204
    %v7206 = vpop.f32.mrb[0].mxu0
    %7207 = vmatprep.mubr.f32.mxu0 0.0
    %7208 = vmatmul.mubr.f32.gmra.mrb[0].mxu0 %v7072
    %v7209 = vpop.f32.mrb[0].mxu0
    %v7210 = vadd.f32 0.0, %v7209
    %v7211 = vpop.f32.mrb[0].mxu0
    %7212 = vmatprep.mubr.f32.mxu0 0.0
    %7213 = vmatmul.mubr.f32.gmra.mrb[0].mxu0 %v7075
    %v7214 = vpop.f32.mrb[0].mxu0
    %v7215 = vadd.f32 0.0, %v7214
    %v7216 = vpop.f32.mrb[0].mxu0
    %7217 = vmatprep.mubr.f32.mxu0 0.0
    %7218 = vmatmul.mubr.f32.gmra.mrb[0].mxu0 %v7078
    %v7219 = vpop.f32.mrb[0].mxu0
    %v7220 = vadd.f32 0.0, %v7219
    %v7221 = vpop.f32.mrb[0].mxu0
    %7222 = vmatprep.mubr.f32.mxu0 0.0
    %7223 = vmatmul.mubr.f32.gmra.mrb[0].mxu0 %v7081
    %v7224 = vpop.f32.mrb[0].mxu0
    %v7225 = vadd.f32 0.0, %v7224
    %v7226 = vpop.f32.mrb[0].mxu0
    %7227 = vdwg.mxu0
    %v7228 = vadd.f32 %v6994, %v7150
    %v7229 = vadd.f32 %v6995, %v7155
    %v7230 = vadd.f32 %v6996, %v7160
    %v7231 = vadd.f32 %v6997, %v7165
    %v7232 = vadd.f32 %v6998, %v7170
    %v7233 = vadd.f32 %v6999, %v7175
    %v7234 = vadd.f32 %v7000, %v7180
    %v7235 = vadd.f32 %v7001, %v7185
    %v7236 = vadd.f32 %v7002, %v7190
    %v7237 = vadd.f32 %v7003, %v7195
    %v7238 = vadd.f32 %v7004, %v7200
    %v7239 = vadd.f32 %v7005, %v7205
    %v7240 = vadd.f32 %v7006, %v7210
    %v7241 = vadd.f32 %v7007, %v7215
    %v7242 = vadd.f32 %v7008, %v7220
    %v7243 = vadd.f32 %v7009, %v7225
    %s7244 = scalar_lea.vmem %s4, 2
    %v7245 = vld [vmem:[%s7244] sm:$0x1]
    %v7247 = vlaneseq
    %v7248 = vshrl.u32 %v7247, 7
    %v7249 = vsub.s32 0, %v7248
    %v7250 = vrot.slane %v7245, %v7249
    %v7252 = vadd.f32 %v7228, %v7250
    %v7253 = vadd.f32 %v7229, %v7250
    %v7254 = vadd.f32 %v7230, %v7250
    %v7255 = vadd.f32 %v7231, %v7250
    %v7256 = vadd.f32 %v7232, %v7250
    %v7257 = vadd.f32 %v7233, %v7250
    %v7258 = vadd.f32 %v7234, %v7250
    %v7259 = vadd.f32 %v7235, %v7250
    %v7260 = vadd.f32 %v7236, %v7250
    %v7261 = vadd.f32 %v7237, %v7250
    %v7262 = vadd.f32 %v7238, %v7250
    %v7263 = vadd.f32 %v7239, %v7250
    %v7264 = vadd.f32 %v7240, %v7250
    %v7265 = vadd.f32 %v7241, %v7250
    %v7266 = vadd.f32 %v7242, %v7250
    %v7267 = vadd.f32 %v7243, %v7250
    %v7268 = vmax.f32 %v7252, 0.0
    %v7269 = vmax.f32 %v7253, 0.0
    %v7270 = vmax.f32 %v7254, 0.0
    %v7271 = vmax.f32 %v7255, 0.0
    %v7272 = vmax.f32 %v7256, 0.0
    %v7273 = vmax.f32 %v7257, 0.0
    %v7274 = vmax.f32 %v7258, 0.0
    %v7275 = vmax.f32 %v7259, 0.0
    %v7276 = vmax.f32 %v7260, 0.0
    %v7277 = vmax.f32 %v7261, 0.0
    %v7278 = vmax.f32 %v7262, 0.0
    %v7279 = vmax.f32 %v7263, 0.0
    %v7280 = vmax.f32 %v7264, 0.0
    %v7281 = vmax.f32 %v7265, 0.0
    %v7282 = vmax.f32 %v7266, 0.0
    %v7283 = vmax.f32 %v7267, 0.0
    %7284 = vst.msk [vmem:[#allocation3] sm:$0xff] %vm21, %v7268
    %7285 = vst.msk [vmem:[#allocation3 + $0x8] sm:$0xff] %vm21, %v7269
    %7286 = vst.msk [vmem:[#allocation3 + $0x10] sm:$0xff] %vm21, %v7270
    %7287 = vst.msk [vmem:[#allocation3 + $0x18] sm:$0xff] %vm21, %v7271
    %7288 = vst.msk [vmem:[#allocation3 + $0x20] sm:$0xff] %vm21, %v7272
    %7289 = vst.msk [vmem:[#allocation3 + $0x28] sm:$0xff] %vm21, %v7273
    %7290 = vst.msk [vmem:[#allocation3 + $0x30] sm:$0xff] %vm21, %v7274
    %7291 = vst.msk [vmem:[#allocation3 + $0x38] sm:$0xff] %vm21, %v7275
    %7292 = vst.msk [vmem:[#allocation3 + $0x40] sm:$0xff] %vm21, %v7276
    %7293 = vst.msk [vmem:[#allocation3 + $0x48] sm:$0xff] %vm21, %v7277
    %7294 = vst.msk [vmem:[#allocation3 + $0x50] sm:$0xff] %vm21, %v7278
    %7295 = vst.msk [vmem:[#allocation3 + $0x58] sm:$0xff] %vm21, %v7279
    %7296 = vst.msk [vmem:[#allocation3 + $0x60] sm:$0xff] %vm21, %v7280
    %7297 = vst.msk [vmem:[#allocation3 + $0x68] sm:$0xff] %vm21, %v7281
    %7298 = vst.msk [vmem:[#allocation3 + $0x70] sm:$0xff] %vm21, %v7282
    %7299 = vst.msk [vmem:[#allocation3 + $0x78] sm:$0xff] %vm21, %v7283
    // Predicated region
    $region22: #{cnn_encoder_forward.1} parent=1 // pred_check
      _
    $region23: #{cnn_encoder_forward.1} parent=1 // pred_check_branch
      %7301 = sbr.rel (0) target = $region25
    $region24: #{cnn_encoder_forward.1} parent=1 // pred_region
      %s7303 = ssub.s32 2048, 2048
      %7304 = vsyncadd [#allocation4], %s7303
      %s7305 = sshll.u32 [#allocation3], 4
      %s7306 = int_to_ptr.vmem [resolvable:$true] %s7305
      %7311 = dma.vmem_to_hbm [thread:$0]  %s7306, 2048, %s5, [#allocation4], 128, 128, 8
    $region25: #{cnn_encoder_forward.1} parent=1 // pred_fallthru
      _
    // Predicated region
    $region26: #{cnn_encoder_forward.1} parent=1 // pred_check
      _
    $region27: #{cnn_encoder_forward.1} parent=1 // pred_check_branch
      %7313 = sbr.rel (0) target = $region29
    $region28: #{cnn_encoder_forward.1} parent=1 // pred_region
      %7314 = dma.done [#allocation4], 2048
    $region29: #{cnn_encoder_forward.1} parent=1 // pred_fallthru
      _
    %7315 = vsyncpa [#allocation4], 1

</llo_original>
